<compile_context>
chip_gen: v7x
topology: tpu7x:2x2x1
jax: 0.10.0
libtpu: 0.0.40
codegen_flags: <defaults>
</compile_context>

<pallas_src>
import functools

import jax
import jax.numpy as jnp
from jax.experimental import pallas as pl
from jax.experimental.pallas import tpu as pltpu


# ----------------------------------------------------------------------------
# small helpers used inside the kernel
# ----------------------------------------------------------------------------
def _gelu(x):
    # TODO(synk): tanh-approximate GELU; PyTorch nn.GELU() default is exact erf.
    c = 0.7978845608028654  # sqrt(2/pi)
    return 0.5 * x * (1.0 + jnp.tanh(c * (x + 0.044715 * x * x * x)))


def _layernorm(h, g, b, eps):
    mu = jnp.mean(h, axis=-1, keepdims=True)
    var = jnp.mean((h - mu) ** 2, axis=-1, keepdims=True)
    return (h - mu) * jax.lax.rsqrt(var + eps) * g + b


def _num_tensorcores_per_chip():
    """Best-effort TensorCore count per chip (v7x has 2, v5e/v6e have 1)."""
    try:
        kind = jax.devices()[0].device_kind.lower()
    except Exception:
        return 1
    return 2 if "7" in kind else 1


# ----------------------------------------------------------------------------
# Fused kernel: conv stem + fusion + CNN pooling + ViT encoder + classifier.
# One grid step processes `bpt` batch elements (grid marked "parallel").
# ----------------------------------------------------------------------------
def _mma_kernel(col_ref, wblk_ref, bblk_ref, pool_ref, extra_ref,
                ln1g_ref, ln1b_ref, wqkv_ref, bqkv_ref, wo_ref, bo_ref,
                ln2g_ref, ln2b_ref, w1_ref, b1_ref, w2_ref, b2_ref,
                lnfg_ref, lnfb_ref, clsw_ref, clsb_ref,
                out_ref, x_scr, obuf,
                *, depth, heads, dim_head, bpt, n_views, hw, tp, d,
                t_real, eps):
    f32 = jnp.float32
    inner = heads * dim_head

    # ---- two-modality conv stem: ONE block-diagonal matmul + GELU ----------
    # col: (bpt*V*HW, 9*l1 + 9*l2); wblk = blockdiag(wA, wB): (., 2*D)
    f = _gelu(jnp.dot(col_ref[...], wblk_ref[...],
                      preferred_element_type=f32) + bblk_ref[...])
    fsum = f[:, :d] + f[:, d:]                       # modality fusion (A + B)

    # ---- CNN stream: view-average + spatial mean-pool as one matmul --------
    cnn = jnp.dot(pool_ref[...], fsum, preferred_element_type=f32)  # (bpt, D)

    # ---- assemble ViT tokens for this batch tile into the x scratch --------
    # Local row layout per batch: rows 0..hw-1 = patch tokens, row hw = cls
    # token, rows hw+1..tp-1 = padding (zeros).  `extra` already carries the
    # positional embeddings + cls token in that layout.
    for lb in range(bpt):
        tok_b = fsum[lb * n_views * hw: lb * n_views * hw + hw, :]  # view 0
        x_scr[lb * tp: lb * tp + hw, :] = tok_b + extra_ref[0:hw, :]
        x_scr[lb * tp + hw: lb * tp + tp, :] = extra_ref[hw:tp, :]
    x = x_scr[...]                                    # (bpt*Tp, D)

    # -inf bias on padded key columns (local token index >= t_real).
    col_ids = jax.lax.broadcasted_iota(jnp.int32, (1, tp), 1)
    key_bias = jnp.where(col_ids < t_real, 0.0, -1e30).astype(f32)

    # ---- pre-LN ViT encoder -------------------------------------------------
    for l in range(depth):
        # multi-head self attention (attention scale folded into wqkv/bqkv)
        xn = _layernorm(x, ln1g_ref[l], ln1b_ref[l], eps)
        qkv = jnp.dot(xn, wqkv_ref[l],
                      preferred_element_type=f32) + bqkv_ref[l]
        for lb in range(bpt):
            r0 = lb * tp
            qkv_b = qkv[r0:r0 + tp, :]
            for h in range(heads):
                lo = h * dim_head
                q = qkv_b[:, lo:lo + dim_head]
                k = qkv_b[:, inner + lo:inner + lo + dim_head]
                v = qkv_b[:, 2 * inner + lo:2 * inner + lo + dim_head]
                s = jnp.dot(q, k.T, preferred_element_type=f32) + key_bias
                m = jnp.max(s, axis=-1, keepdims=True)
                p = jnp.exp(s - m)
                inv = pl.reciprocal(jnp.sum(p, axis=-1, keepdims=True),
                                    approx=True)
                # lane-contiguous per-head write; the head concat is implicit
                obuf[r0:r0 + tp, lo:lo + dim_head] = (
                    jnp.dot(p, v, preferred_element_type=f32) * inv)
        # single output projection over all heads + residual
        x = x + jnp.dot(obuf[...], wo_ref[l],
                        preferred_element_type=f32) + bo_ref[l]

        # MLP + residual
        xn = _layernorm(x, ln2g_ref[l], ln2b_ref[l], eps)
        hmid = _gelu(jnp.dot(xn, w1_ref[l],
                             preferred_element_type=f32) + b1_ref[l])
        x = x + jnp.dot(hmid, w2_ref[l],
                        preferred_element_type=f32) + b2_ref[l]

    # ---- final LN, cls token, fuse with CNN stream, classifier -------------
    xf = _layernorm(x, lnfg_ref[...], lnfb_ref[...], eps)
    cls_rows = jnp.concatenate(
        [xf[lb * tp + hw: lb * tp + hw + 1, :] for lb in range(bpt)], axis=0)
    fused = cls_rows + cnn                                      # (bpt, D)
    logits = jnp.dot(fused, clsw_ref[...],
                     preferred_element_type=f32) + clsb_ref[...]  # (bpt, 128)
    out_ref[...] = logits.reshape(out_ref.shape).astype(out_ref.dtype)


# ----------------------------------------------------------------------------
# Model glue (im2col, parameter prep, forward orchestration)
# ----------------------------------------------------------------------------
def im2col_3x3(x_nhwc):
    """3x3 / stride 1 / pad 1 patch extraction -> (N*H*W, 9*C)."""
    N, H, W, C = x_nhwc.shape
    xp = jnp.pad(x_nhwc, ((0, 0), (1, 1), (1, 1), (0, 0)))
    cols = []
    for dy in range(3):
        for dx in range(3):
            cols.append(xp[:, dy:dy + H, dx:dx + W, :])
    return jnp.concatenate(cols, axis=-1).reshape(N * H * W, 9 * C)


def _stack_views_batch_major(views):
    """[(B,C,H,W)] x V  ->  (B*V, H, W, C)  (batch-major row order)."""
    x = jnp.stack(views, axis=1).astype(jnp.float32)     # (B, V, C, H, W)
    B, V, C, H, W = x.shape
    return jnp.transpose(x, (0, 1, 3, 4, 2)).reshape(B * V, H, W, C)


def init_params(key, l1, l2, D, num_patches, num_classes, depth, heads,
                dim_head, mlp_dim):
    ks = iter(jax.random.split(key, 12))

    def nrm(shape, scale=0.02):
        return (scale * jax.random.normal(next(ks), shape)).astype(jnp.float32)

    inner = heads * dim_head
    L = depth
    return {
        "convA_w": nrm((9 * l1, D)), "convA_b": jnp.zeros((1, D), jnp.float32),
        "convB_w": nrm((9 * l2, D)), "convB_b": jnp.zeros((1, D), jnp.float32),
        "cls_token": nrm((1, D)),
        "pos_emb": nrm((num_patches + 1, D)),
        "ln1_g": jnp.ones((L, 1, D), jnp.float32),
        "ln1_b": jnp.zeros((L, 1, D), jnp.float32),
        "wqkv": nrm((L, D, 3 * inner)),
        "bqkv": jnp.zeros((L, 1, 3 * inner), jnp.float32),
        "wo": nrm((L, inner, D)),
        "bo": jnp.zeros((L, 1, D), jnp.float32),
        "ln2_g": jnp.ones((L, 1, D), jnp.float32),
        "ln2_b": jnp.zeros((L, 1, D), jnp.float32),
        "w1": nrm((L, D, mlp_dim)),
        "b1": jnp.zeros((L, 1, mlp_dim), jnp.float32),
        "w2": nrm((L, mlp_dim, D)),
        "b2": jnp.zeros((L, 1, D), jnp.float32),
        "lnf_g": jnp.ones((1, D), jnp.float32),
        "lnf_b": jnp.zeros((1, D), jnp.float32),
        "cls_w": nrm((D, num_classes)),
        "cls_b": jnp.zeros((1, num_classes), jnp.float32),
    }


def mma_test_forward(params, img11, img21, img12, img22, img13, img23,
                     *, D, heads, dim_head, batch_tile=None, ln_eps=1e-5):
    B = img11.shape[0]
    H, W = img11.shape[2], img11.shape[3]
    hw = H * W
    n_views = 3
    inner = heads * dim_head
    depth = params["wqkv"].shape[0]
    NC = params["cls_w"].shape[1]
    nc_pad = ((NC + 127) // 128) * 128       # lane-dense classifier output
    t_real = hw + 1
    tp = ((t_real + 7) // 8) * 8             # tokens padded to sublane multiple

    # One grid step per TensorCore when possible (v7x), else collapse batch.
    if batch_tile is None:
        n_tc = _num_tensorcores_per_chip()
        batch_tile = B if (n_tc <= 1 or B % n_tc != 0) else B // n_tc
    assert B % batch_tile == 0
    n_tiles = B // batch_tile
    rows_per_tile = batch_tile * n_views * hw

    # ---- im2col (batch-major rows (b, v, h, w)), both modalities along K ---
    colA = im2col_3x3(_stack_views_batch_major([img11, img12, img13]))
    colB = im2col_3x3(_stack_views_batch_major([img21, img22, img23]))
    col = jnp.concatenate([colA, colB], axis=1)        # (B*V*HW, 9*(l1+l2))
    kA = params["convA_w"].shape[0]
    kB = params["convB_w"].shape[0]

    # ---- host-side parameter prep (one-time transforms) --------------------
    scale = float(dim_head) ** -0.5
    wqkv = params["wqkv"].at[:, :, :inner].multiply(scale)   # fold attn scale
    bqkv = params["bqkv"].at[:, :, :inner].multiply(scale)
    w_blk = jnp.zeros((kA + kB, 2 * D), jnp.float32)
    w_blk = w_blk.at[:kA, :D].set(params["convA_w"])
    w_blk = w_blk.at[kA:, D:].set(params["convB_w"])
    b_blk = jnp.concatenate([params["convA_b"], params["convB_b"]], axis=1)
    # Additive token block (per batch): pos emb for patches, cls+pos[0] at row
    # hw, zeros for padding rows.
    extra = jnp.zeros((tp, D), jnp.float32)
    extra = extra.at[:hw, :].set(params["pos_emb"][1:t_real])
    extra = extra.at[hw, :].set(params["cls_token"][0] + params["pos_emb"][0])
    # Block-averaging pooling matrix (same for every batch tile).
    row_b = jnp.arange(rows_per_tile) // (n_views * hw)
    pool = (row_b[None, :] == jnp.arange(batch_tile)[:, None]).astype(
        jnp.float32) / (2.0 * n_views * hw)
    # Lane-padded classifier head.
    cls_w = jnp.zeros((D, nc_pad), jnp.float32).at[:, :NC].set(params["cls_w"])
    cls_b = jnp.zeros((1, nc_pad), jnp.float32).at[:, :NC].set(params["cls_b"])

    def inv(arr):
        n = arr.ndim
        return pl.BlockSpec(arr.shape, lambda i, n=n: (0,) * n)

    kernel = functools.partial(
        _mma_kernel, depth=depth, heads=heads, dim_head=dim_head,
        bpt=batch_tile, n_views=n_views, hw=hw, tp=tp, d=D,
        t_real=t_real, eps=ln_eps)

    out = pl.pallas_call(
        kernel,
        out_shape=jax.ShapeDtypeStruct((B, 1, nc_pad), jnp.float32),
        grid=(n_tiles,),
        in_specs=[
            pl.BlockSpec((rows_per_tile, kA + kB), lambda i: (i, 0)),
            inv(w_blk), inv(b_blk), inv(pool), inv(extra),
            inv(params["ln1_g"]), inv(params["ln1_b"]),
            inv(wqkv), inv(bqkv), inv(params["wo"]), inv(params["bo"]),
            inv(params["ln2_g"]), inv(params["ln2_b"]),
            inv(params["w1"]), inv(params["b1"]),
            inv(params["w2"]), inv(params["b2"]),
            inv(params["lnf_g"]), inv(params["lnf_b"]),
            inv(cls_w), inv(cls_b),
        ],
        out_specs=pl.BlockSpec((batch_tile, 1, nc_pad), lambda i: (i, 0, 0)),
        scratch_shapes=[pltpu.VMEM((batch_tile * tp, D), jnp.float32),
                        pltpu.VMEM((batch_tile * tp, inner), jnp.float32)],
        compiler_params=pltpu.CompilerParams(
            dimension_semantics=("parallel",)),
    )(col, w_blk, b_blk, pool, extra,
      params["ln1_g"], params["ln1_b"], wqkv, bqkv,
      params["wo"], params["bo"], params["ln2_g"], params["ln2_b"],
      params["w1"], params["b1"], params["w2"], params["b2"],
      params["lnf_g"], params["lnf_b"], cls_w, cls_b)

    return out.reshape(B, nc_pad)[:, :NC]


# ----------------------------------------------------------------------------
if __name__ == "__main__":
    # Small, self-consistent config
    B = 2
    l1, l2 = 4, 2                  # channels of modality A (HSI) / B (LiDAR)
    patch_size = 8
    num_patches = patch_size * patch_size
    num_classes = 5
    encoder_embed_dim = 32
    en_depth, en_heads = 2, 2
    dim_head = 16
    mlp_dim = 64

    key = jax.random.PRNGKey(0)
    k_par, k11, k21, k12, k22, k13, k23 = jax.random.split(key, 7)

    params = init_params(k_par, l1, l2, encoder_embed_dim, num_patches,
                         num_classes, en_depth, en_heads, dim_head, mlp_dim)

    img11 = jax.random.normal(k11, (B, l1, patch_size, patch_size), jnp.float32)
    img21 = jax.random.normal(k21, (B, l2, patch_size, patch_size), jnp.float32)
    img12 = jax.random.normal(k12, (B, l1, patch_size, patch_size), jnp.float32)
    img22 = jax.random.normal(k22, (B, l2, patch_size, patch_size), jnp.float32)
    img13 = jax.random.normal(k13, (B, l1, patch_size, patch_size), jnp.float32)
    img23 = jax.random.normal(k23, (B, l2, patch_size, patch_size), jnp.float32)

    fwd = jax.jit(functools.partial(
        mma_test_forward, D=encoder_embed_dim, heads=en_heads,
        dim_head=dim_head))

    x_cls = fwd(params, img11, img21, img12, img22, img13, img23)
    x_cls = jax.block_until_ready(x_cls)
    assert x_cls.shape == (B, num_classes)
    assert jnp.all(jnp.isfinite(x_cls))
    print("KERNEL_OK")
</pallas_src>

<mosaic_0001>
module attributes {stable_mosaic.version = 11 : i64} {
  func.func @_mma_kernel(%arg0: i32, %arg1: memref<384x54xf32, #tpu.memory_space<vmem>>, %arg2: memref<54x64xf32, #tpu.memory_space<vmem>>, %arg3: memref<1x64xf32, #tpu.memory_space<vmem>>, %arg4: memref<2x384xf32, #tpu.memory_space<vmem>>, %arg5: memref<72x32xf32, #tpu.memory_space<vmem>>, %arg6: memref<2x1x32xf32, #tpu.memory_space<vmem>>, %arg7: memref<2x1x32xf32, #tpu.memory_space<vmem>>, %arg8: memref<2x32x96xf32, #tpu.memory_space<vmem>>, %arg9: memref<2x1x96xf32, #tpu.memory_space<vmem>>, %arg10: memref<2x32x32xf32, #tpu.memory_space<vmem>>, %arg11: memref<2x1x32xf32, #tpu.memory_space<vmem>>, %arg12: memref<2x1x32xf32, #tpu.memory_space<vmem>>, %arg13: memref<2x1x32xf32, #tpu.memory_space<vmem>>, %arg14: memref<2x32x64xf32, #tpu.memory_space<vmem>>, %arg15: memref<2x1x64xf32, #tpu.memory_space<vmem>>, %arg16: memref<2x64x32xf32, #tpu.memory_space<vmem>>, %arg17: memref<2x1x32xf32, #tpu.memory_space<vmem>>, %arg18: memref<1x32xf32, #tpu.memory_space<vmem>>, %arg19: memref<1x32xf32, #tpu.memory_space<vmem>>, %arg20: memref<32x128xf32, #tpu.memory_space<vmem>>, %arg21: memref<1x128xf32, #tpu.memory_space<vmem>>, %arg22: memref<2x1x128xf32, #tpu.memory_space<vmem>>, %arg23: memref<144x32xf32, #tpu.memory_space<vmem>>, %arg24: memref<144x32xf32, #tpu.memory_space<vmem>>) attributes {dimension_semantics = [#tpu.dimension_semantics<parallel>], iteration_bounds = array<i64: 1>, scalar_prefetch = 0 : i64, scratch_operands = 2 : i64, tpu.core_type = #tpu.core_type<tc>, window_params = [{transform_indices = @transform_0, window_bounds = array<i64: 384, 54>}, {pipeline_mode = #tpu.pipeline_mode<synchronous>, transform_indices = @transform_1, window_bounds = array<i64: 54, 64>}, {pipeline_mode = #tpu.pipeline_mode<synchronous>, transform_indices = @transform_2, window_bounds = array<i64: 1, 64>}, {pipeline_mode = #tpu.pipeline_mode<synchronous>, transform_indices = @transform_3, window_bounds = array<i64: 2, 384>}, {pipeline_mode = #tpu.pipeline_mode<synchronous>, transform_indices = @transform_4, window_bounds = array<i64: 72, 32>}, {pipeline_mode = #tpu.pipeline_mode<synchronous>, transform_indices = @transform_5, window_bounds = array<i64: 2, 1, 32>}, {pipeline_mode = #tpu.pipeline_mode<synchronous>, transform_indices = @transform_6, window_bounds = array<i64: 2, 1, 32>}, {pipeline_mode = #tpu.pipeline_mode<synchronous>, transform_indices = @transform_7, window_bounds = array<i64: 2, 32, 96>}, {pipeline_mode = #tpu.pipeline_mode<synchronous>, transform_indices = @transform_8, window_bounds = array<i64: 2, 1, 96>}, {pipeline_mode = #tpu.pipeline_mode<synchronous>, transform_indices = @transform_9, window_bounds = array<i64: 2, 32, 32>}, {pipeline_mode = #tpu.pipeline_mode<synchronous>, transform_indices = @transform_10, window_bounds = array<i64: 2, 1, 32>}, {pipeline_mode = #tpu.pipeline_mode<synchronous>, transform_indices = @transform_11, window_bounds = array<i64: 2, 1, 32>}, {pipeline_mode = #tpu.pipeline_mode<synchronous>, transform_indices = @transform_12, window_bounds = array<i64: 2, 1, 32>}, {pipeline_mode = #tpu.pipeline_mode<synchronous>, transform_indices = @transform_13, window_bounds = array<i64: 2, 32, 64>}, {pipeline_mode = #tpu.pipeline_mode<synchronous>, transform_indices = @transform_14, window_bounds = array<i64: 2, 1, 64>}, {pipeline_mode = #tpu.pipeline_mode<synchronous>, transform_indices = @transform_15, window_bounds = array<i64: 2, 64, 32>}, {pipeline_mode = #tpu.pipeline_mode<synchronous>, transform_indices = @transform_16, window_bounds = array<i64: 2, 1, 32>}, {pipeline_mode = #tpu.pipeline_mode<synchronous>, transform_indices = @transform_17, window_bounds = array<i64: 1, 32>}, {pipeline_mode = #tpu.pipeline_mode<synchronous>, transform_indices = @transform_18, window_bounds = array<i64: 1, 32>}, {pipeline_mode = #tpu.pipeline_mode<synchronous>, transform_indices = @transform_19, window_bounds = array<i64: 32, 128>}, {pipeline_mode = #tpu.pipeline_mode<synchronous>, transform_indices = @transform_20, window_bounds = array<i64: 1, 128>}, {transform_indices = @transform_21, window_bounds = array<i64: 2, 1, 128>}]} {
    %c0 = arith.constant 0 : index
    %c0_0 = arith.constant 0 : index
    %0 = vector.load %arg1[%c0, %c0_0] : memref<384x54xf32, #tpu.memory_space<vmem>>, vector<384x54xf32>
    %c0_1 = arith.constant 0 : index
    %c0_2 = arith.constant 0 : index
    %1 = vector.load %arg2[%c0_1, %c0_2] : memref<54x64xf32, #tpu.memory_space<vmem>>, vector<54x64xf32>
    %cst = arith.constant dense<0.000000e+00> : vector<384x64xf32>
    %2 = tpu.matmul %0, %1, %cst {dimension_numbers = #tpu.dot_dimension_numbers<[1], [0], [0], [1], [0, 0, 1, 1], [], []>} : vector<384x54xf32>, vector<54x64xf32>, vector<384x64xf32> -> vector<384x64xf32>
    %c0_3 = arith.constant 0 : index
    %c0_4 = arith.constant 0 : index
    %3 = vector.load %arg3[%c0_3, %c0_4] : memref<1x64xf32, #tpu.memory_space<vmem>>, vector<1x64xf32>
    %4 = vector.broadcast %3 : vector<1x64xf32> to vector<384x64xf32>
    %5 = arith.addf %2, %4 : vector<384x64xf32>
    %cst_5 = arith.constant 5.000000e-01 : f32
    %6 = vector.broadcast %cst_5 : f32 to vector<384x64xf32>
    %7 = arith.mulf %6, %5 : vector<384x64xf32>
    %cst_6 = arith.constant 4.471500e-02 : f32
    %8 = vector.broadcast %cst_6 : f32 to vector<384x64xf32>
    %9 = arith.mulf %8, %5 : vector<384x64xf32>
    %10 = arith.mulf %9, %5 : vector<384x64xf32>
    %11 = arith.mulf %10, %5 : vector<384x64xf32>
    %12 = arith.addf %5, %11 : vector<384x64xf32>
    %cst_7 = arith.constant 0.797884583 : f32
    %13 = vector.broadcast %cst_7 : f32 to vector<384x64xf32>
    %14 = arith.mulf %13, %12 : vector<384x64xf32>
    %15 = math.tanh %14 : vector<384x64xf32>
    %cst_8 = arith.constant 1.000000e+00 : f32
    %16 = vector.broadcast %cst_8 : f32 to vector<384x64xf32>
    %17 = arith.addf %16, %15 : vector<384x64xf32>
    %18 = arith.mulf %7, %17 : vector<384x64xf32>
    %19 = vector.extract_strided_slice %18 {offsets = [0, 0], sizes = [384, 32], strides = [1, 1]} : vector<384x64xf32> to vector<384x32xf32>
    %20 = vector.extract_strided_slice %18 {offsets = [0, 32], sizes = [384, 32], strides = [1, 1]} : vector<384x64xf32> to vector<384x32xf32>
    %21 = arith.addf %19, %20 : vector<384x32xf32>
    %c0_9 = arith.constant 0 : index
    %c0_10 = arith.constant 0 : index
    %22 = vector.load %arg4[%c0_9, %c0_10] : memref<2x384xf32, #tpu.memory_space<vmem>>, vector<2x384xf32>
    %cst_11 = arith.constant dense<0.000000e+00> : vector<2x32xf32>
    %23 = tpu.matmul %22, %21, %cst_11 {dimension_numbers = #tpu.dot_dimension_numbers<[1], [0], [0], [1], [0, 0, 1, 1], [], []>} : vector<2x384xf32>, vector<384x32xf32>, vector<2x32xf32> -> vector<2x32xf32>
    %24 = vector.extract_strided_slice %21 {offsets = [0, 0], sizes = [64, 32], strides = [1, 1]} : vector<384x32xf32> to vector<64x32xf32>
    %c0_12 = arith.constant 0 : index
    %c0_13 = arith.constant 0 : index
    %25 = vector.load %arg5[%c0_12, %c0_13] : memref<72x32xf32, #tpu.memory_space<vmem>>, vector<64x32xf32>
    %26 = arith.addf %24, %25 : vector<64x32xf32>
    %c0_14 = arith.constant 0 : index
    %c0_15 = arith.constant 0 : index
    %27 = vector.load %arg23[%c0_14, %c0_15] : memref<144x32xf32, #tpu.memory_space<vmem>>, vector<64x32xf32>
    tpu.vector_store %arg23[%c0_14, %c0_15], %26 {strides = array<i32>} : memref<144x32xf32, #tpu.memory_space<vmem>>, vector<64x32xf32>,
    %c64 = arith.constant 64 : index
    %c0_16 = arith.constant 0 : index
    %28 = vector.load %arg5[%c64, %c0_16] : memref<72x32xf32, #tpu.memory_space<vmem>>, vector<8x32xf32>
    %c64_17 = arith.constant 64 : index
    %c0_18 = arith.constant 0 : index
    %29 = vector.load %arg23[%c64_17, %c0_18] : memref<144x32xf32, #tpu.memory_space<vmem>>, vector<8x32xf32>
    tpu.vector_store %arg23[%c64_17, %c0_18], %28 {strides = array<i32>} : memref<144x32xf32, #tpu.memory_space<vmem>>, vector<8x32xf32>,
    %30 = vector.extract_strided_slice %21 {offsets = [192, 0], sizes = [64, 32], strides = [1, 1]} : vector<384x32xf32> to vector<64x32xf32>
    %c0_19 = arith.constant 0 : index
    %c0_20 = arith.constant 0 : index
    %31 = vector.load %arg5[%c0_19, %c0_20] : memref<72x32xf32, #tpu.memory_space<vmem>>, vector<64x32xf32>
    %32 = arith.addf %30, %31 : vector<64x32xf32>
    %c72 = arith.constant 72 : index
    %c0_21 = arith.constant 0 : index
    %33 = vector.load %arg23[%c72, %c0_21] : memref<144x32xf32, #tpu.memory_space<vmem>>, vector<64x32xf32>
    tpu.vector_store %arg23[%c72, %c0_21], %32 {strides = array<i32>} : memref<144x32xf32, #tpu.memory_space<vmem>>, vector<64x32xf32>,
    %c64_22 = arith.constant 64 : index
    %c0_23 = arith.constant 0 : index
    %34 = vector.load %arg5[%c64_22, %c0_23] : memref<72x32xf32, #tpu.memory_space<vmem>>, vector<8x32xf32>
    %c136 = arith.constant 136 : index
    %c0_24 = arith.constant 0 : index
    %35 = vector.load %arg23[%c136, %c0_24] : memref<144x32xf32, #tpu.memory_space<vmem>>, vector<8x32xf32>
    tpu.vector_store %arg23[%c136, %c0_24], %34 {strides = array<i32>} : memref<144x32xf32, #tpu.memory_space<vmem>>, vector<8x32xf32>,
    %c0_25 = arith.constant 0 : index
    %c0_26 = arith.constant 0 : index
    %36 = vector.load %arg23[%c0_25, %c0_26] : memref<144x32xf32, #tpu.memory_space<vmem>>, vector<144x32xf32>
    %37 = tpu.iota {dimensions = array<i32: 1>} : vector<1x72xi32>
    %c65_i32 = arith.constant 65 : i32
    %38 = vector.broadcast %c65_i32 : i32 to vector<1x72xi32>
    %39 = arith.cmpi slt, %37, %38 : vector<1x72xi32>
    %cst_27 = arith.constant 0.000000e+00 : f32
    %cst_28 = arith.constant -1.000000e+30 : f32
    %40 = vector.broadcast %cst_27 : f32 to vector<1x72xf32>
    %41 = vector.broadcast %cst_28 : f32 to vector<1x72xf32>
    %42 = arith.select %39, %40, %41 : vector<1x72xi1>, vector<1x72xf32>
    %c0_29 = arith.constant 0 : index
    %c0_30 = arith.constant 0 : index
    %c0_31 = arith.constant 0 : index
    %43 = vector.load %arg6[%c0_29, %c0_30, %c0_31] : memref<2x1x32xf32, #tpu.memory_space<vmem>>, vector<1x1x32xf32>
    %44 = vector.shape_cast %43 : vector<1x1x32xf32> to vector<1x32xf32>
    %c0_32 = arith.constant 0 : index
    %c0_33 = arith.constant 0 : index
    %c0_34 = arith.constant 0 : index
    %45 = vector.load %arg7[%c0_32, %c0_33, %c0_34] : memref<2x1x32xf32, #tpu.memory_space<vmem>>, vector<1x1x32xf32>
    %46 = vector.shape_cast %45 : vector<1x1x32xf32> to vector<1x32xf32>
    %cst_35 = arith.constant dense<0.000000e+00> : vector<144xf32>
    %47 = vector.multi_reduction <add>, %36, %cst_35 [1] : vector<144x32xf32> to vector<144xf32>
    %48 = vector.shape_cast %47 : vector<144xf32> to vector<144x1xf32>
    %cst_36 = arith.constant 3.200000e+01 : f32
    %49 = vector.broadcast %cst_36 : f32 to vector<144x1xf32>
    %50 = arith.divf %48, %49 : vector<144x1xf32>
    %51 = vector.broadcast %50 : vector<144x1xf32> to vector<144x32xf32>
    %52 = arith.subf %36, %51 : vector<144x32xf32>
    %53 = arith.mulf %52, %52 : vector<144x32xf32>
    %cst_37 = arith.constant dense<0.000000e+00> : vector<144xf32>
    %54 = vector.multi_reduction <add>, %53, %cst_37 [1] : vector<144x32xf32> to vector<144xf32>
    %55 = vector.shape_cast %54 : vector<144xf32> to vector<144x1xf32>
    %cst_38 = arith.constant 3.200000e+01 : f32
    %56 = vector.broadcast %cst_38 : f32 to vector<144x1xf32>
    %57 = arith.divf %55, %56 : vector<144x1xf32>
    %58 = vector.broadcast %50 : vector<144x1xf32> to vector<144x32xf32>
    %59 = arith.subf %36, %58 : vector<144x32xf32>
    %cst_39 = arith.constant 9.99999974E-6 : f32
    %60 = vector.broadcast %cst_39 : f32 to vector<144x1xf32>
    %61 = arith.addf %57, %60 : vector<144x1xf32>
    %62 = math.rsqrt %61 : vector<144x1xf32>
    %63 = vector.broadcast %62 : vector<144x1xf32> to vector<144x32xf32>
    %64 = arith.mulf %59, %63 : vector<144x32xf32>
    %65 = vector.broadcast %44 : vector<1x32xf32> to vector<144x32xf32>
    %66 = arith.mulf %64, %65 : vector<144x32xf32>
    %67 = vector.broadcast %46 : vector<1x32xf32> to vector<144x32xf32>
    %68 = arith.addf %66, %67 : vector<144x32xf32>
    %c0_40 = arith.constant 0 : index
    %c0_41 = arith.constant 0 : index
    %c0_42 = arith.constant 0 : index
    %69 = vector.load %arg8[%c0_40, %c0_41, %c0_42] : memref<2x32x96xf32, #tpu.memory_space<vmem>>, vector<1x32x96xf32>
    %70 = vector.shape_cast %69 : vector<1x32x96xf32> to vector<32x96xf32>
    %cst_43 = arith.constant dense<0.000000e+00> : vector<144x96xf32>
    %71 = tpu.matmul %68, %70, %cst_43 {dimension_numbers = #tpu.dot_dimension_numbers<[1], [0], [0], [1], [0, 0, 1, 1], [], []>} : vector<144x32xf32>, vector<32x96xf32>, vector<144x96xf32> -> vector<144x96xf32>
    %c0_44 = arith.constant 0 : index
    %c0_45 = arith.constant 0 : index
    %c0_46 = arith.constant 0 : index
    %72 = vector.load %arg9[%c0_44, %c0_45, %c0_46] : memref<2x1x96xf32, #tpu.memory_space<vmem>>, vector<1x1x96xf32>
    %73 = vector.shape_cast %72 : vector<1x1x96xf32> to vector<1x96xf32>
    %74 = vector.broadcast %73 : vector<1x96xf32> to vector<144x96xf32>
    %75 = arith.addf %71, %74 : vector<144x96xf32>
    %76 = vector.extract_strided_slice %75 {offsets = [0, 0], sizes = [72, 96], strides = [1, 1]} : vector<144x96xf32> to vector<72x96xf32>
    %77 = vector.extract_strided_slice %76 {offsets = [0, 0], sizes = [72, 16], strides = [1, 1]} : vector<72x96xf32> to vector<72x16xf32>
    %78 = vector.extract_strided_slice %76 {offsets = [0, 32], sizes = [72, 16], strides = [1, 1]} : vector<72x96xf32> to vector<72x16xf32>
    %79 = vector.extract_strided_slice %76 {offsets = [0, 64], sizes = [72, 16], strides = [1, 1]} : vector<72x96xf32> to vector<72x16xf32>
    %80 = tpu.transpose %78, [1, 0] : vector<72x16xf32> -> vector<16x72xf32>
    %cst_47 = arith.constant dense<0.000000e+00> : vector<72x72xf32>
    %81 = tpu.matmul %77, %80, %cst_47 {dimension_numbers = #tpu.dot_dimension_numbers<[1], [0], [0], [1], [0, 0, 1, 1], [], []>} : vector<72x16xf32>, vector<16x72xf32>, vector<72x72xf32> -> vector<72x72xf32>
    %82 = vector.broadcast %42 : vector<1x72xf32> to vector<72x72xf32>
    %83 = arith.addf %81, %82 : vector<72x72xf32>
    %cst_48 = arith.constant dense<0xFF800000> : vector<72xf32>
    %84 = vector.multi_reduction <maximumf>, %83, %cst_48 [1] : vector<72x72xf32> to vector<72xf32>
    %85 = vector.shape_cast %84 : vector<72xf32> to vector<72x1xf32>
    %86 = vector.broadcast %85 : vector<72x1xf32> to vector<72x72xf32>
    %87 = arith.subf %83, %86 : vector<72x72xf32>
    %88 = math.exp %87 : vector<72x72xf32>
    %cst_49 = arith.constant dense<0.000000e+00> : vector<72xf32>
    %89 = vector.multi_reduction <add>, %88, %cst_49 [1] : vector<72x72xf32> to vector<72xf32>
    %90 = vector.shape_cast %89 : vector<72xf32> to vector<72x1xf32>
    %91 = tpu.reciprocal %90 {approx = true} : vector<72x1xf32> -> vector<72x1xf32>
    %cst_50 = arith.constant dense<0.000000e+00> : vector<72x16xf32>
    %92 = tpu.matmul %88, %79, %cst_50 {dimension_numbers = #tpu.dot_dimension_numbers<[1], [0], [0], [1], [0, 0, 1, 1], [], []>} : vector<72x72xf32>, vector<72x16xf32>, vector<72x16xf32> -> vector<72x16xf32>
    %93 = vector.broadcast %91 : vector<72x1xf32> to vector<72x16xf32>
    %94 = arith.mulf %92, %93 : vector<72x16xf32>
    %c0_51 = arith.constant 0 : index
    %c0_52 = arith.constant 0 : index
    %95 = vector.load %arg24[%c0_51, %c0_52] : memref<144x32xf32, #tpu.memory_space<vmem>>, vector<72x16xf32>
    tpu.vector_store %arg24[%c0_51, %c0_52], %94 {strides = array<i32>} : memref<144x32xf32, #tpu.memory_space<vmem>>, vector<72x16xf32>,
    %96 = vector.extract_strided_slice %76 {offsets = [0, 16], sizes = [72, 16], strides = [1, 1]} : vector<72x96xf32> to vector<72x16xf32>
    %97 = vector.extract_strided_slice %76 {offsets = [0, 48], sizes = [72, 16], strides = [1, 1]} : vector<72x96xf32> to vector<72x16xf32>
    %98 = vector.extract_strided_slice %76 {offsets = [0, 80], sizes = [72, 16], strides = [1, 1]} : vector<72x96xf32> to vector<72x16xf32>
    %99 = tpu.transpose %97, [1, 0] : vector<72x16xf32> -> vector<16x72xf32>
    %cst_53 = arith.constant dense<0.000000e+00> : vector<72x72xf32>
    %100 = tpu.matmul %96, %99, %cst_53 {dimension_numbers = #tpu.dot_dimension_numbers<[1], [0], [0], [1], [0, 0, 1, 1], [], []>} : vector<72x16xf32>, vector<16x72xf32>, vector<72x72xf32> -> vector<72x72xf32>
    %101 = vector.broadcast %42 : vector<1x72xf32> to vector<72x72xf32>
    %102 = arith.addf %100, %101 : vector<72x72xf32>
    %cst_54 = arith.constant dense<0xFF800000> : vector<72xf32>
    %103 = vector.multi_reduction <maximumf>, %102, %cst_54 [1] : vector<72x72xf32> to vector<72xf32>
    %104 = vector.shape_cast %103 : vector<72xf32> to vector<72x1xf32>
    %105 = vector.broadcast %104 : vector<72x1xf32> to vector<72x72xf32>
    %106 = arith.subf %102, %105 : vector<72x72xf32>
    %107 = math.exp %106 : vector<72x72xf32>
    %cst_55 = arith.constant dense<0.000000e+00> : vector<72xf32>
    %108 = vector.multi_reduction <add>, %107, %cst_55 [1] : vector<72x72xf32> to vector<72xf32>
    %109 = vector.shape_cast %108 : vector<72xf32> to vector<72x1xf32>
    %110 = tpu.reciprocal %109 {approx = true} : vector<72x1xf32> -> vector<72x1xf32>
    %cst_56 = arith.constant dense<0.000000e+00> : vector<72x16xf32>
    %111 = tpu.matmul %107, %98, %cst_56 {dimension_numbers = #tpu.dot_dimension_numbers<[1], [0], [0], [1], [0, 0, 1, 1], [], []>} : vector<72x72xf32>, vector<72x16xf32>, vector<72x16xf32> -> vector<72x16xf32>
    %112 = vector.broadcast %110 : vector<72x1xf32> to vector<72x16xf32>
    %113 = arith.mulf %111, %112 : vector<72x16xf32>
    %c0_57 = arith.constant 0 : index
    %c16 = arith.constant 16 : index
    %114 = vector.load %arg24[%c0_57, %c16] : memref<144x32xf32, #tpu.memory_space<vmem>>, vector<72x16xf32>
    tpu.vector_store %arg24[%c0_57, %c16], %113 {strides = array<i32>} : memref<144x32xf32, #tpu.memory_space<vmem>>, vector<72x16xf32>,
    %115 = vector.extract_strided_slice %75 {offsets = [72, 0], sizes = [72, 96], strides = [1, 1]} : vector<144x96xf32> to vector<72x96xf32>
    %116 = vector.extract_strided_slice %115 {offsets = [0, 0], sizes = [72, 16], strides = [1, 1]} : vector<72x96xf32> to vector<72x16xf32>
    %117 = vector.extract_strided_slice %115 {offsets = [0, 32], sizes = [72, 16], strides = [1, 1]} : vector<72x96xf32> to vector<72x16xf32>
    %118 = vector.extract_strided_slice %115 {offsets = [0, 64], sizes = [72, 16], strides = [1, 1]} : vector<72x96xf32> to vector<72x16xf32>
    %119 = tpu.transpose %117, [1, 0] : vector<72x16xf32> -> vector<16x72xf32>
    %cst_58 = arith.constant dense<0.000000e+00> : vector<72x72xf32>
    %120 = tpu.matmul %116, %119, %cst_58 {dimension_numbers = #tpu.dot_dimension_numbers<[1], [0], [0], [1], [0, 0, 1, 1], [], []>} : vector<72x16xf32>, vector<16x72xf32>, vector<72x72xf32> -> vector<72x72xf32>
    %121 = vector.broadcast %42 : vector<1x72xf32> to vector<72x72xf32>
    %122 = arith.addf %120, %121 : vector<72x72xf32>
    %cst_59 = arith.constant dense<0xFF800000> : vector<72xf32>
    %123 = vector.multi_reduction <maximumf>, %122, %cst_59 [1] : vector<72x72xf32> to vector<72xf32>
    %124 = vector.shape_cast %123 : vector<72xf32> to vector<72x1xf32>
    %125 = vector.broadcast %124 : vector<72x1xf32> to vector<72x72xf32>
    %126 = arith.subf %122, %125 : vector<72x72xf32>
    %127 = math.exp %126 : vector<72x72xf32>
    %cst_60 = arith.constant dense<0.000000e+00> : vector<72xf32>
    %128 = vector.multi_reduction <add>, %127, %cst_60 [1] : vector<72x72xf32> to vector<72xf32>
    %129 = vector.shape_cast %128 : vector<72xf32> to vector<72x1xf32>
    %130 = tpu.reciprocal %129 {approx = true} : vector<72x1xf32> -> vector<72x1xf32>
    %cst_61 = arith.constant dense<0.000000e+00> : vector<72x16xf32>
    %131 = tpu.matmul %127, %118, %cst_61 {dimension_numbers = #tpu.dot_dimension_numbers<[1], [0], [0], [1], [0, 0, 1, 1], [], []>} : vector<72x72xf32>, vector<72x16xf32>, vector<72x16xf32> -> vector<72x16xf32>
    %132 = vector.broadcast %130 : vector<72x1xf32> to vector<72x16xf32>
    %133 = arith.mulf %131, %132 : vector<72x16xf32>
    %c72_62 = arith.constant 72 : index
    %c0_63 = arith.constant 0 : index
    %134 = vector.load %arg24[%c72_62, %c0_63] : memref<144x32xf32, #tpu.memory_space<vmem>>, vector<72x16xf32>
    tpu.vector_store %arg24[%c72_62, %c0_63], %133 {strides = array<i32>} : memref<144x32xf32, #tpu.memory_space<vmem>>, vector<72x16xf32>,
    %135 = vector.extract_strided_slice %115 {offsets = [0, 16], sizes = [72, 16], strides = [1, 1]} : vector<72x96xf32> to vector<72x16xf32>
    %136 = vector.extract_strided_slice %115 {offsets = [0, 48], sizes = [72, 16], strides = [1, 1]} : vector<72x96xf32> to vector<72x16xf32>
    %137 = vector.extract_strided_slice %115 {offsets = [0, 80], sizes = [72, 16], strides = [1, 1]} : vector<72x96xf32> to vector<72x16xf32>
    %138 = tpu.transpose %136, [1, 0] : vector<72x16xf32> -> vector<16x72xf32>
    %cst_64 = arith.constant dense<0.000000e+00> : vector<72x72xf32>
    %139 = tpu.matmul %135, %138, %cst_64 {dimension_numbers = #tpu.dot_dimension_numbers<[1], [0], [0], [1], [0, 0, 1, 1], [], []>} : vector<72x16xf32>, vector<16x72xf32>, vector<72x72xf32> -> vector<72x72xf32>
    %140 = vector.broadcast %42 : vector<1x72xf32> to vector<72x72xf32>
    %141 = arith.addf %139, %140 : vector<72x72xf32>
    %cst_65 = arith.constant dense<0xFF800000> : vector<72xf32>
    %142 = vector.multi_reduction <maximumf>, %141, %cst_65 [1] : vector<72x72xf32> to vector<72xf32>
    %143 = vector.shape_cast %142 : vector<72xf32> to vector<72x1xf32>
    %144 = vector.broadcast %143 : vector<72x1xf32> to vector<72x72xf32>
    %145 = arith.subf %141, %144 : vector<72x72xf32>
    %146 = math.exp %145 : vector<72x72xf32>
    %cst_66 = arith.constant dense<0.000000e+00> : vector<72xf32>
    %147 = vector.multi_reduction <add>, %146, %cst_66 [1] : vector<72x72xf32> to vector<72xf32>
    %148 = vector.shape_cast %147 : vector<72xf32> to vector<72x1xf32>
    %149 = tpu.reciprocal %148 {approx = true} : vector<72x1xf32> -> vector<72x1xf32>
    %cst_67 = arith.constant dense<0.000000e+00> : vector<72x16xf32>
    %150 = tpu.matmul %146, %137, %cst_67 {dimension_numbers = #tpu.dot_dimension_numbers<[1], [0], [0], [1], [0, 0, 1, 1], [], []>} : vector<72x72xf32>, vector<72x16xf32>, vector<72x16xf32> -> vector<72x16xf32>
    %151 = vector.broadcast %149 : vector<72x1xf32> to vector<72x16xf32>
    %152 = arith.mulf %150, %151 : vector<72x16xf32>
    %c72_68 = arith.constant 72 : index
    %c16_69 = arith.constant 16 : index
    %153 = vector.load %arg24[%c72_68, %c16_69] : memref<144x32xf32, #tpu.memory_space<vmem>>, vector<72x16xf32>
    tpu.vector_store %arg24[%c72_68, %c16_69], %152 {strides = array<i32>} : memref<144x32xf32, #tpu.memory_space<vmem>>, vector<72x16xf32>,
    %c0_70 = arith.constant 0 : index
    %c0_71 = arith.constant 0 : index
    %154 = vector.load %arg24[%c0_70, %c0_71] : memref<144x32xf32, #tpu.memory_space<vmem>>, vector<144x32xf32>
    %c0_72 = arith.constant 0 : index
    %c0_73 = arith.constant 0 : index
    %c0_74 = arith.constant 0 : index
    %155 = vector.load %arg10[%c0_72, %c0_73, %c0_74] : memref<2x32x32xf32, #tpu.memory_space<vmem>>, vector<1x32x32xf32>
    %156 = vector.shape_cast %155 : vector<1x32x32xf32> to vector<32x32xf32>
    %cst_75 = arith.constant dense<0.000000e+00> : vector<144x32xf32>
    %157 = tpu.matmul %154, %156, %cst_75 {dimension_numbers = #tpu.dot_dimension_numbers<[1], [0], [0], [1], [0, 0, 1, 1], [], []>} : vector<144x32xf32>, vector<32x32xf32>, vector<144x32xf32> -> vector<144x32xf32>
    %158 = arith.addf %36, %157 : vector<144x32xf32>
    %c0_76 = arith.constant 0 : index
    %c0_77 = arith.constant 0 : index
    %c0_78 = arith.constant 0 : index
    %159 = vector.load %arg11[%c0_76, %c0_77, %c0_78] : memref<2x1x32xf32, #tpu.memory_space<vmem>>, vector<1x1x32xf32>
    %160 = vector.shape_cast %159 : vector<1x1x32xf32> to vector<1x32xf32>
    %161 = vector.broadcast %160 : vector<1x32xf32> to vector<144x32xf32>
    %162 = arith.addf %158, %161 : vector<144x32xf32>
    %c0_79 = arith.constant 0 : index
    %c0_80 = arith.constant 0 : index
    %c0_81 = arith.constant 0 : index
    %163 = vector.load %arg12[%c0_79, %c0_80, %c0_81] : memref<2x1x32xf32, #tpu.memory_space<vmem>>, vector<1x1x32xf32>
    %164 = vector.shape_cast %163 : vector<1x1x32xf32> to vector<1x32xf32>
    %c0_82 = arith.constant 0 : index
    %c0_83 = arith.constant 0 : index
    %c0_84 = arith.constant 0 : index
    %165 = vector.load %arg13[%c0_82, %c0_83, %c0_84] : memref<2x1x32xf32, #tpu.memory_space<vmem>>, vector<1x1x32xf32>
    %166 = vector.shape_cast %165 : vector<1x1x32xf32> to vector<1x32xf32>
    %cst_85 = arith.constant dense<0.000000e+00> : vector<144xf32>
    %167 = vector.multi_reduction <add>, %162, %cst_85 [1] : vector<144x32xf32> to vector<144xf32>
    %168 = vector.shape_cast %167 : vector<144xf32> to vector<144x1xf32>
    %cst_86 = arith.constant 3.200000e+01 : f32
    %169 = vector.broadcast %cst_86 : f32 to vector<144x1xf32>
    %170 = arith.divf %168, %169 : vector<144x1xf32>
    %171 = vector.broadcast %170 : vector<144x1xf32> to vector<144x32xf32>
    %172 = arith.subf %162, %171 : vector<144x32xf32>
    %173 = arith.mulf %172, %172 : vector<144x32xf32>
    %cst_87 = arith.constant dense<0.000000e+00> : vector<144xf32>
    %174 = vector.multi_reduction <add>, %173, %cst_87 [1] : vector<144x32xf32> to vector<144xf32>
    %175 = vector.shape_cast %174 : vector<144xf32> to vector<144x1xf32>
    %cst_88 = arith.constant 3.200000e+01 : f32
    %176 = vector.broadcast %cst_88 : f32 to vector<144x1xf32>
    %177 = arith.divf %175, %176 : vector<144x1xf32>
    %178 = vector.broadcast %170 : vector<144x1xf32> to vector<144x32xf32>
    %179 = arith.subf %162, %178 : vector<144x32xf32>
    %cst_89 = arith.constant 9.99999974E-6 : f32
    %180 = vector.broadcast %cst_89 : f32 to vector<144x1xf32>
    %181 = arith.addf %177, %180 : vector<144x1xf32>
    %182 = math.rsqrt %181 : vector<144x1xf32>
    %183 = vector.broadcast %182 : vector<144x1xf32> to vector<144x32xf32>
    %184 = arith.mulf %179, %183 : vector<144x32xf32>
    %185 = vector.broadcast %164 : vector<1x32xf32> to vector<144x32xf32>
    %186 = arith.mulf %184, %185 : vector<144x32xf32>
    %187 = vector.broadcast %166 : vector<1x32xf32> to vector<144x32xf32>
    %188 = arith.addf %186, %187 : vector<144x32xf32>
    %c0_90 = arith.constant 0 : index
    %c0_91 = arith.constant 0 : index
    %c0_92 = arith.constant 0 : index
    %189 = vector.load %arg14[%c0_90, %c0_91, %c0_92] : memref<2x32x64xf32, #tpu.memory_space<vmem>>, vector<1x32x64xf32>
    %190 = vector.shape_cast %189 : vector<1x32x64xf32> to vector<32x64xf32>
    %cst_93 = arith.constant dense<0.000000e+00> : vector<144x64xf32>
    %191 = tpu.matmul %188, %190, %cst_93 {dimension_numbers = #tpu.dot_dimension_numbers<[1], [0], [0], [1], [0, 0, 1, 1], [], []>} : vector<144x32xf32>, vector<32x64xf32>, vector<144x64xf32> -> vector<144x64xf32>
    %c0_94 = arith.constant 0 : index
    %c0_95 = arith.constant 0 : index
    %c0_96 = arith.constant 0 : index
    %192 = vector.load %arg15[%c0_94, %c0_95, %c0_96] : memref<2x1x64xf32, #tpu.memory_space<vmem>>, vector<1x1x64xf32>
    %193 = vector.shape_cast %192 : vector<1x1x64xf32> to vector<1x64xf32>
    %194 = vector.broadcast %193 : vector<1x64xf32> to vector<144x64xf32>
    %195 = arith.addf %191, %194 : vector<144x64xf32>
    %cst_97 = arith.constant 5.000000e-01 : f32
    %196 = vector.broadcast %cst_97 : f32 to vector<144x64xf32>
    %197 = arith.mulf %196, %195 : vector<144x64xf32>
    %cst_98 = arith.constant 4.471500e-02 : f32
    %198 = vector.broadcast %cst_98 : f32 to vector<144x64xf32>
    %199 = arith.mulf %198, %195 : vector<144x64xf32>
    %200 = arith.mulf %199, %195 : vector<144x64xf32>
    %201 = arith.mulf %200, %195 : vector<144x64xf32>
    %202 = arith.addf %195, %201 : vector<144x64xf32>
    %cst_99 = arith.constant 0.797884583 : f32
    %203 = vector.broadcast %cst_99 : f32 to vector<144x64xf32>
    %204 = arith.mulf %203, %202 : vector<144x64xf32>
    %205 = math.tanh %204 : vector<144x64xf32>
    %cst_100 = arith.constant 1.000000e+00 : f32
    %206 = vector.broadcast %cst_100 : f32 to vector<144x64xf32>
    %207 = arith.addf %206, %205 : vector<144x64xf32>
    %208 = arith.mulf %197, %207 : vector<144x64xf32>
    %c0_101 = arith.constant 0 : index
    %c0_102 = arith.constant 0 : index
    %c0_103 = arith.constant 0 : index
    %209 = vector.load %arg16[%c0_101, %c0_102, %c0_103] : memref<2x64x32xf32, #tpu.memory_space<vmem>>, vector<1x64x32xf32>
    %210 = vector.shape_cast %209 : vector<1x64x32xf32> to vector<64x32xf32>
    %cst_104 = arith.constant dense<0.000000e+00> : vector<144x32xf32>
    %211 = tpu.matmul %208, %210, %cst_104 {dimension_numbers = #tpu.dot_dimension_numbers<[1], [0], [0], [1], [0, 0, 1, 1], [], []>} : vector<144x64xf32>, vector<64x32xf32>, vector<144x32xf32> -> vector<144x32xf32>
    %212 = arith.addf %162, %211 : vector<144x32xf32>
    %c0_105 = arith.constant 0 : index
    %c0_106 = arith.constant 0 : index
    %c0_107 = arith.constant 0 : index
    %213 = vector.load %arg17[%c0_105, %c0_106, %c0_107] : memref<2x1x32xf32, #tpu.memory_space<vmem>>, vector<1x1x32xf32>
    %214 = vector.shape_cast %213 : vector<1x1x32xf32> to vector<1x32xf32>
    %215 = vector.broadcast %214 : vector<1x32xf32> to vector<144x32xf32>
    %216 = arith.addf %212, %215 : vector<144x32xf32>
    %c1 = arith.constant 1 : index
    %c0_108 = arith.constant 0 : index
    %c0_109 = arith.constant 0 : index
    %217 = vector.load %arg6[%c1, %c0_108, %c0_109] : memref<2x1x32xf32, #tpu.memory_space<vmem>>, vector<1x1x32xf32>
    %218 = vector.shape_cast %217 : vector<1x1x32xf32> to vector<1x32xf32>
    %c1_110 = arith.constant 1 : index
    %c0_111 = arith.constant 0 : index
    %c0_112 = arith.constant 0 : index
    %219 = vector.load %arg7[%c1_110, %c0_111, %c0_112] : memref<2x1x32xf32, #tpu.memory_space<vmem>>, vector<1x1x32xf32>
    %220 = vector.shape_cast %219 : vector<1x1x32xf32> to vector<1x32xf32>
    %cst_113 = arith.constant dense<0.000000e+00> : vector<144xf32>
    %221 = vector.multi_reduction <add>, %216, %cst_113 [1] : vector<144x32xf32> to vector<144xf32>
    %222 = vector.shape_cast %221 : vector<144xf32> to vector<144x1xf32>
    %cst_114 = arith.constant 3.200000e+01 : f32
    %223 = vector.broadcast %cst_114 : f32 to vector<144x1xf32>
    %224 = arith.divf %222, %223 : vector<144x1xf32>
    %225 = vector.broadcast %224 : vector<144x1xf32> to vector<144x32xf32>
    %226 = arith.subf %216, %225 : vector<144x32xf32>
    %227 = arith.mulf %226, %226 : vector<144x32xf32>
    %cst_115 = arith.constant dense<0.000000e+00> : vector<144xf32>
    %228 = vector.multi_reduction <add>, %227, %cst_115 [1] : vector<144x32xf32> to vector<144xf32>
    %229 = vector.shape_cast %228 : vector<144xf32> to vector<144x1xf32>
    %cst_116 = arith.constant 3.200000e+01 : f32
    %230 = vector.broadcast %cst_116 : f32 to vector<144x1xf32>
    %231 = arith.divf %229, %230 : vector<144x1xf32>
    %232 = vector.broadcast %224 : vector<144x1xf32> to vector<144x32xf32>
    %233 = arith.subf %216, %232 : vector<144x32xf32>
    %cst_117 = arith.constant 9.99999974E-6 : f32
    %234 = vector.broadcast %cst_117 : f32 to vector<144x1xf32>
    %235 = arith.addf %231, %234 : vector<144x1xf32>
    %236 = math.rsqrt %235 : vector<144x1xf32>
    %237 = vector.broadcast %236 : vector<144x1xf32> to vector<144x32xf32>
    %238 = arith.mulf %233, %237 : vector<144x32xf32>
    %239 = vector.broadcast %218 : vector<1x32xf32> to vector<144x32xf32>
    %240 = arith.mulf %238, %239 : vector<144x32xf32>
    %241 = vector.broadcast %220 : vector<1x32xf32> to vector<144x32xf32>
    %242 = arith.addf %240, %241 : vector<144x32xf32>
    %c1_118 = arith.constant 1 : index
    %c0_119 = arith.constant 0 : index
    %c0_120 = arith.constant 0 : index
    %243 = vector.load %arg8[%c1_118, %c0_119, %c0_120] : memref<2x32x96xf32, #tpu.memory_space<vmem>>, vector<1x32x96xf32>
    %244 = vector.shape_cast %243 : vector<1x32x96xf32> to vector<32x96xf32>
    %cst_121 = arith.constant dense<0.000000e+00> : vector<144x96xf32>
    %245 = tpu.matmul %242, %244, %cst_121 {dimension_numbers = #tpu.dot_dimension_numbers<[1], [0], [0], [1], [0, 0, 1, 1], [], []>} : vector<144x32xf32>, vector<32x96xf32>, vector<144x96xf32> -> vector<144x96xf32>
    %c1_122 = arith.constant 1 : index
    %c0_123 = arith.constant 0 : index
    %c0_124 = arith.constant 0 : index
    %246 = vector.load %arg9[%c1_122, %c0_123, %c0_124] : memref<2x1x96xf32, #tpu.memory_space<vmem>>, vector<1x1x96xf32>
    %247 = vector.shape_cast %246 : vector<1x1x96xf32> to vector<1x96xf32>
    %248 = vector.broadcast %247 : vector<1x96xf32> to vector<144x96xf32>
    %249 = arith.addf %245, %248 : vector<144x96xf32>
    %250 = vector.extract_strided_slice %249 {offsets = [0, 0], sizes = [72, 96], strides = [1, 1]} : vector<144x96xf32> to vector<72x96xf32>
    %251 = vector.extract_strided_slice %250 {offsets = [0, 0], sizes = [72, 16], strides = [1, 1]} : vector<72x96xf32> to vector<72x16xf32>
    %252 = vector.extract_strided_slice %250 {offsets = [0, 32], sizes = [72, 16], strides = [1, 1]} : vector<72x96xf32> to vector<72x16xf32>
    %253 = vector.extract_strided_slice %250 {offsets = [0, 64], sizes = [72, 16], strides = [1, 1]} : vector<72x96xf32> to vector<72x16xf32>
    %254 = tpu.transpose %252, [1, 0] : vector<72x16xf32> -> vector<16x72xf32>
    %cst_125 = arith.constant dense<0.000000e+00> : vector<72x72xf32>
    %255 = tpu.matmul %251, %254, %cst_125 {dimension_numbers = #tpu.dot_dimension_numbers<[1], [0], [0], [1], [0, 0, 1, 1], [], []>} : vector<72x16xf32>, vector<16x72xf32>, vector<72x72xf32> -> vector<72x72xf32>
    %256 = vector.broadcast %42 : vector<1x72xf32> to vector<72x72xf32>
    %257 = arith.addf %255, %256 : vector<72x72xf32>
    %cst_126 = arith.constant dense<0xFF800000> : vector<72xf32>
    %258 = vector.multi_reduction <maximumf>, %257, %cst_126 [1] : vector<72x72xf32> to vector<72xf32>
    %259 = vector.shape_cast %258 : vector<72xf32> to vector<72x1xf32>
    %260 = vector.broadcast %259 : vector<72x1xf32> to vector<72x72xf32>
    %261 = arith.subf %257, %260 : vector<72x72xf32>
    %262 = math.exp %261 : vector<72x72xf32>
    %cst_127 = arith.constant dense<0.000000e+00> : vector<72xf32>
    %263 = vector.multi_reduction <add>, %262, %cst_127 [1] : vector<72x72xf32> to vector<72xf32>
    %264 = vector.shape_cast %263 : vector<72xf32> to vector<72x1xf32>
    %265 = tpu.reciprocal %264 {approx = true} : vector<72x1xf32> -> vector<72x1xf32>
    %cst_128 = arith.constant dense<0.000000e+00> : vector<72x16xf32>
    %266 = tpu.matmul %262, %253, %cst_128 {dimension_numbers = #tpu.dot_dimension_numbers<[1], [0], [0], [1], [0, 0, 1, 1], [], []>} : vector<72x72xf32>, vector<72x16xf32>, vector<72x16xf32> -> vector<72x16xf32>
    %267 = vector.broadcast %265 : vector<72x1xf32> to vector<72x16xf32>
    %268 = arith.mulf %266, %267 : vector<72x16xf32>
    %c0_129 = arith.constant 0 : index
    %c0_130 = arith.constant 0 : index
    %269 = vector.load %arg24[%c0_129, %c0_130] : memref<144x32xf32, #tpu.memory_space<vmem>>, vector<72x16xf32>
    tpu.vector_store %arg24[%c0_129, %c0_130], %268 {strides = array<i32>} : memref<144x32xf32, #tpu.memory_space<vmem>>, vector<72x16xf32>,
    %270 = vector.extract_strided_slice %250 {offsets = [0, 16], sizes = [72, 16], strides = [1, 1]} : vector<72x96xf32> to vector<72x16xf32>
    %271 = vector.extract_strided_slice %250 {offsets = [0, 48], sizes = [72, 16], strides = [1, 1]} : vector<72x96xf32> to vector<72x16xf32>
    %272 = vector.extract_strided_slice %250 {offsets = [0, 80], sizes = [72, 16], strides = [1, 1]} : vector<72x96xf32> to vector<72x16xf32>
    %273 = tpu.transpose %271, [1, 0] : vector<72x16xf32> -> vector<16x72xf32>
    %cst_131 = arith.constant dense<0.000000e+00> : vector<72x72xf32>
    %274 = tpu.matmul %270, %273, %cst_131 {dimension_numbers = #tpu.dot_dimension_numbers<[1], [0], [0], [1], [0, 0, 1, 1], [], []>} : vector<72x16xf32>, vector<16x72xf32>, vector<72x72xf32> -> vector<72x72xf32>
    %275 = vector.broadcast %42 : vector<1x72xf32> to vector<72x72xf32>
    %276 = arith.addf %274, %275 : vector<72x72xf32>
    %cst_132 = arith.constant dense<0xFF800000> : vector<72xf32>
    %277 = vector.multi_reduction <maximumf>, %276, %cst_132 [1] : vector<72x72xf32> to vector<72xf32>
    %278 = vector.shape_cast %277 : vector<72xf32> to vector<72x1xf32>
    %279 = vector.broadcast %278 : vector<72x1xf32> to vector<72x72xf32>
    %280 = arith.subf %276, %279 : vector<72x72xf32>
    %281 = math.exp %280 : vector<72x72xf32>
    %cst_133 = arith.constant dense<0.000000e+00> : vector<72xf32>
    %282 = vector.multi_reduction <add>, %281, %cst_133 [1] : vector<72x72xf32> to vector<72xf32>
    %283 = vector.shape_cast %282 : vector<72xf32> to vector<72x1xf32>
    %284 = tpu.reciprocal %283 {approx = true} : vector<72x1xf32> -> vector<72x1xf32>
    %cst_134 = arith.constant dense<0.000000e+00> : vector<72x16xf32>
    %285 = tpu.matmul %281, %272, %cst_134 {dimension_numbers = #tpu.dot_dimension_numbers<[1], [0], [0], [1], [0, 0, 1, 1], [], []>} : vector<72x72xf32>, vector<72x16xf32>, vector<72x16xf32> -> vector<72x16xf32>
    %286 = vector.broadcast %284 : vector<72x1xf32> to vector<72x16xf32>
    %287 = arith.mulf %285, %286 : vector<72x16xf32>
    %c0_135 = arith.constant 0 : index
    %c16_136 = arith.constant 16 : index
    %288 = vector.load %arg24[%c0_135, %c16_136] : memref<144x32xf32, #tpu.memory_space<vmem>>, vector<72x16xf32>
    tpu.vector_store %arg24[%c0_135, %c16_136], %287 {strides = array<i32>} : memref<144x32xf32, #tpu.memory_space<vmem>>, vector<72x16xf32>,
    %289 = vector.extract_strided_slice %249 {offsets = [72, 0], sizes = [72, 96], strides = [1, 1]} : vector<144x96xf32> to vector<72x96xf32>
    %290 = vector.extract_strided_slice %289 {offsets = [0, 0], sizes = [72, 16], strides = [1, 1]} : vector<72x96xf32> to vector<72x16xf32>
    %291 = vector.extract_strided_slice %289 {offsets = [0, 32], sizes = [72, 16], strides = [1, 1]} : vector<72x96xf32> to vector<72x16xf32>
    %292 = vector.extract_strided_slice %289 {offsets = [0, 64], sizes = [72, 16], strides = [1, 1]} : vector<72x96xf32> to vector<72x16xf32>
    %293 = tpu.transpose %291, [1, 0] : vector<72x16xf32> -> vector<16x72xf32>
    %cst_137 = arith.constant dense<0.000000e+00> : vector<72x72xf32>
    %294 = tpu.matmul %290, %293, %cst_137 {dimension_numbers = #tpu.dot_dimension_numbers<[1], [0], [0], [1], [0, 0, 1, 1], [], []>} : vector<72x16xf32>, vector<16x72xf32>, vector<72x72xf32> -> vector<72x72xf32>
    %295 = vector.broadcast %42 : vector<1x72xf32> to vector<72x72xf32>
    %296 = arith.addf %294, %295 : vector<72x72xf32>
    %cst_138 = arith.constant dense<0xFF800000> : vector<72xf32>
    %297 = vector.multi_reduction <maximumf>, %296, %cst_138 [1] : vector<72x72xf32> to vector<72xf32>
    %298 = vector.shape_cast %297 : vector<72xf32> to vector<72x1xf32>
    %299 = vector.broadcast %298 : vector<72x1xf32> to vector<72x72xf32>
    %300 = arith.subf %296, %299 : vector<72x72xf32>
    %301 = math.exp %300 : vector<72x72xf32>
    %cst_139 = arith.constant dense<0.000000e+00> : vector<72xf32>
    %302 = vector.multi_reduction <add>, %301, %cst_139 [1] : vector<72x72xf32> to vector<72xf32>
    %303 = vector.shape_cast %302 : vector<72xf32> to vector<72x1xf32>
    %304 = tpu.reciprocal %303 {approx = true} : vector<72x1xf32> -> vector<72x1xf32>
    %cst_140 = arith.constant dense<0.000000e+00> : vector<72x16xf32>
    %305 = tpu.matmul %301, %292, %cst_140 {dimension_numbers = #tpu.dot_dimension_numbers<[1], [0], [0], [1], [0, 0, 1, 1], [], []>} : vector<72x72xf32>, vector<72x16xf32>, vector<72x16xf32> -> vector<72x16xf32>
    %306 = vector.broadcast %304 : vector<72x1xf32> to vector<72x16xf32>
    %307 = arith.mulf %305, %306 : vector<72x16xf32>
    %c72_141 = arith.constant 72 : index
    %c0_142 = arith.constant 0 : index
    %308 = vector.load %arg24[%c72_141, %c0_142] : memref<144x32xf32, #tpu.memory_space<vmem>>, vector<72x16xf32>
    tpu.vector_store %arg24[%c72_141, %c0_142], %307 {strides = array<i32>} : memref<144x32xf32, #tpu.memory_space<vmem>>, vector<72x16xf32>,
    %309 = vector.extract_strided_slice %289 {offsets = [0, 16], sizes = [72, 16], strides = [1, 1]} : vector<72x96xf32> to vector<72x16xf32>
    %310 = vector.extract_strided_slice %289 {offsets = [0, 48], sizes = [72, 16], strides = [1, 1]} : vector<72x96xf32> to vector<72x16xf32>
    %311 = vector.extract_strided_slice %289 {offsets = [0, 80], sizes = [72, 16], strides = [1, 1]} : vector<72x96xf32> to vector<72x16xf32>
    %312 = tpu.transpose %310, [1, 0] : vector<72x16xf32> -> vector<16x72xf32>
    %cst_143 = arith.constant dense<0.000000e+00> : vector<72x72xf32>
    %313 = tpu.matmul %309, %312, %cst_143 {dimension_numbers = #tpu.dot_dimension_numbers<[1], [0], [0], [1], [0, 0, 1, 1], [], []>} : vector<72x16xf32>, vector<16x72xf32>, vector<72x72xf32> -> vector<72x72xf32>
    %314 = vector.broadcast %42 : vector<1x72xf32> to vector<72x72xf32>
    %315 = arith.addf %313, %314 : vector<72x72xf32>
    %cst_144 = arith.constant dense<0xFF800000> : vector<72xf32>
    %316 = vector.multi_reduction <maximumf>, %315, %cst_144 [1] : vector<72x72xf32> to vector<72xf32>
    %317 = vector.shape_cast %316 : vector<72xf32> to vector<72x1xf32>
    %318 = vector.broadcast %317 : vector<72x1xf32> to vector<72x72xf32>
    %319 = arith.subf %315, %318 : vector<72x72xf32>
    %320 = math.exp %319 : vector<72x72xf32>
    %cst_145 = arith.constant dense<0.000000e+00> : vector<72xf32>
    %321 = vector.multi_reduction <add>, %320, %cst_145 [1] : vector<72x72xf32> to vector<72xf32>
    %322 = vector.shape_cast %321 : vector<72xf32> to vector<72x1xf32>
    %323 = tpu.reciprocal %322 {approx = true} : vector<72x1xf32> -> vector<72x1xf32>
    %cst_146 = arith.constant dense<0.000000e+00> : vector<72x16xf32>
    %324 = tpu.matmul %320, %311, %cst_146 {dimension_numbers = #tpu.dot_dimension_numbers<[1], [0], [0], [1], [0, 0, 1, 1], [], []>} : vector<72x72xf32>, vector<72x16xf32>, vector<72x16xf32> -> vector<72x16xf32>
    %325 = vector.broadcast %323 : vector<72x1xf32> to vector<72x16xf32>
    %326 = arith.mulf %324, %325 : vector<72x16xf32>
    %c72_147 = arith.constant 72 : index
    %c16_148 = arith.constant 16 : index
    %327 = vector.load %arg24[%c72_147, %c16_148] : memref<144x32xf32, #tpu.memory_space<vmem>>, vector<72x16xf32>
    tpu.vector_store %arg24[%c72_147, %c16_148], %326 {strides = array<i32>} : memref<144x32xf32, #tpu.memory_space<vmem>>, vector<72x16xf32>,
    %c0_149 = arith.constant 0 : index
    %c0_150 = arith.constant 0 : index
    %328 = vector.load %arg24[%c0_149, %c0_150] : memref<144x32xf32, #tpu.memory_space<vmem>>, vector<144x32xf32>
    %c1_151 = arith.constant 1 : index
    %c0_152 = arith.constant 0 : index
    %c0_153 = arith.constant 0 : index
    %329 = vector.load %arg10[%c1_151, %c0_152, %c0_153] : memref<2x32x32xf32, #tpu.memory_space<vmem>>, vector<1x32x32xf32>
    %330 = vector.shape_cast %329 : vector<1x32x32xf32> to vector<32x32xf32>
    %cst_154 = arith.constant dense<0.000000e+00> : vector<144x32xf32>
    %331 = tpu.matmul %328, %330, %cst_154 {dimension_numbers = #tpu.dot_dimension_numbers<[1], [0], [0], [1], [0, 0, 1, 1], [], []>} : vector<144x32xf32>, vector<32x32xf32>, vector<144x32xf32> -> vector<144x32xf32>
    %332 = arith.addf %216, %331 : vector<144x32xf32>
    %c1_155 = arith.constant 1 : index
    %c0_156 = arith.constant 0 : index
    %c0_157 = arith.constant 0 : index
    %333 = vector.load %arg11[%c1_155, %c0_156, %c0_157] : memref<2x1x32xf32, #tpu.memory_space<vmem>>, vector<1x1x32xf32>
    %334 = vector.shape_cast %333 : vector<1x1x32xf32> to vector<1x32xf32>
    %335 = vector.broadcast %334 : vector<1x32xf32> to vector<144x32xf32>
    %336 = arith.addf %332, %335 : vector<144x32xf32>
    %c1_158 = arith.constant 1 : index
    %c0_159 = arith.constant 0 : index
    %c0_160 = arith.constant 0 : index
    %337 = vector.load %arg12[%c1_158, %c0_159, %c0_160] : memref<2x1x32xf32, #tpu.memory_space<vmem>>, vector<1x1x32xf32>
    %338 = vector.shape_cast %337 : vector<1x1x32xf32> to vector<1x32xf32>
    %c1_161 = arith.constant 1 : index
    %c0_162 = arith.constant 0 : index
    %c0_163 = arith.constant 0 : index
    %339 = vector.load %arg13[%c1_161, %c0_162, %c0_163] : memref<2x1x32xf32, #tpu.memory_space<vmem>>, vector<1x1x32xf32>
    %340 = vector.shape_cast %339 : vector<1x1x32xf32> to vector<1x32xf32>
    %cst_164 = arith.constant dense<0.000000e+00> : vector<144xf32>
    %341 = vector.multi_reduction <add>, %336, %cst_164 [1] : vector<144x32xf32> to vector<144xf32>
    %342 = vector.shape_cast %341 : vector<144xf32> to vector<144x1xf32>
    %cst_165 = arith.constant 3.200000e+01 : f32
    %343 = vector.broadcast %cst_165 : f32 to vector<144x1xf32>
    %344 = arith.divf %342, %343 : vector<144x1xf32>
    %345 = vector.broadcast %344 : vector<144x1xf32> to vector<144x32xf32>
    %346 = arith.subf %336, %345 : vector<144x32xf32>
    %347 = arith.mulf %346, %346 : vector<144x32xf32>
    %cst_166 = arith.constant dense<0.000000e+00> : vector<144xf32>
    %348 = vector.multi_reduction <add>, %347, %cst_166 [1] : vector<144x32xf32> to vector<144xf32>
    %349 = vector.shape_cast %348 : vector<144xf32> to vector<144x1xf32>
    %cst_167 = arith.constant 3.200000e+01 : f32
    %350 = vector.broadcast %cst_167 : f32 to vector<144x1xf32>
    %351 = arith.divf %349, %350 : vector<144x1xf32>
    %352 = vector.broadcast %344 : vector<144x1xf32> to vector<144x32xf32>
    %353 = arith.subf %336, %352 : vector<144x32xf32>
    %cst_168 = arith.constant 9.99999974E-6 : f32
    %354 = vector.broadcast %cst_168 : f32 to vector<144x1xf32>
    %355 = arith.addf %351, %354 : vector<144x1xf32>
    %356 = math.rsqrt %355 : vector<144x1xf32>
    %357 = vector.broadcast %356 : vector<144x1xf32> to vector<144x32xf32>
    %358 = arith.mulf %353, %357 : vector<144x32xf32>
    %359 = vector.broadcast %338 : vector<1x32xf32> to vector<144x32xf32>
    %360 = arith.mulf %358, %359 : vector<144x32xf32>
    %361 = vector.broadcast %340 : vector<1x32xf32> to vector<144x32xf32>
    %362 = arith.addf %360, %361 : vector<144x32xf32>
    %c1_169 = arith.constant 1 : index
    %c0_170 = arith.constant 0 : index
    %c0_171 = arith.constant 0 : index
    %363 = vector.load %arg14[%c1_169, %c0_170, %c0_171] : memref<2x32x64xf32, #tpu.memory_space<vmem>>, vector<1x32x64xf32>
    %364 = vector.shape_cast %363 : vector<1x32x64xf32> to vector<32x64xf32>
    %cst_172 = arith.constant dense<0.000000e+00> : vector<144x64xf32>
    %365 = tpu.matmul %362, %364, %cst_172 {dimension_numbers = #tpu.dot_dimension_numbers<[1], [0], [0], [1], [0, 0, 1, 1], [], []>} : vector<144x32xf32>, vector<32x64xf32>, vector<144x64xf32> -> vector<144x64xf32>
    %c1_173 = arith.constant 1 : index
    %c0_174 = arith.constant 0 : index
    %c0_175 = arith.constant 0 : index
    %366 = vector.load %arg15[%c1_173, %c0_174, %c0_175] : memref<2x1x64xf32, #tpu.memory_space<vmem>>, vector<1x1x64xf32>
    %367 = vector.shape_cast %366 : vector<1x1x64xf32> to vector<1x64xf32>
    %368 = vector.broadcast %367 : vector<1x64xf32> to vector<144x64xf32>
    %369 = arith.addf %365, %368 : vector<144x64xf32>
    %cst_176 = arith.constant 5.000000e-01 : f32
    %370 = vector.broadcast %cst_176 : f32 to vector<144x64xf32>
    %371 = arith.mulf %370, %369 : vector<144x64xf32>
    %cst_177 = arith.constant 4.471500e-02 : f32
    %372 = vector.broadcast %cst_177 : f32 to vector<144x64xf32>
    %373 = arith.mulf %372, %369 : vector<144x64xf32>
    %374 = arith.mulf %373, %369 : vector<144x64xf32>
    %375 = arith.mulf %374, %369 : vector<144x64xf32>
    %376 = arith.addf %369, %375 : vector<144x64xf32>
    %cst_178 = arith.constant 0.797884583 : f32
    %377 = vector.broadcast %cst_178 : f32 to vector<144x64xf32>
    %378 = arith.mulf %377, %376 : vector<144x64xf32>
    %379 = math.tanh %378 : vector<144x64xf32>
    %cst_179 = arith.constant 1.000000e+00 : f32
    %380 = vector.broadcast %cst_179 : f32 to vector<144x64xf32>
    %381 = arith.addf %380, %379 : vector<144x64xf32>
    %382 = arith.mulf %371, %381 : vector<144x64xf32>
    %c1_180 = arith.constant 1 : index
    %c0_181 = arith.constant 0 : index
    %c0_182 = arith.constant 0 : index
    %383 = vector.load %arg16[%c1_180, %c0_181, %c0_182] : memref<2x64x32xf32, #tpu.memory_space<vmem>>, vector<1x64x32xf32>
    %384 = vector.shape_cast %383 : vector<1x64x32xf32> to vector<64x32xf32>
    %cst_183 = arith.constant dense<0.000000e+00> : vector<144x32xf32>
    %385 = tpu.matmul %382, %384, %cst_183 {dimension_numbers = #tpu.dot_dimension_numbers<[1], [0], [0], [1], [0, 0, 1, 1], [], []>} : vector<144x64xf32>, vector<64x32xf32>, vector<144x32xf32> -> vector<144x32xf32>
    %386 = arith.addf %336, %385 : vector<144x32xf32>
    %c1_184 = arith.constant 1 : index
    %c0_185 = arith.constant 0 : index
    %c0_186 = arith.constant 0 : index
    %387 = vector.load %arg17[%c1_184, %c0_185, %c0_186] : memref<2x1x32xf32, #tpu.memory_space<vmem>>, vector<1x1x32xf32>
    %388 = vector.shape_cast %387 : vector<1x1x32xf32> to vector<1x32xf32>
    %389 = vector.broadcast %388 : vector<1x32xf32> to vector<144x32xf32>
    %390 = arith.addf %386, %389 : vector<144x32xf32>
    %c0_187 = arith.constant 0 : index
    %c0_188 = arith.constant 0 : index
    %391 = vector.load %arg18[%c0_187, %c0_188] : memref<1x32xf32, #tpu.memory_space<vmem>>, vector<1x32xf32>
    %c0_189 = arith.constant 0 : index
    %c0_190 = arith.constant 0 : index
    %392 = vector.load %arg19[%c0_189, %c0_190] : memref<1x32xf32, #tpu.memory_space<vmem>>, vector<1x32xf32>
    %cst_191 = arith.constant dense<0.000000e+00> : vector<144xf32>
    %393 = vector.multi_reduction <add>, %390, %cst_191 [1] : vector<144x32xf32> to vector<144xf32>
    %394 = vector.shape_cast %393 : vector<144xf32> to vector<144x1xf32>
    %cst_192 = arith.constant 3.200000e+01 : f32
    %395 = vector.broadcast %cst_192 : f32 to vector<144x1xf32>
    %396 = arith.divf %394, %395 : vector<144x1xf32>
    %397 = vector.broadcast %396 : vector<144x1xf32> to vector<144x32xf32>
    %398 = arith.subf %390, %397 : vector<144x32xf32>
    %399 = arith.mulf %398, %398 : vector<144x32xf32>
    %cst_193 = arith.constant dense<0.000000e+00> : vector<144xf32>
    %400 = vector.multi_reduction <add>, %399, %cst_193 [1] : vector<144x32xf32> to vector<144xf32>
    %401 = vector.shape_cast %400 : vector<144xf32> to vector<144x1xf32>
    %cst_194 = arith.constant 3.200000e+01 : f32
    %402 = vector.broadcast %cst_194 : f32 to vector<144x1xf32>
    %403 = arith.divf %401, %402 : vector<144x1xf32>
    %404 = vector.broadcast %396 : vector<144x1xf32> to vector<144x32xf32>
    %405 = arith.subf %390, %404 : vector<144x32xf32>
    %cst_195 = arith.constant 9.99999974E-6 : f32
    %406 = vector.broadcast %cst_195 : f32 to vector<144x1xf32>
    %407 = arith.addf %403, %406 : vector<144x1xf32>
    %408 = math.rsqrt %407 : vector<144x1xf32>
    %409 = vector.broadcast %408 : vector<144x1xf32> to vector<144x32xf32>
    %410 = arith.mulf %405, %409 : vector<144x32xf32>
    %411 = vector.broadcast %391 : vector<1x32xf32> to vector<144x32xf32>
    %412 = arith.mulf %410, %411 : vector<144x32xf32>
    %413 = vector.broadcast %392 : vector<1x32xf32> to vector<144x32xf32>
    %414 = arith.addf %412, %413 : vector<144x32xf32>
    %415 = vector.extract_strided_slice %414 {offsets = [64, 0], sizes = [1, 32], strides = [1, 1]} : vector<144x32xf32> to vector<1x32xf32>
    %416 = vector.extract_strided_slice %414 {offsets = [136, 0], sizes = [1, 32], strides = [1, 1]} : vector<144x32xf32> to vector<1x32xf32>
    %417 = tpu.concatenate %415, %416 in 0 : vector<1x32xf32>, vector<1x32xf32> -> vector<2x32xf32>
    %418 = arith.addf %417, %23 : vector<2x32xf32>
    %c0_196 = arith.constant 0 : index
    %c0_197 = arith.constant 0 : index
    %419 = vector.load %arg20[%c0_196, %c0_197] : memref<32x128xf32, #tpu.memory_space<vmem>>, vector<32x128xf32>
    %cst_198 = arith.constant dense<0.000000e+00> : vector<2x128xf32>
    %420 = tpu.matmul %418, %419, %cst_198 {dimension_numbers = #tpu.dot_dimension_numbers<[1], [0], [0], [1], [0, 0, 1, 1], [], []>} : vector<2x32xf32>, vector<32x128xf32>, vector<2x128xf32> -> vector<2x128xf32>
    %c0_199 = arith.constant 0 : index
    %c0_200 = arith.constant 0 : index
    %421 = vector.load %arg21[%c0_199, %c0_200] : memref<1x128xf32, #tpu.memory_space<vmem>>, vector<1x128xf32>
    %422 = vector.broadcast %421 : vector<1x128xf32> to vector<2x128xf32>
    %423 = arith.addf %420, %422 : vector<2x128xf32>
    %424 = vector.shape_cast %423 : vector<2x128xf32> to vector<2x1x128xf32>
    %c0_201 = arith.constant 0 : index
    %c0_202 = arith.constant 0 : index
    %c0_203 = arith.constant 0 : index
    %425 = vector.load %arg22[%c0_201, %c0_202, %c0_203] : memref<2x1x128xf32, #tpu.memory_space<vmem>>, vector<2x1x128xf32>
    tpu.vector_store %arg22[%c0_201, %c0_202, %c0_203], %424 {strides = array<i32>} : memref<2x1x128xf32, #tpu.memory_space<vmem>>, vector<2x1x128xf32>,
    return
  }
  func.func @transform_0(%arg0: i32) -> (i32, i32) {
    %c0_i32 = arith.constant 0 : i32
    %c0_i32_0 = arith.constant 0 : i32
    return %arg0, %c0_i32 : i32, i32
  }
  func.func @transform_1(%arg0: i32) -> (i32, i32) {
    %c0_i32 = arith.constant 0 : i32
    %c0_i32_0 = arith.constant 0 : i32
    %c0_i32_1 = arith.constant 0 : i32
    return %c0_i32, %c0_i32_0 : i32, i32
  }
  func.func @transform_2(%arg0: i32) -> (i32, i32) {
    %c0_i32 = arith.constant 0 : i32
    %c0_i32_0 = arith.constant 0 : i32
    %c0_i32_1 = arith.constant 0 : i32
    return %c0_i32, %c0_i32_0 : i32, i32
  }
  func.func @transform_3(%arg0: i32) -> (i32, i32) {
    %c0_i32 = arith.constant 0 : i32
    %c0_i32_0 = arith.constant 0 : i32
    %c0_i32_1 = arith.constant 0 : i32
    return %c0_i32, %c0_i32_0 : i32, i32
  }
  func.func @transform_4(%arg0: i32) -> (i32, i32) {
    %c0_i32 = arith.constant 0 : i32
    %c0_i32_0 = arith.constant 0 : i32
    %c0_i32_1 = arith.constant 0 : i32
    return %c0_i32, %c0_i32_0 : i32, i32
  }
  func.func @transform_5(%arg0: i32) -> (i32, i32, i32) {
    %c0_i32 = arith.constant 0 : i32
    %c0_i32_0 = arith.constant 0 : i32
    %c0_i32_1 = arith.constant 0 : i32
    %c0_i32_2 = arith.constant 0 : i32
    return %c0_i32, %c0_i32_0, %c0_i32_1 : i32, i32, i32
  }
  func.func @transform_6(%arg0: i32) -> (i32, i32, i32) {
    %c0_i32 = arith.constant 0 : i32
    %c0_i32_0 = arith.constant 0 : i32
    %c0_i32_1 = arith.constant 0 : i32
    %c0_i32_2 = arith.constant 0 : i32
    return %c0_i32, %c0_i32_0, %c0_i32_1 : i32, i32, i32
  }
  func.func @transform_7(%arg0: i32) -> (i32, i32, i32) {
    %c0_i32 = arith.constant 0 : i32
    %c0_i32_0 = arith.constant 0 : i32
    %c0_i32_1 = arith.constant 0 : i32
    %c0_i32_2 = arith.constant 0 : i32
    return %c0_i32, %c0_i32_0, %c0_i32_1 : i32, i32, i32
  }
  func.func @transform_8(%arg0: i32) -> (i32, i32, i32) {
    %c0_i32 = arith.constant 0 : i32
    %c0_i32_0 = arith.constant 0 : i32
    %c0_i32_1 = arith.constant 0 : i32
    %c0_i32_2 = arith.constant 0 : i32
    return %c0_i32, %c0_i32_0, %c0_i32_1 : i32, i32, i32
  }
  func.func @transform_9(%arg0: i32) -> (i32, i32, i32) {
    %c0_i32 = arith.constant 0 : i32
    %c0_i32_0 = arith.constant 0 : i32
    %c0_i32_1 = arith.constant 0 : i32
    %c0_i32_2 = arith.constant 0 : i32
    return %c0_i32, %c0_i32_0, %c0_i32_1 : i32, i32, i32
  }
  func.func @transform_10(%arg0: i32) -> (i32, i32, i32) {
    %c0_i32 = arith.constant 0 : i32
    %c0_i32_0 = arith.constant 0 : i32
    %c0_i32_1 = arith.constant 0 : i32
    %c0_i32_2 = arith.constant 0 : i32
    return %c0_i32, %c0_i32_0, %c0_i32_1 : i32, i32, i32
  }
  func.func @transform_11(%arg0: i32) -> (i32, i32, i32) {
    %c0_i32 = arith.constant 0 : i32
    %c0_i32_0 = arith.constant 0 : i32
    %c0_i32_1 = arith.constant 0 : i32
    %c0_i32_2 = arith.constant 0 : i32
    return %c0_i32, %c0_i32_0, %c0_i32_1 : i32, i32, i32
  }
  func.func @transform_12(%arg0: i32) -> (i32, i32, i32) {
    %c0_i32 = arith.constant 0 : i32
    %c0_i32_0 = arith.constant 0 : i32
    %c0_i32_1 = arith.constant 0 : i32
    %c0_i32_2 = arith.constant 0 : i32
    return %c0_i32, %c0_i32_0, %c0_i32_1 : i32, i32, i32
  }
  func.func @transform_13(%arg0: i32) -> (i32, i32, i32) {
    %c0_i32 = arith.constant 0 : i32
    %c0_i32_0 = arith.constant 0 : i32
    %c0_i32_1 = arith.constant 0 : i32
    %c0_i32_2 = arith.constant 0 : i32
    return %c0_i32, %c0_i32_0, %c0_i32_1 : i32, i32, i32
  }
  func.func @transform_14(%arg0: i32) -> (i32, i32, i32) {
    %c0_i32 = arith.constant 0 : i32
    %c0_i32_0 = arith.constant 0 : i32
    %c0_i32_1 = arith.constant 0 : i32
    %c0_i32_2 = arith.constant 0 : i32
    return %c0_i32, %c0_i32_0, %c0_i32_1 : i32, i32, i32
  }
  func.func @transform_15(%arg0: i32) -> (i32, i32, i32) {
    %c0_i32 = arith.constant 0 : i32
    %c0_i32_0 = arith.constant 0 : i32
    %c0_i32_1 = arith.constant 0 : i32
    %c0_i32_2 = arith.constant 0 : i32
    return %c0_i32, %c0_i32_0, %c0_i32_1 : i32, i32, i32
  }
  func.func @transform_16(%arg0: i32) -> (i32, i32, i32) {
    %c0_i32 = arith.constant 0 : i32
    %c0_i32_0 = arith.constant 0 : i32
    %c0_i32_1 = arith.constant 0 : i32
    %c0_i32_2 = arith.constant 0 : i32
    return %c0_i32, %c0_i32_0, %c0_i32_1 : i32, i32, i32
  }
  func.func @transform_17(%arg0: i32) -> (i32, i32) {
    %c0_i32 = arith.constant 0 : i32
    %c0_i32_0 = arith.constant 0 : i32
    %c0_i32_1 = arith.constant 0 : i32
    return %c0_i32, %c0_i32_0 : i32, i32
  }
  func.func @transform_18(%arg0: i32) -> (i32, i32) {
    %c0_i32 = arith.constant 0 : i32
    %c0_i32_0 = arith.constant 0 : i32
    %c0_i32_1 = arith.constant 0 : i32
    return %c0_i32, %c0_i32_0 : i32, i32
  }
  func.func @transform_19(%arg0: i32) -> (i32, i32) {
    %c0_i32 = arith.constant 0 : i32
    %c0_i32_0 = arith.constant 0 : i32
    %c0_i32_1 = arith.constant 0 : i32
    return %c0_i32, %c0_i32_0 : i32, i32
  }
  func.func @transform_20(%arg0: i32) -> (i32, i32) {
    %c0_i32 = arith.constant 0 : i32
    %c0_i32_0 = arith.constant 0 : i32
    %c0_i32_1 = arith.constant 0 : i32
    return %c0_i32, %c0_i32_0 : i32, i32
  }
  func.func @transform_21(%arg0: i32) -> (i32, i32, i32) {
    %c0_i32 = arith.constant 0 : i32
    %c0_i32_0 = arith.constant 0 : i32
    %c0_i32_1 = arith.constant 0 : i32
    return %arg0, %c0_i32, %c0_i32_0 : i32, i32, i32
  }
}

</mosaic_0001>

<llo_original>
// kernel: mma_test_forward.1
$region0: #{mma_test_forward.1}
  #allocation0 [shape = 'u32[]', space=smem, size = 0x4, offset = 0x4, fixed_abs, tag = 'smem constant byte address 0x4 - core index']
  #allocation1 [shape = 'u32[144,128]{1,0:T(1,128)}', space=vmem, size = 0x12000, scoped, tag = 'internal scratch']
  #allocation2 [shape = 'f32[144,32]{1,0:T(8,128)}', space=vmem, size = 0x12000, scoped, tag = 'scratch operand']
  #allocation3 [shape = 'f32[144,32]{1,0:T(8,128)}', space=vmem, size = 0x12000, scoped, tag = 'scratch operand']
  %s0 = inlined_call_operand.vmem [shape: f32[384,54], index: 0, kind: input, shape index: {}]
  %s1 = inlined_call_operand.vmem [shape: f32[54,64], index: 1, kind: input, shape index: {}]
  %s2 = inlined_call_operand.vmem [shape: f32[1,64], index: 2, kind: input, shape index: {}]
  %s3 = inlined_call_operand.vmem [shape: f32[2,384], index: 3, kind: input, shape index: {}]
  %s4 = inlined_call_operand.vmem [shape: f32[72,32], index: 4, kind: input, shape index: {}]
  %s5 = inlined_call_operand.vmem [shape: f32[2,1,32], index: 5, kind: input, shape index: {}]
  %s6 = inlined_call_operand.vmem [shape: f32[2,1,32], index: 6, kind: input, shape index: {}]
  %s7 = inlined_call_operand.vmem [shape: f32[2,32,96], index: 7, kind: input, shape index: {}]
  %s8 = inlined_call_operand.vmem [shape: f32[2,1,96], index: 8, kind: input, shape index: {}]
  %s9 = inlined_call_operand.vmem [shape: f32[2,32,32], index: 9, kind: input, shape index: {}]
  %s10 = inlined_call_operand.vmem [shape: f32[2,1,32], index: 10, kind: input, shape index: {}]
  %s11 = inlined_call_operand.vmem [shape: f32[2,1,32], index: 11, kind: input, shape index: {}]
  %s12 = inlined_call_operand.vmem [shape: f32[2,1,32], index: 12, kind: input, shape index: {}]
  %s13 = inlined_call_operand.vmem [shape: f32[2,32,64], index: 13, kind: input, shape index: {}]
  %s14 = inlined_call_operand.vmem [shape: f32[2,1,64], index: 14, kind: input, shape index: {}]
  %s15 = inlined_call_operand.vmem [shape: f32[2,64,32], index: 15, kind: input, shape index: {}]
  %s16 = inlined_call_operand.vmem [shape: f32[2,1,32], index: 16, kind: input, shape index: {}]
  %s17 = inlined_call_operand.vmem [shape: f32[1,32], index: 17, kind: input, shape index: {}]
  %s18 = inlined_call_operand.vmem [shape: f32[1,32], index: 18, kind: input, shape index: {}]
  %s19 = inlined_call_operand.vmem [shape: f32[32,128], index: 19, kind: input, shape index: {}]
  %s20 = inlined_call_operand.vmem [shape: f32[1,128], index: 20, kind: input, shape index: {}]
  %s21 = inlined_call_operand.hbm [shape: f32[2,1,128], index: 21, kind: output, shape index: {}]
  %s22 = sld [smem:[#allocation0]]
  $region94: #{mma_test_forward.1} parent=0
    _
  %s24 = ssub.s32 1, %s22
  %s25 = scalar_select 0, %s24, %s22
  $region1: #{mma_test_forward.1} parent=0
    #allocation4 [shape = 'u8[1024]{0}', space=vmem, size = 0x400, scoped, tag = 'output window, operand 0, single buffered']
    #allocation5 [shape = 's32[1]{0}', space=sflag, size = 0x4, scoped, tag = 'scoped memory for mma_test_forward.1']
    %26 = vsyncpa [#allocation5], 0
    // Predicated region
    $region2: #{mma_test_forward.1} parent=1 // pred_check
      _
    $region3: #{mma_test_forward.1} parent=1 // pred_check_branch
      %28 = sbr.rel (0) target = $region5
    $region4: #{mma_test_forward.1} parent=1 // pred_region
      _
    $region5: #{mma_test_forward.1} parent=1 // pred_fallthru
      _
    // Predicated region
    $region6: #{mma_test_forward.1} parent=1 // pred_check
      _
    $region7: #{mma_test_forward.1} parent=1 // pred_check_branch
      %30 = sbr.rel (0) target = $region9
    $region8: #{mma_test_forward.1} parent=1 // pred_region
      _
    $region9: #{mma_test_forward.1} parent=1 // pred_fallthru
      _
    // Predicated region
    $region10: #{mma_test_forward.1} parent=1 // pred_check
      _
    $region11: #{mma_test_forward.1} parent=1 // pred_check_branch
      %32 = sbr.rel (0) target = $region13
    $region12: #{mma_test_forward.1} parent=1 // pred_region
      _
    $region13: #{mma_test_forward.1} parent=1 // pred_fallthru
      _
    // Predicated region
    $region14: #{mma_test_forward.1} parent=1 // pred_check
      _
    $region15: #{mma_test_forward.1} parent=1 // pred_check_branch
      %34 = sbr.rel (0) target = $region17
    $region16: #{mma_test_forward.1} parent=1 // pred_region
      _
    $region17: #{mma_test_forward.1} parent=1 // pred_fallthru
      _
    // Predicated region
    $region18: #{mma_test_forward.1} parent=1 // pred_check
      _
    $region19: #{mma_test_forward.1} parent=1 // pred_check_branch
      %36 = sbr.rel (0) target = $region21
    $region20: #{mma_test_forward.1} parent=1 // pred_region
      _
    $region21: #{mma_test_forward.1} parent=1 // pred_fallthru
      _
    // Predicated region
    $region22: #{mma_test_forward.1} parent=1 // pred_check
      _
    $region23: #{mma_test_forward.1} parent=1 // pred_check_branch
      %38 = sbr.rel (0) target = $region25
    $region24: #{mma_test_forward.1} parent=1 // pred_region
      _
    $region25: #{mma_test_forward.1} parent=1 // pred_fallthru
      _
    // Predicated region
    $region26: #{mma_test_forward.1} parent=1 // pred_check
      _
    $region27: #{mma_test_forward.1} parent=1 // pred_check_branch
      %40 = sbr.rel (0) target = $region29
    $region28: #{mma_test_forward.1} parent=1 // pred_region
      _
    $region29: #{mma_test_forward.1} parent=1 // pred_fallthru
      _
    // Predicated region
    $region30: #{mma_test_forward.1} parent=1 // pred_check
      _
    $region31: #{mma_test_forward.1} parent=1 // pred_check_branch
      %42 = sbr.rel (0) target = $region33
    $region32: #{mma_test_forward.1} parent=1 // pred_region
      _
    $region33: #{mma_test_forward.1} parent=1 // pred_fallthru
      _
    // Predicated region
    $region34: #{mma_test_forward.1} parent=1 // pred_check
      _
    $region35: #{mma_test_forward.1} parent=1 // pred_check_branch
      %44 = sbr.rel (0) target = $region37
    $region36: #{mma_test_forward.1} parent=1 // pred_region
      _
    $region37: #{mma_test_forward.1} parent=1 // pred_fallthru
      _
    // Predicated region
    $region38: #{mma_test_forward.1} parent=1 // pred_check
      _
    $region39: #{mma_test_forward.1} parent=1 // pred_check_branch
      %46 = sbr.rel (0) target = $region41
    $region40: #{mma_test_forward.1} parent=1 // pred_region
      _
    $region41: #{mma_test_forward.1} parent=1 // pred_fallthru
      _
    // Predicated region
    $region42: #{mma_test_forward.1} parent=1 // pred_check
      _
    $region43: #{mma_test_forward.1} parent=1 // pred_check_branch
      %48 = sbr.rel (0) target = $region45
    $region44: #{mma_test_forward.1} parent=1 // pred_region
      _
    $region45: #{mma_test_forward.1} parent=1 // pred_fallthru
      _
    // Predicated region
    $region46: #{mma_test_forward.1} parent=1 // pred_check
      _
    $region47: #{mma_test_forward.1} parent=1 // pred_check_branch
      %50 = sbr.rel (0) target = $region49
    $region48: #{mma_test_forward.1} parent=1 // pred_region
      _
    $region49: #{mma_test_forward.1} parent=1 // pred_fallthru
      _
    // Predicated region
    $region50: #{mma_test_forward.1} parent=1 // pred_check
      _
    $region51: #{mma_test_forward.1} parent=1 // pred_check_branch
      %52 = sbr.rel (0) target = $region53
    $region52: #{mma_test_forward.1} parent=1 // pred_region
      _
    $region53: #{mma_test_forward.1} parent=1 // pred_fallthru
      _
    // Predicated region
    $region54: #{mma_test_forward.1} parent=1 // pred_check
      _
    $region55: #{mma_test_forward.1} parent=1 // pred_check_branch
      %54 = sbr.rel (0) target = $region57
    $region56: #{mma_test_forward.1} parent=1 // pred_region
      _
    $region57: #{mma_test_forward.1} parent=1 // pred_fallthru
      _
    // Predicated region
    $region58: #{mma_test_forward.1} parent=1 // pred_check
      _
    $region59: #{mma_test_forward.1} parent=1 // pred_check_branch
      %56 = sbr.rel (0) target = $region61
    $region60: #{mma_test_forward.1} parent=1 // pred_region
      _
    $region61: #{mma_test_forward.1} parent=1 // pred_fallthru
      _
    // Predicated region
    $region62: #{mma_test_forward.1} parent=1 // pred_check
      _
    $region63: #{mma_test_forward.1} parent=1 // pred_check_branch
      %58 = sbr.rel (0) target = $region65
    $region64: #{mma_test_forward.1} parent=1 // pred_region
      _
    $region65: #{mma_test_forward.1} parent=1 // pred_fallthru
      _
    // Predicated region
    $region66: #{mma_test_forward.1} parent=1 // pred_check
      _
    $region67: #{mma_test_forward.1} parent=1 // pred_check_branch
      %60 = sbr.rel (0) target = $region69
    $region68: #{mma_test_forward.1} parent=1 // pred_region
      _
    $region69: #{mma_test_forward.1} parent=1 // pred_fallthru
      _
    // Predicated region
    $region70: #{mma_test_forward.1} parent=1 // pred_check
      _
    $region71: #{mma_test_forward.1} parent=1 // pred_check_branch
      %62 = sbr.rel (0) target = $region73
    $region72: #{mma_test_forward.1} parent=1 // pred_region
      _
    $region73: #{mma_test_forward.1} parent=1 // pred_fallthru
      _
    // Predicated region
    $region74: #{mma_test_forward.1} parent=1 // pred_check
      _
    $region75: #{mma_test_forward.1} parent=1 // pred_check_branch
      %64 = sbr.rel (0) target = $region77
    $region76: #{mma_test_forward.1} parent=1 // pred_region
      _
    $region77: #{mma_test_forward.1} parent=1 // pred_fallthru
      _
    // Predicated region
    $region78: #{mma_test_forward.1} parent=1 // pred_check
      _
    $region79: #{mma_test_forward.1} parent=1 // pred_check_branch
      %66 = sbr.rel (0) target = $region81
    $region80: #{mma_test_forward.1} parent=1 // pred_region
      _
    $region81: #{mma_test_forward.1} parent=1 // pred_fallthru
      _
    // Predicated region
    $region82: #{mma_test_forward.1} parent=1 // pred_check
      _
    $region83: #{mma_test_forward.1} parent=1 // pred_check_branch
      %68 = sbr.rel (0) target = $region85
    $region84: #{mma_test_forward.1} parent=1 // pred_region
      _
    $region85: #{mma_test_forward.1} parent=1 // pred_fallthru
      _
    %v69 = vld [vmem:[%s0] sm:$0xff]
    %v70 = vld [vmem:[%s0 + $0x8] sm:$0xff]
    %v71 = vld [vmem:[%s0 + $0x10] sm:$0xff]
    %v72 = vld [vmem:[%s0 + $0x18] sm:$0xff]
    %v73 = vld [vmem:[%s0 + $0x20] sm:$0xff]
    %v74 = vld [vmem:[%s0 + $0x28] sm:$0xff]
    %v75 = vld [vmem:[%s0 + $0x30] sm:$0xff]
    %v76 = vld [vmem:[%s0 + $0x38] sm:$0xff]
    %v77 = vld [vmem:[%s0 + $0x40] sm:$0xff]
    %v78 = vld [vmem:[%s0 + $0x48] sm:$0xff]
    %v79 = vld [vmem:[%s0 + $0x50] sm:$0xff]
    %v80 = vld [vmem:[%s0 + $0x58] sm:$0xff]
    %v81 = vld [vmem:[%s0 + $0x60] sm:$0xff]
    %v82 = vld [vmem:[%s0 + $0x68] sm:$0xff]
    %v83 = vld [vmem:[%s0 + $0x70] sm:$0xff]
    %v84 = vld [vmem:[%s0 + $0x78] sm:$0xff]
    %v85 = vld [vmem:[%s0 + $0x80] sm:$0xff]
    %v86 = vld [vmem:[%s0 + $0x88] sm:$0xff]
    %v87 = vld [vmem:[%s0 + $0x90] sm:$0xff]
    %v88 = vld [vmem:[%s0 + $0x98] sm:$0xff]
    %v89 = vld [vmem:[%s0 + $0xa0] sm:$0xff]
    %v90 = vld [vmem:[%s0 + $0xa8] sm:$0xff]
    %v91 = vld [vmem:[%s0 + $0xb0] sm:$0xff]
    %v92 = vld [vmem:[%s0 + $0xb8] sm:$0xff]
    %v93 = vld [vmem:[%s0 + $0xc0] sm:$0xff]
    %v94 = vld [vmem:[%s0 + $0xc8] sm:$0xff]
    %v95 = vld [vmem:[%s0 + $0xd0] sm:$0xff]
    %v96 = vld [vmem:[%s0 + $0xd8] sm:$0xff]
    %v97 = vld [vmem:[%s0 + $0xe0] sm:$0xff]
    %v98 = vld [vmem:[%s0 + $0xe8] sm:$0xff]
    %v99 = vld [vmem:[%s0 + $0xf0] sm:$0xff]
    %v100 = vld [vmem:[%s0 + $0xf8] sm:$0xff]
    %v101 = vld [vmem:[%s0 + $0x100] sm:$0xff]
    %v102 = vld [vmem:[%s0 + $0x108] sm:$0xff]
    %v103 = vld [vmem:[%s0 + $0x110] sm:$0xff]
    %v104 = vld [vmem:[%s0 + $0x118] sm:$0xff]
    %v105 = vld [vmem:[%s0 + $0x120] sm:$0xff]
    %v106 = vld [vmem:[%s0 + $0x128] sm:$0xff]
    %v107 = vld [vmem:[%s0 + $0x130] sm:$0xff]
    %v108 = vld [vmem:[%s0 + $0x138] sm:$0xff]
    %v109 = vld [vmem:[%s0 + $0x140] sm:$0xff]
    %v110 = vld [vmem:[%s0 + $0x148] sm:$0xff]
    %v111 = vld [vmem:[%s0 + $0x150] sm:$0xff]
    %v112 = vld [vmem:[%s0 + $0x158] sm:$0xff]
    %v113 = vld [vmem:[%s0 + $0x160] sm:$0xff]
    %v114 = vld [vmem:[%s0 + $0x168] sm:$0xff]
    %v115 = vld [vmem:[%s0 + $0x170] sm:$0xff]
    %v116 = vld [vmem:[%s0 + $0x178] sm:$0xff]
    %v117 = vld [vmem:[%s1] sm:$0xff]
    %v118 = vld [vmem:[%s1 + $0x8] sm:$0xff]
    %v119 = vld [vmem:[%s1 + $0x10] sm:$0xff]
    %v120 = vld [vmem:[%s1 + $0x18] sm:$0xff]
    %v121 = vld [vmem:[%s1 + $0x20] sm:$0xff]
    %v122 = vld [vmem:[%s1 + $0x28] sm:$0xff]
    %v123 = vld [vmem:[%s1 + $0x30] sm:$0x3f]
    %v124 = vld [vmem:[%s2] sm:$0x1]
    %v126 = vlaneseq
    %v127 = vshrl.u32 %v126, 7
    %v128 = vsub.s32 0, %v127
    %v129 = vrot.slane %v124, %v128
    %vm131 = vcmask 441344
    %v133 = vsel %vm131, %v69, 0
    %v136 = vsel %vm131, %v70, 0
    %v139 = vsel %vm131, %v71, 0
    %v142 = vsel %vm131, %v72, 0
    %v145 = vsel %vm131, %v73, 0
    %v148 = vsel %vm131, %v74, 0
    %v151 = vsel %vm131, %v75, 0
    %v154 = vsel %vm131, %v76, 0
    %v157 = vsel %vm131, %v77, 0
    %v160 = vsel %vm131, %v78, 0
    %v163 = vsel %vm131, %v79, 0
    %v166 = vsel %vm131, %v80, 0
    %v169 = vsel %vm131, %v81, 0
    %v172 = vsel %vm131, %v82, 0
    %v175 = vsel %vm131, %v83, 0
    %v178 = vsel %vm131, %v84, 0
    %v181 = vsel %vm131, %v85, 0
    %v184 = vsel %vm131, %v86, 0
    %v187 = vsel %vm131, %v87, 0
    %v190 = vsel %vm131, %v88, 0
    %v193 = vsel %vm131, %v89, 0
    %v196 = vsel %vm131, %v90, 0
    %v199 = vsel %vm131, %v91, 0
    %v202 = vsel %vm131, %v92, 0
    %v205 = vsel %vm131, %v93, 0
    %v208 = vsel %vm131, %v94, 0
    %v211 = vsel %vm131, %v95, 0
    %v214 = vsel %vm131, %v96, 0
    %v217 = vsel %vm131, %v97, 0
    %v220 = vsel %vm131, %v98, 0
    %v223 = vsel %vm131, %v99, 0
    %v226 = vsel %vm131, %v100, 0
    %v229 = vsel %vm131, %v101, 0
    %v232 = vsel %vm131, %v102, 0
    %v235 = vsel %vm131, %v103, 0
    %v238 = vsel %vm131, %v104, 0
    %v241 = vsel %vm131, %v105, 0
    %v244 = vsel %vm131, %v106, 0
    %v247 = vsel %vm131, %v107, 0
    %v250 = vsel %vm131, %v108, 0
    %v253 = vsel %vm131, %v109, 0
    %v256 = vsel %vm131, %v110, 0
    %v259 = vsel %vm131, %v111, 0
    %v262 = vsel %vm131, %v112, 0
    %v265 = vsel %vm131, %v113, 0
    %v268 = vsel %vm131, %v114, 0
    %v271 = vsel %vm131, %v115, 0
    %v274 = vsel %vm131, %v116, 0
    %vm276 = vcmask 1045504
    %v278 = vsel %vm276, %v123, 0
    %280 = vmatprep.subr.mxu0 0.0
    %281 = vmatpush1.msra.mxu0 %v117
    %282 = vmatprep.subr.mxu0 0.0
    %283 = vmatpush1.msra.mxu0 %v118
    %284 = vmatprep.subr.mxu0 0.0
    %285 = vmatpush1.msra.mxu0 %v119
    %286 = vmatprep.subr.mxu0 0.0
    %287 = vmatpush1.msra.mxu0 %v120
    %288 = vmatprep.subr.mxu0 0.0
    %289 = vmatpush1.msra.mxu0 %v121
    %290 = vmatprep.subr.mxu0 0.0
    %291 = vmatpush1.msra.mxu0 %v122
    %292 = vmatprep.subr.mxu0 0.0
    %293 = vmatpush1.msra.mxu0 %v278
    %294 = vmatprep.subr.mxu0 0.0
    %295 = vmatpush1.msra.mxu0 0.0
    %296 = vmatprep.subr.mxu0 0.0
    %297 = vmatpush1.msra.mxu0 0.0
    %298 = vmatprep.subr.mxu0 0.0
    %299 = vmatpush1.msra.mxu0 0.0
    %300 = vmatprep.subr.mxu0 0.0
    %301 = vmatpush1.msra.mxu0 0.0
    %302 = vmatprep.subr.mxu0 0.0
    %303 = vmatpush1.msra.mxu0 0.0
    %304 = vmatprep.subr.mxu0 0.0
    %305 = vmatpush1.msra.mxu0 0.0
    %306 = vmatprep.subr.mxu0 0.0
    %307 = vmatpush1.msra.mxu0 0.0
    %308 = vmatprep.subr.mxu0 0.0
    %309 = vmatpush1.msra.mxu0 0.0
    %310 = vmatprep.subr.mxu0 0.0
    %311 = vmatpush1.msra.mxu0 0.0
    %312 = vmatprep.subr.mxu0 0.0
    %313 = vmatpush1.msra.mxu0 0.0
    %314 = vmatprep.subr.mxu0 0.0
    %315 = vmatpush1.msra.mxu0 0.0
    %316 = vmatprep.subr.mxu0 0.0
    %317 = vmatpush1.msra.mxu0 0.0
    %318 = vmatprep.subr.mxu0 0.0
    %319 = vmatpush1.msra.mxu0 0.0
    %320 = vmatprep.subr.mxu0 0.0
    %321 = vmatpush1.msra.mxu0 0.0
    %322 = vmatprep.subr.mxu0 0.0
    %323 = vmatpush1.msra.mxu0 0.0
    %324 = vmatprep.subr.mxu0 0.0
    %325 = vmatpush1.msra.mxu0 0.0
    %326 = vmatprep.subr.mxu0 0.0
    %327 = vmatpush1.msra.mxu0 0.0
    %328 = vmatprep.subr.mxu0 0.0
    %329 = vmatpush1.msra.mxu0 0.0
    %330 = vmatprep.subr.mxu0 0.0
    %331 = vmatpush1.msra.mxu0 0.0
    %332 = vmatprep.subr.mxu0 0.0
    %333 = vmatpush1.msra.mxu0 0.0
    %334 = vmatprep.subr.mxu0 0.0
    %335 = vmatpush1.msra.mxu0 0.0
    %336 = vmatprep.subr.mxu0 0.0
    %337 = vmatpush1.msra.mxu0 0.0
    %338 = vmatprep.subr.mxu0 0.0
    %339 = vmatpush1.msra.mxu0 0.0
    %340 = vmatprep.subr.mxu0 0.0
    %341 = vmatpush1.msra.mxu0 0.0
    %342 = vmatprep.subr.mxu0 0.0
    %343 = vmatpush1.msra.mxu0 0.0
    %344 = vmatprep.mubr.f32.mxu0 0.0
    %345 = vmatmul.mubr.f32.gmra.mrb[0].mxu0 %v133
    %v346 = vpop.f32.mrb[0].mxu0
    %v347 = vadd.f32 %v129, %v346
    %v348 = vpop.f32.mrb[0].mxu0
    %349 = vmatprep.mubr.f32.mxu0 0.0
    %350 = vmatmul.mubr.f32.gmra.mrb[0].mxu0 %v136
    %v351 = vpop.f32.mrb[0].mxu0
    %v352 = vadd.f32 %v129, %v351
    %v353 = vpop.f32.mrb[0].mxu0
    %354 = vmatprep.mubr.f32.mxu0 0.0
    %355 = vmatmul.mubr.f32.gmra.mrb[0].mxu0 %v139
    %v356 = vpop.f32.mrb[0].mxu0
    %v357 = vadd.f32 %v129, %v356
    %v358 = vpop.f32.mrb[0].mxu0
    %359 = vmatprep.mubr.f32.mxu0 0.0
    %360 = vmatmul.mubr.f32.gmra.mrb[0].mxu0 %v142
    %v361 = vpop.f32.mrb[0].mxu0
    %v362 = vadd.f32 %v129, %v361
    %v363 = vpop.f32.mrb[0].mxu0
    %364 = vmatprep.mubr.f32.mxu0 0.0
    %365 = vmatmul.mubr.f32.gmra.mrb[0].mxu0 %v145
    %v366 = vpop.f32.mrb[0].mxu0
    %v367 = vadd.f32 %v129, %v366
    %v368 = vpop.f32.mrb[0].mxu0
    %369 = vmatprep.mubr.f32.mxu0 0.0
    %370 = vmatmul.mubr.f32.gmra.mrb[0].mxu0 %v148
    %v371 = vpop.f32.mrb[0].mxu0
    %v372 = vadd.f32 %v129, %v371
    %v373 = vpop.f32.mrb[0].mxu0
    %374 = vmatprep.mubr.f32.mxu0 0.0
    %375 = vmatmul.mubr.f32.gmra.mrb[0].mxu0 %v151
    %v376 = vpop.f32.mrb[0].mxu0
    %v377 = vadd.f32 %v129, %v376
    %v378 = vpop.f32.mrb[0].mxu0
    %379 = vmatprep.mubr.f32.mxu0 0.0
    %380 = vmatmul.mubr.f32.gmra.mrb[0].mxu0 %v154
    %v381 = vpop.f32.mrb[0].mxu0
    %v382 = vadd.f32 %v129, %v381
    %v383 = vpop.f32.mrb[0].mxu0
    %384 = vmatprep.mubr.f32.mxu0 0.0
    %385 = vmatmul.mubr.f32.gmra.mrb[0].mxu0 %v157
    %v386 = vpop.f32.mrb[0].mxu0
    %v387 = vadd.f32 %v129, %v386
    %v388 = vpop.f32.mrb[0].mxu0
    %389 = vmatprep.mubr.f32.mxu0 0.0
    %390 = vmatmul.mubr.f32.gmra.mrb[0].mxu0 %v160
    %v391 = vpop.f32.mrb[0].mxu0
    %v392 = vadd.f32 %v129, %v391
    %v393 = vpop.f32.mrb[0].mxu0
    %394 = vmatprep.mubr.f32.mxu0 0.0
    %395 = vmatmul.mubr.f32.gmra.mrb[0].mxu0 %v163
    %v396 = vpop.f32.mrb[0].mxu0
    %v397 = vadd.f32 %v129, %v396
    %v398 = vpop.f32.mrb[0].mxu0
    %399 = vmatprep.mubr.f32.mxu0 0.0
    %400 = vmatmul.mubr.f32.gmra.mrb[0].mxu0 %v166
    %v401 = vpop.f32.mrb[0].mxu0
    %v402 = vadd.f32 %v129, %v401
    %v403 = vpop.f32.mrb[0].mxu0
    %404 = vmatprep.mubr.f32.mxu0 0.0
    %405 = vmatmul.mubr.f32.gmra.mrb[0].mxu0 %v169
    %v406 = vpop.f32.mrb[0].mxu0
    %v407 = vadd.f32 %v129, %v406
    %v408 = vpop.f32.mrb[0].mxu0
    %409 = vmatprep.mubr.f32.mxu0 0.0
    %410 = vmatmul.mubr.f32.gmra.mrb[0].mxu0 %v172
    %v411 = vpop.f32.mrb[0].mxu0
    %v412 = vadd.f32 %v129, %v411
    %v413 = vpop.f32.mrb[0].mxu0
    %414 = vmatprep.mubr.f32.mxu0 0.0
    %415 = vmatmul.mubr.f32.gmra.mrb[0].mxu0 %v175
    %v416 = vpop.f32.mrb[0].mxu0
    %v417 = vadd.f32 %v129, %v416
    %v418 = vpop.f32.mrb[0].mxu0
    %419 = vmatprep.mubr.f32.mxu0 0.0
    %420 = vmatmul.mubr.f32.gmra.mrb[0].mxu0 %v178
    %v421 = vpop.f32.mrb[0].mxu0
    %v422 = vadd.f32 %v129, %v421
    %v423 = vpop.f32.mrb[0].mxu0
    %424 = vmatprep.mubr.f32.mxu0 0.0
    %425 = vmatmul.mubr.f32.gmra.mrb[0].mxu0 %v181
    %v426 = vpop.f32.mrb[0].mxu0
    %v427 = vadd.f32 %v129, %v426
    %v428 = vpop.f32.mrb[0].mxu0
    %429 = vmatprep.mubr.f32.mxu0 0.0
    %430 = vmatmul.mubr.f32.gmra.mrb[0].mxu0 %v184
    %v431 = vpop.f32.mrb[0].mxu0
    %v432 = vadd.f32 %v129, %v431
    %v433 = vpop.f32.mrb[0].mxu0
    %434 = vmatprep.mubr.f32.mxu0 0.0
    %435 = vmatmul.mubr.f32.gmra.mrb[0].mxu0 %v187
    %v436 = vpop.f32.mrb[0].mxu0
    %v437 = vadd.f32 %v129, %v436
    %v438 = vpop.f32.mrb[0].mxu0
    %439 = vmatprep.mubr.f32.mxu0 0.0
    %440 = vmatmul.mubr.f32.gmra.mrb[0].mxu0 %v190
    %v441 = vpop.f32.mrb[0].mxu0
    %v442 = vadd.f32 %v129, %v441
    %v443 = vpop.f32.mrb[0].mxu0
    %444 = vmatprep.mubr.f32.mxu0 0.0
    %445 = vmatmul.mubr.f32.gmra.mrb[0].mxu0 %v193
    %v446 = vpop.f32.mrb[0].mxu0
    %v447 = vadd.f32 %v129, %v446
    %v448 = vpop.f32.mrb[0].mxu0
    %449 = vmatprep.mubr.f32.mxu0 0.0
    %450 = vmatmul.mubr.f32.gmra.mrb[0].mxu0 %v196
    %v451 = vpop.f32.mrb[0].mxu0
    %v452 = vadd.f32 %v129, %v451
    %v453 = vpop.f32.mrb[0].mxu0
    %454 = vmatprep.mubr.f32.mxu0 0.0
    %455 = vmatmul.mubr.f32.gmra.mrb[0].mxu0 %v199
    %v456 = vpop.f32.mrb[0].mxu0
    %v457 = vadd.f32 %v129, %v456
    %v458 = vpop.f32.mrb[0].mxu0
    %459 = vmatprep.mubr.f32.mxu0 0.0
    %460 = vmatmul.mubr.f32.gmra.mrb[0].mxu0 %v202
    %v461 = vpop.f32.mrb[0].mxu0
    %v462 = vadd.f32 %v129, %v461
    %v463 = vpop.f32.mrb[0].mxu0
    %464 = vmatprep.mubr.f32.mxu0 0.0
    %465 = vmatmul.mubr.f32.gmra.mrb[0].mxu0 %v205
    %v466 = vpop.f32.mrb[0].mxu0
    %v467 = vadd.f32 %v129, %v466
    %v468 = vpop.f32.mrb[0].mxu0
    %469 = vmatprep.mubr.f32.mxu0 0.0
    %470 = vmatmul.mubr.f32.gmra.mrb[0].mxu0 %v208
    %v471 = vpop.f32.mrb[0].mxu0
    %v472 = vadd.f32 %v129, %v471
    %v473 = vpop.f32.mrb[0].mxu0
    %474 = vmatprep.mubr.f32.mxu0 0.0
    %475 = vmatmul.mubr.f32.gmra.mrb[0].mxu0 %v211
    %v476 = vpop.f32.mrb[0].mxu0
    %v477 = vadd.f32 %v129, %v476
    %v478 = vpop.f32.mrb[0].mxu0
    %479 = vmatprep.mubr.f32.mxu0 0.0
    %480 = vmatmul.mubr.f32.gmra.mrb[0].mxu0 %v214
    %v481 = vpop.f32.mrb[0].mxu0
    %v482 = vadd.f32 %v129, %v481
    %v483 = vpop.f32.mrb[0].mxu0
    %484 = vmatprep.mubr.f32.mxu0 0.0
    %485 = vmatmul.mubr.f32.gmra.mrb[0].mxu0 %v217
    %v486 = vpop.f32.mrb[0].mxu0
    %v487 = vadd.f32 %v129, %v486
    %v488 = vpop.f32.mrb[0].mxu0
    %489 = vmatprep.mubr.f32.mxu0 0.0
    %490 = vmatmul.mubr.f32.gmra.mrb[0].mxu0 %v220
    %v491 = vpop.f32.mrb[0].mxu0
    %v492 = vadd.f32 %v129, %v491
    %v493 = vpop.f32.mrb[0].mxu0
    %494 = vmatprep.mubr.f32.mxu0 0.0
    %495 = vmatmul.mubr.f32.gmra.mrb[0].mxu0 %v223
    %v496 = vpop.f32.mrb[0].mxu0
    %v497 = vadd.f32 %v129, %v496
    %v498 = vpop.f32.mrb[0].mxu0
    %499 = vmatprep.mubr.f32.mxu0 0.0
    %500 = vmatmul.mubr.f32.gmra.mrb[0].mxu0 %v226
    %v501 = vpop.f32.mrb[0].mxu0
    %v502 = vadd.f32 %v129, %v501
    %v503 = vpop.f32.mrb[0].mxu0
    %504 = vmatprep.mubr.f32.mxu0 0.0
    %505 = vmatmul.mubr.f32.gmra.mrb[0].mxu0 %v229
    %v506 = vpop.f32.mrb[0].mxu0
    %v507 = vadd.f32 %v129, %v506
    %v508 = vpop.f32.mrb[0].mxu0
    %509 = vmatprep.mubr.f32.mxu0 0.0
    %510 = vmatmul.mubr.f32.gmra.mrb[0].mxu0 %v232
    %v511 = vpop.f32.mrb[0].mxu0
    %v512 = vadd.f32 %v129, %v511
    %v513 = vpop.f32.mrb[0].mxu0
    %514 = vmatprep.mubr.f32.mxu0 0.0
    %515 = vmatmul.mubr.f32.gmra.mrb[0].mxu0 %v235
    %v516 = vpop.f32.mrb[0].mxu0
    %v517 = vadd.f32 %v129, %v516
    %v518 = vpop.f32.mrb[0].mxu0
    %519 = vmatprep.mubr.f32.mxu0 0.0
    %520 = vmatmul.mubr.f32.gmra.mrb[0].mxu0 %v238
    %v521 = vpop.f32.mrb[0].mxu0
    %v522 = vadd.f32 %v129, %v521
    %v523 = vpop.f32.mrb[0].mxu0
    %524 = vmatprep.mubr.f32.mxu0 0.0
    %525 = vmatmul.mubr.f32.gmra.mrb[0].mxu0 %v241
    %v526 = vpop.f32.mrb[0].mxu0
    %v527 = vadd.f32 %v129, %v526
    %v528 = vpop.f32.mrb[0].mxu0
    %529 = vmatprep.mubr.f32.mxu0 0.0
    %530 = vmatmul.mubr.f32.gmra.mrb[0].mxu0 %v244
    %v531 = vpop.f32.mrb[0].mxu0
    %v532 = vadd.f32 %v129, %v531
    %v533 = vpop.f32.mrb[0].mxu0
    %534 = vmatprep.mubr.f32.mxu0 0.0
    %535 = vmatmul.mubr.f32.gmra.mrb[0].mxu0 %v247
    %v536 = vpop.f32.mrb[0].mxu0
    %v537 = vadd.f32 %v129, %v536
    %v538 = vpop.f32.mrb[0].mxu0
    %539 = vmatprep.mubr.f32.mxu0 0.0
    %540 = vmatmul.mubr.f32.gmra.mrb[0].mxu0 %v250
    %v541 = vpop.f32.mrb[0].mxu0
    %v542 = vadd.f32 %v129, %v541
    %v543 = vpop.f32.mrb[0].mxu0
    %544 = vmatprep.mubr.f32.mxu0 0.0
    %545 = vmatmul.mubr.f32.gmra.mrb[0].mxu0 %v253
    %v546 = vpop.f32.mrb[0].mxu0
    %v547 = vadd.f32 %v129, %v546
    %v548 = vpop.f32.mrb[0].mxu0
    %549 = vmatprep.mubr.f32.mxu0 0.0
    %550 = vmatmul.mubr.f32.gmra.mrb[0].mxu0 %v256
    %v551 = vpop.f32.mrb[0].mxu0
    %v552 = vadd.f32 %v129, %v551
    %v553 = vpop.f32.mrb[0].mxu0
    %554 = vmatprep.mubr.f32.mxu0 0.0
    %555 = vmatmul.mubr.f32.gmra.mrb[0].mxu0 %v259
    %v556 = vpop.f32.mrb[0].mxu0
    %v557 = vadd.f32 %v129, %v556
    %v558 = vpop.f32.mrb[0].mxu0
    %559 = vmatprep.mubr.f32.mxu0 0.0
    %560 = vmatmul.mubr.f32.gmra.mrb[0].mxu0 %v262
    %v561 = vpop.f32.mrb[0].mxu0
    %v562 = vadd.f32 %v129, %v561
    %v563 = vpop.f32.mrb[0].mxu0
    %564 = vmatprep.mubr.f32.mxu0 0.0
    %565 = vmatmul.mubr.f32.gmra.mrb[0].mxu0 %v265
    %v566 = vpop.f32.mrb[0].mxu0
    %v567 = vadd.f32 %v129, %v566
    %v568 = vpop.f32.mrb[0].mxu0
    %569 = vmatprep.mubr.f32.mxu0 0.0
    %570 = vmatmul.mubr.f32.gmra.mrb[0].mxu0 %v268
    %v571 = vpop.f32.mrb[0].mxu0
    %v572 = vadd.f32 %v129, %v571
    %v573 = vpop.f32.mrb[0].mxu0
    %574 = vmatprep.mubr.f32.mxu0 0.0
    %575 = vmatmul.mubr.f32.gmra.mrb[0].mxu0 %v271
    %v576 = vpop.f32.mrb[0].mxu0
    %v577 = vadd.f32 %v129, %v576
    %v578 = vpop.f32.mrb[0].mxu0
    %579 = vmatprep.mubr.f32.mxu0 0.0
    %580 = vmatmul.mubr.f32.gmra.mrb[0].mxu0 %v274
    %v581 = vpop.f32.mrb[0].mxu0
    %v582 = vadd.f32 %v129, %v581
    %v583 = vpop.f32.mrb[0].mxu0
    %584 = vdwg.mxu0
    %v585 = vmul.f32 %v347, 0.5
    %v586 = vmul.f32 %v352, 0.5
    %v587 = vmul.f32 %v357, 0.5
    %v588 = vmul.f32 %v362, 0.5
    %v589 = vmul.f32 %v367, 0.5
    %v590 = vmul.f32 %v372, 0.5
    %v591 = vmul.f32 %v377, 0.5
    %v592 = vmul.f32 %v382, 0.5
    %v593 = vmul.f32 %v387, 0.5
    %v594 = vmul.f32 %v392, 0.5
    %v595 = vmul.f32 %v397, 0.5
    %v596 = vmul.f32 %v402, 0.5
    %v597 = vmul.f32 %v407, 0.5
    %v598 = vmul.f32 %v412, 0.5
    %v599 = vmul.f32 %v417, 0.5
    %v600 = vmul.f32 %v422, 0.5
    %v601 = vmul.f32 %v427, 0.5
    %v602 = vmul.f32 %v432, 0.5
    %v603 = vmul.f32 %v437, 0.5
    %v604 = vmul.f32 %v442, 0.5
    %v605 = vmul.f32 %v447, 0.5
    %v606 = vmul.f32 %v452, 0.5
    %v607 = vmul.f32 %v457, 0.5
    %v608 = vmul.f32 %v462, 0.5
    %v609 = vmul.f32 %v467, 0.5
    %v610 = vmul.f32 %v472, 0.5
    %v611 = vmul.f32 %v477, 0.5
    %v612 = vmul.f32 %v482, 0.5
    %v613 = vmul.f32 %v487, 0.5
    %v614 = vmul.f32 %v492, 0.5
    %v615 = vmul.f32 %v497, 0.5
    %v616 = vmul.f32 %v502, 0.5
    %v617 = vmul.f32 %v507, 0.5
    %v618 = vmul.f32 %v512, 0.5
    %v619 = vmul.f32 %v517, 0.5
    %v620 = vmul.f32 %v522, 0.5
    %v621 = vmul.f32 %v527, 0.5
    %v622 = vmul.f32 %v532, 0.5
    %v623 = vmul.f32 %v537, 0.5
    %v624 = vmul.f32 %v542, 0.5
    %v625 = vmul.f32 %v547, 0.5
    %v626 = vmul.f32 %v552, 0.5
    %v627 = vmul.f32 %v557, 0.5
    %v628 = vmul.f32 %v562, 0.5
    %v629 = vmul.f32 %v567, 0.5
    %v630 = vmul.f32 %v572, 0.5
    %v631 = vmul.f32 %v577, 0.5
    %v632 = vmul.f32 %v582, 0.5
    %v633 = vmul.f32 %v347, 0.044715
    %v634 = vmul.f32 %v352, 0.044715
    %v635 = vmul.f32 %v357, 0.044715
    %v636 = vmul.f32 %v362, 0.044715
    %v637 = vmul.f32 %v367, 0.044715
    %v638 = vmul.f32 %v372, 0.044715
    %v639 = vmul.f32 %v377, 0.044715
    %v640 = vmul.f32 %v382, 0.044715
    %v641 = vmul.f32 %v387, 0.044715
    %v642 = vmul.f32 %v392, 0.044715
    %v643 = vmul.f32 %v397, 0.044715
    %v644 = vmul.f32 %v402, 0.044715
    %v645 = vmul.f32 %v407, 0.044715
    %v646 = vmul.f32 %v412, 0.044715
    %v647 = vmul.f32 %v417, 0.044715
    %v648 = vmul.f32 %v422, 0.044715
    %v649 = vmul.f32 %v427, 0.044715
    %v650 = vmul.f32 %v432, 0.044715
    %v651 = vmul.f32 %v437, 0.044715
    %v652 = vmul.f32 %v442, 0.044715
    %v653 = vmul.f32 %v447, 0.044715
    %v654 = vmul.f32 %v452, 0.044715
    %v655 = vmul.f32 %v457, 0.044715
    %v656 = vmul.f32 %v462, 0.044715
    %v657 = vmul.f32 %v467, 0.044715
    %v658 = vmul.f32 %v472, 0.044715
    %v659 = vmul.f32 %v477, 0.044715
    %v660 = vmul.f32 %v482, 0.044715
    %v661 = vmul.f32 %v487, 0.044715
    %v662 = vmul.f32 %v492, 0.044715
    %v663 = vmul.f32 %v497, 0.044715
    %v664 = vmul.f32 %v502, 0.044715
    %v665 = vmul.f32 %v507, 0.044715
    %v666 = vmul.f32 %v512, 0.044715
    %v667 = vmul.f32 %v517, 0.044715
    %v668 = vmul.f32 %v522, 0.044715
    %v669 = vmul.f32 %v527, 0.044715
    %v670 = vmul.f32 %v532, 0.044715
    %v671 = vmul.f32 %v537, 0.044715
    %v672 = vmul.f32 %v542, 0.044715
    %v673 = vmul.f32 %v547, 0.044715
    %v674 = vmul.f32 %v552, 0.044715
    %v675 = vmul.f32 %v557, 0.044715
    %v676 = vmul.f32 %v562, 0.044715
    %v677 = vmul.f32 %v567, 0.044715
    %v678 = vmul.f32 %v572, 0.044715
    %v679 = vmul.f32 %v577, 0.044715
    %v680 = vmul.f32 %v582, 0.044715
    %v681 = vmul.f32 %v633, %v347
    %v682 = vmul.f32 %v634, %v352
    %v683 = vmul.f32 %v635, %v357
    %v684 = vmul.f32 %v636, %v362
    %v685 = vmul.f32 %v637, %v367
    %v686 = vmul.f32 %v638, %v372
    %v687 = vmul.f32 %v639, %v377
    %v688 = vmul.f32 %v640, %v382
    %v689 = vmul.f32 %v641, %v387
    %v690 = vmul.f32 %v642, %v392
    %v691 = vmul.f32 %v643, %v397
    %v692 = vmul.f32 %v644, %v402
    %v693 = vmul.f32 %v645, %v407
    %v694 = vmul.f32 %v646, %v412
    %v695 = vmul.f32 %v647, %v417
    %v696 = vmul.f32 %v648, %v422
    %v697 = vmul.f32 %v649, %v427
    %v698 = vmul.f32 %v650, %v432
    %v699 = vmul.f32 %v651, %v437
    %v700 = vmul.f32 %v652, %v442
    %v701 = vmul.f32 %v653, %v447
    %v702 = vmul.f32 %v654, %v452
    %v703 = vmul.f32 %v655, %v457
    %v704 = vmul.f32 %v656, %v462
    %v705 = vmul.f32 %v657, %v467
    %v706 = vmul.f32 %v658, %v472
    %v707 = vmul.f32 %v659, %v477
    %v708 = vmul.f32 %v660, %v482
    %v709 = vmul.f32 %v661, %v487
    %v710 = vmul.f32 %v662, %v492
    %v711 = vmul.f32 %v663, %v497
    %v712 = vmul.f32 %v664, %v502
    %v713 = vmul.f32 %v665, %v507
    %v714 = vmul.f32 %v666, %v512
    %v715 = vmul.f32 %v667, %v517
    %v716 = vmul.f32 %v668, %v522
    %v717 = vmul.f32 %v669, %v527
    %v718 = vmul.f32 %v670, %v532
    %v719 = vmul.f32 %v671, %v537
    %v720 = vmul.f32 %v672, %v542
    %v721 = vmul.f32 %v673, %v547
    %v722 = vmul.f32 %v674, %v552
    %v723 = vmul.f32 %v675, %v557
    %v724 = vmul.f32 %v676, %v562
    %v725 = vmul.f32 %v677, %v567
    %v726 = vmul.f32 %v678, %v572
    %v727 = vmul.f32 %v679, %v577
    %v728 = vmul.f32 %v680, %v582
    %v729 = vmul.f32 %v681, %v347
    %v730 = vmul.f32 %v682, %v352
    %v731 = vmul.f32 %v683, %v357
    %v732 = vmul.f32 %v684, %v362
    %v733 = vmul.f32 %v685, %v367
    %v734 = vmul.f32 %v686, %v372
    %v735 = vmul.f32 %v687, %v377
    %v736 = vmul.f32 %v688, %v382
    %v737 = vmul.f32 %v689, %v387
    %v738 = vmul.f32 %v690, %v392
    %v739 = vmul.f32 %v691, %v397
    %v740 = vmul.f32 %v692, %v402
    %v741 = vmul.f32 %v693, %v407
    %v742 = vmul.f32 %v694, %v412
    %v743 = vmul.f32 %v695, %v417
    %v744 = vmul.f32 %v696, %v422
    %v745 = vmul.f32 %v697, %v427
    %v746 = vmul.f32 %v698, %v432
    %v747 = vmul.f32 %v699, %v437
    %v748 = vmul.f32 %v700, %v442
    %v749 = vmul.f32 %v701, %v447
    %v750 = vmul.f32 %v702, %v452
    %v751 = vmul.f32 %v703, %v457
    %v752 = vmul.f32 %v704, %v462
    %v753 = vmul.f32 %v705, %v467
    %v754 = vmul.f32 %v706, %v472
    %v755 = vmul.f32 %v707, %v477
    %v756 = vmul.f32 %v708, %v482
    %v757 = vmul.f32 %v709, %v487
    %v758 = vmul.f32 %v710, %v492
    %v759 = vmul.f32 %v711, %v497
    %v760 = vmul.f32 %v712, %v502
    %v761 = vmul.f32 %v713, %v507
    %v762 = vmul.f32 %v714, %v512
    %v763 = vmul.f32 %v715, %v517
    %v764 = vmul.f32 %v716, %v522
    %v765 = vmul.f32 %v717, %v527
    %v766 = vmul.f32 %v718, %v532
    %v767 = vmul.f32 %v719, %v537
    %v768 = vmul.f32 %v720, %v542
    %v769 = vmul.f32 %v721, %v547
    %v770 = vmul.f32 %v722, %v552
    %v771 = vmul.f32 %v723, %v557
    %v772 = vmul.f32 %v724, %v562
    %v773 = vmul.f32 %v725, %v567
    %v774 = vmul.f32 %v726, %v572
    %v775 = vmul.f32 %v727, %v577
    %v776 = vmul.f32 %v728, %v582
    %v777 = vadd.f32 %v347, %v729
    %v778 = vadd.f32 %v352, %v730
    %v779 = vadd.f32 %v357, %v731
    %v780 = vadd.f32 %v362, %v732
    %v781 = vadd.f32 %v367, %v733
    %v782 = vadd.f32 %v372, %v734
    %v783 = vadd.f32 %v377, %v735
    %v784 = vadd.f32 %v382, %v736
    %v785 = vadd.f32 %v387, %v737
    %v786 = vadd.f32 %v392, %v738
    %v787 = vadd.f32 %v397, %v739
    %v788 = vadd.f32 %v402, %v740
    %v789 = vadd.f32 %v407, %v741
    %v790 = vadd.f32 %v412, %v742
    %v791 = vadd.f32 %v417, %v743
    %v792 = vadd.f32 %v422, %v744
    %v793 = vadd.f32 %v427, %v745
    %v794 = vadd.f32 %v432, %v746
    %v795 = vadd.f32 %v437, %v747
    %v796 = vadd.f32 %v442, %v748
    %v797 = vadd.f32 %v447, %v749
    %v798 = vadd.f32 %v452, %v750
    %v799 = vadd.f32 %v457, %v751
    %v800 = vadd.f32 %v462, %v752
    %v801 = vadd.f32 %v467, %v753
    %v802 = vadd.f32 %v472, %v754
    %v803 = vadd.f32 %v477, %v755
    %v804 = vadd.f32 %v482, %v756
    %v805 = vadd.f32 %v487, %v757
    %v806 = vadd.f32 %v492, %v758
    %v807 = vadd.f32 %v497, %v759
    %v808 = vadd.f32 %v502, %v760
    %v809 = vadd.f32 %v507, %v761
    %v810 = vadd.f32 %v512, %v762
    %v811 = vadd.f32 %v517, %v763
    %v812 = vadd.f32 %v522, %v764
    %v813 = vadd.f32 %v527, %v765
    %v814 = vadd.f32 %v532, %v766
    %v815 = vadd.f32 %v537, %v767
    %v816 = vadd.f32 %v542, %v768
    %v817 = vadd.f32 %v547, %v769
    %v818 = vadd.f32 %v552, %v770
    %v819 = vadd.f32 %v557, %v771
    %v820 = vadd.f32 %v562, %v772
    %v821 = vadd.f32 %v567, %v773
    %v822 = vadd.f32 %v572, %v774
    %v823 = vadd.f32 %v577, %v775
    %v824 = vadd.f32 %v582, %v776
    %v825 = vmul.f32 %v777, 0.7978846
    %v826 = vmul.f32 %v778, 0.7978846
    %v827 = vmul.f32 %v779, 0.7978846
    %v828 = vmul.f32 %v780, 0.7978846
    %v829 = vmul.f32 %v781, 0.7978846
    %v830 = vmul.f32 %v782, 0.7978846
    %v831 = vmul.f32 %v783, 0.7978846
    %v832 = vmul.f32 %v784, 0.7978846
    %v833 = vmul.f32 %v785, 0.7978846
    %v834 = vmul.f32 %v786, 0.7978846
    %v835 = vmul.f32 %v787, 0.7978846
    %v836 = vmul.f32 %v788, 0.7978846
    %v837 = vmul.f32 %v789, 0.7978846
    %v838 = vmul.f32 %v790, 0.7978846
    %v839 = vmul.f32 %v791, 0.7978846
    %v840 = vmul.f32 %v792, 0.7978846
    %v841 = vmul.f32 %v793, 0.7978846
    %v842 = vmul.f32 %v794, 0.7978846
    %v843 = vmul.f32 %v795, 0.7978846
    %v844 = vmul.f32 %v796, 0.7978846
    %v845 = vmul.f32 %v797, 0.7978846
    %v846 = vmul.f32 %v798, 0.7978846
    %v847 = vmul.f32 %v799, 0.7978846
    %v848 = vmul.f32 %v800, 0.7978846
    %v849 = vmul.f32 %v801, 0.7978846
    %v850 = vmul.f32 %v802, 0.7978846
    %v851 = vmul.f32 %v803, 0.7978846
    %v852 = vmul.f32 %v804, 0.7978846
    %v853 = vmul.f32 %v805, 0.7978846
    %v854 = vmul.f32 %v806, 0.7978846
    %v855 = vmul.f32 %v807, 0.7978846
    %v856 = vmul.f32 %v808, 0.7978846
    %v857 = vmul.f32 %v809, 0.7978846
    %v858 = vmul.f32 %v810, 0.7978846
    %v859 = vmul.f32 %v811, 0.7978846
    %v860 = vmul.f32 %v812, 0.7978846
    %v861 = vmul.f32 %v813, 0.7978846
    %v862 = vmul.f32 %v814, 0.7978846
    %v863 = vmul.f32 %v815, 0.7978846
    %v864 = vmul.f32 %v816, 0.7978846
    %v865 = vmul.f32 %v817, 0.7978846
    %v866 = vmul.f32 %v818, 0.7978846
    %v867 = vmul.f32 %v819, 0.7978846
    %v868 = vmul.f32 %v820, 0.7978846
    %v869 = vmul.f32 %v821, 0.7978846
    %v870 = vmul.f32 %v822, 0.7978846
    %v871 = vmul.f32 %v823, 0.7978846
    %v872 = vmul.f32 %v824, 0.7978846
    %v873 = vtanh.pop %v825
    %v874 = vtanh.pop %v826
    %v875 = vtanh.pop %v827
    %v876 = vtanh.pop %v828
    %v877 = vtanh.pop %v829
    %v878 = vtanh.pop %v830
    %v879 = vtanh.pop %v831
    %v880 = vtanh.pop %v832
    %v881 = vtanh.pop %v833
    %v882 = vtanh.pop %v834
    %v883 = vtanh.pop %v835
    %v884 = vtanh.pop %v836
    %v885 = vtanh.pop %v837
    %v886 = vtanh.pop %v838
    %v887 = vtanh.pop %v839
    %v888 = vtanh.pop %v840
    %v889 = vtanh.pop %v841
    %v890 = vtanh.pop %v842
    %v891 = vtanh.pop %v843
    %v892 = vtanh.pop %v844
    %v893 = vtanh.pop %v845
    %v894 = vtanh.pop %v846
    %v895 = vtanh.pop %v847
    %v896 = vtanh.pop %v848
    %v897 = vtanh.pop %v849
    %v898 = vtanh.pop %v850
    %v899 = vtanh.pop %v851
    %v900 = vtanh.pop %v852
    %v901 = vtanh.pop %v853
    %v902 = vtanh.pop %v854
    %v903 = vtanh.pop %v855
    %v904 = vtanh.pop %v856
    %v905 = vtanh.pop %v857
    %v906 = vtanh.pop %v858
    %v907 = vtanh.pop %v859
    %v908 = vtanh.pop %v860
    %v909 = vtanh.pop %v861
    %v910 = vtanh.pop %v862
    %v911 = vtanh.pop %v863
    %v912 = vtanh.pop %v864
    %v913 = vtanh.pop %v865
    %v914 = vtanh.pop %v866
    %v915 = vtanh.pop %v867
    %v916 = vtanh.pop %v868
    %v917 = vtanh.pop %v869
    %v918 = vtanh.pop %v870
    %v919 = vtanh.pop %v871
    %v920 = vtanh.pop %v872
    %v921 = vadd.f32 %v873, 1.0
    %v922 = vadd.f32 %v874, 1.0
    %v923 = vadd.f32 %v875, 1.0
    %v924 = vadd.f32 %v876, 1.0
    %v925 = vadd.f32 %v877, 1.0
    %v926 = vadd.f32 %v878, 1.0
    %v927 = vadd.f32 %v879, 1.0
    %v928 = vadd.f32 %v880, 1.0
    %v929 = vadd.f32 %v881, 1.0
    %v930 = vadd.f32 %v882, 1.0
    %v931 = vadd.f32 %v883, 1.0
    %v932 = vadd.f32 %v884, 1.0
    %v933 = vadd.f32 %v885, 1.0
    %v934 = vadd.f32 %v886, 1.0
    %v935 = vadd.f32 %v887, 1.0
    %v936 = vadd.f32 %v888, 1.0
    %v937 = vadd.f32 %v889, 1.0
    %v938 = vadd.f32 %v890, 1.0
    %v939 = vadd.f32 %v891, 1.0
    %v940 = vadd.f32 %v892, 1.0
    %v941 = vadd.f32 %v893, 1.0
    %v942 = vadd.f32 %v894, 1.0
    %v943 = vadd.f32 %v895, 1.0
    %v944 = vadd.f32 %v896, 1.0
    %v945 = vadd.f32 %v897, 1.0
    %v946 = vadd.f32 %v898, 1.0
    %v947 = vadd.f32 %v899, 1.0
    %v948 = vadd.f32 %v900, 1.0
    %v949 = vadd.f32 %v901, 1.0
    %v950 = vadd.f32 %v902, 1.0
    %v951 = vadd.f32 %v903, 1.0
    %v952 = vadd.f32 %v904, 1.0
    %v953 = vadd.f32 %v905, 1.0
    %v954 = vadd.f32 %v906, 1.0
    %v955 = vadd.f32 %v907, 1.0
    %v956 = vadd.f32 %v908, 1.0
    %v957 = vadd.f32 %v909, 1.0
    %v958 = vadd.f32 %v910, 1.0
    %v959 = vadd.f32 %v911, 1.0
    %v960 = vadd.f32 %v912, 1.0
    %v961 = vadd.f32 %v913, 1.0
    %v962 = vadd.f32 %v914, 1.0
    %v963 = vadd.f32 %v915, 1.0
    %v964 = vadd.f32 %v916, 1.0
    %v965 = vadd.f32 %v917, 1.0
    %v966 = vadd.f32 %v918, 1.0
    %v967 = vadd.f32 %v919, 1.0
    %v968 = vadd.f32 %v920, 1.0
    %v969 = vmul.f32 %v585, %v921
    %v970 = vmul.f32 %v586, %v922
    %v971 = vmul.f32 %v587, %v923
    %v972 = vmul.f32 %v588, %v924
    %v973 = vmul.f32 %v589, %v925
    %v974 = vmul.f32 %v590, %v926
    %v975 = vmul.f32 %v591, %v927
    %v976 = vmul.f32 %v592, %v928
    %v977 = vmul.f32 %v593, %v929
    %v978 = vmul.f32 %v594, %v930
    %v979 = vmul.f32 %v595, %v931
    %v980 = vmul.f32 %v596, %v932
    %v981 = vmul.f32 %v597, %v933
    %v982 = vmul.f32 %v598, %v934
    %v983 = vmul.f32 %v599, %v935
    %v984 = vmul.f32 %v600, %v936
    %v985 = vmul.f32 %v601, %v937
    %v986 = vmul.f32 %v602, %v938
    %v987 = vmul.f32 %v603, %v939
    %v988 = vmul.f32 %v604, %v940
    %v989 = vmul.f32 %v605, %v941
    %v990 = vmul.f32 %v606, %v942
    %v991 = vmul.f32 %v607, %v943
    %v992 = vmul.f32 %v608, %v944
    %v993 = vmul.f32 %v609, %v945
    %v994 = vmul.f32 %v610, %v946
    %v995 = vmul.f32 %v611, %v947
    %v996 = vmul.f32 %v612, %v948
    %v997 = vmul.f32 %v613, %v949
    %v998 = vmul.f32 %v614, %v950
    %v999 = vmul.f32 %v615, %v951
    %v1000 = vmul.f32 %v616, %v952
    %v1001 = vmul.f32 %v617, %v953
    %v1002 = vmul.f32 %v618, %v954
    %v1003 = vmul.f32 %v619, %v955
    %v1004 = vmul.f32 %v620, %v956
    %v1005 = vmul.f32 %v621, %v957
    %v1006 = vmul.f32 %v622, %v958
    %v1007 = vmul.f32 %v623, %v959
    %v1008 = vmul.f32 %v624, %v960
    %v1009 = vmul.f32 %v625, %v961
    %v1010 = vmul.f32 %v626, %v962
    %v1011 = vmul.f32 %v627, %v963
    %v1012 = vmul.f32 %v628, %v964
    %v1013 = vmul.f32 %v629, %v965
    %v1014 = vmul.f32 %v630, %v966
    %v1015 = vmul.f32 %v631, %v967
    %v1016 = vmul.f32 %v632, %v968
    %1065 = vrot.lane.b32.xlu0 %v969, 96
    %v1066 = vpop.permute.xlu0 %1065
    %1067 = vrot.lane.b32.xlu0 %v970, 96
    %v1068 = vpop.permute.xlu0 %1067
    %1069 = vrot.lane.b32.xlu0 %v971, 96
    %v1070 = vpop.permute.xlu0 %1069
    %1071 = vrot.lane.b32.xlu0 %v972, 96
    %v1072 = vpop.permute.xlu0 %1071
    %1073 = vrot.lane.b32.xlu0 %v973, 96
    %v1074 = vpop.permute.xlu0 %1073
    %1075 = vrot.lane.b32.xlu0 %v974, 96
    %v1076 = vpop.permute.xlu0 %1075
    %1077 = vrot.lane.b32.xlu0 %v975, 96
    %v1078 = vpop.permute.xlu0 %1077
    %1079 = vrot.lane.b32.xlu0 %v976, 96
    %v1080 = vpop.permute.xlu0 %1079
    %1081 = vrot.lane.b32.xlu0 %v977, 96
    %v1082 = vpop.permute.xlu0 %1081
    %1083 = vrot.lane.b32.xlu0 %v978, 96
    %v1084 = vpop.permute.xlu0 %1083
    %1085 = vrot.lane.b32.xlu0 %v979, 96
    %v1086 = vpop.permute.xlu0 %1085
    %1087 = vrot.lane.b32.xlu0 %v980, 96
    %v1088 = vpop.permute.xlu0 %1087
    %1089 = vrot.lane.b32.xlu0 %v981, 96
    %v1090 = vpop.permute.xlu0 %1089
    %1091 = vrot.lane.b32.xlu0 %v982, 96
    %v1092 = vpop.permute.xlu0 %1091
    %1093 = vrot.lane.b32.xlu0 %v983, 96
    %v1094 = vpop.permute.xlu0 %1093
    %1095 = vrot.lane.b32.xlu0 %v984, 96
    %v1096 = vpop.permute.xlu0 %1095
    %1097 = vrot.lane.b32.xlu0 %v985, 96
    %v1098 = vpop.permute.xlu0 %1097
    %1099 = vrot.lane.b32.xlu0 %v986, 96
    %v1100 = vpop.permute.xlu0 %1099
    %1101 = vrot.lane.b32.xlu0 %v987, 96
    %v1102 = vpop.permute.xlu0 %1101
    %1103 = vrot.lane.b32.xlu0 %v988, 96
    %v1104 = vpop.permute.xlu0 %1103
    %1105 = vrot.lane.b32.xlu0 %v989, 96
    %v1106 = vpop.permute.xlu0 %1105
    %1107 = vrot.lane.b32.xlu0 %v990, 96
    %v1108 = vpop.permute.xlu0 %1107
    %1109 = vrot.lane.b32.xlu0 %v991, 96
    %v1110 = vpop.permute.xlu0 %1109
    %1111 = vrot.lane.b32.xlu0 %v992, 96
    %v1112 = vpop.permute.xlu0 %1111
    %1113 = vrot.lane.b32.xlu0 %v993, 96
    %v1114 = vpop.permute.xlu0 %1113
    %1115 = vrot.lane.b32.xlu0 %v994, 96
    %v1116 = vpop.permute.xlu0 %1115
    %1117 = vrot.lane.b32.xlu0 %v995, 96
    %v1118 = vpop.permute.xlu0 %1117
    %1119 = vrot.lane.b32.xlu0 %v996, 96
    %v1120 = vpop.permute.xlu0 %1119
    %1121 = vrot.lane.b32.xlu0 %v997, 96
    %v1122 = vpop.permute.xlu0 %1121
    %1123 = vrot.lane.b32.xlu0 %v998, 96
    %v1124 = vpop.permute.xlu0 %1123
    %1125 = vrot.lane.b32.xlu0 %v999, 96
    %v1126 = vpop.permute.xlu0 %1125
    %1127 = vrot.lane.b32.xlu0 %v1000, 96
    %v1128 = vpop.permute.xlu0 %1127
    %1129 = vrot.lane.b32.xlu0 %v1001, 96
    %v1130 = vpop.permute.xlu0 %1129
    %1131 = vrot.lane.b32.xlu0 %v1002, 96
    %v1132 = vpop.permute.xlu0 %1131
    %1133 = vrot.lane.b32.xlu0 %v1003, 96
    %v1134 = vpop.permute.xlu0 %1133
    %1135 = vrot.lane.b32.xlu0 %v1004, 96
    %v1136 = vpop.permute.xlu0 %1135
    %1137 = vrot.lane.b32.xlu0 %v1005, 96
    %v1138 = vpop.permute.xlu0 %1137
    %1139 = vrot.lane.b32.xlu0 %v1006, 96
    %v1140 = vpop.permute.xlu0 %1139
    %1141 = vrot.lane.b32.xlu0 %v1007, 96
    %v1142 = vpop.permute.xlu0 %1141
    %1143 = vrot.lane.b32.xlu0 %v1008, 96
    %v1144 = vpop.permute.xlu0 %1143
    %1145 = vrot.lane.b32.xlu0 %v1009, 96
    %v1146 = vpop.permute.xlu0 %1145
    %1147 = vrot.lane.b32.xlu0 %v1010, 96
    %v1148 = vpop.permute.xlu0 %1147
    %1149 = vrot.lane.b32.xlu0 %v1011, 96
    %v1150 = vpop.permute.xlu0 %1149
    %1151 = vrot.lane.b32.xlu0 %v1012, 96
    %v1152 = vpop.permute.xlu0 %1151
    %1153 = vrot.lane.b32.xlu0 %v1013, 96
    %v1154 = vpop.permute.xlu0 %1153
    %1155 = vrot.lane.b32.xlu0 %v1014, 96
    %v1156 = vpop.permute.xlu0 %1155
    %1157 = vrot.lane.b32.xlu0 %v1015, 96
    %v1158 = vpop.permute.xlu0 %1157
    %1159 = vrot.lane.b32.xlu0 %v1016, 96
    %v1160 = vpop.permute.xlu0 %1159
    %v1209 = vadd.f32 %v969, %v1066
    %v1210 = vadd.f32 %v970, %v1068
    %v1211 = vadd.f32 %v971, %v1070
    %v1212 = vadd.f32 %v972, %v1072
    %v1213 = vadd.f32 %v973, %v1074
    %v1214 = vadd.f32 %v974, %v1076
    %v1215 = vadd.f32 %v975, %v1078
    %v1216 = vadd.f32 %v976, %v1080
    %v1217 = vadd.f32 %v977, %v1082
    %v1218 = vadd.f32 %v978, %v1084
    %v1219 = vadd.f32 %v979, %v1086
    %v1220 = vadd.f32 %v980, %v1088
    %v1221 = vadd.f32 %v981, %v1090
    %v1222 = vadd.f32 %v982, %v1092
    %v1223 = vadd.f32 %v983, %v1094
    %v1224 = vadd.f32 %v984, %v1096
    %v1225 = vadd.f32 %v985, %v1098
    %v1226 = vadd.f32 %v986, %v1100
    %v1227 = vadd.f32 %v987, %v1102
    %v1228 = vadd.f32 %v988, %v1104
    %v1229 = vadd.f32 %v989, %v1106
    %v1230 = vadd.f32 %v990, %v1108
    %v1231 = vadd.f32 %v991, %v1110
    %v1232 = vadd.f32 %v992, %v1112
    %v1233 = vadd.f32 %v993, %v1114
    %v1234 = vadd.f32 %v994, %v1116
    %v1235 = vadd.f32 %v995, %v1118
    %v1236 = vadd.f32 %v996, %v1120
    %v1237 = vadd.f32 %v997, %v1122
    %v1238 = vadd.f32 %v998, %v1124
    %v1239 = vadd.f32 %v999, %v1126
    %v1240 = vadd.f32 %v1000, %v1128
    %v1241 = vadd.f32 %v1001, %v1130
    %v1242 = vadd.f32 %v1002, %v1132
    %v1243 = vadd.f32 %v1003, %v1134
    %v1244 = vadd.f32 %v1004, %v1136
    %v1245 = vadd.f32 %v1005, %v1138
    %v1246 = vadd.f32 %v1006, %v1140
    %v1247 = vadd.f32 %v1007, %v1142
    %v1248 = vadd.f32 %v1008, %v1144
    %v1249 = vadd.f32 %v1009, %v1146
    %v1250 = vadd.f32 %v1010, %v1148
    %v1251 = vadd.f32 %v1011, %v1150
    %v1252 = vadd.f32 %v1012, %v1152
    %v1253 = vadd.f32 %v1013, %v1154
    %v1254 = vadd.f32 %v1014, %v1156
    %v1255 = vadd.f32 %v1015, %v1158
    %v1256 = vadd.f32 %v1016, %v1160
    %v1257 = vld [vmem:[%s3] sm:$0x3f]
    %v1259 = vcombine.high %v1257, %v1257
    %v1261 = vunpack.c.l.s4 1983009808
    %v1262 = vunpack.c.0.s8 %v1261
    %v1263 = vlaneseq
    %v1264 = vshrl.u32 %v1263, 7
    %v1265 = vsub.s32 %v1262, %v1264
    %v1266 = vrot.slane %v1257, %v1265
    %v1268 = vunpack.c.l.s4 1983009808
    %v1269 = vunpack.c.0.s8 %v1268
    %v1270 = vlaneseq
    %v1271 = vshrl.u32 %v1270, 7
    %v1272 = vsub.s32 %v1269, %v1271
    %v1273 = vrot.slane %v1259, %v1272
    %v1274 = vcombine.high %v1266, %v1266
    %1278 = vmatprep.subr.mxu0 0.0
    %1279 = vmatpush1.msra.mxu0 %v1209
    %1280 = vmatprep.subr.mxu0 0.0
    %1281 = vmatpush1.msra.mxu0 %v1210
    %1282 = vmatprep.subr.mxu0 0.0
    %1283 = vmatpush1.msra.mxu0 %v1211
    %1284 = vmatprep.subr.mxu0 0.0
    %1285 = vmatpush1.msra.mxu0 %v1212
    %1286 = vmatprep.subr.mxu0 0.0
    %1287 = vmatpush1.msra.mxu0 %v1213
    %1288 = vmatprep.subr.mxu0 0.0
    %1289 = vmatpush1.msra.mxu0 %v1214
    %1290 = vmatprep.subr.mxu0 0.0
    %1291 = vmatpush1.msra.mxu0 %v1215
    %1292 = vmatprep.subr.mxu0 0.0
    %1293 = vmatpush1.msra.mxu0 %v1216
    %1294 = vmatprep.subr.mxu0 0.0
    %1295 = vmatpush1.msra.mxu0 %v1217
    %1296 = vmatprep.subr.mxu0 0.0
    %1297 = vmatpush1.msra.mxu0 %v1218
    %1298 = vmatprep.subr.mxu0 0.0
    %1299 = vmatpush1.msra.mxu0 %v1219
    %1300 = vmatprep.subr.mxu0 0.0
    %1301 = vmatpush1.msra.mxu0 %v1220
    %1302 = vmatprep.subr.mxu0 0.0
    %1303 = vmatpush1.msra.mxu0 %v1221
    %1304 = vmatprep.subr.mxu0 0.0
    %1305 = vmatpush1.msra.mxu0 %v1222
    %1306 = vmatprep.subr.mxu0 0.0
    %1307 = vmatpush1.msra.mxu0 %v1223
    %1308 = vmatprep.subr.mxu0 0.0
    %1309 = vmatpush1.msra.mxu0 %v1224
    %1310 = vmatprep.subr.mxu0 0.0
    %1311 = vmatpush1.msra.mxu0 %v1225
    %1312 = vmatprep.subr.mxu0 0.0
    %1313 = vmatpush1.msra.mxu0 %v1226
    %1314 = vmatprep.subr.mxu0 0.0
    %1315 = vmatpush1.msra.mxu0 %v1227
    %1316 = vmatprep.subr.mxu0 0.0
    %1317 = vmatpush1.msra.mxu0 %v1228
    %1318 = vmatprep.subr.mxu0 0.0
    %1319 = vmatpush1.msra.mxu0 %v1229
    %1320 = vmatprep.subr.mxu0 0.0
    %1321 = vmatpush1.msra.mxu0 %v1230
    %1322 = vmatprep.subr.mxu0 0.0
    %1323 = vmatpush1.msra.mxu0 %v1231
    %1324 = vmatprep.subr.mxu0 0.0
    %1325 = vmatpush1.msra.mxu0 %v1232
    %1326 = vmatprep.subr.mxu0 0.0
    %1327 = vmatpush1.msra.mxu0 %v1233
    %1328 = vmatprep.subr.mxu0 0.0
    %1329 = vmatpush1.msra.mxu0 %v1234
    %1330 = vmatprep.subr.mxu0 0.0
    %1331 = vmatpush1.msra.mxu0 %v1235
    %1332 = vmatprep.subr.mxu0 0.0
    %1333 = vmatpush1.msra.mxu0 %v1236
    %1334 = vmatprep.subr.mxu0 0.0
    %1335 = vmatpush1.msra.mxu0 %v1237
    %1336 = vmatprep.subr.mxu0 0.0
    %1337 = vmatpush1.msra.mxu0 %v1238
    %1338 = vmatprep.subr.mxu0 0.0
    %1339 = vmatpush1.msra.mxu0 %v1239
    %1340 = vmatprep.subr.mxu0 0.0
    %1341 = vmatpush1.msra.mxu0 %v1240
    %1342 = vmatprep.mubr.f32.mxu0 %v1274
    %1343 = vmatmul.mubr.f32.gmra.mrb[0].mxu0 %v1266
    %v1344 = vpop.f32.mrb[0].mxu0
    %v1345 = vadd.f32 0.0, %v1344
    %v1346 = vpop.f32.mrb[0].mxu0
    %1347 = vdwg.mxu0
    %1348 = vmatprep.subr.mxu0 0.0
    %1349 = vmatpush1.msra.mxu0 %v1241
    %1350 = vmatprep.subr.mxu0 0.0
    %1351 = vmatpush1.msra.mxu0 %v1242
    %1352 = vmatprep.subr.mxu0 0.0
    %1353 = vmatpush1.msra.mxu0 %v1243
    %1354 = vmatprep.subr.mxu0 0.0
    %1355 = vmatpush1.msra.mxu0 %v1244
    %1356 = vmatprep.subr.mxu0 0.0
    %1357 = vmatpush1.msra.mxu0 %v1245
    %1358 = vmatprep.subr.mxu0 0.0
    %1359 = vmatpush1.msra.mxu0 %v1246
    %1360 = vmatprep.subr.mxu0 0.0
    %1361 = vmatpush1.msra.mxu0 %v1247
    %1362 = vmatprep.subr.mxu0 0.0
    %1363 = vmatpush1.msra.mxu0 %v1248
    %1364 = vmatprep.subr.mxu0 0.0
    %1365 = vmatpush1.msra.mxu0 %v1249
    %1366 = vmatprep.subr.mxu0 0.0
    %1367 = vmatpush1.msra.mxu0 %v1250
    %1368 = vmatprep.subr.mxu0 0.0
    %1369 = vmatpush1.msra.mxu0 %v1251
    %1370 = vmatprep.subr.mxu0 0.0
    %1371 = vmatpush1.msra.mxu0 %v1252
    %1372 = vmatprep.subr.mxu0 0.0
    %1373 = vmatpush1.msra.mxu0 %v1253
    %1374 = vmatprep.subr.mxu0 0.0
    %1375 = vmatpush1.msra.mxu0 %v1254
    %1376 = vmatprep.subr.mxu0 0.0
    %1377 = vmatpush1.msra.mxu0 %v1255
    %1378 = vmatprep.subr.mxu0 0.0
    %1379 = vmatpush1.msra.mxu0 %v1256
    %1380 = vmatprep.subr.mxu0 0.0
    %1381 = vmatpush1.msra.mxu0 0.0
    %1382 = vmatprep.subr.mxu0 0.0
    %1383 = vmatpush1.msra.mxu0 0.0
    %1384 = vmatprep.subr.mxu0 0.0
    %1385 = vmatpush1.msra.mxu0 0.0
    %1386 = vmatprep.subr.mxu0 0.0
    %1387 = vmatpush1.msra.mxu0 0.0
    %1388 = vmatprep.subr.mxu0 0.0
    %1389 = vmatpush1.msra.mxu0 0.0
    %1390 = vmatprep.subr.mxu0 0.0
    %1391 = vmatpush1.msra.mxu0 0.0
    %1392 = vmatprep.subr.mxu0 0.0
    %1393 = vmatpush1.msra.mxu0 0.0
    %1394 = vmatprep.subr.mxu0 0.0
    %1395 = vmatpush1.msra.mxu0 0.0
    %1396 = vmatprep.subr.mxu0 0.0
    %1397 = vmatpush1.msra.mxu0 0.0
    %1398 = vmatprep.subr.mxu0 0.0
    %1399 = vmatpush1.msra.mxu0 0.0
    %1400 = vmatprep.subr.mxu0 0.0
    %1401 = vmatpush1.msra.mxu0 0.0
    %1402 = vmatprep.subr.mxu0 0.0
    %1403 = vmatpush1.msra.mxu0 0.0
    %1404 = vmatprep.subr.mxu0 0.0
    %1405 = vmatpush1.msra.mxu0 0.0
    %1406 = vmatprep.subr.mxu0 0.0
    %1407 = vmatpush1.msra.mxu0 0.0
    %1408 = vmatprep.subr.mxu0 0.0
    %1409 = vmatpush1.msra.mxu0 0.0
    %1410 = vmatprep.subr.mxu0 0.0
    %1411 = vmatpush1.msra.mxu0 0.0
    %1412 = vmatprep.mubr.f32.mxu0 0.0
    %1413 = vmatmul.mubr.f32.gmra.mrb[0].mxu0 %v1273
    %v1414 = vpop.f32.mrb[0].mxu0
    %v1415 = vadd.f32 %v1345, %v1414
    %v1416 = vpop.f32.mrb[0].mxu0
    %1417 = vdwg.mxu0
    %v1418 = vld [vmem:[%s4] sm:$0xff]
    %v1419 = vld [vmem:[%s4 + $0x8] sm:$0xff]
    %v1420 = vld [vmem:[%s4 + $0x10] sm:$0xff]
    %v1421 = vld [vmem:[%s4 + $0x18] sm:$0xff]
    %v1422 = vld [vmem:[%s4 + $0x20] sm:$0xff]
    %v1423 = vld [vmem:[%s4 + $0x28] sm:$0xff]
    %v1424 = vld [vmem:[%s4 + $0x30] sm:$0xff]
    %v1425 = vld [vmem:[%s4 + $0x38] sm:$0xff]
    %v1426 = vadd.f32 %v1209, %v1418
    %v1427 = vadd.f32 %v1210, %v1419
    %v1428 = vadd.f32 %v1211, %v1420
    %v1429 = vadd.f32 %v1212, %v1421
    %v1430 = vadd.f32 %v1213, %v1422
    %v1431 = vadd.f32 %v1214, %v1423
    %v1432 = vadd.f32 %v1215, %v1424
    %v1433 = vadd.f32 %v1216, %v1425
    %vm1434 = vcmask 261120
    %1435 = vst.msk [vmem:[#allocation2] sm:$0xff] %vm1434, %v1426
    %1436 = vst.msk [vmem:[#allocation2 + $0x8] sm:$0xff] %vm1434, %v1427
    %1437 = vst.msk [vmem:[#allocation2 + $0x10] sm:$0xff] %vm1434, %v1428
    %1438 = vst.msk [vmem:[#allocation2 + $0x18] sm:$0xff] %vm1434, %v1429
    %1439 = vst.msk [vmem:[#allocation2 + $0x20] sm:$0xff] %vm1434, %v1430
    %1440 = vst.msk [vmem:[#allocation2 + $0x28] sm:$0xff] %vm1434, %v1431
    %1441 = vst.msk [vmem:[#allocation2 + $0x30] sm:$0xff] %vm1434, %v1432
    %1442 = vst.msk [vmem:[#allocation2 + $0x38] sm:$0xff] %vm1434, %v1433
    %v1443 = vld [vmem:[%s4 + $0x40] sm:$0xff]
    %1444 = vst.msk [vmem:[#allocation2 + $0x40] sm:$0xff] %vm1434, %v1443
    %v1445 = vld [vmem:[%s4] sm:$0xff]
    %v1446 = vld [vmem:[%s4 + $0x8] sm:$0xff]
    %v1447 = vld [vmem:[%s4 + $0x10] sm:$0xff]
    %v1448 = vld [vmem:[%s4 + $0x18] sm:$0xff]
    %v1449 = vld [vmem:[%s4 + $0x20] sm:$0xff]
    %v1450 = vld [vmem:[%s4 + $0x28] sm:$0xff]
    %v1451 = vld [vmem:[%s4 + $0x30] sm:$0xff]
    %v1452 = vld [vmem:[%s4 + $0x38] sm:$0xff]
    %v1453 = vadd.f32 %v1233, %v1445
    %v1454 = vadd.f32 %v1234, %v1446
    %v1455 = vadd.f32 %v1235, %v1447
    %v1456 = vadd.f32 %v1236, %v1448
    %v1457 = vadd.f32 %v1237, %v1449
    %v1458 = vadd.f32 %v1238, %v1450
    %v1459 = vadd.f32 %v1239, %v1451
    %v1460 = vadd.f32 %v1240, %v1452
    %1461 = vst.msk [vmem:[#allocation2 + $0x48] sm:$0xff] %vm1434, %v1453
    %1462 = vst.msk [vmem:[#allocation2 + $0x50] sm:$0xff] %vm1434, %v1454
    %1463 = vst.msk [vmem:[#allocation2 + $0x58] sm:$0xff] %vm1434, %v1455
    %1464 = vst.msk [vmem:[#allocation2 + $0x60] sm:$0xff] %vm1434, %v1456
    %1465 = vst.msk [vmem:[#allocation2 + $0x68] sm:$0xff] %vm1434, %v1457
    %1466 = vst.msk [vmem:[#allocation2 + $0x70] sm:$0xff] %vm1434, %v1458
    %1467 = vst.msk [vmem:[#allocation2 + $0x78] sm:$0xff] %vm1434, %v1459
    %1468 = vst.msk [vmem:[#allocation2 + $0x80] sm:$0xff] %vm1434, %v1460
    %v1469 = vld [vmem:[%s4 + $0x40] sm:$0xff]
    %1470 = vst.msk [vmem:[#allocation2 + $0x88] sm:$0xff] %vm1434, %v1469
    %v1471 = vld [vmem:[#allocation2] sm:$0xff]
    %v1472 = vld [vmem:[#allocation2 + $0x8] sm:$0xff]
    %v1473 = vld [vmem:[#allocation2 + $0x10] sm:$0xff]
    %v1474 = vld [vmem:[#allocation2 + $0x18] sm:$0xff]
    %v1475 = vld [vmem:[#allocation2 + $0x20] sm:$0xff]
    %v1476 = vld [vmem:[#allocation2 + $0x28] sm:$0xff]
    %v1477 = vld [vmem:[#allocation2 + $0x30] sm:$0xff]
    %v1478 = vld [vmem:[#allocation2 + $0x38] sm:$0xff]
    %v1479 = vld [vmem:[#allocation2 + $0x40] sm:$0xff]
    %v1480 = vld [vmem:[#allocation2 + $0x48] sm:$0xff]
    %v1481 = vld [vmem:[#allocation2 + $0x50] sm:$0xff]
    %v1482 = vld [vmem:[#allocation2 + $0x58] sm:$0xff]
    %v1483 = vld [vmem:[#allocation2 + $0x60] sm:$0xff]
    %v1484 = vld [vmem:[#allocation2 + $0x68] sm:$0xff]
    %v1485 = vld [vmem:[#allocation2 + $0x70] sm:$0xff]
    %v1486 = vld [vmem:[#allocation2 + $0x78] sm:$0xff]
    %v1487 = vld [vmem:[#allocation2 + $0x80] sm:$0xff]
    %v1488 = vld [vmem:[#allocation2 + $0x88] sm:$0xff]
    %v1489 = vlaneseq
    %v1490 = vand.u32 %v1489, 127
    %vm1491 = vcmp.lt.s32.totalorder %v1490, 65
    %v1492 = vsel %vm1491, 0.0, -1e+30
    %v1493 = vld [vmem:[%s5] sm:$0x1]
    %v1494 = vld [vmem:[%s6] sm:$0x1]
    %v1495 = vsel %vm1434, %v1471, 0.0
    %1496 = vadd.xlane.f32.xlu0 %v1495
    %v1497 = vpop.xlane.xlu0 %1496
    %v1498 = vsel %vm1434, %v1472, 0.0
    %1499 = vadd.xlane.f32.xlu0 %v1498
    %v1500 = vpop.xlane.xlu0 %1499
    %v1501 = vsel %vm1434, %v1473, 0.0
    %1502 = vadd.xlane.f32.xlu0 %v1501
    %v1503 = vpop.xlane.xlu0 %1502
    %v1504 = vsel %vm1434, %v1474, 0.0
    %1505 = vadd.xlane.f32.xlu0 %v1504
    %v1506 = vpop.xlane.xlu0 %1505
    %v1507 = vsel %vm1434, %v1475, 0.0
    %1508 = vadd.xlane.f32.xlu0 %v1507
    %v1509 = vpop.xlane.xlu0 %1508
    %v1510 = vsel %vm1434, %v1476, 0.0
    %1511 = vadd.xlane.f32.xlu0 %v1510
    %v1512 = vpop.xlane.xlu0 %1511
    %v1513 = vsel %vm1434, %v1477, 0.0
    %1514 = vadd.xlane.f32.xlu0 %v1513
    %v1515 = vpop.xlane.xlu0 %1514
    %v1516 = vsel %vm1434, %v1478, 0.0
    %1517 = vadd.xlane.f32.xlu0 %v1516
    %v1518 = vpop.xlane.xlu0 %1517
    %v1519 = vsel %vm1434, %v1479, 0.0
    %1520 = vadd.xlane.f32.xlu0 %v1519
    %v1521 = vpop.xlane.xlu0 %1520
    %v1522 = vsel %vm1434, %v1480, 0.0
    %1523 = vadd.xlane.f32.xlu0 %v1522
    %v1524 = vpop.xlane.xlu0 %1523
    %v1525 = vsel %vm1434, %v1481, 0.0
    %1526 = vadd.xlane.f32.xlu0 %v1525
    %v1527 = vpop.xlane.xlu0 %1526
    %v1528 = vsel %vm1434, %v1482, 0.0
    %1529 = vadd.xlane.f32.xlu0 %v1528
    %v1530 = vpop.xlane.xlu0 %1529
    %v1531 = vsel %vm1434, %v1483, 0.0
    %1532 = vadd.xlane.f32.xlu0 %v1531
    %v1533 = vpop.xlane.xlu0 %1532
    %v1534 = vsel %vm1434, %v1484, 0.0
    %1535 = vadd.xlane.f32.xlu0 %v1534
    %v1536 = vpop.xlane.xlu0 %1535
    %v1537 = vsel %vm1434, %v1485, 0.0
    %1538 = vadd.xlane.f32.xlu0 %v1537
    %v1539 = vpop.xlane.xlu0 %1538
    %v1540 = vsel %vm1434, %v1486, 0.0
    %1541 = vadd.xlane.f32.xlu0 %v1540
    %v1542 = vpop.xlane.xlu0 %1541
    %v1543 = vsel %vm1434, %v1487, 0.0
    %1544 = vadd.xlane.f32.xlu0 %v1543
    %v1545 = vpop.xlane.xlu0 %1544
    %v1546 = vsel %vm1434, %v1488, 0.0
    %1547 = vadd.xlane.f32.xlu0 %v1546
    %v1548 = vpop.xlane.xlu0 %1547
    %v1549 = vrcp.pop 32.0
    %v1550 = vmul.f32 %v1497, %v1549
    %v1551 = vmul.f32 %v1500, %v1549
    %v1552 = vmul.f32 %v1503, %v1549
    %v1553 = vmul.f32 %v1506, %v1549
    %v1554 = vmul.f32 %v1509, %v1549
    %v1555 = vmul.f32 %v1512, %v1549
    %v1556 = vmul.f32 %v1515, %v1549
    %v1557 = vmul.f32 %v1518, %v1549
    %v1558 = vmul.f32 %v1521, %v1549
    %v1559 = vmul.f32 %v1524, %v1549
    %v1560 = vmul.f32 %v1527, %v1549
    %v1561 = vmul.f32 %v1530, %v1549
    %v1562 = vmul.f32 %v1533, %v1549
    %v1563 = vmul.f32 %v1536, %v1549
    %v1564 = vmul.f32 %v1539, %v1549
    %v1565 = vmul.f32 %v1542, %v1549
    %v1566 = vmul.f32 %v1545, %v1549
    %v1567 = vmul.f32 %v1548, %v1549
    %v1568 = vsub.f32 %v1471, %v1550
    %v1569 = vsub.f32 %v1472, %v1551
    %v1570 = vsub.f32 %v1473, %v1552
    %v1571 = vsub.f32 %v1474, %v1553
    %v1572 = vsub.f32 %v1475, %v1554
    %v1573 = vsub.f32 %v1476, %v1555
    %v1574 = vsub.f32 %v1477, %v1556
    %v1575 = vsub.f32 %v1478, %v1557
    %v1576 = vsub.f32 %v1479, %v1558
    %v1577 = vsub.f32 %v1480, %v1559
    %v1578 = vsub.f32 %v1481, %v1560
    %v1579 = vsub.f32 %v1482, %v1561
    %v1580 = vsub.f32 %v1483, %v1562
    %v1581 = vsub.f32 %v1484, %v1563
    %v1582 = vsub.f32 %v1485, %v1564
    %v1583 = vsub.f32 %v1486, %v1565
    %v1584 = vsub.f32 %v1487, %v1566
    %v1585 = vsub.f32 %v1488, %v1567
    %v1586 = vmul.f32 %v1568, %v1568
    %v1587 = vmul.f32 %v1569, %v1569
    %v1588 = vmul.f32 %v1570, %v1570
    %v1589 = vmul.f32 %v1571, %v1571
    %v1590 = vmul.f32 %v1572, %v1572
    %v1591 = vmul.f32 %v1573, %v1573
    %v1592 = vmul.f32 %v1574, %v1574
    %v1593 = vmul.f32 %v1575, %v1575
    %v1594 = vmul.f32 %v1576, %v1576
    %v1595 = vmul.f32 %v1577, %v1577
    %v1596 = vmul.f32 %v1578, %v1578
    %v1597 = vmul.f32 %v1579, %v1579
    %v1598 = vmul.f32 %v1580, %v1580
    %v1599 = vmul.f32 %v1581, %v1581
    %v1600 = vmul.f32 %v1582, %v1582
    %v1601 = vmul.f32 %v1583, %v1583
    %v1602 = vmul.f32 %v1584, %v1584
    %v1603 = vmul.f32 %v1585, %v1585
    %v1604 = vsel %vm1434, %v1586, 0.0
    %1605 = vadd.xlane.f32.xlu0 %v1604
    %v1606 = vpop.xlane.xlu0 %1605
    %v1607 = vsel %vm1434, %v1587, 0.0
    %1608 = vadd.xlane.f32.xlu0 %v1607
    %v1609 = vpop.xlane.xlu0 %1608
    %v1610 = vsel %vm1434, %v1588, 0.0
    %1611 = vadd.xlane.f32.xlu0 %v1610
    %v1612 = vpop.xlane.xlu0 %1611
    %v1613 = vsel %vm1434, %v1589, 0.0
    %1614 = vadd.xlane.f32.xlu0 %v1613
    %v1615 = vpop.xlane.xlu0 %1614
    %v1616 = vsel %vm1434, %v1590, 0.0
    %1617 = vadd.xlane.f32.xlu0 %v1616
    %v1618 = vpop.xlane.xlu0 %1617
    %v1619 = vsel %vm1434, %v1591, 0.0
    %1620 = vadd.xlane.f32.xlu0 %v1619
    %v1621 = vpop.xlane.xlu0 %1620
    %v1622 = vsel %vm1434, %v1592, 0.0
    %1623 = vadd.xlane.f32.xlu0 %v1622
    %v1624 = vpop.xlane.xlu0 %1623
    %v1625 = vsel %vm1434, %v1593, 0.0
    %1626 = vadd.xlane.f32.xlu0 %v1625
    %v1627 = vpop.xlane.xlu0 %1626
    %v1628 = vsel %vm1434, %v1594, 0.0
    %1629 = vadd.xlane.f32.xlu0 %v1628
    %v1630 = vpop.xlane.xlu0 %1629
    %v1631 = vsel %vm1434, %v1595, 0.0
    %1632 = vadd.xlane.f32.xlu0 %v1631
    %v1633 = vpop.xlane.xlu0 %1632
    %v1634 = vsel %vm1434, %v1596, 0.0
    %1635 = vadd.xlane.f32.xlu0 %v1634
    %v1636 = vpop.xlane.xlu0 %1635
    %v1637 = vsel %vm1434, %v1597, 0.0
    %1638 = vadd.xlane.f32.xlu0 %v1637
    %v1639 = vpop.xlane.xlu0 %1638
    %v1640 = vsel %vm1434, %v1598, 0.0
    %1641 = vadd.xlane.f32.xlu0 %v1640
    %v1642 = vpop.xlane.xlu0 %1641
    %v1643 = vsel %vm1434, %v1599, 0.0
    %1644 = vadd.xlane.f32.xlu0 %v1643
    %v1645 = vpop.xlane.xlu0 %1644
    %v1646 = vsel %vm1434, %v1600, 0.0
    %1647 = vadd.xlane.f32.xlu0 %v1646
    %v1648 = vpop.xlane.xlu0 %1647
    %v1649 = vsel %vm1434, %v1601, 0.0
    %1650 = vadd.xlane.f32.xlu0 %v1649
    %v1651 = vpop.xlane.xlu0 %1650
    %v1652 = vsel %vm1434, %v1602, 0.0
    %1653 = vadd.xlane.f32.xlu0 %v1652
    %v1654 = vpop.xlane.xlu0 %1653
    %v1655 = vsel %vm1434, %v1603, 0.0
    %1656 = vadd.xlane.f32.xlu0 %v1655
    %v1657 = vpop.xlane.xlu0 %1656
    %v1658 = vmul.f32 %v1606, %v1549
    %v1659 = vmul.f32 %v1609, %v1549
    %v1660 = vmul.f32 %v1612, %v1549
    %v1661 = vmul.f32 %v1615, %v1549
    %v1662 = vmul.f32 %v1618, %v1549
    %v1663 = vmul.f32 %v1621, %v1549
    %v1664 = vmul.f32 %v1624, %v1549
    %v1665 = vmul.f32 %v1627, %v1549
    %v1666 = vmul.f32 %v1630, %v1549
    %v1667 = vmul.f32 %v1633, %v1549
    %v1668 = vmul.f32 %v1636, %v1549
    %v1669 = vmul.f32 %v1639, %v1549
    %v1670 = vmul.f32 %v1642, %v1549
    %v1671 = vmul.f32 %v1645, %v1549
    %v1672 = vmul.f32 %v1648, %v1549
    %v1673 = vmul.f32 %v1651, %v1549
    %v1674 = vmul.f32 %v1654, %v1549
    %v1675 = vmul.f32 %v1657, %v1549
    %v1676 = vadd.f32 %v1658, 1e-05
    %v1677 = vadd.f32 %v1659, 1e-05
    %v1678 = vadd.f32 %v1660, 1e-05
    %v1679 = vadd.f32 %v1661, 1e-05
    %v1680 = vadd.f32 %v1662, 1e-05
    %v1681 = vadd.f32 %v1663, 1e-05
    %v1682 = vadd.f32 %v1664, 1e-05
    %v1683 = vadd.f32 %v1665, 1e-05
    %v1684 = vadd.f32 %v1666, 1e-05
    %v1685 = vadd.f32 %v1667, 1e-05
    %v1686 = vadd.f32 %v1668, 1e-05
    %v1687 = vadd.f32 %v1669, 1e-05
    %v1688 = vadd.f32 %v1670, 1e-05
    %v1689 = vadd.f32 %v1671, 1e-05
    %v1690 = vadd.f32 %v1672, 1e-05
    %v1691 = vadd.f32 %v1673, 1e-05
    %v1692 = vadd.f32 %v1674, 1e-05
    %v1693 = vadd.f32 %v1675, 1e-05
    %v1694 = vrsqrt.pop %v1676
    %v1695 = vrsqrt.pop %v1677
    %v1696 = vrsqrt.pop %v1678
    %v1697 = vrsqrt.pop %v1679
    %v1698 = vrsqrt.pop %v1680
    %v1699 = vrsqrt.pop %v1681
    %v1700 = vrsqrt.pop %v1682
    %v1701 = vrsqrt.pop %v1683
    %v1702 = vrsqrt.pop %v1684
    %v1703 = vrsqrt.pop %v1685
    %v1704 = vrsqrt.pop %v1686
    %v1705 = vrsqrt.pop %v1687
    %v1706 = vrsqrt.pop %v1688
    %v1707 = vrsqrt.pop %v1689
    %v1708 = vrsqrt.pop %v1690
    %v1709 = vrsqrt.pop %v1691
    %v1710 = vrsqrt.pop %v1692
    %v1711 = vrsqrt.pop %v1693
    %v1712 = vmul.f32 %v1568, %v1694
    %v1713 = vmul.f32 %v1569, %v1695
    %v1714 = vmul.f32 %v1570, %v1696
    %v1715 = vmul.f32 %v1571, %v1697
    %v1716 = vmul.f32 %v1572, %v1698
    %v1717 = vmul.f32 %v1573, %v1699
    %v1718 = vmul.f32 %v1574, %v1700
    %v1719 = vmul.f32 %v1575, %v1701
    %v1720 = vmul.f32 %v1576, %v1702
    %v1721 = vmul.f32 %v1577, %v1703
    %v1722 = vmul.f32 %v1578, %v1704
    %v1723 = vmul.f32 %v1579, %v1705
    %v1724 = vmul.f32 %v1580, %v1706
    %v1725 = vmul.f32 %v1581, %v1707
    %v1726 = vmul.f32 %v1582, %v1708
    %v1727 = vmul.f32 %v1583, %v1709
    %v1728 = vmul.f32 %v1584, %v1710
    %v1729 = vmul.f32 %v1585, %v1711
    %v1731 = vlaneseq
    %v1732 = vshrl.u32 %v1731, 7
    %v1733 = vsub.s32 0, %v1732
    %v1734 = vrot.slane %v1493, %v1733
    %v1736 = vmul.f32 %v1712, %v1734
    %v1737 = vmul.f32 %v1713, %v1734
    %v1738 = vmul.f32 %v1714, %v1734
    %v1739 = vmul.f32 %v1715, %v1734
    %v1740 = vmul.f32 %v1716, %v1734
    %v1741 = vmul.f32 %v1717, %v1734
    %v1742 = vmul.f32 %v1718, %v1734
    %v1743 = vmul.f32 %v1719, %v1734
    %v1744 = vmul.f32 %v1720, %v1734
    %v1745 = vmul.f32 %v1721, %v1734
    %v1746 = vmul.f32 %v1722, %v1734
    %v1747 = vmul.f32 %v1723, %v1734
    %v1748 = vmul.f32 %v1724, %v1734
    %v1749 = vmul.f32 %v1725, %v1734
    %v1750 = vmul.f32 %v1726, %v1734
    %v1751 = vmul.f32 %v1727, %v1734
    %v1752 = vmul.f32 %v1728, %v1734
    %v1753 = vmul.f32 %v1729, %v1734
    %v1755 = vlaneseq
    %v1756 = vshrl.u32 %v1755, 7
    %v1757 = vsub.s32 0, %v1756
    %v1758 = vrot.slane %v1494, %v1757
    %v1760 = vadd.f32 %v1736, %v1758
    %v1761 = vadd.f32 %v1737, %v1758
    %v1762 = vadd.f32 %v1738, %v1758
    %v1763 = vadd.f32 %v1739, %v1758
    %v1764 = vadd.f32 %v1740, %v1758
    %v1765 = vadd.f32 %v1741, %v1758
    %v1766 = vadd.f32 %v1742, %v1758
    %v1767 = vadd.f32 %v1743, %v1758
    %v1768 = vadd.f32 %v1744, %v1758
    %v1769 = vadd.f32 %v1745, %v1758
    %v1770 = vadd.f32 %v1746, %v1758
    %v1771 = vadd.f32 %v1747, %v1758
    %v1772 = vadd.f32 %v1748, %v1758
    %v1773 = vadd.f32 %v1749, %v1758
    %v1774 = vadd.f32 %v1750, %v1758
    %v1775 = vadd.f32 %v1751, %v1758
    %v1776 = vadd.f32 %v1752, %v1758
    %v1777 = vadd.f32 %v1753, %v1758
    %v1778 = vld [vmem:[%s7] sm:$0xff]
    %v1779 = vld [vmem:[%s7 + $0x8] sm:$0xff]
    %v1780 = vld [vmem:[%s7 + $0x10] sm:$0xff]
    %v1781 = vld [vmem:[%s7 + $0x18] sm:$0xff]
    %v1782 = vld [vmem:[%s8] sm:$0x1]
    %v1784 = vlaneseq
    %v1785 = vshrl.u32 %v1784, 7
    %v1786 = vsub.s32 0, %v1785
    %v1787 = vrot.slane %v1782, %v1786
    %v1790 = vsel %vm1434, %v1760, 0
    %v1793 = vsel %vm1434, %v1761, 0
    %v1796 = vsel %vm1434, %v1762, 0
    %v1799 = vsel %vm1434, %v1763, 0
    %v1802 = vsel %vm1434, %v1764, 0
    %v1805 = vsel %vm1434, %v1765, 0
    %v1808 = vsel %vm1434, %v1766, 0
    %v1811 = vsel %vm1434, %v1767, 0
    %v1814 = vsel %vm1434, %v1768, 0
    %v1817 = vsel %vm1434, %v1769, 0
    %v1820 = vsel %vm1434, %v1770, 0
    %v1823 = vsel %vm1434, %v1771, 0
    %v1826 = vsel %vm1434, %v1772, 0
    %v1829 = vsel %vm1434, %v1773, 0
    %v1832 = vsel %vm1434, %v1774, 0
    %v1835 = vsel %vm1434, %v1775, 0
    %v1838 = vsel %vm1434, %v1776, 0
    %v1841 = vsel %vm1434, %v1777, 0
    %1843 = vmatprep.subr.mxu0 0.0
    %1844 = vmatpush1.msra.mxu0 %v1778
    %1845 = vmatprep.subr.mxu0 0.0
    %1846 = vmatpush1.msra.mxu0 %v1779
    %1847 = vmatprep.subr.mxu0 0.0
    %1848 = vmatpush1.msra.mxu0 %v1780
    %1849 = vmatprep.subr.mxu0 0.0
    %1850 = vmatpush1.msra.mxu0 %v1781
    %1851 = vmatprep.subr.mxu0 0.0
    %1852 = vmatpush1.msra.mxu0 0.0
    %1853 = vmatprep.subr.mxu0 0.0
    %1854 = vmatpush1.msra.mxu0 0.0
    %1855 = vmatprep.subr.mxu0 0.0
    %1856 = vmatpush1.msra.mxu0 0.0
    %1857 = vmatprep.subr.mxu0 0.0
    %1858 = vmatpush1.msra.mxu0 0.0
    %1859 = vmatprep.subr.mxu0 0.0
    %1860 = vmatpush1.msra.mxu0 0.0
    %1861 = vmatprep.subr.mxu0 0.0
    %1862 = vmatpush1.msra.mxu0 0.0
    %1863 = vmatprep.subr.mxu0 0.0
    %1864 = vmatpush1.msra.mxu0 0.0
    %1865 = vmatprep.subr.mxu0 0.0
    %1866 = vmatpush1.msra.mxu0 0.0
    %1867 = vmatprep.subr.mxu0 0.0
    %1868 = vmatpush1.msra.mxu0 0.0
    %1869 = vmatprep.subr.mxu0 0.0
    %1870 = vmatpush1.msra.mxu0 0.0
    %1871 = vmatprep.subr.mxu0 0.0
    %1872 = vmatpush1.msra.mxu0 0.0
    %1873 = vmatprep.subr.mxu0 0.0
    %1874 = vmatpush1.msra.mxu0 0.0
    %1875 = vmatprep.subr.mxu0 0.0
    %1876 = vmatpush1.msra.mxu0 0.0
    %1877 = vmatprep.subr.mxu0 0.0
    %1878 = vmatpush1.msra.mxu0 0.0
    %1879 = vmatprep.subr.mxu0 0.0
    %1880 = vmatpush1.msra.mxu0 0.0
    %1881 = vmatprep.subr.mxu0 0.0
    %1882 = vmatpush1.msra.mxu0 0.0
    %1883 = vmatprep.subr.mxu0 0.0
    %1884 = vmatpush1.msra.mxu0 0.0
    %1885 = vmatprep.subr.mxu0 0.0
    %1886 = vmatpush1.msra.mxu0 0.0
    %1887 = vmatprep.subr.mxu0 0.0
    %1888 = vmatpush1.msra.mxu0 0.0
    %1889 = vmatprep.subr.mxu0 0.0
    %1890 = vmatpush1.msra.mxu0 0.0
    %1891 = vmatprep.subr.mxu0 0.0
    %1892 = vmatpush1.msra.mxu0 0.0
    %1893 = vmatprep.subr.mxu0 0.0
    %1894 = vmatpush1.msra.mxu0 0.0
    %1895 = vmatprep.subr.mxu0 0.0
    %1896 = vmatpush1.msra.mxu0 0.0
    %1897 = vmatprep.subr.mxu0 0.0
    %1898 = vmatpush1.msra.mxu0 0.0
    %1899 = vmatprep.subr.mxu0 0.0
    %1900 = vmatpush1.msra.mxu0 0.0
    %1901 = vmatprep.subr.mxu0 0.0
    %1902 = vmatpush1.msra.mxu0 0.0
    %1903 = vmatprep.subr.mxu0 0.0
    %1904 = vmatpush1.msra.mxu0 0.0
    %1905 = vmatprep.subr.mxu0 0.0
    %1906 = vmatpush1.msra.mxu0 0.0
    %1907 = vmatprep.mubr.f32.mxu0 0.0
    %1908 = vmatmul.mubr.f32.gmra.mrb[0].mxu0 %v1790
    %v1909 = vpop.f32.mrb[0].mxu0
    %v1910 = vadd.f32 %v1787, %v1909
    %v1911 = vpop.f32.mrb[0].mxu0
    %1912 = vmatprep.mubr.f32.mxu0 0.0
    %1913 = vmatmul.mubr.f32.gmra.mrb[0].mxu0 %v1793
    %v1914 = vpop.f32.mrb[0].mxu0
    %v1915 = vadd.f32 %v1787, %v1914
    %v1916 = vpop.f32.mrb[0].mxu0
    %1917 = vmatprep.mubr.f32.mxu0 0.0
    %1918 = vmatmul.mubr.f32.gmra.mrb[0].mxu0 %v1796
    %v1919 = vpop.f32.mrb[0].mxu0
    %v1920 = vadd.f32 %v1787, %v1919
    %v1921 = vpop.f32.mrb[0].mxu0
    %1922 = vmatprep.mubr.f32.mxu0 0.0
    %1923 = vmatmul.mubr.f32.gmra.mrb[0].mxu0 %v1799
    %v1924 = vpop.f32.mrb[0].mxu0
    %v1925 = vadd.f32 %v1787, %v1924
    %v1926 = vpop.f32.mrb[0].mxu0
    %1927 = vmatprep.mubr.f32.mxu0 0.0
    %1928 = vmatmul.mubr.f32.gmra.mrb[0].mxu0 %v1802
    %v1929 = vpop.f32.mrb[0].mxu0
    %v1930 = vadd.f32 %v1787, %v1929
    %v1931 = vpop.f32.mrb[0].mxu0
    %1932 = vmatprep.mubr.f32.mxu0 0.0
    %1933 = vmatmul.mubr.f32.gmra.mrb[0].mxu0 %v1805
    %v1934 = vpop.f32.mrb[0].mxu0
    %v1935 = vadd.f32 %v1787, %v1934
    %v1936 = vpop.f32.mrb[0].mxu0
    %1937 = vmatprep.mubr.f32.mxu0 0.0
    %1938 = vmatmul.mubr.f32.gmra.mrb[0].mxu0 %v1808
    %v1939 = vpop.f32.mrb[0].mxu0
    %v1940 = vadd.f32 %v1787, %v1939
    %v1941 = vpop.f32.mrb[0].mxu0
    %1942 = vmatprep.mubr.f32.mxu0 0.0
    %1943 = vmatmul.mubr.f32.gmra.mrb[0].mxu0 %v1811
    %v1944 = vpop.f32.mrb[0].mxu0
    %v1945 = vadd.f32 %v1787, %v1944
    %v1946 = vpop.f32.mrb[0].mxu0
    %1947 = vmatprep.mubr.f32.mxu0 0.0
    %1948 = vmatmul.mubr.f32.gmra.mrb[0].mxu0 %v1814
    %v1949 = vpop.f32.mrb[0].mxu0
    %v1950 = vadd.f32 %v1787, %v1949
    %v1951 = vpop.f32.mrb[0].mxu0
    %1952 = vmatprep.mubr.f32.mxu0 0.0
    %1953 = vmatmul.mubr.f32.gmra.mrb[0].mxu0 %v1817
    %v1954 = vpop.f32.mrb[0].mxu0
    %v1955 = vadd.f32 %v1787, %v1954
    %v1956 = vpop.f32.mrb[0].mxu0
    %1957 = vmatprep.mubr.f32.mxu0 0.0
    %1958 = vmatmul.mubr.f32.gmra.mrb[0].mxu0 %v1820
    %v1959 = vpop.f32.mrb[0].mxu0
    %v1960 = vadd.f32 %v1787, %v1959
    %v1961 = vpop.f32.mrb[0].mxu0
    %1962 = vmatprep.mubr.f32.mxu0 0.0
    %1963 = vmatmul.mubr.f32.gmra.mrb[0].mxu0 %v1823
    %v1964 = vpop.f32.mrb[0].mxu0
    %v1965 = vadd.f32 %v1787, %v1964
    %v1966 = vpop.f32.mrb[0].mxu0
    %1967 = vmatprep.mubr.f32.mxu0 0.0
    %1968 = vmatmul.mubr.f32.gmra.mrb[0].mxu0 %v1826
    %v1969 = vpop.f32.mrb[0].mxu0
    %v1970 = vadd.f32 %v1787, %v1969
    %v1971 = vpop.f32.mrb[0].mxu0
    %1972 = vmatprep.mubr.f32.mxu0 0.0
    %1973 = vmatmul.mubr.f32.gmra.mrb[0].mxu0 %v1829
    %v1974 = vpop.f32.mrb[0].mxu0
    %v1975 = vadd.f32 %v1787, %v1974
    %v1976 = vpop.f32.mrb[0].mxu0
    %1977 = vmatprep.mubr.f32.mxu0 0.0
    %1978 = vmatmul.mubr.f32.gmra.mrb[0].mxu0 %v1832
    %v1979 = vpop.f32.mrb[0].mxu0
    %v1980 = vadd.f32 %v1787, %v1979
    %v1981 = vpop.f32.mrb[0].mxu0
    %1982 = vmatprep.mubr.f32.mxu0 0.0
    %1983 = vmatmul.mubr.f32.gmra.mrb[0].mxu0 %v1835
    %v1984 = vpop.f32.mrb[0].mxu0
    %v1985 = vadd.f32 %v1787, %v1984
    %v1986 = vpop.f32.mrb[0].mxu0
    %1987 = vmatprep.mubr.f32.mxu0 0.0
    %1988 = vmatmul.mubr.f32.gmra.mrb[0].mxu0 %v1838
    %v1989 = vpop.f32.mrb[0].mxu0
    %v1990 = vadd.f32 %v1787, %v1989
    %v1991 = vpop.f32.mrb[0].mxu0
    %1992 = vmatprep.mubr.f32.mxu0 0.0
    %1993 = vmatmul.mubr.f32.gmra.mrb[0].mxu0 %v1841
    %v1994 = vpop.f32.mrb[0].mxu0
    %v1995 = vadd.f32 %v1787, %v1994
    %v1996 = vpop.f32.mrb[0].mxu0
    %1997 = vdwg.mxu0
    %2007 = vrot.lane.b32.xlu0 %v1910, 96
    %v2008 = vpop.permute.xlu0 %2007
    %2009 = vrot.lane.b32.xlu0 %v1915, 96
    %v2010 = vpop.permute.xlu0 %2009
    %2011 = vrot.lane.b32.xlu0 %v1920, 96
    %v2012 = vpop.permute.xlu0 %2011
    %2013 = vrot.lane.b32.xlu0 %v1925, 96
    %v2014 = vpop.permute.xlu0 %2013
    %2015 = vrot.lane.b32.xlu0 %v1930, 96
    %v2016 = vpop.permute.xlu0 %2015
    %2017 = vrot.lane.b32.xlu0 %v1935, 96
    %v2018 = vpop.permute.xlu0 %2017
    %2019 = vrot.lane.b32.xlu0 %v1940, 96
    %v2020 = vpop.permute.xlu0 %2019
    %2021 = vrot.lane.b32.xlu0 %v1945, 96
    %v2022 = vpop.permute.xlu0 %2021
    %2023 = vrot.lane.b32.xlu0 %v1950, 96
    %v2024 = vpop.permute.xlu0 %2023
    %vm2025 = vcmask 130048
    %v2026 = vsel %vm2025, %v1910, 0
    %v2028 = vsel %vm2025, %v1915, 0
    %v2030 = vsel %vm2025, %v1920, 0
    %v2032 = vsel %vm2025, %v1925, 0
    %v2034 = vsel %vm2025, %v1930, 0
    %v2036 = vsel %vm2025, %v1935, 0
    %v2038 = vsel %vm2025, %v1940, 0
    %v2040 = vsel %vm2025, %v1945, 0
    %v2042 = vsel %vm2025, %v1950, 0
    %v2044 = vsel %vm2025, %v2008, 0
    %v2046 = vsel %vm2025, %v2010, 0
    %v2048 = vsel %vm2025, %v2012, 0
    %v2050 = vsel %vm2025, %v2014, 0
    %v2052 = vsel %vm2025, %v2016, 0
    %v2054 = vsel %vm2025, %v2018, 0
    %v2056 = vsel %vm2025, %v2020, 0
    %v2058 = vsel %vm2025, %v2022, 0
    %v2060 = vsel %vm2025, %v2024, 0
    %2062 = vmatprep.subr.mxu0 0.0
    %2063 = vmatpush1.xpose.msra.mxu0 %v2044
    %2064 = vmatprep.subr.mxu0 0.0
    %2065 = vmatpush1.xpose.msra.mxu0 %v2046
    %2066 = vmatprep.subr.mxu0 0.0
    %2067 = vmatpush1.xpose.msra.mxu0 %v2048
    %2068 = vmatprep.subr.mxu0 0.0
    %2069 = vmatpush1.xpose.msra.mxu0 %v2050
    %2070 = vmatprep.subr.mxu0 0.0
    %2071 = vmatpush1.xpose.msra.mxu0 %v2052
    %2072 = vmatprep.subr.mxu0 0.0
    %2073 = vmatpush1.xpose.msra.mxu0 %v2054
    %2074 = vmatprep.subr.mxu0 0.0
    %2075 = vmatpush1.xpose.msra.mxu0 %v2056
    %2076 = vmatprep.subr.mxu0 0.0
    %2077 = vmatpush1.xpose.msra.mxu0 %v2058
    %2078 = vmatprep.subr.mxu0 0.0
    %2079 = vmatpush1.xpose.msra.mxu0 %v2060
    %2080 = vmatprep.subr.mxu0 0.0
    %2081 = vmatpush1.xpose.msra.mxu0 0.0
    %2082 = vmatprep.subr.mxu0 0.0
    %2083 = vmatpush1.xpose.msra.mxu0 0.0
    %2084 = vmatprep.subr.mxu0 0.0
    %2085 = vmatpush1.xpose.msra.mxu0 0.0
    %2086 = vmatprep.subr.mxu0 0.0
    %2087 = vmatpush1.xpose.msra.mxu0 0.0
    %2088 = vmatprep.subr.mxu0 0.0
    %2089 = vmatpush1.xpose.msra.mxu0 0.0
    %2090 = vmatprep.subr.mxu0 0.0
    %2091 = vmatpush1.xpose.msra.mxu0 0.0
    %2092 = vmatprep.subr.mxu0 0.0
    %2093 = vmatpush1.xpose.msra.mxu0 0.0
    %2094 = vmatprep.subr.mxu0 0.0
    %2095 = vmatpush1.xpose.msra.mxu0 0.0
    %2096 = vmatprep.subr.mxu0 0.0
    %2097 = vmatpush1.xpose.msra.mxu0 0.0
    %2098 = vmatprep.subr.mxu0 0.0
    %2099 = vmatpush1.xpose.msra.mxu0 0.0
    %2100 = vmatprep.subr.mxu0 0.0
    %2101 = vmatpush1.xpose.msra.mxu0 0.0
    %2102 = vmatprep.subr.mxu0 0.0
    %2103 = vmatpush1.xpose.msra.mxu0 0.0
    %2104 = vmatprep.subr.mxu0 0.0
    %2105 = vmatpush1.xpose.msra.mxu0 0.0
    %2106 = vmatprep.subr.mxu0 0.0
    %2107 = vmatpush1.xpose.msra.mxu0 0.0
    %2108 = vmatprep.subr.mxu0 0.0
    %2109 = vmatpush1.xpose.msra.mxu0 0.0
    %2110 = vmatprep.subr.mxu0 0.0
    %2111 = vmatpush1.xpose.msra.mxu0 0.0
    %2112 = vmatprep.subr.mxu0 0.0
    %2113 = vmatpush1.xpose.msra.mxu0 0.0
    %2114 = vmatprep.subr.mxu0 0.0
    %2115 = vmatpush1.xpose.msra.mxu0 0.0
    %2116 = vmatprep.subr.mxu0 0.0
    %2117 = vmatpush1.xpose.msra.mxu0 0.0
    %2118 = vmatprep.subr.mxu0 0.0
    %2119 = vmatpush1.xpose.msra.mxu0 0.0
    %2120 = vmatprep.subr.mxu0 0.0
    %2121 = vmatpush1.xpose.msra.mxu0 0.0
    %2122 = vmatprep.subr.mxu0 0.0
    %2123 = vmatpush1.xpose.msra.mxu0 0.0
    %2124 = vmatprep.subr.mxu0 0.0
    %2125 = vmatpush1.xpose.msra.mxu0 0.0
    %2126 = vmatprep.mubr.f32.mxu0 0.0
    %2127 = vmatmul.mubr.f32.gmra.mrb[0].mxu0 %v2026
    %v2128 = vpop.f32.mrb[0].mxu0
    %v2129 = vadd.f32 %v1492, %v2128
    %v2130 = vpop.f32.mrb[0].mxu0
    %2131 = vmatprep.mubr.f32.mxu0 0.0
    %2132 = vmatmul.mubr.f32.gmra.mrb[0].mxu0 %v2028
    %v2133 = vpop.f32.mrb[0].mxu0
    %v2134 = vadd.f32 %v1492, %v2133
    %v2135 = vpop.f32.mrb[0].mxu0
    %2136 = vmatprep.mubr.f32.mxu0 0.0
    %2137 = vmatmul.mubr.f32.gmra.mrb[0].mxu0 %v2030
    %v2138 = vpop.f32.mrb[0].mxu0
    %v2139 = vadd.f32 %v1492, %v2138
    %v2140 = vpop.f32.mrb[0].mxu0
    %2141 = vmatprep.mubr.f32.mxu0 0.0
    %2142 = vmatmul.mubr.f32.gmra.mrb[0].mxu0 %v2032
    %v2143 = vpop.f32.mrb[0].mxu0
    %v2144 = vadd.f32 %v1492, %v2143
    %v2145 = vpop.f32.mrb[0].mxu0
    %2146 = vmatprep.mubr.f32.mxu0 0.0
    %2147 = vmatmul.mubr.f32.gmra.mrb[0].mxu0 %v2034
    %v2148 = vpop.f32.mrb[0].mxu0
    %v2149 = vadd.f32 %v1492, %v2148
    %v2150 = vpop.f32.mrb[0].mxu0
    %2151 = vmatprep.mubr.f32.mxu0 0.0
    %2152 = vmatmul.mubr.f32.gmra.mrb[0].mxu0 %v2036
    %v2153 = vpop.f32.mrb[0].mxu0
    %v2154 = vadd.f32 %v1492, %v2153
    %v2155 = vpop.f32.mrb[0].mxu0
    %2156 = vmatprep.mubr.f32.mxu0 0.0
    %2157 = vmatmul.mubr.f32.gmra.mrb[0].mxu0 %v2038
    %v2158 = vpop.f32.mrb[0].mxu0
    %v2159 = vadd.f32 %v1492, %v2158
    %v2160 = vpop.f32.mrb[0].mxu0
    %2161 = vmatprep.mubr.f32.mxu0 0.0
    %2162 = vmatmul.mubr.f32.gmra.mrb[0].mxu0 %v2040
    %v2163 = vpop.f32.mrb[0].mxu0
    %v2164 = vadd.f32 %v1492, %v2163
    %v2165 = vpop.f32.mrb[0].mxu0
    %2166 = vmatprep.mubr.f32.mxu0 0.0
    %2167 = vmatmul.mubr.f32.gmra.mrb[0].mxu0 %v2042
    %v2168 = vpop.f32.mrb[0].mxu0
    %v2169 = vadd.f32 %v1492, %v2168
    %v2170 = vpop.f32.mrb[0].mxu0
    %2171 = vdwg.mxu0
    %vm2172 = vcmask 588800
    %v2173 = vsel %vm2172, %v2129, -inf
    %2174 = vmax.xlane.f32.xlu0 %v2173
    %v2175 = vpop.xlane.xlu0 %2174
    %v2176 = vsel %vm2172, %v2134, -inf
    %2177 = vmax.xlane.f32.xlu0 %v2176
    %v2178 = vpop.xlane.xlu0 %2177
    %v2179 = vsel %vm2172, %v2139, -inf
    %2180 = vmax.xlane.f32.xlu0 %v2179
    %v2181 = vpop.xlane.xlu0 %2180
    %v2182 = vsel %vm2172, %v2144, -inf
    %2183 = vmax.xlane.f32.xlu0 %v2182
    %v2184 = vpop.xlane.xlu0 %2183
    %v2185 = vsel %vm2172, %v2149, -inf
    %2186 = vmax.xlane.f32.xlu0 %v2185
    %v2187 = vpop.xlane.xlu0 %2186
    %v2188 = vsel %vm2172, %v2154, -inf
    %2189 = vmax.xlane.f32.xlu0 %v2188
    %v2190 = vpop.xlane.xlu0 %2189
    %v2191 = vsel %vm2172, %v2159, -inf
    %2192 = vmax.xlane.f32.xlu0 %v2191
    %v2193 = vpop.xlane.xlu0 %2192
    %v2194 = vsel %vm2172, %v2164, -inf
    %2195 = vmax.xlane.f32.xlu0 %v2194
    %v2196 = vpop.xlane.xlu0 %2195
    %v2197 = vsel %vm2172, %v2169, -inf
    %2198 = vmax.xlane.f32.xlu0 %v2197
    %v2199 = vpop.xlane.xlu0 %2198
    %v2200 = vsub.f32 %v2129, %v2175
    %v2201 = vsub.f32 %v2134, %v2178
    %v2202 = vsub.f32 %v2139, %v2181
    %v2203 = vsub.f32 %v2144, %v2184
    %v2204 = vsub.f32 %v2149, %v2187
    %v2205 = vsub.f32 %v2154, %v2190
    %v2206 = vsub.f32 %v2159, %v2193
    %v2207 = vsub.f32 %v2164, %v2196
    %v2208 = vsub.f32 %v2169, %v2199
    %v2209 = vmul.f32 %v2200, 1.442695
    %v2210 = vpow.pop %v2209
    %v2211 = vmul.f32 %v2201, 1.442695
    %v2212 = vpow.pop %v2211
    %v2213 = vmul.f32 %v2202, 1.442695
    %v2214 = vpow.pop %v2213
    %v2215 = vmul.f32 %v2203, 1.442695
    %v2216 = vpow.pop %v2215
    %v2217 = vmul.f32 %v2204, 1.442695
    %v2218 = vpow.pop %v2217
    %v2219 = vmul.f32 %v2205, 1.442695
    %v2220 = vpow.pop %v2219
    %v2221 = vmul.f32 %v2206, 1.442695
    %v2222 = vpow.pop %v2221
    %v2223 = vmul.f32 %v2207, 1.442695
    %v2224 = vpow.pop %v2223
    %v2225 = vmul.f32 %v2208, 1.442695
    %v2226 = vpow.pop %v2225
    %v2227 = vsel %vm2172, %v2210, 0.0
    %2228 = vadd.xlane.f32.xlu0 %v2227
    %v2229 = vpop.xlane.xlu0 %2228
    %v2230 = vsel %vm2172, %v2212, 0.0
    %2231 = vadd.xlane.f32.xlu0 %v2230
    %v2232 = vpop.xlane.xlu0 %2231
    %v2233 = vsel %vm2172, %v2214, 0.0
    %2234 = vadd.xlane.f32.xlu0 %v2233
    %v2235 = vpop.xlane.xlu0 %2234
    %v2236 = vsel %vm2172, %v2216, 0.0
    %2237 = vadd.xlane.f32.xlu0 %v2236
    %v2238 = vpop.xlane.xlu0 %2237
    %v2239 = vsel %vm2172, %v2218, 0.0
    %2240 = vadd.xlane.f32.xlu0 %v2239
    %v2241 = vpop.xlane.xlu0 %2240
    %v2242 = vsel %vm2172, %v2220, 0.0
    %2243 = vadd.xlane.f32.xlu0 %v2242
    %v2244 = vpop.xlane.xlu0 %2243
    %v2245 = vsel %vm2172, %v2222, 0.0
    %2246 = vadd.xlane.f32.xlu0 %v2245
    %v2247 = vpop.xlane.xlu0 %2246
    %v2248 = vsel %vm2172, %v2224, 0.0
    %2249 = vadd.xlane.f32.xlu0 %v2248
    %v2250 = vpop.xlane.xlu0 %2249
    %v2251 = vsel %vm2172, %v2226, 0.0
    %2252 = vadd.xlane.f32.xlu0 %v2251
    %v2253 = vpop.xlane.xlu0 %2252
    %v2254 = vrcp.pop %v2229
    %v2255 = vrcp.pop %v2232
    %v2256 = vrcp.pop %v2235
    %v2257 = vrcp.pop %v2238
    %v2258 = vrcp.pop %v2241
    %v2259 = vrcp.pop %v2244
    %v2260 = vrcp.pop %v2247
    %v2261 = vrcp.pop %v2250
    %v2262 = vrcp.pop %v2253
    %2263 = vrot.lane.b32.xlu0 %v1910, 64
    %v2264 = vpop.permute.xlu0 %2263
    %2265 = vrot.lane.b32.xlu0 %v1915, 64
    %v2266 = vpop.permute.xlu0 %2265
    %2267 = vrot.lane.b32.xlu0 %v1920, 64
    %v2268 = vpop.permute.xlu0 %2267
    %2269 = vrot.lane.b32.xlu0 %v1925, 64
    %v2270 = vpop.permute.xlu0 %2269
    %2271 = vrot.lane.b32.xlu0 %v1930, 64
    %v2272 = vpop.permute.xlu0 %2271
    %2273 = vrot.lane.b32.xlu0 %v1935, 64
    %v2274 = vpop.permute.xlu0 %2273
    %2275 = vrot.lane.b32.xlu0 %v1940, 64
    %v2276 = vpop.permute.xlu0 %2275
    %2277 = vrot.lane.b32.xlu0 %v1945, 64
    %v2278 = vpop.permute.xlu0 %2277
    %2279 = vrot.lane.b32.xlu0 %v1950, 64
    %v2280 = vpop.permute.xlu0 %2279
    %v2291 = vsel %vm2172, %v2210, 0
    %v2294 = vsel %vm2172, %v2212, 0
    %v2297 = vsel %vm2172, %v2214, 0
    %v2300 = vsel %vm2172, %v2216, 0
    %v2303 = vsel %vm2172, %v2218, 0
    %v2306 = vsel %vm2172, %v2220, 0
    %v2309 = vsel %vm2172, %v2222, 0
    %v2312 = vsel %vm2172, %v2224, 0
    %v2315 = vsel %vm2172, %v2226, 0
    %2317 = vmatprep.subr.mxu0 0.0
    %2318 = vmatpush1.msra.mxu0 %v2264
    %2319 = vmatprep.subr.mxu0 0.0
    %2320 = vmatpush1.msra.mxu0 %v2266
    %2321 = vmatprep.subr.mxu0 0.0
    %2322 = vmatpush1.msra.mxu0 %v2268
    %2323 = vmatprep.subr.mxu0 0.0
    %2324 = vmatpush1.msra.mxu0 %v2270
    %2325 = vmatprep.subr.mxu0 0.0
    %2326 = vmatpush1.msra.mxu0 %v2272
    %2327 = vmatprep.subr.mxu0 0.0
    %2328 = vmatpush1.msra.mxu0 %v2274
    %2329 = vmatprep.subr.mxu0 0.0
    %2330 = vmatpush1.msra.mxu0 %v2276
    %2331 = vmatprep.subr.mxu0 0.0
    %2332 = vmatpush1.msra.mxu0 %v2278
    %2333 = vmatprep.subr.mxu0 0.0
    %2334 = vmatpush1.msra.mxu0 %v2280
    %2335 = vmatprep.subr.mxu0 0.0
    %2336 = vmatpush1.msra.mxu0 0.0
    %2337 = vmatprep.subr.mxu0 0.0
    %2338 = vmatpush1.msra.mxu0 0.0
    %2339 = vmatprep.subr.mxu0 0.0
    %2340 = vmatpush1.msra.mxu0 0.0
    %2341 = vmatprep.subr.mxu0 0.0
    %2342 = vmatpush1.msra.mxu0 0.0
    %2343 = vmatprep.subr.mxu0 0.0
    %2344 = vmatpush1.msra.mxu0 0.0
    %2345 = vmatprep.subr.mxu0 0.0
    %2346 = vmatpush1.msra.mxu0 0.0
    %2347 = vmatprep.subr.mxu0 0.0
    %2348 = vmatpush1.msra.mxu0 0.0
    %2349 = vmatprep.subr.mxu0 0.0
    %2350 = vmatpush1.msra.mxu0 0.0
    %2351 = vmatprep.subr.mxu0 0.0
    %2352 = vmatpush1.msra.mxu0 0.0
    %2353 = vmatprep.subr.mxu0 0.0
    %2354 = vmatpush1.msra.mxu0 0.0
    %2355 = vmatprep.subr.mxu0 0.0
    %2356 = vmatpush1.msra.mxu0 0.0
    %2357 = vmatprep.subr.mxu0 0.0
    %2358 = vmatpush1.msra.mxu0 0.0
    %2359 = vmatprep.subr.mxu0 0.0
    %2360 = vmatpush1.msra.mxu0 0.0
    %2361 = vmatprep.subr.mxu0 0.0
    %2362 = vmatpush1.msra.mxu0 0.0
    %2363 = vmatprep.subr.mxu0 0.0
    %2364 = vmatpush1.msra.mxu0 0.0
    %2365 = vmatprep.subr.mxu0 0.0
    %2366 = vmatpush1.msra.mxu0 0.0
    %2367 = vmatprep.subr.mxu0 0.0
    %2368 = vmatpush1.msra.mxu0 0.0
    %2369 = vmatprep.subr.mxu0 0.0
    %2370 = vmatpush1.msra.mxu0 0.0
    %2371 = vmatprep.subr.mxu0 0.0
    %2372 = vmatpush1.msra.mxu0 0.0
    %2373 = vmatprep.subr.mxu0 0.0
    %2374 = vmatpush1.msra.mxu0 0.0
    %2375 = vmatprep.subr.mxu0 0.0
    %2376 = vmatpush1.msra.mxu0 0.0
    %2377 = vmatprep.subr.mxu0 0.0
    %2378 = vmatpush1.msra.mxu0 0.0
    %2379 = vmatprep.subr.mxu0 0.0
    %2380 = vmatpush1.msra.mxu0 0.0
    %2381 = vmatprep.mubr.f32.mxu0 0.0
    %2382 = vmatmul.mubr.f32.gmra.mrb[0].mxu0 %v2291
    %v2383 = vpop.f32.mrb[0].mxu0
    %v2384 = vadd.f32 0.0, %v2383
    %v2385 = vpop.f32.mrb[0].mxu0
    %2386 = vmatprep.mubr.f32.mxu0 0.0
    %2387 = vmatmul.mubr.f32.gmra.mrb[0].mxu0 %v2294
    %v2388 = vpop.f32.mrb[0].mxu0
    %v2389 = vadd.f32 0.0, %v2388
    %v2390 = vpop.f32.mrb[0].mxu0
    %2391 = vmatprep.mubr.f32.mxu0 0.0
    %2392 = vmatmul.mubr.f32.gmra.mrb[0].mxu0 %v2297
    %v2393 = vpop.f32.mrb[0].mxu0
    %v2394 = vadd.f32 0.0, %v2393
    %v2395 = vpop.f32.mrb[0].mxu0
    %2396 = vmatprep.mubr.f32.mxu0 0.0
    %2397 = vmatmul.mubr.f32.gmra.mrb[0].mxu0 %v2300
    %v2398 = vpop.f32.mrb[0].mxu0
    %v2399 = vadd.f32 0.0, %v2398
    %v2400 = vpop.f32.mrb[0].mxu0
    %2401 = vmatprep.mubr.f32.mxu0 0.0
    %2402 = vmatmul.mubr.f32.gmra.mrb[0].mxu0 %v2303
    %v2403 = vpop.f32.mrb[0].mxu0
    %v2404 = vadd.f32 0.0, %v2403
    %v2405 = vpop.f32.mrb[0].mxu0
    %2406 = vmatprep.mubr.f32.mxu0 0.0
    %2407 = vmatmul.mubr.f32.gmra.mrb[0].mxu0 %v2306
    %v2408 = vpop.f32.mrb[0].mxu0
    %v2409 = vadd.f32 0.0, %v2408
    %v2410 = vpop.f32.mrb[0].mxu0
    %2411 = vmatprep.mubr.f32.mxu0 0.0
    %2412 = vmatmul.mubr.f32.gmra.mrb[0].mxu0 %v2309
    %v2413 = vpop.f32.mrb[0].mxu0
    %v2414 = vadd.f32 0.0, %v2413
    %v2415 = vpop.f32.mrb[0].mxu0
    %2416 = vmatprep.mubr.f32.mxu0 0.0
    %2417 = vmatmul.mubr.f32.gmra.mrb[0].mxu0 %v2312
    %v2418 = vpop.f32.mrb[0].mxu0
    %v2419 = vadd.f32 0.0, %v2418
    %v2420 = vpop.f32.mrb[0].mxu0
    %2421 = vmatprep.mubr.f32.mxu0 0.0
    %2422 = vmatmul.mubr.f32.gmra.mrb[0].mxu0 %v2315
    %v2423 = vpop.f32.mrb[0].mxu0
    %v2424 = vadd.f32 0.0, %v2423
    %v2425 = vpop.f32.mrb[0].mxu0
    %2426 = vdwg.mxu0
    %v2427 = vmul.f32 %v2384, %v2254
    %v2428 = vmul.f32 %v2389, %v2255
    %v2429 = vmul.f32 %v2394, %v2256
    %v2430 = vmul.f32 %v2399, %v2257
    %v2431 = vmul.f32 %v2404, %v2258
    %v2432 = vmul.f32 %v2409, %v2259
    %v2433 = vmul.f32 %v2414, %v2260
    %v2434 = vmul.f32 %v2419, %v2261
    %v2435 = vmul.f32 %v2424, %v2262
    %2436 = vst.msk [vmem:[#allocation3] sm:$0xff] %vm2025, %v2427
    %2437 = vst.msk [vmem:[#allocation3 + $0x8] sm:$0xff] %vm2025, %v2428
    %2438 = vst.msk [vmem:[#allocation3 + $0x10] sm:$0xff] %vm2025, %v2429
    %2439 = vst.msk [vmem:[#allocation3 + $0x18] sm:$0xff] %vm2025, %v2430
    %2440 = vst.msk [vmem:[#allocation3 + $0x20] sm:$0xff] %vm2025, %v2431
    %2441 = vst.msk [vmem:[#allocation3 + $0x28] sm:$0xff] %vm2025, %v2432
    %2442 = vst.msk [vmem:[#allocation3 + $0x30] sm:$0xff] %vm2025, %v2433
    %2443 = vst.msk [vmem:[#allocation3 + $0x38] sm:$0xff] %vm2025, %v2434
    %2444 = vst.msk [vmem:[#allocation3 + $0x40] sm:$0xff] %vm2025, %v2435
    %2445 = vrot.lane.b32.xlu0 %v1910, 112
    %v2446 = vpop.permute.xlu0 %2445
    %2447 = vrot.lane.b32.xlu0 %v1915, 112
    %v2448 = vpop.permute.xlu0 %2447
    %2449 = vrot.lane.b32.xlu0 %v1920, 112
    %v2450 = vpop.permute.xlu0 %2449
    %2451 = vrot.lane.b32.xlu0 %v1925, 112
    %v2452 = vpop.permute.xlu0 %2451
    %2453 = vrot.lane.b32.xlu0 %v1930, 112
    %v2454 = vpop.permute.xlu0 %2453
    %2455 = vrot.lane.b32.xlu0 %v1935, 112
    %v2456 = vpop.permute.xlu0 %2455
    %2457 = vrot.lane.b32.xlu0 %v1940, 112
    %v2458 = vpop.permute.xlu0 %2457
    %2459 = vrot.lane.b32.xlu0 %v1945, 112
    %v2460 = vpop.permute.xlu0 %2459
    %2461 = vrot.lane.b32.xlu0 %v1950, 112
    %v2462 = vpop.permute.xlu0 %2461
    %2463 = vrot.lane.b32.xlu0 %v1910, 80
    %v2464 = vpop.permute.xlu0 %2463
    %2465 = vrot.lane.b32.xlu0 %v1915, 80
    %v2466 = vpop.permute.xlu0 %2465
    %2467 = vrot.lane.b32.xlu0 %v1920, 80
    %v2468 = vpop.permute.xlu0 %2467
    %2469 = vrot.lane.b32.xlu0 %v1925, 80
    %v2470 = vpop.permute.xlu0 %2469
    %2471 = vrot.lane.b32.xlu0 %v1930, 80
    %v2472 = vpop.permute.xlu0 %2471
    %2473 = vrot.lane.b32.xlu0 %v1935, 80
    %v2474 = vpop.permute.xlu0 %2473
    %2475 = vrot.lane.b32.xlu0 %v1940, 80
    %v2476 = vpop.permute.xlu0 %2475
    %2477 = vrot.lane.b32.xlu0 %v1945, 80
    %v2478 = vpop.permute.xlu0 %2477
    %2479 = vrot.lane.b32.xlu0 %v1950, 80
    %v2480 = vpop.permute.xlu0 %2479
    %v2481 = vsel %vm2025, %v2446, 0
    %v2483 = vsel %vm2025, %v2448, 0
    %v2485 = vsel %vm2025, %v2450, 0
    %v2487 = vsel %vm2025, %v2452, 0
    %v2489 = vsel %vm2025, %v2454, 0
    %v2491 = vsel %vm2025, %v2456, 0
    %v2493 = vsel %vm2025, %v2458, 0
    %v2495 = vsel %vm2025, %v2460, 0
    %v2497 = vsel %vm2025, %v2462, 0
    %v2499 = vsel %vm2025, %v2464, 0
    %v2501 = vsel %vm2025, %v2466, 0
    %v2503 = vsel %vm2025, %v2468, 0
    %v2505 = vsel %vm2025, %v2470, 0
    %v2507 = vsel %vm2025, %v2472, 0
    %v2509 = vsel %vm2025, %v2474, 0
    %v2511 = vsel %vm2025, %v2476, 0
    %v2513 = vsel %vm2025, %v2478, 0
    %v2515 = vsel %vm2025, %v2480, 0
    %2517 = vmatprep.subr.mxu0 0.0
    %2518 = vmatpush1.xpose.msra.mxu0 %v2499
    %2519 = vmatprep.subr.mxu0 0.0
    %2520 = vmatpush1.xpose.msra.mxu0 %v2501
    %2521 = vmatprep.subr.mxu0 0.0
    %2522 = vmatpush1.xpose.msra.mxu0 %v2503
    %2523 = vmatprep.subr.mxu0 0.0
    %2524 = vmatpush1.xpose.msra.mxu0 %v2505
    %2525 = vmatprep.subr.mxu0 0.0
    %2526 = vmatpush1.xpose.msra.mxu0 %v2507
    %2527 = vmatprep.subr.mxu0 0.0
    %2528 = vmatpush1.xpose.msra.mxu0 %v2509
    %2529 = vmatprep.subr.mxu0 0.0
    %2530 = vmatpush1.xpose.msra.mxu0 %v2511
    %2531 = vmatprep.subr.mxu0 0.0
    %2532 = vmatpush1.xpose.msra.mxu0 %v2513
    %2533 = vmatprep.subr.mxu0 0.0
    %2534 = vmatpush1.xpose.msra.mxu0 %v2515
    %2535 = vmatprep.subr.mxu0 0.0
    %2536 = vmatpush1.xpose.msra.mxu0 0.0
    %2537 = vmatprep.subr.mxu0 0.0
    %2538 = vmatpush1.xpose.msra.mxu0 0.0
    %2539 = vmatprep.subr.mxu0 0.0
    %2540 = vmatpush1.xpose.msra.mxu0 0.0
    %2541 = vmatprep.subr.mxu0 0.0
    %2542 = vmatpush1.xpose.msra.mxu0 0.0
    %2543 = vmatprep.subr.mxu0 0.0
    %2544 = vmatpush1.xpose.msra.mxu0 0.0
    %2545 = vmatprep.subr.mxu0 0.0
    %2546 = vmatpush1.xpose.msra.mxu0 0.0
    %2547 = vmatprep.subr.mxu0 0.0
    %2548 = vmatpush1.xpose.msra.mxu0 0.0
    %2549 = vmatprep.subr.mxu0 0.0
    %2550 = vmatpush1.xpose.msra.mxu0 0.0
    %2551 = vmatprep.subr.mxu0 0.0
    %2552 = vmatpush1.xpose.msra.mxu0 0.0
    %2553 = vmatprep.subr.mxu0 0.0
    %2554 = vmatpush1.xpose.msra.mxu0 0.0
    %2555 = vmatprep.subr.mxu0 0.0
    %2556 = vmatpush1.xpose.msra.mxu0 0.0
    %2557 = vmatprep.subr.mxu0 0.0
    %2558 = vmatpush1.xpose.msra.mxu0 0.0
    %2559 = vmatprep.subr.mxu0 0.0
    %2560 = vmatpush1.xpose.msra.mxu0 0.0
    %2561 = vmatprep.subr.mxu0 0.0
    %2562 = vmatpush1.xpose.msra.mxu0 0.0
    %2563 = vmatprep.subr.mxu0 0.0
    %2564 = vmatpush1.xpose.msra.mxu0 0.0
    %2565 = vmatprep.subr.mxu0 0.0
    %2566 = vmatpush1.xpose.msra.mxu0 0.0
    %2567 = vmatprep.subr.mxu0 0.0
    %2568 = vmatpush1.xpose.msra.mxu0 0.0
    %2569 = vmatprep.subr.mxu0 0.0
    %2570 = vmatpush1.xpose.msra.mxu0 0.0
    %2571 = vmatprep.subr.mxu0 0.0
    %2572 = vmatpush1.xpose.msra.mxu0 0.0
    %2573 = vmatprep.subr.mxu0 0.0
    %2574 = vmatpush1.xpose.msra.mxu0 0.0
    %2575 = vmatprep.subr.mxu0 0.0
    %2576 = vmatpush1.xpose.msra.mxu0 0.0
    %2577 = vmatprep.subr.mxu0 0.0
    %2578 = vmatpush1.xpose.msra.mxu0 0.0
    %2579 = vmatprep.subr.mxu0 0.0
    %2580 = vmatpush1.xpose.msra.mxu0 0.0
    %2581 = vmatprep.mubr.f32.mxu0 0.0
    %2582 = vmatmul.mubr.f32.gmra.mrb[0].mxu0 %v2481
    %v2583 = vpop.f32.mrb[0].mxu0
    %v2584 = vadd.f32 %v1492, %v2583
    %v2585 = vpop.f32.mrb[0].mxu0
    %2586 = vmatprep.mubr.f32.mxu0 0.0
    %2587 = vmatmul.mubr.f32.gmra.mrb[0].mxu0 %v2483
    %v2588 = vpop.f32.mrb[0].mxu0
    %v2589 = vadd.f32 %v1492, %v2588
    %v2590 = vpop.f32.mrb[0].mxu0
    %2591 = vmatprep.mubr.f32.mxu0 0.0
    %2592 = vmatmul.mubr.f32.gmra.mrb[0].mxu0 %v2485
    %v2593 = vpop.f32.mrb[0].mxu0
    %v2594 = vadd.f32 %v1492, %v2593
    %v2595 = vpop.f32.mrb[0].mxu0
    %2596 = vmatprep.mubr.f32.mxu0 0.0
    %2597 = vmatmul.mubr.f32.gmra.mrb[0].mxu0 %v2487
    %v2598 = vpop.f32.mrb[0].mxu0
    %v2599 = vadd.f32 %v1492, %v2598
    %v2600 = vpop.f32.mrb[0].mxu0
    %2601 = vmatprep.mubr.f32.mxu0 0.0
    %2602 = vmatmul.mubr.f32.gmra.mrb[0].mxu0 %v2489
    %v2603 = vpop.f32.mrb[0].mxu0
    %v2604 = vadd.f32 %v1492, %v2603
    %v2605 = vpop.f32.mrb[0].mxu0
    %2606 = vmatprep.mubr.f32.mxu0 0.0
    %2607 = vmatmul.mubr.f32.gmra.mrb[0].mxu0 %v2491
    %v2608 = vpop.f32.mrb[0].mxu0
    %v2609 = vadd.f32 %v1492, %v2608
    %v2610 = vpop.f32.mrb[0].mxu0
    %2611 = vmatprep.mubr.f32.mxu0 0.0
    %2612 = vmatmul.mubr.f32.gmra.mrb[0].mxu0 %v2493
    %v2613 = vpop.f32.mrb[0].mxu0
    %v2614 = vadd.f32 %v1492, %v2613
    %v2615 = vpop.f32.mrb[0].mxu0
    %2616 = vmatprep.mubr.f32.mxu0 0.0
    %2617 = vmatmul.mubr.f32.gmra.mrb[0].mxu0 %v2495
    %v2618 = vpop.f32.mrb[0].mxu0
    %v2619 = vadd.f32 %v1492, %v2618
    %v2620 = vpop.f32.mrb[0].mxu0
    %2621 = vmatprep.mubr.f32.mxu0 0.0
    %2622 = vmatmul.mubr.f32.gmra.mrb[0].mxu0 %v2497
    %v2623 = vpop.f32.mrb[0].mxu0
    %v2624 = vadd.f32 %v1492, %v2623
    %v2625 = vpop.f32.mrb[0].mxu0
    %2626 = vdwg.mxu0
    %v2627 = vsel %vm2172, %v2584, -inf
    %2628 = vmax.xlane.f32.xlu0 %v2627
    %v2629 = vpop.xlane.xlu0 %2628
    %v2630 = vsel %vm2172, %v2589, -inf
    %2631 = vmax.xlane.f32.xlu0 %v2630
    %v2632 = vpop.xlane.xlu0 %2631
    %v2633 = vsel %vm2172, %v2594, -inf
    %2634 = vmax.xlane.f32.xlu0 %v2633
    %v2635 = vpop.xlane.xlu0 %2634
    %v2636 = vsel %vm2172, %v2599, -inf
    %2637 = vmax.xlane.f32.xlu0 %v2636
    %v2638 = vpop.xlane.xlu0 %2637
    %v2639 = vsel %vm2172, %v2604, -inf
    %2640 = vmax.xlane.f32.xlu0 %v2639
    %v2641 = vpop.xlane.xlu0 %2640
    %v2642 = vsel %vm2172, %v2609, -inf
    %2643 = vmax.xlane.f32.xlu0 %v2642
    %v2644 = vpop.xlane.xlu0 %2643
    %v2645 = vsel %vm2172, %v2614, -inf
    %2646 = vmax.xlane.f32.xlu0 %v2645
    %v2647 = vpop.xlane.xlu0 %2646
    %v2648 = vsel %vm2172, %v2619, -inf
    %2649 = vmax.xlane.f32.xlu0 %v2648
    %v2650 = vpop.xlane.xlu0 %2649
    %v2651 = vsel %vm2172, %v2624, -inf
    %2652 = vmax.xlane.f32.xlu0 %v2651
    %v2653 = vpop.xlane.xlu0 %2652
    %v2654 = vsub.f32 %v2584, %v2629
    %v2655 = vsub.f32 %v2589, %v2632
    %v2656 = vsub.f32 %v2594, %v2635
    %v2657 = vsub.f32 %v2599, %v2638
    %v2658 = vsub.f32 %v2604, %v2641
    %v2659 = vsub.f32 %v2609, %v2644
    %v2660 = vsub.f32 %v2614, %v2647
    %v2661 = vsub.f32 %v2619, %v2650
    %v2662 = vsub.f32 %v2624, %v2653
    %v2663 = vmul.f32 %v2654, 1.442695
    %v2664 = vpow.pop %v2663
    %v2665 = vmul.f32 %v2655, 1.442695
    %v2666 = vpow.pop %v2665
    %v2667 = vmul.f32 %v2656, 1.442695
    %v2668 = vpow.pop %v2667
    %v2669 = vmul.f32 %v2657, 1.442695
    %v2670 = vpow.pop %v2669
    %v2671 = vmul.f32 %v2658, 1.442695
    %v2672 = vpow.pop %v2671
    %v2673 = vmul.f32 %v2659, 1.442695
    %v2674 = vpow.pop %v2673
    %v2675 = vmul.f32 %v2660, 1.442695
    %v2676 = vpow.pop %v2675
    %v2677 = vmul.f32 %v2661, 1.442695
    %v2678 = vpow.pop %v2677
    %v2679 = vmul.f32 %v2662, 1.442695
    %v2680 = vpow.pop %v2679
    %v2681 = vsel %vm2172, %v2664, 0.0
    %2682 = vadd.xlane.f32.xlu0 %v2681
    %v2683 = vpop.xlane.xlu0 %2682
    %v2684 = vsel %vm2172, %v2666, 0.0
    %2685 = vadd.xlane.f32.xlu0 %v2684
    %v2686 = vpop.xlane.xlu0 %2685
    %v2687 = vsel %vm2172, %v2668, 0.0
    %2688 = vadd.xlane.f32.xlu0 %v2687
    %v2689 = vpop.xlane.xlu0 %2688
    %v2690 = vsel %vm2172, %v2670, 0.0
    %2691 = vadd.xlane.f32.xlu0 %v2690
    %v2692 = vpop.xlane.xlu0 %2691
    %v2693 = vsel %vm2172, %v2672, 0.0
    %2694 = vadd.xlane.f32.xlu0 %v2693
    %v2695 = vpop.xlane.xlu0 %2694
    %v2696 = vsel %vm2172, %v2674, 0.0
    %2697 = vadd.xlane.f32.xlu0 %v2696
    %v2698 = vpop.xlane.xlu0 %2697
    %v2699 = vsel %vm2172, %v2676, 0.0
    %2700 = vadd.xlane.f32.xlu0 %v2699
    %v2701 = vpop.xlane.xlu0 %2700
    %v2702 = vsel %vm2172, %v2678, 0.0
    %2703 = vadd.xlane.f32.xlu0 %v2702
    %v2704 = vpop.xlane.xlu0 %2703
    %v2705 = vsel %vm2172, %v2680, 0.0
    %2706 = vadd.xlane.f32.xlu0 %v2705
    %v2707 = vpop.xlane.xlu0 %2706
    %v2708 = vrcp.pop %v2683
    %v2709 = vrcp.pop %v2686
    %v2710 = vrcp.pop %v2689
    %v2711 = vrcp.pop %v2692
    %v2712 = vrcp.pop %v2695
    %v2713 = vrcp.pop %v2698
    %v2714 = vrcp.pop %v2701
    %v2715 = vrcp.pop %v2704
    %v2716 = vrcp.pop %v2707
    %2717 = vrot.lane.b32.xlu0 %v1910, 48
    %v2718 = vpop.permute.xlu0 %2717
    %2719 = vrot.lane.b32.xlu0 %v1915, 48
    %v2720 = vpop.permute.xlu0 %2719
    %2721 = vrot.lane.b32.xlu0 %v1920, 48
    %v2722 = vpop.permute.xlu0 %2721
    %2723 = vrot.lane.b32.xlu0 %v1925, 48
    %v2724 = vpop.permute.xlu0 %2723
    %2725 = vrot.lane.b32.xlu0 %v1930, 48
    %v2726 = vpop.permute.xlu0 %2725
    %2727 = vrot.lane.b32.xlu0 %v1935, 48
    %v2728 = vpop.permute.xlu0 %2727
    %2729 = vrot.lane.b32.xlu0 %v1940, 48
    %v2730 = vpop.permute.xlu0 %2729
    %2731 = vrot.lane.b32.xlu0 %v1945, 48
    %v2732 = vpop.permute.xlu0 %2731
    %2733 = vrot.lane.b32.xlu0 %v1950, 48
    %v2734 = vpop.permute.xlu0 %2733
    %v2745 = vsel %vm2172, %v2664, 0
    %v2748 = vsel %vm2172, %v2666, 0
    %v2751 = vsel %vm2172, %v2668, 0
    %v2754 = vsel %vm2172, %v2670, 0
    %v2757 = vsel %vm2172, %v2672, 0
    %v2760 = vsel %vm2172, %v2674, 0
    %v2763 = vsel %vm2172, %v2676, 0
    %v2766 = vsel %vm2172, %v2678, 0
    %v2769 = vsel %vm2172, %v2680, 0
    %2771 = vmatprep.subr.mxu0 0.0
    %2772 = vmatpush1.msra.mxu0 %v2718
    %2773 = vmatprep.subr.mxu0 0.0
    %2774 = vmatpush1.msra.mxu0 %v2720
    %2775 = vmatprep.subr.mxu0 0.0
    %2776 = vmatpush1.msra.mxu0 %v2722
    %2777 = vmatprep.subr.mxu0 0.0
    %2778 = vmatpush1.msra.mxu0 %v2724
    %2779 = vmatprep.subr.mxu0 0.0
    %2780 = vmatpush1.msra.mxu0 %v2726
    %2781 = vmatprep.subr.mxu0 0.0
    %2782 = vmatpush1.msra.mxu0 %v2728
    %2783 = vmatprep.subr.mxu0 0.0
    %2784 = vmatpush1.msra.mxu0 %v2730
    %2785 = vmatprep.subr.mxu0 0.0
    %2786 = vmatpush1.msra.mxu0 %v2732
    %2787 = vmatprep.subr.mxu0 0.0
    %2788 = vmatpush1.msra.mxu0 %v2734
    %2789 = vmatprep.subr.mxu0 0.0
    %2790 = vmatpush1.msra.mxu0 0.0
    %2791 = vmatprep.subr.mxu0 0.0
    %2792 = vmatpush1.msra.mxu0 0.0
    %2793 = vmatprep.subr.mxu0 0.0
    %2794 = vmatpush1.msra.mxu0 0.0
    %2795 = vmatprep.subr.mxu0 0.0
    %2796 = vmatpush1.msra.mxu0 0.0
    %2797 = vmatprep.subr.mxu0 0.0
    %2798 = vmatpush1.msra.mxu0 0.0
    %2799 = vmatprep.subr.mxu0 0.0
    %2800 = vmatpush1.msra.mxu0 0.0
    %2801 = vmatprep.subr.mxu0 0.0
    %2802 = vmatpush1.msra.mxu0 0.0
    %2803 = vmatprep.subr.mxu0 0.0
    %2804 = vmatpush1.msra.mxu0 0.0
    %2805 = vmatprep.subr.mxu0 0.0
    %2806 = vmatpush1.msra.mxu0 0.0
    %2807 = vmatprep.subr.mxu0 0.0
    %2808 = vmatpush1.msra.mxu0 0.0
    %2809 = vmatprep.subr.mxu0 0.0
    %2810 = vmatpush1.msra.mxu0 0.0
    %2811 = vmatprep.subr.mxu0 0.0
    %2812 = vmatpush1.msra.mxu0 0.0
    %2813 = vmatprep.subr.mxu0 0.0
    %2814 = vmatpush1.msra.mxu0 0.0
    %2815 = vmatprep.subr.mxu0 0.0
    %2816 = vmatpush1.msra.mxu0 0.0
    %2817 = vmatprep.subr.mxu0 0.0
    %2818 = vmatpush1.msra.mxu0 0.0
    %2819 = vmatprep.subr.mxu0 0.0
    %2820 = vmatpush1.msra.mxu0 0.0
    %2821 = vmatprep.subr.mxu0 0.0
    %2822 = vmatpush1.msra.mxu0 0.0
    %2823 = vmatprep.subr.mxu0 0.0
    %2824 = vmatpush1.msra.mxu0 0.0
    %2825 = vmatprep.subr.mxu0 0.0
    %2826 = vmatpush1.msra.mxu0 0.0
    %2827 = vmatprep.subr.mxu0 0.0
    %2828 = vmatpush1.msra.mxu0 0.0
    %2829 = vmatprep.subr.mxu0 0.0
    %2830 = vmatpush1.msra.mxu0 0.0
    %2831 = vmatprep.subr.mxu0 0.0
    %2832 = vmatpush1.msra.mxu0 0.0
    %2833 = vmatprep.subr.mxu0 0.0
    %2834 = vmatpush1.msra.mxu0 0.0
    %2835 = vmatprep.mubr.f32.mxu0 0.0
    %2836 = vmatmul.mubr.f32.gmra.mrb[0].mxu0 %v2745
    %v2837 = vpop.f32.mrb[0].mxu0
    %v2838 = vadd.f32 0.0, %v2837
    %v2839 = vpop.f32.mrb[0].mxu0
    %2840 = vmatprep.mubr.f32.mxu0 0.0
    %2841 = vmatmul.mubr.f32.gmra.mrb[0].mxu0 %v2748
    %v2842 = vpop.f32.mrb[0].mxu0
    %v2843 = vadd.f32 0.0, %v2842
    %v2844 = vpop.f32.mrb[0].mxu0
    %2845 = vmatprep.mubr.f32.mxu0 0.0
    %2846 = vmatmul.mubr.f32.gmra.mrb[0].mxu0 %v2751
    %v2847 = vpop.f32.mrb[0].mxu0
    %v2848 = vadd.f32 0.0, %v2847
    %v2849 = vpop.f32.mrb[0].mxu0
    %2850 = vmatprep.mubr.f32.mxu0 0.0
    %2851 = vmatmul.mubr.f32.gmra.mrb[0].mxu0 %v2754
    %v2852 = vpop.f32.mrb[0].mxu0
    %v2853 = vadd.f32 0.0, %v2852
    %v2854 = vpop.f32.mrb[0].mxu0
    %2855 = vmatprep.mubr.f32.mxu0 0.0
    %2856 = vmatmul.mubr.f32.gmra.mrb[0].mxu0 %v2757
    %v2857 = vpop.f32.mrb[0].mxu0
    %v2858 = vadd.f32 0.0, %v2857
    %v2859 = vpop.f32.mrb[0].mxu0
    %2860 = vmatprep.mubr.f32.mxu0 0.0
    %2861 = vmatmul.mubr.f32.gmra.mrb[0].mxu0 %v2760
    %v2862 = vpop.f32.mrb[0].mxu0
    %v2863 = vadd.f32 0.0, %v2862
    %v2864 = vpop.f32.mrb[0].mxu0
    %2865 = vmatprep.mubr.f32.mxu0 0.0
    %2866 = vmatmul.mubr.f32.gmra.mrb[0].mxu0 %v2763
    %v2867 = vpop.f32.mrb[0].mxu0
    %v2868 = vadd.f32 0.0, %v2867
    %v2869 = vpop.f32.mrb[0].mxu0
    %2870 = vmatprep.mubr.f32.mxu0 0.0
    %2871 = vmatmul.mubr.f32.gmra.mrb[0].mxu0 %v2766
    %v2872 = vpop.f32.mrb[0].mxu0
    %v2873 = vadd.f32 0.0, %v2872
    %v2874 = vpop.f32.mrb[0].mxu0
    %2875 = vmatprep.mubr.f32.mxu0 0.0
    %2876 = vmatmul.mubr.f32.gmra.mrb[0].mxu0 %v2769
    %v2877 = vpop.f32.mrb[0].mxu0
    %v2878 = vadd.f32 0.0, %v2877
    %v2879 = vpop.f32.mrb[0].mxu0
    %2880 = vdwg.mxu0
    %v2881 = vmul.f32 %v2838, %v2708
    %v2882 = vmul.f32 %v2843, %v2709
    %v2883 = vmul.f32 %v2848, %v2710
    %v2884 = vmul.f32 %v2853, %v2711
    %v2885 = vmul.f32 %v2858, %v2712
    %v2886 = vmul.f32 %v2863, %v2713
    %v2887 = vmul.f32 %v2868, %v2714
    %v2888 = vmul.f32 %v2873, %v2715
    %v2889 = vmul.f32 %v2878, %v2716
    %2899 = vrot.lane.b32.xlu0 %v2881, 16
    %v2900 = vpop.permute.xlu0 %2899
    %2901 = vrot.lane.b32.xlu0 %v2882, 16
    %v2902 = vpop.permute.xlu0 %2901
    %2903 = vrot.lane.b32.xlu0 %v2883, 16
    %v2904 = vpop.permute.xlu0 %2903
    %2905 = vrot.lane.b32.xlu0 %v2884, 16
    %v2906 = vpop.permute.xlu0 %2905
    %2907 = vrot.lane.b32.xlu0 %v2885, 16
    %v2908 = vpop.permute.xlu0 %2907
    %2909 = vrot.lane.b32.xlu0 %v2886, 16
    %v2910 = vpop.permute.xlu0 %2909
    %2911 = vrot.lane.b32.xlu0 %v2887, 16
    %v2912 = vpop.permute.xlu0 %2911
    %2913 = vrot.lane.b32.xlu0 %v2888, 16
    %v2914 = vpop.permute.xlu0 %2913
    %2915 = vrot.lane.b32.xlu0 %v2889, 16
    %v2916 = vpop.permute.xlu0 %2915
    %vm2926 = vcmask 261248
    %2927 = vst.msk [vmem:[#allocation3] sm:$0xff] %vm2926, %v2900
    %2928 = vst.msk [vmem:[#allocation3 + $0x8] sm:$0xff] %vm2926, %v2902
    %2929 = vst.msk [vmem:[#allocation3 + $0x10] sm:$0xff] %vm2926, %v2904
    %2930 = vst.msk [vmem:[#allocation3 + $0x18] sm:$0xff] %vm2926, %v2906
    %2931 = vst.msk [vmem:[#allocation3 + $0x20] sm:$0xff] %vm2926, %v2908
    %2932 = vst.msk [vmem:[#allocation3 + $0x28] sm:$0xff] %vm2926, %v2910
    %2933 = vst.msk [vmem:[#allocation3 + $0x30] sm:$0xff] %vm2926, %v2912
    %2934 = vst.msk [vmem:[#allocation3 + $0x38] sm:$0xff] %vm2926, %v2914
    %2935 = vst.msk [vmem:[#allocation3 + $0x40] sm:$0xff] %vm2926, %v2916
    %2945 = vrot.lane.b32.xlu0 %v1955, 96
    %v2946 = vpop.permute.xlu0 %2945
    %2947 = vrot.lane.b32.xlu0 %v1960, 96
    %v2948 = vpop.permute.xlu0 %2947
    %2949 = vrot.lane.b32.xlu0 %v1965, 96
    %v2950 = vpop.permute.xlu0 %2949
    %2951 = vrot.lane.b32.xlu0 %v1970, 96
    %v2952 = vpop.permute.xlu0 %2951
    %2953 = vrot.lane.b32.xlu0 %v1975, 96
    %v2954 = vpop.permute.xlu0 %2953
    %2955 = vrot.lane.b32.xlu0 %v1980, 96
    %v2956 = vpop.permute.xlu0 %2955
    %2957 = vrot.lane.b32.xlu0 %v1985, 96
    %v2958 = vpop.permute.xlu0 %2957
    %2959 = vrot.lane.b32.xlu0 %v1990, 96
    %v2960 = vpop.permute.xlu0 %2959
    %2961 = vrot.lane.b32.xlu0 %v1995, 96
    %v2962 = vpop.permute.xlu0 %2961
    %v2963 = vsel %vm2025, %v1955, 0
    %v2965 = vsel %vm2025, %v1960, 0
    %v2967 = vsel %vm2025, %v1965, 0
    %v2969 = vsel %vm2025, %v1970, 0
    %v2971 = vsel %vm2025, %v1975, 0
    %v2973 = vsel %vm2025, %v1980, 0
    %v2975 = vsel %vm2025, %v1985, 0
    %v2977 = vsel %vm2025, %v1990, 0
    %v2979 = vsel %vm2025, %v1995, 0
    %v2981 = vsel %vm2025, %v2946, 0
    %v2983 = vsel %vm2025, %v2948, 0
    %v2985 = vsel %vm2025, %v2950, 0
    %v2987 = vsel %vm2025, %v2952, 0
    %v2989 = vsel %vm2025, %v2954, 0
    %v2991 = vsel %vm2025, %v2956, 0
    %v2993 = vsel %vm2025, %v2958, 0
    %v2995 = vsel %vm2025, %v2960, 0
    %v2997 = vsel %vm2025, %v2962, 0
    %2999 = vmatprep.subr.mxu0 0.0
    %3000 = vmatpush1.xpose.msra.mxu0 %v2981
    %3001 = vmatprep.subr.mxu0 0.0
    %3002 = vmatpush1.xpose.msra.mxu0 %v2983
    %3003 = vmatprep.subr.mxu0 0.0
    %3004 = vmatpush1.xpose.msra.mxu0 %v2985
    %3005 = vmatprep.subr.mxu0 0.0
    %3006 = vmatpush1.xpose.msra.mxu0 %v2987
    %3007 = vmatprep.subr.mxu0 0.0
    %3008 = vmatpush1.xpose.msra.mxu0 %v2989
    %3009 = vmatprep.subr.mxu0 0.0
    %3010 = vmatpush1.xpose.msra.mxu0 %v2991
    %3011 = vmatprep.subr.mxu0 0.0
    %3012 = vmatpush1.xpose.msra.mxu0 %v2993
    %3013 = vmatprep.subr.mxu0 0.0
    %3014 = vmatpush1.xpose.msra.mxu0 %v2995
    %3015 = vmatprep.subr.mxu0 0.0
    %3016 = vmatpush1.xpose.msra.mxu0 %v2997
    %3017 = vmatprep.subr.mxu0 0.0
    %3018 = vmatpush1.xpose.msra.mxu0 0.0
    %3019 = vmatprep.subr.mxu0 0.0
    %3020 = vmatpush1.xpose.msra.mxu0 0.0
    %3021 = vmatprep.subr.mxu0 0.0
    %3022 = vmatpush1.xpose.msra.mxu0 0.0
    %3023 = vmatprep.subr.mxu0 0.0
    %3024 = vmatpush1.xpose.msra.mxu0 0.0
    %3025 = vmatprep.subr.mxu0 0.0
    %3026 = vmatpush1.xpose.msra.mxu0 0.0
    %3027 = vmatprep.subr.mxu0 0.0
    %3028 = vmatpush1.xpose.msra.mxu0 0.0
    %3029 = vmatprep.subr.mxu0 0.0
    %3030 = vmatpush1.xpose.msra.mxu0 0.0
    %3031 = vmatprep.subr.mxu0 0.0
    %3032 = vmatpush1.xpose.msra.mxu0 0.0
    %3033 = vmatprep.subr.mxu0 0.0
    %3034 = vmatpush1.xpose.msra.mxu0 0.0
    %3035 = vmatprep.subr.mxu0 0.0
    %3036 = vmatpush1.xpose.msra.mxu0 0.0
    %3037 = vmatprep.subr.mxu0 0.0
    %3038 = vmatpush1.xpose.msra.mxu0 0.0
    %3039 = vmatprep.subr.mxu0 0.0
    %3040 = vmatpush1.xpose.msra.mxu0 0.0
    %3041 = vmatprep.subr.mxu0 0.0
    %3042 = vmatpush1.xpose.msra.mxu0 0.0
    %3043 = vmatprep.subr.mxu0 0.0
    %3044 = vmatpush1.xpose.msra.mxu0 0.0
    %3045 = vmatprep.subr.mxu0 0.0
    %3046 = vmatpush1.xpose.msra.mxu0 0.0
    %3047 = vmatprep.subr.mxu0 0.0
    %3048 = vmatpush1.xpose.msra.mxu0 0.0
    %3049 = vmatprep.subr.mxu0 0.0
    %3050 = vmatpush1.xpose.msra.mxu0 0.0
    %3051 = vmatprep.subr.mxu0 0.0
    %3052 = vmatpush1.xpose.msra.mxu0 0.0
    %3053 = vmatprep.subr.mxu0 0.0
    %3054 = vmatpush1.xpose.msra.mxu0 0.0
    %3055 = vmatprep.subr.mxu0 0.0
    %3056 = vmatpush1.xpose.msra.mxu0 0.0
    %3057 = vmatprep.subr.mxu0 0.0
    %3058 = vmatpush1.xpose.msra.mxu0 0.0
    %3059 = vmatprep.subr.mxu0 0.0
    %3060 = vmatpush1.xpose.msra.mxu0 0.0
    %3061 = vmatprep.subr.mxu0 0.0
    %3062 = vmatpush1.xpose.msra.mxu0 0.0
    %3063 = vmatprep.mubr.f32.mxu0 0.0
    %3064 = vmatmul.mubr.f32.gmra.mrb[0].mxu0 %v2963
    %v3065 = vpop.f32.mrb[0].mxu0
    %v3066 = vadd.f32 %v1492, %v3065
    %v3067 = vpop.f32.mrb[0].mxu0
    %3068 = vmatprep.mubr.f32.mxu0 0.0
    %3069 = vmatmul.mubr.f32.gmra.mrb[0].mxu0 %v2965
    %v3070 = vpop.f32.mrb[0].mxu0
    %v3071 = vadd.f32 %v1492, %v3070
    %v3072 = vpop.f32.mrb[0].mxu0
    %3073 = vmatprep.mubr.f32.mxu0 0.0
    %3074 = vmatmul.mubr.f32.gmra.mrb[0].mxu0 %v2967
    %v3075 = vpop.f32.mrb[0].mxu0
    %v3076 = vadd.f32 %v1492, %v3075
    %v3077 = vpop.f32.mrb[0].mxu0
    %3078 = vmatprep.mubr.f32.mxu0 0.0
    %3079 = vmatmul.mubr.f32.gmra.mrb[0].mxu0 %v2969
    %v3080 = vpop.f32.mrb[0].mxu0
    %v3081 = vadd.f32 %v1492, %v3080
    %v3082 = vpop.f32.mrb[0].mxu0
    %3083 = vmatprep.mubr.f32.mxu0 0.0
    %3084 = vmatmul.mubr.f32.gmra.mrb[0].mxu0 %v2971
    %v3085 = vpop.f32.mrb[0].mxu0
    %v3086 = vadd.f32 %v1492, %v3085
    %v3087 = vpop.f32.mrb[0].mxu0
    %3088 = vmatprep.mubr.f32.mxu0 0.0
    %3089 = vmatmul.mubr.f32.gmra.mrb[0].mxu0 %v2973
    %v3090 = vpop.f32.mrb[0].mxu0
    %v3091 = vadd.f32 %v1492, %v3090
    %v3092 = vpop.f32.mrb[0].mxu0
    %3093 = vmatprep.mubr.f32.mxu0 0.0
    %3094 = vmatmul.mubr.f32.gmra.mrb[0].mxu0 %v2975
    %v3095 = vpop.f32.mrb[0].mxu0
    %v3096 = vadd.f32 %v1492, %v3095
    %v3097 = vpop.f32.mrb[0].mxu0
    %3098 = vmatprep.mubr.f32.mxu0 0.0
    %3099 = vmatmul.mubr.f32.gmra.mrb[0].mxu0 %v2977
    %v3100 = vpop.f32.mrb[0].mxu0
    %v3101 = vadd.f32 %v1492, %v3100
    %v3102 = vpop.f32.mrb[0].mxu0
    %3103 = vmatprep.mubr.f32.mxu0 0.0
    %3104 = vmatmul.mubr.f32.gmra.mrb[0].mxu0 %v2979
    %v3105 = vpop.f32.mrb[0].mxu0
    %v3106 = vadd.f32 %v1492, %v3105
    %v3107 = vpop.f32.mrb[0].mxu0
    %3108 = vdwg.mxu0
    %v3109 = vsel %vm2172, %v3066, -inf
    %3110 = vmax.xlane.f32.xlu0 %v3109
    %v3111 = vpop.xlane.xlu0 %3110
    %v3112 = vsel %vm2172, %v3071, -inf
    %3113 = vmax.xlane.f32.xlu0 %v3112
    %v3114 = vpop.xlane.xlu0 %3113
    %v3115 = vsel %vm2172, %v3076, -inf
    %3116 = vmax.xlane.f32.xlu0 %v3115
    %v3117 = vpop.xlane.xlu0 %3116
    %v3118 = vsel %vm2172, %v3081, -inf
    %3119 = vmax.xlane.f32.xlu0 %v3118
    %v3120 = vpop.xlane.xlu0 %3119
    %v3121 = vsel %vm2172, %v3086, -inf
    %3122 = vmax.xlane.f32.xlu0 %v3121
    %v3123 = vpop.xlane.xlu0 %3122
    %v3124 = vsel %vm2172, %v3091, -inf
    %3125 = vmax.xlane.f32.xlu0 %v3124
    %v3126 = vpop.xlane.xlu0 %3125
    %v3127 = vsel %vm2172, %v3096, -inf
    %3128 = vmax.xlane.f32.xlu0 %v3127
    %v3129 = vpop.xlane.xlu0 %3128
    %v3130 = vsel %vm2172, %v3101, -inf
    %3131 = vmax.xlane.f32.xlu0 %v3130
    %v3132 = vpop.xlane.xlu0 %3131
    %v3133 = vsel %vm2172, %v3106, -inf
    %3134 = vmax.xlane.f32.xlu0 %v3133
    %v3135 = vpop.xlane.xlu0 %3134
    %v3136 = vsub.f32 %v3066, %v3111
    %v3137 = vsub.f32 %v3071, %v3114
    %v3138 = vsub.f32 %v3076, %v3117
    %v3139 = vsub.f32 %v3081, %v3120
    %v3140 = vsub.f32 %v3086, %v3123
    %v3141 = vsub.f32 %v3091, %v3126
    %v3142 = vsub.f32 %v3096, %v3129
    %v3143 = vsub.f32 %v3101, %v3132
    %v3144 = vsub.f32 %v3106, %v3135
    %v3145 = vmul.f32 %v3136, 1.442695
    %v3146 = vpow.pop %v3145
    %v3147 = vmul.f32 %v3137, 1.442695
    %v3148 = vpow.pop %v3147
    %v3149 = vmul.f32 %v3138, 1.442695
    %v3150 = vpow.pop %v3149
    %v3151 = vmul.f32 %v3139, 1.442695
    %v3152 = vpow.pop %v3151
    %v3153 = vmul.f32 %v3140, 1.442695
    %v3154 = vpow.pop %v3153
    %v3155 = vmul.f32 %v3141, 1.442695
    %v3156 = vpow.pop %v3155
    %v3157 = vmul.f32 %v3142, 1.442695
    %v3158 = vpow.pop %v3157
    %v3159 = vmul.f32 %v3143, 1.442695
    %v3160 = vpow.pop %v3159
    %v3161 = vmul.f32 %v3144, 1.442695
    %v3162 = vpow.pop %v3161
    %v3163 = vsel %vm2172, %v3146, 0.0
    %3164 = vadd.xlane.f32.xlu0 %v3163
    %v3165 = vpop.xlane.xlu0 %3164
    %v3166 = vsel %vm2172, %v3148, 0.0
    %3167 = vadd.xlane.f32.xlu0 %v3166
    %v3168 = vpop.xlane.xlu0 %3167
    %v3169 = vsel %vm2172, %v3150, 0.0
    %3170 = vadd.xlane.f32.xlu0 %v3169
    %v3171 = vpop.xlane.xlu0 %3170
    %v3172 = vsel %vm2172, %v3152, 0.0
    %3173 = vadd.xlane.f32.xlu0 %v3172
    %v3174 = vpop.xlane.xlu0 %3173
    %v3175 = vsel %vm2172, %v3154, 0.0
    %3176 = vadd.xlane.f32.xlu0 %v3175
    %v3177 = vpop.xlane.xlu0 %3176
    %v3178 = vsel %vm2172, %v3156, 0.0
    %3179 = vadd.xlane.f32.xlu0 %v3178
    %v3180 = vpop.xlane.xlu0 %3179
    %v3181 = vsel %vm2172, %v3158, 0.0
    %3182 = vadd.xlane.f32.xlu0 %v3181
    %v3183 = vpop.xlane.xlu0 %3182
    %v3184 = vsel %vm2172, %v3160, 0.0
    %3185 = vadd.xlane.f32.xlu0 %v3184
    %v3186 = vpop.xlane.xlu0 %3185
    %v3187 = vsel %vm2172, %v3162, 0.0
    %3188 = vadd.xlane.f32.xlu0 %v3187
    %v3189 = vpop.xlane.xlu0 %3188
    %v3190 = vrcp.pop %v3165
    %v3191 = vrcp.pop %v3168
    %v3192 = vrcp.pop %v3171
    %v3193 = vrcp.pop %v3174
    %v3194 = vrcp.pop %v3177
    %v3195 = vrcp.pop %v3180
    %v3196 = vrcp.pop %v3183
    %v3197 = vrcp.pop %v3186
    %v3198 = vrcp.pop %v3189
    %3199 = vrot.lane.b32.xlu0 %v1955, 64
    %v3200 = vpop.permute.xlu0 %3199
    %3201 = vrot.lane.b32.xlu0 %v1960, 64
    %v3202 = vpop.permute.xlu0 %3201
    %3203 = vrot.lane.b32.xlu0 %v1965, 64
    %v3204 = vpop.permute.xlu0 %3203
    %3205 = vrot.lane.b32.xlu0 %v1970, 64
    %v3206 = vpop.permute.xlu0 %3205
    %3207 = vrot.lane.b32.xlu0 %v1975, 64
    %v3208 = vpop.permute.xlu0 %3207
    %3209 = vrot.lane.b32.xlu0 %v1980, 64
    %v3210 = vpop.permute.xlu0 %3209
    %3211 = vrot.lane.b32.xlu0 %v1985, 64
    %v3212 = vpop.permute.xlu0 %3211
    %3213 = vrot.lane.b32.xlu0 %v1990, 64
    %v3214 = vpop.permute.xlu0 %3213
    %3215 = vrot.lane.b32.xlu0 %v1995, 64
    %v3216 = vpop.permute.xlu0 %3215
    %v3227 = vsel %vm2172, %v3146, 0
    %v3230 = vsel %vm2172, %v3148, 0
    %v3233 = vsel %vm2172, %v3150, 0
    %v3236 = vsel %vm2172, %v3152, 0
    %v3239 = vsel %vm2172, %v3154, 0
    %v3242 = vsel %vm2172, %v3156, 0
    %v3245 = vsel %vm2172, %v3158, 0
    %v3248 = vsel %vm2172, %v3160, 0
    %v3251 = vsel %vm2172, %v3162, 0
    %3253 = vmatprep.subr.mxu0 0.0
    %3254 = vmatpush1.msra.mxu0 %v3200
    %3255 = vmatprep.subr.mxu0 0.0
    %3256 = vmatpush1.msra.mxu0 %v3202
    %3257 = vmatprep.subr.mxu0 0.0
    %3258 = vmatpush1.msra.mxu0 %v3204
    %3259 = vmatprep.subr.mxu0 0.0
    %3260 = vmatpush1.msra.mxu0 %v3206
    %3261 = vmatprep.subr.mxu0 0.0
    %3262 = vmatpush1.msra.mxu0 %v3208
    %3263 = vmatprep.subr.mxu0 0.0
    %3264 = vmatpush1.msra.mxu0 %v3210
    %3265 = vmatprep.subr.mxu0 0.0
    %3266 = vmatpush1.msra.mxu0 %v3212
    %3267 = vmatprep.subr.mxu0 0.0
    %3268 = vmatpush1.msra.mxu0 %v3214
    %3269 = vmatprep.subr.mxu0 0.0
    %3270 = vmatpush1.msra.mxu0 %v3216
    %3271 = vmatprep.subr.mxu0 0.0
    %3272 = vmatpush1.msra.mxu0 0.0
    %3273 = vmatprep.subr.mxu0 0.0
    %3274 = vmatpush1.msra.mxu0 0.0
    %3275 = vmatprep.subr.mxu0 0.0
    %3276 = vmatpush1.msra.mxu0 0.0
    %3277 = vmatprep.subr.mxu0 0.0
    %3278 = vmatpush1.msra.mxu0 0.0
    %3279 = vmatprep.subr.mxu0 0.0
    %3280 = vmatpush1.msra.mxu0 0.0
    %3281 = vmatprep.subr.mxu0 0.0
    %3282 = vmatpush1.msra.mxu0 0.0
    %3283 = vmatprep.subr.mxu0 0.0
    %3284 = vmatpush1.msra.mxu0 0.0
    %3285 = vmatprep.subr.mxu0 0.0
    %3286 = vmatpush1.msra.mxu0 0.0
    %3287 = vmatprep.subr.mxu0 0.0
    %3288 = vmatpush1.msra.mxu0 0.0
    %3289 = vmatprep.subr.mxu0 0.0
    %3290 = vmatpush1.msra.mxu0 0.0
    %3291 = vmatprep.subr.mxu0 0.0
    %3292 = vmatpush1.msra.mxu0 0.0
    %3293 = vmatprep.subr.mxu0 0.0
    %3294 = vmatpush1.msra.mxu0 0.0
    %3295 = vmatprep.subr.mxu0 0.0
    %3296 = vmatpush1.msra.mxu0 0.0
    %3297 = vmatprep.subr.mxu0 0.0
    %3298 = vmatpush1.msra.mxu0 0.0
    %3299 = vmatprep.subr.mxu0 0.0
    %3300 = vmatpush1.msra.mxu0 0.0
    %3301 = vmatprep.subr.mxu0 0.0
    %3302 = vmatpush1.msra.mxu0 0.0
    %3303 = vmatprep.subr.mxu0 0.0
    %3304 = vmatpush1.msra.mxu0 0.0
    %3305 = vmatprep.subr.mxu0 0.0
    %3306 = vmatpush1.msra.mxu0 0.0
    %3307 = vmatprep.subr.mxu0 0.0
    %3308 = vmatpush1.msra.mxu0 0.0
    %3309 = vmatprep.subr.mxu0 0.0
    %3310 = vmatpush1.msra.mxu0 0.0
    %3311 = vmatprep.subr.mxu0 0.0
    %3312 = vmatpush1.msra.mxu0 0.0
    %3313 = vmatprep.subr.mxu0 0.0
    %3314 = vmatpush1.msra.mxu0 0.0
    %3315 = vmatprep.subr.mxu0 0.0
    %3316 = vmatpush1.msra.mxu0 0.0
    %3317 = vmatprep.mubr.f32.mxu0 0.0
    %3318 = vmatmul.mubr.f32.gmra.mrb[0].mxu0 %v3227
    %v3319 = vpop.f32.mrb[0].mxu0
    %v3320 = vadd.f32 0.0, %v3319
    %v3321 = vpop.f32.mrb[0].mxu0
    %3322 = vmatprep.mubr.f32.mxu0 0.0
    %3323 = vmatmul.mubr.f32.gmra.mrb[0].mxu0 %v3230
    %v3324 = vpop.f32.mrb[0].mxu0
    %v3325 = vadd.f32 0.0, %v3324
    %v3326 = vpop.f32.mrb[0].mxu0
    %3327 = vmatprep.mubr.f32.mxu0 0.0
    %3328 = vmatmul.mubr.f32.gmra.mrb[0].mxu0 %v3233
    %v3329 = vpop.f32.mrb[0].mxu0
    %v3330 = vadd.f32 0.0, %v3329
    %v3331 = vpop.f32.mrb[0].mxu0
    %3332 = vmatprep.mubr.f32.mxu0 0.0
    %3333 = vmatmul.mubr.f32.gmra.mrb[0].mxu0 %v3236
    %v3334 = vpop.f32.mrb[0].mxu0
    %v3335 = vadd.f32 0.0, %v3334
    %v3336 = vpop.f32.mrb[0].mxu0
    %3337 = vmatprep.mubr.f32.mxu0 0.0
    %3338 = vmatmul.mubr.f32.gmra.mrb[0].mxu0 %v3239
    %v3339 = vpop.f32.mrb[0].mxu0
    %v3340 = vadd.f32 0.0, %v3339
    %v3341 = vpop.f32.mrb[0].mxu0
    %3342 = vmatprep.mubr.f32.mxu0 0.0
    %3343 = vmatmul.mubr.f32.gmra.mrb[0].mxu0 %v3242
    %v3344 = vpop.f32.mrb[0].mxu0
    %v3345 = vadd.f32 0.0, %v3344
    %v3346 = vpop.f32.mrb[0].mxu0
    %3347 = vmatprep.mubr.f32.mxu0 0.0
    %3348 = vmatmul.mubr.f32.gmra.mrb[0].mxu0 %v3245
    %v3349 = vpop.f32.mrb[0].mxu0
    %v3350 = vadd.f32 0.0, %v3349
    %v3351 = vpop.f32.mrb[0].mxu0
    %3352 = vmatprep.mubr.f32.mxu0 0.0
    %3353 = vmatmul.mubr.f32.gmra.mrb[0].mxu0 %v3248
    %v3354 = vpop.f32.mrb[0].mxu0
    %v3355 = vadd.f32 0.0, %v3354
    %v3356 = vpop.f32.mrb[0].mxu0
    %3357 = vmatprep.mubr.f32.mxu0 0.0
    %3358 = vmatmul.mubr.f32.gmra.mrb[0].mxu0 %v3251
    %v3359 = vpop.f32.mrb[0].mxu0
    %v3360 = vadd.f32 0.0, %v3359
    %v3361 = vpop.f32.mrb[0].mxu0
    %3362 = vdwg.mxu0
    %v3363 = vmul.f32 %v3320, %v3190
    %v3364 = vmul.f32 %v3325, %v3191
    %v3365 = vmul.f32 %v3330, %v3192
    %v3366 = vmul.f32 %v3335, %v3193
    %v3367 = vmul.f32 %v3340, %v3194
    %v3368 = vmul.f32 %v3345, %v3195
    %v3369 = vmul.f32 %v3350, %v3196
    %v3370 = vmul.f32 %v3355, %v3197
    %v3371 = vmul.f32 %v3360, %v3198
    %3372 = vst.msk [vmem:[#allocation3 + $0x48] sm:$0xff] %vm2025, %v3363
    %3373 = vst.msk [vmem:[#allocation3 + $0x50] sm:$0xff] %vm2025, %v3364
    %3374 = vst.msk [vmem:[#allocation3 + $0x58] sm:$0xff] %vm2025, %v3365
    %3375 = vst.msk [vmem:[#allocation3 + $0x60] sm:$0xff] %vm2025, %v3366
    %3376 = vst.msk [vmem:[#allocation3 + $0x68] sm:$0xff] %vm2025, %v3367
    %3377 = vst.msk [vmem:[#allocation3 + $0x70] sm:$0xff] %vm2025, %v3368
    %3378 = vst.msk [vmem:[#allocation3 + $0x78] sm:$0xff] %vm2025, %v3369
    %3379 = vst.msk [vmem:[#allocation3 + $0x80] sm:$0xff] %vm2025, %v3370
    %3380 = vst.msk [vmem:[#allocation3 + $0x88] sm:$0xff] %vm2025, %v3371
    %3381 = vrot.lane.b32.xlu0 %v1955, 112
    %v3382 = vpop.permute.xlu0 %3381
    %3383 = vrot.lane.b32.xlu0 %v1960, 112
    %v3384 = vpop.permute.xlu0 %3383
    %3385 = vrot.lane.b32.xlu0 %v1965, 112
    %v3386 = vpop.permute.xlu0 %3385
    %3387 = vrot.lane.b32.xlu0 %v1970, 112
    %v3388 = vpop.permute.xlu0 %3387
    %3389 = vrot.lane.b32.xlu0 %v1975, 112
    %v3390 = vpop.permute.xlu0 %3389
    %3391 = vrot.lane.b32.xlu0 %v1980, 112
    %v3392 = vpop.permute.xlu0 %3391
    %3393 = vrot.lane.b32.xlu0 %v1985, 112
    %v3394 = vpop.permute.xlu0 %3393
    %3395 = vrot.lane.b32.xlu0 %v1990, 112
    %v3396 = vpop.permute.xlu0 %3395
    %3397 = vrot.lane.b32.xlu0 %v1995, 112
    %v3398 = vpop.permute.xlu0 %3397
    %3399 = vrot.lane.b32.xlu0 %v1955, 80
    %v3400 = vpop.permute.xlu0 %3399
    %3401 = vrot.lane.b32.xlu0 %v1960, 80
    %v3402 = vpop.permute.xlu0 %3401
    %3403 = vrot.lane.b32.xlu0 %v1965, 80
    %v3404 = vpop.permute.xlu0 %3403
    %3405 = vrot.lane.b32.xlu0 %v1970, 80
    %v3406 = vpop.permute.xlu0 %3405
    %3407 = vrot.lane.b32.xlu0 %v1975, 80
    %v3408 = vpop.permute.xlu0 %3407
    %3409 = vrot.lane.b32.xlu0 %v1980, 80
    %v3410 = vpop.permute.xlu0 %3409
    %3411 = vrot.lane.b32.xlu0 %v1985, 80
    %v3412 = vpop.permute.xlu0 %3411
    %3413 = vrot.lane.b32.xlu0 %v1990, 80
    %v3414 = vpop.permute.xlu0 %3413
    %3415 = vrot.lane.b32.xlu0 %v1995, 80
    %v3416 = vpop.permute.xlu0 %3415
    %v3417 = vsel %vm2025, %v3382, 0
    %v3419 = vsel %vm2025, %v3384, 0
    %v3421 = vsel %vm2025, %v3386, 0
    %v3423 = vsel %vm2025, %v3388, 0
    %v3425 = vsel %vm2025, %v3390, 0
    %v3427 = vsel %vm2025, %v3392, 0
    %v3429 = vsel %vm2025, %v3394, 0
    %v3431 = vsel %vm2025, %v3396, 0
    %v3433 = vsel %vm2025, %v3398, 0
    %v3435 = vsel %vm2025, %v3400, 0
    %v3437 = vsel %vm2025, %v3402, 0
    %v3439 = vsel %vm2025, %v3404, 0
    %v3441 = vsel %vm2025, %v3406, 0
    %v3443 = vsel %vm2025, %v3408, 0
    %v3445 = vsel %vm2025, %v3410, 0
    %v3447 = vsel %vm2025, %v3412, 0
    %v3449 = vsel %vm2025, %v3414, 0
    %v3451 = vsel %vm2025, %v3416, 0
    %3453 = vmatprep.subr.mxu0 0.0
    %3454 = vmatpush1.xpose.msra.mxu0 %v3435
    %3455 = vmatprep.subr.mxu0 0.0
    %3456 = vmatpush1.xpose.msra.mxu0 %v3437
    %3457 = vmatprep.subr.mxu0 0.0
    %3458 = vmatpush1.xpose.msra.mxu0 %v3439
    %3459 = vmatprep.subr.mxu0 0.0
    %3460 = vmatpush1.xpose.msra.mxu0 %v3441
    %3461 = vmatprep.subr.mxu0 0.0
    %3462 = vmatpush1.xpose.msra.mxu0 %v3443
    %3463 = vmatprep.subr.mxu0 0.0
    %3464 = vmatpush1.xpose.msra.mxu0 %v3445
    %3465 = vmatprep.subr.mxu0 0.0
    %3466 = vmatpush1.xpose.msra.mxu0 %v3447
    %3467 = vmatprep.subr.mxu0 0.0
    %3468 = vmatpush1.xpose.msra.mxu0 %v3449
    %3469 = vmatprep.subr.mxu0 0.0
    %3470 = vmatpush1.xpose.msra.mxu0 %v3451
    %3471 = vmatprep.subr.mxu0 0.0
    %3472 = vmatpush1.xpose.msra.mxu0 0.0
    %3473 = vmatprep.subr.mxu0 0.0
    %3474 = vmatpush1.xpose.msra.mxu0 0.0
    %3475 = vmatprep.subr.mxu0 0.0
    %3476 = vmatpush1.xpose.msra.mxu0 0.0
    %3477 = vmatprep.subr.mxu0 0.0
    %3478 = vmatpush1.xpose.msra.mxu0 0.0
    %3479 = vmatprep.subr.mxu0 0.0
    %3480 = vmatpush1.xpose.msra.mxu0 0.0
    %3481 = vmatprep.subr.mxu0 0.0
    %3482 = vmatpush1.xpose.msra.mxu0 0.0
    %3483 = vmatprep.subr.mxu0 0.0
    %3484 = vmatpush1.xpose.msra.mxu0 0.0
    %3485 = vmatprep.subr.mxu0 0.0
    %3486 = vmatpush1.xpose.msra.mxu0 0.0
    %3487 = vmatprep.subr.mxu0 0.0
    %3488 = vmatpush1.xpose.msra.mxu0 0.0
    %3489 = vmatprep.subr.mxu0 0.0
    %3490 = vmatpush1.xpose.msra.mxu0 0.0
    %3491 = vmatprep.subr.mxu0 0.0
    %3492 = vmatpush1.xpose.msra.mxu0 0.0
    %3493 = vmatprep.subr.mxu0 0.0
    %3494 = vmatpush1.xpose.msra.mxu0 0.0
    %3495 = vmatprep.subr.mxu0 0.0
    %3496 = vmatpush1.xpose.msra.mxu0 0.0
    %3497 = vmatprep.subr.mxu0 0.0
    %3498 = vmatpush1.xpose.msra.mxu0 0.0
    %3499 = vmatprep.subr.mxu0 0.0
    %3500 = vmatpush1.xpose.msra.mxu0 0.0
    %3501 = vmatprep.subr.mxu0 0.0
    %3502 = vmatpush1.xpose.msra.mxu0 0.0
    %3503 = vmatprep.subr.mxu0 0.0
    %3504 = vmatpush1.xpose.msra.mxu0 0.0
    %3505 = vmatprep.subr.mxu0 0.0
    %3506 = vmatpush1.xpose.msra.mxu0 0.0
    %3507 = vmatprep.subr.mxu0 0.0
    %3508 = vmatpush1.xpose.msra.mxu0 0.0
    %3509 = vmatprep.subr.mxu0 0.0
    %3510 = vmatpush1.xpose.msra.mxu0 0.0
    %3511 = vmatprep.subr.mxu0 0.0
    %3512 = vmatpush1.xpose.msra.mxu0 0.0
    %3513 = vmatprep.subr.mxu0 0.0
    %3514 = vmatpush1.xpose.msra.mxu0 0.0
    %3515 = vmatprep.subr.mxu0 0.0
    %3516 = vmatpush1.xpose.msra.mxu0 0.0
    %3517 = vmatprep.mubr.f32.mxu0 0.0
    %3518 = vmatmul.mubr.f32.gmra.mrb[0].mxu0 %v3417
    %v3519 = vpop.f32.mrb[0].mxu0
    %v3520 = vadd.f32 %v1492, %v3519
    %v3521 = vpop.f32.mrb[0].mxu0
    %3522 = vmatprep.mubr.f32.mxu0 0.0
    %3523 = vmatmul.mubr.f32.gmra.mrb[0].mxu0 %v3419
    %v3524 = vpop.f32.mrb[0].mxu0
    %v3525 = vadd.f32 %v1492, %v3524
    %v3526 = vpop.f32.mrb[0].mxu0
    %3527 = vmatprep.mubr.f32.mxu0 0.0
    %3528 = vmatmul.mubr.f32.gmra.mrb[0].mxu0 %v3421
    %v3529 = vpop.f32.mrb[0].mxu0
    %v3530 = vadd.f32 %v1492, %v3529
    %v3531 = vpop.f32.mrb[0].mxu0
    %3532 = vmatprep.mubr.f32.mxu0 0.0
    %3533 = vmatmul.mubr.f32.gmra.mrb[0].mxu0 %v3423
    %v3534 = vpop.f32.mrb[0].mxu0
    %v3535 = vadd.f32 %v1492, %v3534
    %v3536 = vpop.f32.mrb[0].mxu0
    %3537 = vmatprep.mubr.f32.mxu0 0.0
    %3538 = vmatmul.mubr.f32.gmra.mrb[0].mxu0 %v3425
    %v3539 = vpop.f32.mrb[0].mxu0
    %v3540 = vadd.f32 %v1492, %v3539
    %v3541 = vpop.f32.mrb[0].mxu0
    %3542 = vmatprep.mubr.f32.mxu0 0.0
    %3543 = vmatmul.mubr.f32.gmra.mrb[0].mxu0 %v3427
    %v3544 = vpop.f32.mrb[0].mxu0
    %v3545 = vadd.f32 %v1492, %v3544
    %v3546 = vpop.f32.mrb[0].mxu0
    %3547 = vmatprep.mubr.f32.mxu0 0.0
    %3548 = vmatmul.mubr.f32.gmra.mrb[0].mxu0 %v3429
    %v3549 = vpop.f32.mrb[0].mxu0
    %v3550 = vadd.f32 %v1492, %v3549
    %v3551 = vpop.f32.mrb[0].mxu0
    %3552 = vmatprep.mubr.f32.mxu0 0.0
    %3553 = vmatmul.mubr.f32.gmra.mrb[0].mxu0 %v3431
    %v3554 = vpop.f32.mrb[0].mxu0
    %v3555 = vadd.f32 %v1492, %v3554
    %v3556 = vpop.f32.mrb[0].mxu0
    %3557 = vmatprep.mubr.f32.mxu0 0.0
    %3558 = vmatmul.mubr.f32.gmra.mrb[0].mxu0 %v3433
    %v3559 = vpop.f32.mrb[0].mxu0
    %v3560 = vadd.f32 %v1492, %v3559
    %v3561 = vpop.f32.mrb[0].mxu0
    %3562 = vdwg.mxu0
    %v3563 = vsel %vm2172, %v3520, -inf
    %3564 = vmax.xlane.f32.xlu0 %v3563
    %v3565 = vpop.xlane.xlu0 %3564
    %v3566 = vsel %vm2172, %v3525, -inf
    %3567 = vmax.xlane.f32.xlu0 %v3566
    %v3568 = vpop.xlane.xlu0 %3567
    %v3569 = vsel %vm2172, %v3530, -inf
    %3570 = vmax.xlane.f32.xlu0 %v3569
    %v3571 = vpop.xlane.xlu0 %3570
    %v3572 = vsel %vm2172, %v3535, -inf
    %3573 = vmax.xlane.f32.xlu0 %v3572
    %v3574 = vpop.xlane.xlu0 %3573
    %v3575 = vsel %vm2172, %v3540, -inf
    %3576 = vmax.xlane.f32.xlu0 %v3575
    %v3577 = vpop.xlane.xlu0 %3576
    %v3578 = vsel %vm2172, %v3545, -inf
    %3579 = vmax.xlane.f32.xlu0 %v3578
    %v3580 = vpop.xlane.xlu0 %3579
    %v3581 = vsel %vm2172, %v3550, -inf
    %3582 = vmax.xlane.f32.xlu0 %v3581
    %v3583 = vpop.xlane.xlu0 %3582
    %v3584 = vsel %vm2172, %v3555, -inf
    %3585 = vmax.xlane.f32.xlu0 %v3584
    %v3586 = vpop.xlane.xlu0 %3585
    %v3587 = vsel %vm2172, %v3560, -inf
    %3588 = vmax.xlane.f32.xlu0 %v3587
    %v3589 = vpop.xlane.xlu0 %3588
    %v3590 = vsub.f32 %v3520, %v3565
    %v3591 = vsub.f32 %v3525, %v3568
    %v3592 = vsub.f32 %v3530, %v3571
    %v3593 = vsub.f32 %v3535, %v3574
    %v3594 = vsub.f32 %v3540, %v3577
    %v3595 = vsub.f32 %v3545, %v3580
    %v3596 = vsub.f32 %v3550, %v3583
    %v3597 = vsub.f32 %v3555, %v3586
    %v3598 = vsub.f32 %v3560, %v3589
    %v3599 = vmul.f32 %v3590, 1.442695
    %v3600 = vpow.pop %v3599
    %v3601 = vmul.f32 %v3591, 1.442695
    %v3602 = vpow.pop %v3601
    %v3603 = vmul.f32 %v3592, 1.442695
    %v3604 = vpow.pop %v3603
    %v3605 = vmul.f32 %v3593, 1.442695
    %v3606 = vpow.pop %v3605
    %v3607 = vmul.f32 %v3594, 1.442695
    %v3608 = vpow.pop %v3607
    %v3609 = vmul.f32 %v3595, 1.442695
    %v3610 = vpow.pop %v3609
    %v3611 = vmul.f32 %v3596, 1.442695
    %v3612 = vpow.pop %v3611
    %v3613 = vmul.f32 %v3597, 1.442695
    %v3614 = vpow.pop %v3613
    %v3615 = vmul.f32 %v3598, 1.442695
    %v3616 = vpow.pop %v3615
    %v3617 = vsel %vm2172, %v3600, 0.0
    %3618 = vadd.xlane.f32.xlu0 %v3617
    %v3619 = vpop.xlane.xlu0 %3618
    %v3620 = vsel %vm2172, %v3602, 0.0
    %3621 = vadd.xlane.f32.xlu0 %v3620
    %v3622 = vpop.xlane.xlu0 %3621
    %v3623 = vsel %vm2172, %v3604, 0.0
    %3624 = vadd.xlane.f32.xlu0 %v3623
    %v3625 = vpop.xlane.xlu0 %3624
    %v3626 = vsel %vm2172, %v3606, 0.0
    %3627 = vadd.xlane.f32.xlu0 %v3626
    %v3628 = vpop.xlane.xlu0 %3627
    %v3629 = vsel %vm2172, %v3608, 0.0
    %3630 = vadd.xlane.f32.xlu0 %v3629
    %v3631 = vpop.xlane.xlu0 %3630
    %v3632 = vsel %vm2172, %v3610, 0.0
    %3633 = vadd.xlane.f32.xlu0 %v3632
    %v3634 = vpop.xlane.xlu0 %3633
    %v3635 = vsel %vm2172, %v3612, 0.0
    %3636 = vadd.xlane.f32.xlu0 %v3635
    %v3637 = vpop.xlane.xlu0 %3636
    %v3638 = vsel %vm2172, %v3614, 0.0
    %3639 = vadd.xlane.f32.xlu0 %v3638
    %v3640 = vpop.xlane.xlu0 %3639
    %v3641 = vsel %vm2172, %v3616, 0.0
    %3642 = vadd.xlane.f32.xlu0 %v3641
    %v3643 = vpop.xlane.xlu0 %3642
    %v3644 = vrcp.pop %v3619
    %v3645 = vrcp.pop %v3622
    %v3646 = vrcp.pop %v3625
    %v3647 = vrcp.pop %v3628
    %v3648 = vrcp.pop %v3631
    %v3649 = vrcp.pop %v3634
    %v3650 = vrcp.pop %v3637
    %v3651 = vrcp.pop %v3640
    %v3652 = vrcp.pop %v3643
    %3653 = vrot.lane.b32.xlu0 %v1955, 48
    %v3654 = vpop.permute.xlu0 %3653
    %3655 = vrot.lane.b32.xlu0 %v1960, 48
    %v3656 = vpop.permute.xlu0 %3655
    %3657 = vrot.lane.b32.xlu0 %v1965, 48
    %v3658 = vpop.permute.xlu0 %3657
    %3659 = vrot.lane.b32.xlu0 %v1970, 48
    %v3660 = vpop.permute.xlu0 %3659
    %3661 = vrot.lane.b32.xlu0 %v1975, 48
    %v3662 = vpop.permute.xlu0 %3661
    %3663 = vrot.lane.b32.xlu0 %v1980, 48
    %v3664 = vpop.permute.xlu0 %3663
    %3665 = vrot.lane.b32.xlu0 %v1985, 48
    %v3666 = vpop.permute.xlu0 %3665
    %3667 = vrot.lane.b32.xlu0 %v1990, 48
    %v3668 = vpop.permute.xlu0 %3667
    %3669 = vrot.lane.b32.xlu0 %v1995, 48
    %v3670 = vpop.permute.xlu0 %3669
    %v3681 = vsel %vm2172, %v3600, 0
    %v3684 = vsel %vm2172, %v3602, 0
    %v3687 = vsel %vm2172, %v3604, 0
    %v3690 = vsel %vm2172, %v3606, 0
    %v3693 = vsel %vm2172, %v3608, 0
    %v3696 = vsel %vm2172, %v3610, 0
    %v3699 = vsel %vm2172, %v3612, 0
    %v3702 = vsel %vm2172, %v3614, 0
    %v3705 = vsel %vm2172, %v3616, 0
    %3707 = vmatprep.subr.mxu0 0.0
    %3708 = vmatpush1.msra.mxu0 %v3654
    %3709 = vmatprep.subr.mxu0 0.0
    %3710 = vmatpush1.msra.mxu0 %v3656
    %3711 = vmatprep.subr.mxu0 0.0
    %3712 = vmatpush1.msra.mxu0 %v3658
    %3713 = vmatprep.subr.mxu0 0.0
    %3714 = vmatpush1.msra.mxu0 %v3660
    %3715 = vmatprep.subr.mxu0 0.0
    %3716 = vmatpush1.msra.mxu0 %v3662
    %3717 = vmatprep.subr.mxu0 0.0
    %3718 = vmatpush1.msra.mxu0 %v3664
    %3719 = vmatprep.subr.mxu0 0.0
    %3720 = vmatpush1.msra.mxu0 %v3666
    %3721 = vmatprep.subr.mxu0 0.0
    %3722 = vmatpush1.msra.mxu0 %v3668
    %3723 = vmatprep.subr.mxu0 0.0
    %3724 = vmatpush1.msra.mxu0 %v3670
    %3725 = vmatprep.subr.mxu0 0.0
    %3726 = vmatpush1.msra.mxu0 0.0
    %3727 = vmatprep.subr.mxu0 0.0
    %3728 = vmatpush1.msra.mxu0 0.0
    %3729 = vmatprep.subr.mxu0 0.0
    %3730 = vmatpush1.msra.mxu0 0.0
    %3731 = vmatprep.subr.mxu0 0.0
    %3732 = vmatpush1.msra.mxu0 0.0
    %3733 = vmatprep.subr.mxu0 0.0
    %3734 = vmatpush1.msra.mxu0 0.0
    %3735 = vmatprep.subr.mxu0 0.0
    %3736 = vmatpush1.msra.mxu0 0.0
    %3737 = vmatprep.subr.mxu0 0.0
    %3738 = vmatpush1.msra.mxu0 0.0
    %3739 = vmatprep.subr.mxu0 0.0
    %3740 = vmatpush1.msra.mxu0 0.0
    %3741 = vmatprep.subr.mxu0 0.0
    %3742 = vmatpush1.msra.mxu0 0.0
    %3743 = vmatprep.subr.mxu0 0.0
    %3744 = vmatpush1.msra.mxu0 0.0
    %3745 = vmatprep.subr.mxu0 0.0
    %3746 = vmatpush1.msra.mxu0 0.0
    %3747 = vmatprep.subr.mxu0 0.0
    %3748 = vmatpush1.msra.mxu0 0.0
    %3749 = vmatprep.subr.mxu0 0.0
    %3750 = vmatpush1.msra.mxu0 0.0
    %3751 = vmatprep.subr.mxu0 0.0
    %3752 = vmatpush1.msra.mxu0 0.0
    %3753 = vmatprep.subr.mxu0 0.0
    %3754 = vmatpush1.msra.mxu0 0.0
    %3755 = vmatprep.subr.mxu0 0.0
    %3756 = vmatpush1.msra.mxu0 0.0
    %3757 = vmatprep.subr.mxu0 0.0
    %3758 = vmatpush1.msra.mxu0 0.0
    %3759 = vmatprep.subr.mxu0 0.0
    %3760 = vmatpush1.msra.mxu0 0.0
    %3761 = vmatprep.subr.mxu0 0.0
    %3762 = vmatpush1.msra.mxu0 0.0
    %3763 = vmatprep.subr.mxu0 0.0
    %3764 = vmatpush1.msra.mxu0 0.0
    %3765 = vmatprep.subr.mxu0 0.0
    %3766 = vmatpush1.msra.mxu0 0.0
    %3767 = vmatprep.subr.mxu0 0.0
    %3768 = vmatpush1.msra.mxu0 0.0
    %3769 = vmatprep.subr.mxu0 0.0
    %3770 = vmatpush1.msra.mxu0 0.0
    %3771 = vmatprep.mubr.f32.mxu0 0.0
    %3772 = vmatmul.mubr.f32.gmra.mrb[0].mxu0 %v3681
    %v3773 = vpop.f32.mrb[0].mxu0
    %v3774 = vadd.f32 0.0, %v3773
    %v3775 = vpop.f32.mrb[0].mxu0
    %3776 = vmatprep.mubr.f32.mxu0 0.0
    %3777 = vmatmul.mubr.f32.gmra.mrb[0].mxu0 %v3684
    %v3778 = vpop.f32.mrb[0].mxu0
    %v3779 = vadd.f32 0.0, %v3778
    %v3780 = vpop.f32.mrb[0].mxu0
    %3781 = vmatprep.mubr.f32.mxu0 0.0
    %3782 = vmatmul.mubr.f32.gmra.mrb[0].mxu0 %v3687
    %v3783 = vpop.f32.mrb[0].mxu0
    %v3784 = vadd.f32 0.0, %v3783
    %v3785 = vpop.f32.mrb[0].mxu0
    %3786 = vmatprep.mubr.f32.mxu0 0.0
    %3787 = vmatmul.mubr.f32.gmra.mrb[0].mxu0 %v3690
    %v3788 = vpop.f32.mrb[0].mxu0
    %v3789 = vadd.f32 0.0, %v3788
    %v3790 = vpop.f32.mrb[0].mxu0
    %3791 = vmatprep.mubr.f32.mxu0 0.0
    %3792 = vmatmul.mubr.f32.gmra.mrb[0].mxu0 %v3693
    %v3793 = vpop.f32.mrb[0].mxu0
    %v3794 = vadd.f32 0.0, %v3793
    %v3795 = vpop.f32.mrb[0].mxu0
    %3796 = vmatprep.mubr.f32.mxu0 0.0
    %3797 = vmatmul.mubr.f32.gmra.mrb[0].mxu0 %v3696
    %v3798 = vpop.f32.mrb[0].mxu0
    %v3799 = vadd.f32 0.0, %v3798
    %v3800 = vpop.f32.mrb[0].mxu0
    %3801 = vmatprep.mubr.f32.mxu0 0.0
    %3802 = vmatmul.mubr.f32.gmra.mrb[0].mxu0 %v3699
    %v3803 = vpop.f32.mrb[0].mxu0
    %v3804 = vadd.f32 0.0, %v3803
    %v3805 = vpop.f32.mrb[0].mxu0
    %3806 = vmatprep.mubr.f32.mxu0 0.0
    %3807 = vmatmul.mubr.f32.gmra.mrb[0].mxu0 %v3702
    %v3808 = vpop.f32.mrb[0].mxu0
    %v3809 = vadd.f32 0.0, %v3808
    %v3810 = vpop.f32.mrb[0].mxu0
    %3811 = vmatprep.mubr.f32.mxu0 0.0
    %3812 = vmatmul.mubr.f32.gmra.mrb[0].mxu0 %v3705
    %v3813 = vpop.f32.mrb[0].mxu0
    %v3814 = vadd.f32 0.0, %v3813
    %v3815 = vpop.f32.mrb[0].mxu0
    %3816 = vdwg.mxu0
    %v3817 = vmul.f32 %v3774, %v3644
    %v3818 = vmul.f32 %v3779, %v3645
    %v3819 = vmul.f32 %v3784, %v3646
    %v3820 = vmul.f32 %v3789, %v3647
    %v3821 = vmul.f32 %v3794, %v3648
    %v3822 = vmul.f32 %v3799, %v3649
    %v3823 = vmul.f32 %v3804, %v3650
    %v3824 = vmul.f32 %v3809, %v3651
    %v3825 = vmul.f32 %v3814, %v3652
    %3835 = vrot.lane.b32.xlu0 %v3817, 16
    %v3836 = vpop.permute.xlu0 %3835
    %3837 = vrot.lane.b32.xlu0 %v3818, 16
    %v3838 = vpop.permute.xlu0 %3837
    %3839 = vrot.lane.b32.xlu0 %v3819, 16
    %v3840 = vpop.permute.xlu0 %3839
    %3841 = vrot.lane.b32.xlu0 %v3820, 16
    %v3842 = vpop.permute.xlu0 %3841
    %3843 = vrot.lane.b32.xlu0 %v3821, 16
    %v3844 = vpop.permute.xlu0 %3843
    %3845 = vrot.lane.b32.xlu0 %v3822, 16
    %v3846 = vpop.permute.xlu0 %3845
    %3847 = vrot.lane.b32.xlu0 %v3823, 16
    %v3848 = vpop.permute.xlu0 %3847
    %3849 = vrot.lane.b32.xlu0 %v3824, 16
    %v3850 = vpop.permute.xlu0 %3849
    %3851 = vrot.lane.b32.xlu0 %v3825, 16
    %v3852 = vpop.permute.xlu0 %3851
    %3862 = vst.msk [vmem:[#allocation3 + $0x48] sm:$0xff] %vm2926, %v3836
    %3863 = vst.msk [vmem:[#allocation3 + $0x50] sm:$0xff] %vm2926, %v3838
    %3864 = vst.msk [vmem:[#allocation3 + $0x58] sm:$0xff] %vm2926, %v3840
    %3865 = vst.msk [vmem:[#allocation3 + $0x60] sm:$0xff] %vm2926, %v3842
    %3866 = vst.msk [vmem:[#allocation3 + $0x68] sm:$0xff] %vm2926, %v3844
    %3867 = vst.msk [vmem:[#allocation3 + $0x70] sm:$0xff] %vm2926, %v3846
    %3868 = vst.msk [vmem:[#allocation3 + $0x78] sm:$0xff] %vm2926, %v3848
    %3869 = vst.msk [vmem:[#allocation3 + $0x80] sm:$0xff] %vm2926, %v3850
    %3870 = vst.msk [vmem:[#allocation3 + $0x88] sm:$0xff] %vm2926, %v3852
    %v3871 = vld [vmem:[#allocation3] sm:$0xff]
    %v3872 = vld [vmem:[#allocation3 + $0x8] sm:$0xff]
    %v3873 = vld [vmem:[#allocation3 + $0x10] sm:$0xff]
    %v3874 = vld [vmem:[#allocation3 + $0x18] sm:$0xff]
    %v3875 = vld [vmem:[#allocation3 + $0x20] sm:$0xff]
    %v3876 = vld [vmem:[#allocation3 + $0x28] sm:$0xff]
    %v3877 = vld [vmem:[#allocation3 + $0x30] sm:$0xff]
    %v3878 = vld [vmem:[#allocation3 + $0x38] sm:$0xff]
    %v3879 = vld [vmem:[#allocation3 + $0x40] sm:$0xff]
    %v3880 = vld [vmem:[#allocation3 + $0x48] sm:$0xff]
    %v3881 = vld [vmem:[#allocation3 + $0x50] sm:$0xff]
    %v3882 = vld [vmem:[#allocation3 + $0x58] sm:$0xff]
    %v3883 = vld [vmem:[#allocation3 + $0x60] sm:$0xff]
    %v3884 = vld [vmem:[#allocation3 + $0x68] sm:$0xff]
    %v3885 = vld [vmem:[#allocation3 + $0x70] sm:$0xff]
    %v3886 = vld [vmem:[#allocation3 + $0x78] sm:$0xff]
    %v3887 = vld [vmem:[#allocation3 + $0x80] sm:$0xff]
    %v3888 = vld [vmem:[#allocation3 + $0x88] sm:$0xff]
    %v3889 = vld [vmem:[%s9] sm:$0xff]
    %v3890 = vld [vmem:[%s9 + $0x8] sm:$0xff]
    %v3891 = vld [vmem:[%s9 + $0x10] sm:$0xff]
    %v3892 = vld [vmem:[%s9 + $0x18] sm:$0xff]
    %v3894 = vsel %vm1434, %v3871, 0
    %v3897 = vsel %vm1434, %v3872, 0
    %v3900 = vsel %vm1434, %v3873, 0
    %v3903 = vsel %vm1434, %v3874, 0
    %v3906 = vsel %vm1434, %v3875, 0
    %v3909 = vsel %vm1434, %v3876, 0
    %v3912 = vsel %vm1434, %v3877, 0
    %v3915 = vsel %vm1434, %v3878, 0
    %v3918 = vsel %vm1434, %v3879, 0
    %v3921 = vsel %vm1434, %v3880, 0
    %v3924 = vsel %vm1434, %v3881, 0
    %v3927 = vsel %vm1434, %v3882, 0
    %v3930 = vsel %vm1434, %v3883, 0
    %v3933 = vsel %vm1434, %v3884, 0
    %v3936 = vsel %vm1434, %v3885, 0
    %v3939 = vsel %vm1434, %v3886, 0
    %v3942 = vsel %vm1434, %v3887, 0
    %v3945 = vsel %vm1434, %v3888, 0
    %3947 = vmatprep.subr.mxu0 0.0
    %3948 = vmatpush1.msra.mxu0 %v3889
    %3949 = vmatprep.subr.mxu0 0.0
    %3950 = vmatpush1.msra.mxu0 %v3890
    %3951 = vmatprep.subr.mxu0 0.0
    %3952 = vmatpush1.msra.mxu0 %v3891
    %3953 = vmatprep.subr.mxu0 0.0
    %3954 = vmatpush1.msra.mxu0 %v3892
    %3955 = vmatprep.subr.mxu0 0.0
    %3956 = vmatpush1.msra.mxu0 0.0
    %3957 = vmatprep.subr.mxu0 0.0
    %3958 = vmatpush1.msra.mxu0 0.0
    %3959 = vmatprep.subr.mxu0 0.0
    %3960 = vmatpush1.msra.mxu0 0.0
    %3961 = vmatprep.subr.mxu0 0.0
    %3962 = vmatpush1.msra.mxu0 0.0
    %3963 = vmatprep.subr.mxu0 0.0
    %3964 = vmatpush1.msra.mxu0 0.0
    %3965 = vmatprep.subr.mxu0 0.0
    %3966 = vmatpush1.msra.mxu0 0.0
    %3967 = vmatprep.subr.mxu0 0.0
    %3968 = vmatpush1.msra.mxu0 0.0
    %3969 = vmatprep.subr.mxu0 0.0
    %3970 = vmatpush1.msra.mxu0 0.0
    %3971 = vmatprep.subr.mxu0 0.0
    %3972 = vmatpush1.msra.mxu0 0.0
    %3973 = vmatprep.subr.mxu0 0.0
    %3974 = vmatpush1.msra.mxu0 0.0
    %3975 = vmatprep.subr.mxu0 0.0
    %3976 = vmatpush1.msra.mxu0 0.0
    %3977 = vmatprep.subr.mxu0 0.0
    %3978 = vmatpush1.msra.mxu0 0.0
    %3979 = vmatprep.subr.mxu0 0.0
    %3980 = vmatpush1.msra.mxu0 0.0
    %3981 = vmatprep.subr.mxu0 0.0
    %3982 = vmatpush1.msra.mxu0 0.0
    %3983 = vmatprep.subr.mxu0 0.0
    %3984 = vmatpush1.msra.mxu0 0.0
    %3985 = vmatprep.subr.mxu0 0.0
    %3986 = vmatpush1.msra.mxu0 0.0
    %3987 = vmatprep.subr.mxu0 0.0
    %3988 = vmatpush1.msra.mxu0 0.0
    %3989 = vmatprep.subr.mxu0 0.0
    %3990 = vmatpush1.msra.mxu0 0.0
    %3991 = vmatprep.subr.mxu0 0.0
    %3992 = vmatpush1.msra.mxu0 0.0
    %3993 = vmatprep.subr.mxu0 0.0
    %3994 = vmatpush1.msra.mxu0 0.0
    %3995 = vmatprep.subr.mxu0 0.0
    %3996 = vmatpush1.msra.mxu0 0.0
    %3997 = vmatprep.subr.mxu0 0.0
    %3998 = vmatpush1.msra.mxu0 0.0
    %3999 = vmatprep.subr.mxu0 0.0
    %4000 = vmatpush1.msra.mxu0 0.0
    %4001 = vmatprep.subr.mxu0 0.0
    %4002 = vmatpush1.msra.mxu0 0.0
    %4003 = vmatprep.subr.mxu0 0.0
    %4004 = vmatpush1.msra.mxu0 0.0
    %4005 = vmatprep.subr.mxu0 0.0
    %4006 = vmatpush1.msra.mxu0 0.0
    %4007 = vmatprep.subr.mxu0 0.0
    %4008 = vmatpush1.msra.mxu0 0.0
    %4009 = vmatprep.subr.mxu0 0.0
    %4010 = vmatpush1.msra.mxu0 0.0
    %4011 = vmatprep.mubr.f32.mxu0 0.0
    %4012 = vmatmul.mubr.f32.gmra.mrb[0].mxu0 %v3894
    %v4013 = vpop.f32.mrb[0].mxu0
    %v4014 = vadd.f32 0.0, %v4013
    %v4015 = vpop.f32.mrb[0].mxu0
    %4016 = vmatprep.mubr.f32.mxu0 0.0
    %4017 = vmatmul.mubr.f32.gmra.mrb[0].mxu0 %v3897
    %v4018 = vpop.f32.mrb[0].mxu0
    %v4019 = vadd.f32 0.0, %v4018
    %v4020 = vpop.f32.mrb[0].mxu0
    %4021 = vmatprep.mubr.f32.mxu0 0.0
    %4022 = vmatmul.mubr.f32.gmra.mrb[0].mxu0 %v3900
    %v4023 = vpop.f32.mrb[0].mxu0
    %v4024 = vadd.f32 0.0, %v4023
    %v4025 = vpop.f32.mrb[0].mxu0
    %4026 = vmatprep.mubr.f32.mxu0 0.0
    %4027 = vmatmul.mubr.f32.gmra.mrb[0].mxu0 %v3903
    %v4028 = vpop.f32.mrb[0].mxu0
    %v4029 = vadd.f32 0.0, %v4028
    %v4030 = vpop.f32.mrb[0].mxu0
    %4031 = vmatprep.mubr.f32.mxu0 0.0
    %4032 = vmatmul.mubr.f32.gmra.mrb[0].mxu0 %v3906
    %v4033 = vpop.f32.mrb[0].mxu0
    %v4034 = vadd.f32 0.0, %v4033
    %v4035 = vpop.f32.mrb[0].mxu0
    %4036 = vmatprep.mubr.f32.mxu0 0.0
    %4037 = vmatmul.mubr.f32.gmra.mrb[0].mxu0 %v3909
    %v4038 = vpop.f32.mrb[0].mxu0
    %v4039 = vadd.f32 0.0, %v4038
    %v4040 = vpop.f32.mrb[0].mxu0
    %4041 = vmatprep.mubr.f32.mxu0 0.0
    %4042 = vmatmul.mubr.f32.gmra.mrb[0].mxu0 %v3912
    %v4043 = vpop.f32.mrb[0].mxu0
    %v4044 = vadd.f32 0.0, %v4043
    %v4045 = vpop.f32.mrb[0].mxu0
    %4046 = vmatprep.mubr.f32.mxu0 0.0
    %4047 = vmatmul.mubr.f32.gmra.mrb[0].mxu0 %v3915
    %v4048 = vpop.f32.mrb[0].mxu0
    %v4049 = vadd.f32 0.0, %v4048
    %v4050 = vpop.f32.mrb[0].mxu0
    %4051 = vmatprep.mubr.f32.mxu0 0.0
    %4052 = vmatmul.mubr.f32.gmra.mrb[0].mxu0 %v3918
    %v4053 = vpop.f32.mrb[0].mxu0
    %v4054 = vadd.f32 0.0, %v4053
    %v4055 = vpop.f32.mrb[0].mxu0
    %4056 = vmatprep.mubr.f32.mxu0 0.0
    %4057 = vmatmul.mubr.f32.gmra.mrb[0].mxu0 %v3921
    %v4058 = vpop.f32.mrb[0].mxu0
    %v4059 = vadd.f32 0.0, %v4058
    %v4060 = vpop.f32.mrb[0].mxu0
    %4061 = vmatprep.mubr.f32.mxu0 0.0
    %4062 = vmatmul.mubr.f32.gmra.mrb[0].mxu0 %v3924
    %v4063 = vpop.f32.mrb[0].mxu0
    %v4064 = vadd.f32 0.0, %v4063
    %v4065 = vpop.f32.mrb[0].mxu0
    %4066 = vmatprep.mubr.f32.mxu0 0.0
    %4067 = vmatmul.mubr.f32.gmra.mrb[0].mxu0 %v3927
    %v4068 = vpop.f32.mrb[0].mxu0
    %v4069 = vadd.f32 0.0, %v4068
    %v4070 = vpop.f32.mrb[0].mxu0
    %4071 = vmatprep.mubr.f32.mxu0 0.0
    %4072 = vmatmul.mubr.f32.gmra.mrb[0].mxu0 %v3930
    %v4073 = vpop.f32.mrb[0].mxu0
    %v4074 = vadd.f32 0.0, %v4073
    %v4075 = vpop.f32.mrb[0].mxu0
    %4076 = vmatprep.mubr.f32.mxu0 0.0
    %4077 = vmatmul.mubr.f32.gmra.mrb[0].mxu0 %v3933
    %v4078 = vpop.f32.mrb[0].mxu0
    %v4079 = vadd.f32 0.0, %v4078
    %v4080 = vpop.f32.mrb[0].mxu0
    %4081 = vmatprep.mubr.f32.mxu0 0.0
    %4082 = vmatmul.mubr.f32.gmra.mrb[0].mxu0 %v3936
    %v4083 = vpop.f32.mrb[0].mxu0
    %v4084 = vadd.f32 0.0, %v4083
    %v4085 = vpop.f32.mrb[0].mxu0
    %4086 = vmatprep.mubr.f32.mxu0 0.0
    %4087 = vmatmul.mubr.f32.gmra.mrb[0].mxu0 %v3939
    %v4088 = vpop.f32.mrb[0].mxu0
    %v4089 = vadd.f32 0.0, %v4088
    %v4090 = vpop.f32.mrb[0].mxu0
    %4091 = vmatprep.mubr.f32.mxu0 0.0
    %4092 = vmatmul.mubr.f32.gmra.mrb[0].mxu0 %v3942
    %v4093 = vpop.f32.mrb[0].mxu0
    %v4094 = vadd.f32 0.0, %v4093
    %v4095 = vpop.f32.mrb[0].mxu0
    %4096 = vmatprep.mubr.f32.mxu0 0.0
    %4097 = vmatmul.mubr.f32.gmra.mrb[0].mxu0 %v3945
    %v4098 = vpop.f32.mrb[0].mxu0
    %v4099 = vadd.f32 0.0, %v4098
    %v4100 = vpop.f32.mrb[0].mxu0
    %4101 = vdwg.mxu0
    %v4102 = vadd.f32 %v1471, %v4014
    %v4103 = vadd.f32 %v1472, %v4019
    %v4104 = vadd.f32 %v1473, %v4024
    %v4105 = vadd.f32 %v1474, %v4029
    %v4106 = vadd.f32 %v1475, %v4034
    %v4107 = vadd.f32 %v1476, %v4039
    %v4108 = vadd.f32 %v1477, %v4044
    %v4109 = vadd.f32 %v1478, %v4049
    %v4110 = vadd.f32 %v1479, %v4054
    %v4111 = vadd.f32 %v1480, %v4059
    %v4112 = vadd.f32 %v1481, %v4064
    %v4113 = vadd.f32 %v1482, %v4069
    %v4114 = vadd.f32 %v1483, %v4074
    %v4115 = vadd.f32 %v1484, %v4079
    %v4116 = vadd.f32 %v1485, %v4084
    %v4117 = vadd.f32 %v1486, %v4089
    %v4118 = vadd.f32 %v1487, %v4094
    %v4119 = vadd.f32 %v1488, %v4099
    %v4120 = vld [vmem:[%s10] sm:$0x1]
    %v4122 = vlaneseq
    %v4123 = vshrl.u32 %v4122, 7
    %v4124 = vsub.s32 0, %v4123
    %v4125 = vrot.slane %v4120, %v4124
    %v4127 = vadd.f32 %v4102, %v4125
    %v4128 = vadd.f32 %v4103, %v4125
    %v4129 = vadd.f32 %v4104, %v4125
    %v4130 = vadd.f32 %v4105, %v4125
    %v4131 = vadd.f32 %v4106, %v4125
    %v4132 = vadd.f32 %v4107, %v4125
    %v4133 = vadd.f32 %v4108, %v4125
    %v4134 = vadd.f32 %v4109, %v4125
    %v4135 = vadd.f32 %v4110, %v4125
    %v4136 = vadd.f32 %v4111, %v4125
    %v4137 = vadd.f32 %v4112, %v4125
    %v4138 = vadd.f32 %v4113, %v4125
    %v4139 = vadd.f32 %v4114, %v4125
    %v4140 = vadd.f32 %v4115, %v4125
    %v4141 = vadd.f32 %v4116, %v4125
    %v4142 = vadd.f32 %v4117, %v4125
    %v4143 = vadd.f32 %v4118, %v4125
    %v4144 = vadd.f32 %v4119, %v4125
    %v4145 = vld [vmem:[%s11] sm:$0x1]
    %v4146 = vld [vmem:[%s12] sm:$0x1]
    %v4147 = vsel %vm1434, %v4127, 0.0
    %4148 = vadd.xlane.f32.xlu0 %v4147
    %v4149 = vpop.xlane.xlu0 %4148
    %v4150 = vsel %vm1434, %v4128, 0.0
    %4151 = vadd.xlane.f32.xlu0 %v4150
    %v4152 = vpop.xlane.xlu0 %4151
    %v4153 = vsel %vm1434, %v4129, 0.0
    %4154 = vadd.xlane.f32.xlu0 %v4153
    %v4155 = vpop.xlane.xlu0 %4154
    %v4156 = vsel %vm1434, %v4130, 0.0
    %4157 = vadd.xlane.f32.xlu0 %v4156
    %v4158 = vpop.xlane.xlu0 %4157
    %v4159 = vsel %vm1434, %v4131, 0.0
    %4160 = vadd.xlane.f32.xlu0 %v4159
    %v4161 = vpop.xlane.xlu0 %4160
    %v4162 = vsel %vm1434, %v4132, 0.0
    %4163 = vadd.xlane.f32.xlu0 %v4162
    %v4164 = vpop.xlane.xlu0 %4163
    %v4165 = vsel %vm1434, %v4133, 0.0
    %4166 = vadd.xlane.f32.xlu0 %v4165
    %v4167 = vpop.xlane.xlu0 %4166
    %v4168 = vsel %vm1434, %v4134, 0.0
    %4169 = vadd.xlane.f32.xlu0 %v4168
    %v4170 = vpop.xlane.xlu0 %4169
    %v4171 = vsel %vm1434, %v4135, 0.0
    %4172 = vadd.xlane.f32.xlu0 %v4171
    %v4173 = vpop.xlane.xlu0 %4172
    %v4174 = vsel %vm1434, %v4136, 0.0
    %4175 = vadd.xlane.f32.xlu0 %v4174
    %v4176 = vpop.xlane.xlu0 %4175
    %v4177 = vsel %vm1434, %v4137, 0.0
    %4178 = vadd.xlane.f32.xlu0 %v4177
    %v4179 = vpop.xlane.xlu0 %4178
    %v4180 = vsel %vm1434, %v4138, 0.0
    %4181 = vadd.xlane.f32.xlu0 %v4180
    %v4182 = vpop.xlane.xlu0 %4181
    %v4183 = vsel %vm1434, %v4139, 0.0
    %4184 = vadd.xlane.f32.xlu0 %v4183
    %v4185 = vpop.xlane.xlu0 %4184
    %v4186 = vsel %vm1434, %v4140, 0.0
    %4187 = vadd.xlane.f32.xlu0 %v4186
    %v4188 = vpop.xlane.xlu0 %4187
    %v4189 = vsel %vm1434, %v4141, 0.0
    %4190 = vadd.xlane.f32.xlu0 %v4189
    %v4191 = vpop.xlane.xlu0 %4190
    %v4192 = vsel %vm1434, %v4142, 0.0
    %4193 = vadd.xlane.f32.xlu0 %v4192
    %v4194 = vpop.xlane.xlu0 %4193
    %v4195 = vsel %vm1434, %v4143, 0.0
    %4196 = vadd.xlane.f32.xlu0 %v4195
    %v4197 = vpop.xlane.xlu0 %4196
    %v4198 = vsel %vm1434, %v4144, 0.0
    %4199 = vadd.xlane.f32.xlu0 %v4198
    %v4200 = vpop.xlane.xlu0 %4199
    %v4201 = vmul.f32 %v4149, %v1549
    %v4202 = vmul.f32 %v4152, %v1549
    %v4203 = vmul.f32 %v4155, %v1549
    %v4204 = vmul.f32 %v4158, %v1549
    %v4205 = vmul.f32 %v4161, %v1549
    %v4206 = vmul.f32 %v4164, %v1549
    %v4207 = vmul.f32 %v4167, %v1549
    %v4208 = vmul.f32 %v4170, %v1549
    %v4209 = vmul.f32 %v4173, %v1549
    %v4210 = vmul.f32 %v4176, %v1549
    %v4211 = vmul.f32 %v4179, %v1549
    %v4212 = vmul.f32 %v4182, %v1549
    %v4213 = vmul.f32 %v4185, %v1549
    %v4214 = vmul.f32 %v4188, %v1549
    %v4215 = vmul.f32 %v4191, %v1549
    %v4216 = vmul.f32 %v4194, %v1549
    %v4217 = vmul.f32 %v4197, %v1549
    %v4218 = vmul.f32 %v4200, %v1549
    %v4219 = vsub.f32 %v4127, %v4201
    %v4220 = vsub.f32 %v4128, %v4202
    %v4221 = vsub.f32 %v4129, %v4203
    %v4222 = vsub.f32 %v4130, %v4204
    %v4223 = vsub.f32 %v4131, %v4205
    %v4224 = vsub.f32 %v4132, %v4206
    %v4225 = vsub.f32 %v4133, %v4207
    %v4226 = vsub.f32 %v4134, %v4208
    %v4227 = vsub.f32 %v4135, %v4209
    %v4228 = vsub.f32 %v4136, %v4210
    %v4229 = vsub.f32 %v4137, %v4211
    %v4230 = vsub.f32 %v4138, %v4212
    %v4231 = vsub.f32 %v4139, %v4213
    %v4232 = vsub.f32 %v4140, %v4214
    %v4233 = vsub.f32 %v4141, %v4215
    %v4234 = vsub.f32 %v4142, %v4216
    %v4235 = vsub.f32 %v4143, %v4217
    %v4236 = vsub.f32 %v4144, %v4218
    %v4237 = vmul.f32 %v4219, %v4219
    %v4238 = vmul.f32 %v4220, %v4220
    %v4239 = vmul.f32 %v4221, %v4221
    %v4240 = vmul.f32 %v4222, %v4222
    %v4241 = vmul.f32 %v4223, %v4223
    %v4242 = vmul.f32 %v4224, %v4224
    %v4243 = vmul.f32 %v4225, %v4225
    %v4244 = vmul.f32 %v4226, %v4226
    %v4245 = vmul.f32 %v4227, %v4227
    %v4246 = vmul.f32 %v4228, %v4228
    %v4247 = vmul.f32 %v4229, %v4229
    %v4248 = vmul.f32 %v4230, %v4230
    %v4249 = vmul.f32 %v4231, %v4231
    %v4250 = vmul.f32 %v4232, %v4232
    %v4251 = vmul.f32 %v4233, %v4233
    %v4252 = vmul.f32 %v4234, %v4234
    %v4253 = vmul.f32 %v4235, %v4235
    %v4254 = vmul.f32 %v4236, %v4236
    %v4255 = vsel %vm1434, %v4237, 0.0
    %4256 = vadd.xlane.f32.xlu0 %v4255
    %v4257 = vpop.xlane.xlu0 %4256
    %v4258 = vsel %vm1434, %v4238, 0.0
    %4259 = vadd.xlane.f32.xlu0 %v4258
    %v4260 = vpop.xlane.xlu0 %4259
    %v4261 = vsel %vm1434, %v4239, 0.0
    %4262 = vadd.xlane.f32.xlu0 %v4261
    %v4263 = vpop.xlane.xlu0 %4262
    %v4264 = vsel %vm1434, %v4240, 0.0
    %4265 = vadd.xlane.f32.xlu0 %v4264
    %v4266 = vpop.xlane.xlu0 %4265
    %v4267 = vsel %vm1434, %v4241, 0.0
    %4268 = vadd.xlane.f32.xlu0 %v4267
    %v4269 = vpop.xlane.xlu0 %4268
    %v4270 = vsel %vm1434, %v4242, 0.0
    %4271 = vadd.xlane.f32.xlu0 %v4270
    %v4272 = vpop.xlane.xlu0 %4271
    %v4273 = vsel %vm1434, %v4243, 0.0
    %4274 = vadd.xlane.f32.xlu0 %v4273
    %v4275 = vpop.xlane.xlu0 %4274
    %v4276 = vsel %vm1434, %v4244, 0.0
    %4277 = vadd.xlane.f32.xlu0 %v4276
    %v4278 = vpop.xlane.xlu0 %4277
    %v4279 = vsel %vm1434, %v4245, 0.0
    %4280 = vadd.xlane.f32.xlu0 %v4279
    %v4281 = vpop.xlane.xlu0 %4280
    %v4282 = vsel %vm1434, %v4246, 0.0
    %4283 = vadd.xlane.f32.xlu0 %v4282
    %v4284 = vpop.xlane.xlu0 %4283
    %v4285 = vsel %vm1434, %v4247, 0.0
    %4286 = vadd.xlane.f32.xlu0 %v4285
    %v4287 = vpop.xlane.xlu0 %4286
    %v4288 = vsel %vm1434, %v4248, 0.0
    %4289 = vadd.xlane.f32.xlu0 %v4288
    %v4290 = vpop.xlane.xlu0 %4289
    %v4291 = vsel %vm1434, %v4249, 0.0
    %4292 = vadd.xlane.f32.xlu0 %v4291
    %v4293 = vpop.xlane.xlu0 %4292
    %v4294 = vsel %vm1434, %v4250, 0.0
    %4295 = vadd.xlane.f32.xlu0 %v4294
    %v4296 = vpop.xlane.xlu0 %4295
    %v4297 = vsel %vm1434, %v4251, 0.0
    %4298 = vadd.xlane.f32.xlu0 %v4297
    %v4299 = vpop.xlane.xlu0 %4298
    %v4300 = vsel %vm1434, %v4252, 0.0
    %4301 = vadd.xlane.f32.xlu0 %v4300
    %v4302 = vpop.xlane.xlu0 %4301
    %v4303 = vsel %vm1434, %v4253, 0.0
    %4304 = vadd.xlane.f32.xlu0 %v4303
    %v4305 = vpop.xlane.xlu0 %4304
    %v4306 = vsel %vm1434, %v4254, 0.0
    %4307 = vadd.xlane.f32.xlu0 %v4306
    %v4308 = vpop.xlane.xlu0 %4307
    %v4309 = vmul.f32 %v4257, %v1549
    %v4310 = vmul.f32 %v4260, %v1549
    %v4311 = vmul.f32 %v4263, %v1549
    %v4312 = vmul.f32 %v4266, %v1549
    %v4313 = vmul.f32 %v4269, %v1549
    %v4314 = vmul.f32 %v4272, %v1549
    %v4315 = vmul.f32 %v4275, %v1549
    %v4316 = vmul.f32 %v4278, %v1549
    %v4317 = vmul.f32 %v4281, %v1549
    %v4318 = vmul.f32 %v4284, %v1549
    %v4319 = vmul.f32 %v4287, %v1549
    %v4320 = vmul.f32 %v4290, %v1549
    %v4321 = vmul.f32 %v4293, %v1549
    %v4322 = vmul.f32 %v4296, %v1549
    %v4323 = vmul.f32 %v4299, %v1549
    %v4324 = vmul.f32 %v4302, %v1549
    %v4325 = vmul.f32 %v4305, %v1549
    %v4326 = vmul.f32 %v4308, %v1549
    %v4327 = vadd.f32 %v4309, 1e-05
    %v4328 = vadd.f32 %v4310, 1e-05
    %v4329 = vadd.f32 %v4311, 1e-05
    %v4330 = vadd.f32 %v4312, 1e-05
    %v4331 = vadd.f32 %v4313, 1e-05
    %v4332 = vadd.f32 %v4314, 1e-05
    %v4333 = vadd.f32 %v4315, 1e-05
    %v4334 = vadd.f32 %v4316, 1e-05
    %v4335 = vadd.f32 %v4317, 1e-05
    %v4336 = vadd.f32 %v4318, 1e-05
    %v4337 = vadd.f32 %v4319, 1e-05
    %v4338 = vadd.f32 %v4320, 1e-05
    %v4339 = vadd.f32 %v4321, 1e-05
    %v4340 = vadd.f32 %v4322, 1e-05
    %v4341 = vadd.f32 %v4323, 1e-05
    %v4342 = vadd.f32 %v4324, 1e-05
    %v4343 = vadd.f32 %v4325, 1e-05
    %v4344 = vadd.f32 %v4326, 1e-05
    %v4345 = vrsqrt.pop %v4327
    %v4346 = vrsqrt.pop %v4328
    %v4347 = vrsqrt.pop %v4329
    %v4348 = vrsqrt.pop %v4330
    %v4349 = vrsqrt.pop %v4331
    %v4350 = vrsqrt.pop %v4332
    %v4351 = vrsqrt.pop %v4333
    %v4352 = vrsqrt.pop %v4334
    %v4353 = vrsqrt.pop %v4335
    %v4354 = vrsqrt.pop %v4336
    %v4355 = vrsqrt.pop %v4337
    %v4356 = vrsqrt.pop %v4338
    %v4357 = vrsqrt.pop %v4339
    %v4358 = vrsqrt.pop %v4340
    %v4359 = vrsqrt.pop %v4341
    %v4360 = vrsqrt.pop %v4342
    %v4361 = vrsqrt.pop %v4343
    %v4362 = vrsqrt.pop %v4344
    %v4363 = vmul.f32 %v4219, %v4345
    %v4364 = vmul.f32 %v4220, %v4346
    %v4365 = vmul.f32 %v4221, %v4347
    %v4366 = vmul.f32 %v4222, %v4348
    %v4367 = vmul.f32 %v4223, %v4349
    %v4368 = vmul.f32 %v4224, %v4350
    %v4369 = vmul.f32 %v4225, %v4351
    %v4370 = vmul.f32 %v4226, %v4352
    %v4371 = vmul.f32 %v4227, %v4353
    %v4372 = vmul.f32 %v4228, %v4354
    %v4373 = vmul.f32 %v4229, %v4355
    %v4374 = vmul.f32 %v4230, %v4356
    %v4375 = vmul.f32 %v4231, %v4357
    %v4376 = vmul.f32 %v4232, %v4358
    %v4377 = vmul.f32 %v4233, %v4359
    %v4378 = vmul.f32 %v4234, %v4360
    %v4379 = vmul.f32 %v4235, %v4361
    %v4380 = vmul.f32 %v4236, %v4362
    %v4382 = vlaneseq
    %v4383 = vshrl.u32 %v4382, 7
    %v4384 = vsub.s32 0, %v4383
    %v4385 = vrot.slane %v4145, %v4384
    %v4387 = vmul.f32 %v4363, %v4385
    %v4388 = vmul.f32 %v4364, %v4385
    %v4389 = vmul.f32 %v4365, %v4385
    %v4390 = vmul.f32 %v4366, %v4385
    %v4391 = vmul.f32 %v4367, %v4385
    %v4392 = vmul.f32 %v4368, %v4385
    %v4393 = vmul.f32 %v4369, %v4385
    %v4394 = vmul.f32 %v4370, %v4385
    %v4395 = vmul.f32 %v4371, %v4385
    %v4396 = vmul.f32 %v4372, %v4385
    %v4397 = vmul.f32 %v4373, %v4385
    %v4398 = vmul.f32 %v4374, %v4385
    %v4399 = vmul.f32 %v4375, %v4385
    %v4400 = vmul.f32 %v4376, %v4385
    %v4401 = vmul.f32 %v4377, %v4385
    %v4402 = vmul.f32 %v4378, %v4385
    %v4403 = vmul.f32 %v4379, %v4385
    %v4404 = vmul.f32 %v4380, %v4385
    %v4406 = vlaneseq
    %v4407 = vshrl.u32 %v4406, 7
    %v4408 = vsub.s32 0, %v4407
    %v4409 = vrot.slane %v4146, %v4408
    %v4411 = vadd.f32 %v4387, %v4409
    %v4412 = vadd.f32 %v4388, %v4409
    %v4413 = vadd.f32 %v4389, %v4409
    %v4414 = vadd.f32 %v4390, %v4409
    %v4415 = vadd.f32 %v4391, %v4409
    %v4416 = vadd.f32 %v4392, %v4409
    %v4417 = vadd.f32 %v4393, %v4409
    %v4418 = vadd.f32 %v4394, %v4409
    %v4419 = vadd.f32 %v4395, %v4409
    %v4420 = vadd.f32 %v4396, %v4409
    %v4421 = vadd.f32 %v4397, %v4409
    %v4422 = vadd.f32 %v4398, %v4409
    %v4423 = vadd.f32 %v4399, %v4409
    %v4424 = vadd.f32 %v4400, %v4409
    %v4425 = vadd.f32 %v4401, %v4409
    %v4426 = vadd.f32 %v4402, %v4409
    %v4427 = vadd.f32 %v4403, %v4409
    %v4428 = vadd.f32 %v4404, %v4409
    %v4429 = vld [vmem:[%s13] sm:$0xff]
    %v4430 = vld [vmem:[%s13 + $0x8] sm:$0xff]
    %v4431 = vld [vmem:[%s13 + $0x10] sm:$0xff]
    %v4432 = vld [vmem:[%s13 + $0x18] sm:$0xff]
    %v4433 = vld [vmem:[%s14] sm:$0x1]
    %v4435 = vlaneseq
    %v4436 = vshrl.u32 %v4435, 7
    %v4437 = vsub.s32 0, %v4436
    %v4438 = vrot.slane %v4433, %v4437
    %v4441 = vsel %vm1434, %v4411, 0
    %v4444 = vsel %vm1434, %v4412, 0
    %v4447 = vsel %vm1434, %v4413, 0
    %v4450 = vsel %vm1434, %v4414, 0
    %v4453 = vsel %vm1434, %v4415, 0
    %v4456 = vsel %vm1434, %v4416, 0
    %v4459 = vsel %vm1434, %v4417, 0
    %v4462 = vsel %vm1434, %v4418, 0
    %v4465 = vsel %vm1434, %v4419, 0
    %v4468 = vsel %vm1434, %v4420, 0
    %v4471 = vsel %vm1434, %v4421, 0
    %v4474 = vsel %vm1434, %v4422, 0
    %v4477 = vsel %vm1434, %v4423, 0
    %v4480 = vsel %vm1434, %v4424, 0
    %v4483 = vsel %vm1434, %v4425, 0
    %v4486 = vsel %vm1434, %v4426, 0
    %v4489 = vsel %vm1434, %v4427, 0
    %v4492 = vsel %vm1434, %v4428, 0
    %4494 = vmatprep.subr.mxu0 0.0
    %4495 = vmatpush1.msra.mxu0 %v4429
    %4496 = vmatprep.subr.mxu0 0.0
    %4497 = vmatpush1.msra.mxu0 %v4430
    %4498 = vmatprep.subr.mxu0 0.0
    %4499 = vmatpush1.msra.mxu0 %v4431
    %4500 = vmatprep.subr.mxu0 0.0
    %4501 = vmatpush1.msra.mxu0 %v4432
    %4502 = vmatprep.subr.mxu0 0.0
    %4503 = vmatpush1.msra.mxu0 0.0
    %4504 = vmatprep.subr.mxu0 0.0
    %4505 = vmatpush1.msra.mxu0 0.0
    %4506 = vmatprep.subr.mxu0 0.0
    %4507 = vmatpush1.msra.mxu0 0.0
    %4508 = vmatprep.subr.mxu0 0.0
    %4509 = vmatpush1.msra.mxu0 0.0
    %4510 = vmatprep.subr.mxu0 0.0
    %4511 = vmatpush1.msra.mxu0 0.0
    %4512 = vmatprep.subr.mxu0 0.0
    %4513 = vmatpush1.msra.mxu0 0.0
    %4514 = vmatprep.subr.mxu0 0.0
    %4515 = vmatpush1.msra.mxu0 0.0
    %4516 = vmatprep.subr.mxu0 0.0
    %4517 = vmatpush1.msra.mxu0 0.0
    %4518 = vmatprep.subr.mxu0 0.0
    %4519 = vmatpush1.msra.mxu0 0.0
    %4520 = vmatprep.subr.mxu0 0.0
    %4521 = vmatpush1.msra.mxu0 0.0
    %4522 = vmatprep.subr.mxu0 0.0
    %4523 = vmatpush1.msra.mxu0 0.0
    %4524 = vmatprep.subr.mxu0 0.0
    %4525 = vmatpush1.msra.mxu0 0.0
    %4526 = vmatprep.subr.mxu0 0.0
    %4527 = vmatpush1.msra.mxu0 0.0
    %4528 = vmatprep.subr.mxu0 0.0
    %4529 = vmatpush1.msra.mxu0 0.0
    %4530 = vmatprep.subr.mxu0 0.0
    %4531 = vmatpush1.msra.mxu0 0.0
    %4532 = vmatprep.subr.mxu0 0.0
    %4533 = vmatpush1.msra.mxu0 0.0
    %4534 = vmatprep.subr.mxu0 0.0
    %4535 = vmatpush1.msra.mxu0 0.0
    %4536 = vmatprep.subr.mxu0 0.0
    %4537 = vmatpush1.msra.mxu0 0.0
    %4538 = vmatprep.subr.mxu0 0.0
    %4539 = vmatpush1.msra.mxu0 0.0
    %4540 = vmatprep.subr.mxu0 0.0
    %4541 = vmatpush1.msra.mxu0 0.0
    %4542 = vmatprep.subr.mxu0 0.0
    %4543 = vmatpush1.msra.mxu0 0.0
    %4544 = vmatprep.subr.mxu0 0.0
    %4545 = vmatpush1.msra.mxu0 0.0
    %4546 = vmatprep.subr.mxu0 0.0
    %4547 = vmatpush1.msra.mxu0 0.0
    %4548 = vmatprep.subr.mxu0 0.0
    %4549 = vmatpush1.msra.mxu0 0.0
    %4550 = vmatprep.subr.mxu0 0.0
    %4551 = vmatpush1.msra.mxu0 0.0
    %4552 = vmatprep.subr.mxu0 0.0
    %4553 = vmatpush1.msra.mxu0 0.0
    %4554 = vmatprep.subr.mxu0 0.0
    %4555 = vmatpush1.msra.mxu0 0.0
    %4556 = vmatprep.subr.mxu0 0.0
    %4557 = vmatpush1.msra.mxu0 0.0
    %4558 = vmatprep.mubr.f32.mxu0 0.0
    %4559 = vmatmul.mubr.f32.gmra.mrb[0].mxu0 %v4441
    %v4560 = vpop.f32.mrb[0].mxu0
    %v4561 = vadd.f32 %v4438, %v4560
    %v4562 = vpop.f32.mrb[0].mxu0
    %4563 = vmatprep.mubr.f32.mxu0 0.0
    %4564 = vmatmul.mubr.f32.gmra.mrb[0].mxu0 %v4444
    %v4565 = vpop.f32.mrb[0].mxu0
    %v4566 = vadd.f32 %v4438, %v4565
    %v4567 = vpop.f32.mrb[0].mxu0
    %4568 = vmatprep.mubr.f32.mxu0 0.0
    %4569 = vmatmul.mubr.f32.gmra.mrb[0].mxu0 %v4447
    %v4570 = vpop.f32.mrb[0].mxu0
    %v4571 = vadd.f32 %v4438, %v4570
    %v4572 = vpop.f32.mrb[0].mxu0
    %4573 = vmatprep.mubr.f32.mxu0 0.0
    %4574 = vmatmul.mubr.f32.gmra.mrb[0].mxu0 %v4450
    %v4575 = vpop.f32.mrb[0].mxu0
    %v4576 = vadd.f32 %v4438, %v4575
    %v4577 = vpop.f32.mrb[0].mxu0
    %4578 = vmatprep.mubr.f32.mxu0 0.0
    %4579 = vmatmul.mubr.f32.gmra.mrb[0].mxu0 %v4453
    %v4580 = vpop.f32.mrb[0].mxu0
    %v4581 = vadd.f32 %v4438, %v4580
    %v4582 = vpop.f32.mrb[0].mxu0
    %4583 = vmatprep.mubr.f32.mxu0 0.0
    %4584 = vmatmul.mubr.f32.gmra.mrb[0].mxu0 %v4456
    %v4585 = vpop.f32.mrb[0].mxu0
    %v4586 = vadd.f32 %v4438, %v4585
    %v4587 = vpop.f32.mrb[0].mxu0
    %4588 = vmatprep.mubr.f32.mxu0 0.0
    %4589 = vmatmul.mubr.f32.gmra.mrb[0].mxu0 %v4459
    %v4590 = vpop.f32.mrb[0].mxu0
    %v4591 = vadd.f32 %v4438, %v4590
    %v4592 = vpop.f32.mrb[0].mxu0
    %4593 = vmatprep.mubr.f32.mxu0 0.0
    %4594 = vmatmul.mubr.f32.gmra.mrb[0].mxu0 %v4462
    %v4595 = vpop.f32.mrb[0].mxu0
    %v4596 = vadd.f32 %v4438, %v4595
    %v4597 = vpop.f32.mrb[0].mxu0
    %4598 = vmatprep.mubr.f32.mxu0 0.0
    %4599 = vmatmul.mubr.f32.gmra.mrb[0].mxu0 %v4465
    %v4600 = vpop.f32.mrb[0].mxu0
    %v4601 = vadd.f32 %v4438, %v4600
    %v4602 = vpop.f32.mrb[0].mxu0
    %4603 = vmatprep.mubr.f32.mxu0 0.0
    %4604 = vmatmul.mubr.f32.gmra.mrb[0].mxu0 %v4468
    %v4605 = vpop.f32.mrb[0].mxu0
    %v4606 = vadd.f32 %v4438, %v4605
    %v4607 = vpop.f32.mrb[0].mxu0
    %4608 = vmatprep.mubr.f32.mxu0 0.0
    %4609 = vmatmul.mubr.f32.gmra.mrb[0].mxu0 %v4471
    %v4610 = vpop.f32.mrb[0].mxu0
    %v4611 = vadd.f32 %v4438, %v4610
    %v4612 = vpop.f32.mrb[0].mxu0
    %4613 = vmatprep.mubr.f32.mxu0 0.0
    %4614 = vmatmul.mubr.f32.gmra.mrb[0].mxu0 %v4474
    %v4615 = vpop.f32.mrb[0].mxu0
    %v4616 = vadd.f32 %v4438, %v4615
    %v4617 = vpop.f32.mrb[0].mxu0
    %4618 = vmatprep.mubr.f32.mxu0 0.0
    %4619 = vmatmul.mubr.f32.gmra.mrb[0].mxu0 %v4477
    %v4620 = vpop.f32.mrb[0].mxu0
    %v4621 = vadd.f32 %v4438, %v4620
    %v4622 = vpop.f32.mrb[0].mxu0
    %4623 = vmatprep.mubr.f32.mxu0 0.0
    %4624 = vmatmul.mubr.f32.gmra.mrb[0].mxu0 %v4480
    %v4625 = vpop.f32.mrb[0].mxu0
    %v4626 = vadd.f32 %v4438, %v4625
    %v4627 = vpop.f32.mrb[0].mxu0
    %4628 = vmatprep.mubr.f32.mxu0 0.0
    %4629 = vmatmul.mubr.f32.gmra.mrb[0].mxu0 %v4483
    %v4630 = vpop.f32.mrb[0].mxu0
    %v4631 = vadd.f32 %v4438, %v4630
    %v4632 = vpop.f32.mrb[0].mxu0
    %4633 = vmatprep.mubr.f32.mxu0 0.0
    %4634 = vmatmul.mubr.f32.gmra.mrb[0].mxu0 %v4486
    %v4635 = vpop.f32.mrb[0].mxu0
    %v4636 = vadd.f32 %v4438, %v4635
    %v4637 = vpop.f32.mrb[0].mxu0
    %4638 = vmatprep.mubr.f32.mxu0 0.0
    %4639 = vmatmul.mubr.f32.gmra.mrb[0].mxu0 %v4489
    %v4640 = vpop.f32.mrb[0].mxu0
    %v4641 = vadd.f32 %v4438, %v4640
    %v4642 = vpop.f32.mrb[0].mxu0
    %4643 = vmatprep.mubr.f32.mxu0 0.0
    %4644 = vmatmul.mubr.f32.gmra.mrb[0].mxu0 %v4492
    %v4645 = vpop.f32.mrb[0].mxu0
    %v4646 = vadd.f32 %v4438, %v4645
    %v4647 = vpop.f32.mrb[0].mxu0
    %4648 = vdwg.mxu0
    %v4649 = vmul.f32 %v4561, 0.5
    %v4650 = vmul.f32 %v4566, 0.5
    %v4651 = vmul.f32 %v4571, 0.5
    %v4652 = vmul.f32 %v4576, 0.5
    %v4653 = vmul.f32 %v4581, 0.5
    %v4654 = vmul.f32 %v4586, 0.5
    %v4655 = vmul.f32 %v4591, 0.5
    %v4656 = vmul.f32 %v4596, 0.5
    %v4657 = vmul.f32 %v4601, 0.5
    %v4658 = vmul.f32 %v4606, 0.5
    %v4659 = vmul.f32 %v4611, 0.5
    %v4660 = vmul.f32 %v4616, 0.5
    %v4661 = vmul.f32 %v4621, 0.5
    %v4662 = vmul.f32 %v4626, 0.5
    %v4663 = vmul.f32 %v4631, 0.5
    %v4664 = vmul.f32 %v4636, 0.5
    %v4665 = vmul.f32 %v4641, 0.5
    %v4666 = vmul.f32 %v4646, 0.5
    %v4667 = vmul.f32 %v4561, 0.044715
    %v4668 = vmul.f32 %v4566, 0.044715
    %v4669 = vmul.f32 %v4571, 0.044715
    %v4670 = vmul.f32 %v4576, 0.044715
    %v4671 = vmul.f32 %v4581, 0.044715
    %v4672 = vmul.f32 %v4586, 0.044715
    %v4673 = vmul.f32 %v4591, 0.044715
    %v4674 = vmul.f32 %v4596, 0.044715
    %v4675 = vmul.f32 %v4601, 0.044715
    %v4676 = vmul.f32 %v4606, 0.044715
    %v4677 = vmul.f32 %v4611, 0.044715
    %v4678 = vmul.f32 %v4616, 0.044715
    %v4679 = vmul.f32 %v4621, 0.044715
    %v4680 = vmul.f32 %v4626, 0.044715
    %v4681 = vmul.f32 %v4631, 0.044715
    %v4682 = vmul.f32 %v4636, 0.044715
    %v4683 = vmul.f32 %v4641, 0.044715
    %v4684 = vmul.f32 %v4646, 0.044715
    %v4685 = vmul.f32 %v4667, %v4561
    %v4686 = vmul.f32 %v4668, %v4566
    %v4687 = vmul.f32 %v4669, %v4571
    %v4688 = vmul.f32 %v4670, %v4576
    %v4689 = vmul.f32 %v4671, %v4581
    %v4690 = vmul.f32 %v4672, %v4586
    %v4691 = vmul.f32 %v4673, %v4591
    %v4692 = vmul.f32 %v4674, %v4596
    %v4693 = vmul.f32 %v4675, %v4601
    %v4694 = vmul.f32 %v4676, %v4606
    %v4695 = vmul.f32 %v4677, %v4611
    %v4696 = vmul.f32 %v4678, %v4616
    %v4697 = vmul.f32 %v4679, %v4621
    %v4698 = vmul.f32 %v4680, %v4626
    %v4699 = vmul.f32 %v4681, %v4631
    %v4700 = vmul.f32 %v4682, %v4636
    %v4701 = vmul.f32 %v4683, %v4641
    %v4702 = vmul.f32 %v4684, %v4646
    %v4703 = vmul.f32 %v4685, %v4561
    %v4704 = vmul.f32 %v4686, %v4566
    %v4705 = vmul.f32 %v4687, %v4571
    %v4706 = vmul.f32 %v4688, %v4576
    %v4707 = vmul.f32 %v4689, %v4581
    %v4708 = vmul.f32 %v4690, %v4586
    %v4709 = vmul.f32 %v4691, %v4591
    %v4710 = vmul.f32 %v4692, %v4596
    %v4711 = vmul.f32 %v4693, %v4601
    %v4712 = vmul.f32 %v4694, %v4606
    %v4713 = vmul.f32 %v4695, %v4611
    %v4714 = vmul.f32 %v4696, %v4616
    %v4715 = vmul.f32 %v4697, %v4621
    %v4716 = vmul.f32 %v4698, %v4626
    %v4717 = vmul.f32 %v4699, %v4631
    %v4718 = vmul.f32 %v4700, %v4636
    %v4719 = vmul.f32 %v4701, %v4641
    %v4720 = vmul.f32 %v4702, %v4646
    %v4721 = vadd.f32 %v4561, %v4703
    %v4722 = vadd.f32 %v4566, %v4704
    %v4723 = vadd.f32 %v4571, %v4705
    %v4724 = vadd.f32 %v4576, %v4706
    %v4725 = vadd.f32 %v4581, %v4707
    %v4726 = vadd.f32 %v4586, %v4708
    %v4727 = vadd.f32 %v4591, %v4709
    %v4728 = vadd.f32 %v4596, %v4710
    %v4729 = vadd.f32 %v4601, %v4711
    %v4730 = vadd.f32 %v4606, %v4712
    %v4731 = vadd.f32 %v4611, %v4713
    %v4732 = vadd.f32 %v4616, %v4714
    %v4733 = vadd.f32 %v4621, %v4715
    %v4734 = vadd.f32 %v4626, %v4716
    %v4735 = vadd.f32 %v4631, %v4717
    %v4736 = vadd.f32 %v4636, %v4718
    %v4737 = vadd.f32 %v4641, %v4719
    %v4738 = vadd.f32 %v4646, %v4720
    %v4739 = vmul.f32 %v4721, 0.7978846
    %v4740 = vmul.f32 %v4722, 0.7978846
    %v4741 = vmul.f32 %v4723, 0.7978846
    %v4742 = vmul.f32 %v4724, 0.7978846
    %v4743 = vmul.f32 %v4725, 0.7978846
    %v4744 = vmul.f32 %v4726, 0.7978846
    %v4745 = vmul.f32 %v4727, 0.7978846
    %v4746 = vmul.f32 %v4728, 0.7978846
    %v4747 = vmul.f32 %v4729, 0.7978846
    %v4748 = vmul.f32 %v4730, 0.7978846
    %v4749 = vmul.f32 %v4731, 0.7978846
    %v4750 = vmul.f32 %v4732, 0.7978846
    %v4751 = vmul.f32 %v4733, 0.7978846
    %v4752 = vmul.f32 %v4734, 0.7978846
    %v4753 = vmul.f32 %v4735, 0.7978846
    %v4754 = vmul.f32 %v4736, 0.7978846
    %v4755 = vmul.f32 %v4737, 0.7978846
    %v4756 = vmul.f32 %v4738, 0.7978846
    %v4757 = vtanh.pop %v4739
    %v4758 = vtanh.pop %v4740
    %v4759 = vtanh.pop %v4741
    %v4760 = vtanh.pop %v4742
    %v4761 = vtanh.pop %v4743
    %v4762 = vtanh.pop %v4744
    %v4763 = vtanh.pop %v4745
    %v4764 = vtanh.pop %v4746
    %v4765 = vtanh.pop %v4747
    %v4766 = vtanh.pop %v4748
    %v4767 = vtanh.pop %v4749
    %v4768 = vtanh.pop %v4750
    %v4769 = vtanh.pop %v4751
    %v4770 = vtanh.pop %v4752
    %v4771 = vtanh.pop %v4753
    %v4772 = vtanh.pop %v4754
    %v4773 = vtanh.pop %v4755
    %v4774 = vtanh.pop %v4756
    %v4775 = vadd.f32 %v4757, 1.0
    %v4776 = vadd.f32 %v4758, 1.0
    %v4777 = vadd.f32 %v4759, 1.0
    %v4778 = vadd.f32 %v4760, 1.0
    %v4779 = vadd.f32 %v4761, 1.0
    %v4780 = vadd.f32 %v4762, 1.0
    %v4781 = vadd.f32 %v4763, 1.0
    %v4782 = vadd.f32 %v4764, 1.0
    %v4783 = vadd.f32 %v4765, 1.0
    %v4784 = vadd.f32 %v4766, 1.0
    %v4785 = vadd.f32 %v4767, 1.0
    %v4786 = vadd.f32 %v4768, 1.0
    %v4787 = vadd.f32 %v4769, 1.0
    %v4788 = vadd.f32 %v4770, 1.0
    %v4789 = vadd.f32 %v4771, 1.0
    %v4790 = vadd.f32 %v4772, 1.0
    %v4791 = vadd.f32 %v4773, 1.0
    %v4792 = vadd.f32 %v4774, 1.0
    %v4793 = vmul.f32 %v4649, %v4775
    %v4794 = vmul.f32 %v4650, %v4776
    %v4795 = vmul.f32 %v4651, %v4777
    %v4796 = vmul.f32 %v4652, %v4778
    %v4797 = vmul.f32 %v4653, %v4779
    %v4798 = vmul.f32 %v4654, %v4780
    %v4799 = vmul.f32 %v4655, %v4781
    %v4800 = vmul.f32 %v4656, %v4782
    %v4801 = vmul.f32 %v4657, %v4783
    %v4802 = vmul.f32 %v4658, %v4784
    %v4803 = vmul.f32 %v4659, %v4785
    %v4804 = vmul.f32 %v4660, %v4786
    %v4805 = vmul.f32 %v4661, %v4787
    %v4806 = vmul.f32 %v4662, %v4788
    %v4807 = vmul.f32 %v4663, %v4789
    %v4808 = vmul.f32 %v4664, %v4790
    %v4809 = vmul.f32 %v4665, %v4791
    %v4810 = vmul.f32 %v4666, %v4792
    %v4811 = vld [vmem:[%s15] sm:$0xff]
    %v4812 = vld [vmem:[%s15 + $0x8] sm:$0xff]
    %v4813 = vld [vmem:[%s15 + $0x10] sm:$0xff]
    %v4814 = vld [vmem:[%s15 + $0x18] sm:$0xff]
    %v4815 = vld [vmem:[%s15 + $0x20] sm:$0xff]
    %v4816 = vld [vmem:[%s15 + $0x28] sm:$0xff]
    %v4817 = vld [vmem:[%s15 + $0x30] sm:$0xff]
    %v4818 = vld [vmem:[%s15 + $0x38] sm:$0xff]
    %vm4819 = vcmask 523264
    %v4821 = vsel %vm4819, %v4793, 0
    %v4824 = vsel %vm4819, %v4794, 0
    %v4827 = vsel %vm4819, %v4795, 0
    %v4830 = vsel %vm4819, %v4796, 0
    %v4833 = vsel %vm4819, %v4797, 0
    %v4836 = vsel %vm4819, %v4798, 0
    %v4839 = vsel %vm4819, %v4799, 0
    %v4842 = vsel %vm4819, %v4800, 0
    %v4845 = vsel %vm4819, %v4801, 0
    %v4848 = vsel %vm4819, %v4802, 0
    %v4851 = vsel %vm4819, %v4803, 0
    %v4854 = vsel %vm4819, %v4804, 0
    %v4857 = vsel %vm4819, %v4805, 0
    %v4860 = vsel %vm4819, %v4806, 0
    %v4863 = vsel %vm4819, %v4807, 0
    %v4866 = vsel %vm4819, %v4808, 0
    %v4869 = vsel %vm4819, %v4809, 0
    %v4872 = vsel %vm4819, %v4810, 0
    %4874 = vmatprep.subr.mxu0 0.0
    %4875 = vmatpush1.msra.mxu0 %v4811
    %4876 = vmatprep.subr.mxu0 0.0
    %4877 = vmatpush1.msra.mxu0 %v4812
    %4878 = vmatprep.subr.mxu0 0.0
    %4879 = vmatpush1.msra.mxu0 %v4813
    %4880 = vmatprep.subr.mxu0 0.0
    %4881 = vmatpush1.msra.mxu0 %v4814
    %4882 = vmatprep.subr.mxu0 0.0
    %4883 = vmatpush1.msra.mxu0 %v4815
    %4884 = vmatprep.subr.mxu0 0.0
    %4885 = vmatpush1.msra.mxu0 %v4816
    %4886 = vmatprep.subr.mxu0 0.0
    %4887 = vmatpush1.msra.mxu0 %v4817
    %4888 = vmatprep.subr.mxu0 0.0
    %4889 = vmatpush1.msra.mxu0 %v4818
    %4890 = vmatprep.subr.mxu0 0.0
    %4891 = vmatpush1.msra.mxu0 0.0
    %4892 = vmatprep.subr.mxu0 0.0
    %4893 = vmatpush1.msra.mxu0 0.0
    %4894 = vmatprep.subr.mxu0 0.0
    %4895 = vmatpush1.msra.mxu0 0.0
    %4896 = vmatprep.subr.mxu0 0.0
    %4897 = vmatpush1.msra.mxu0 0.0
    %4898 = vmatprep.subr.mxu0 0.0
    %4899 = vmatpush1.msra.mxu0 0.0
    %4900 = vmatprep.subr.mxu0 0.0
    %4901 = vmatpush1.msra.mxu0 0.0
    %4902 = vmatprep.subr.mxu0 0.0
    %4903 = vmatpush1.msra.mxu0 0.0
    %4904 = vmatprep.subr.mxu0 0.0
    %4905 = vmatpush1.msra.mxu0 0.0
    %4906 = vmatprep.subr.mxu0 0.0
    %4907 = vmatpush1.msra.mxu0 0.0
    %4908 = vmatprep.subr.mxu0 0.0
    %4909 = vmatpush1.msra.mxu0 0.0
    %4910 = vmatprep.subr.mxu0 0.0
    %4911 = vmatpush1.msra.mxu0 0.0
    %4912 = vmatprep.subr.mxu0 0.0
    %4913 = vmatpush1.msra.mxu0 0.0
    %4914 = vmatprep.subr.mxu0 0.0
    %4915 = vmatpush1.msra.mxu0 0.0
    %4916 = vmatprep.subr.mxu0 0.0
    %4917 = vmatpush1.msra.mxu0 0.0
    %4918 = vmatprep.subr.mxu0 0.0
    %4919 = vmatpush1.msra.mxu0 0.0
    %4920 = vmatprep.subr.mxu0 0.0
    %4921 = vmatpush1.msra.mxu0 0.0
    %4922 = vmatprep.subr.mxu0 0.0
    %4923 = vmatpush1.msra.mxu0 0.0
    %4924 = vmatprep.subr.mxu0 0.0
    %4925 = vmatpush1.msra.mxu0 0.0
    %4926 = vmatprep.subr.mxu0 0.0
    %4927 = vmatpush1.msra.mxu0 0.0
    %4928 = vmatprep.subr.mxu0 0.0
    %4929 = vmatpush1.msra.mxu0 0.0
    %4930 = vmatprep.subr.mxu0 0.0
    %4931 = vmatpush1.msra.mxu0 0.0
    %4932 = vmatprep.subr.mxu0 0.0
    %4933 = vmatpush1.msra.mxu0 0.0
    %4934 = vmatprep.subr.mxu0 0.0
    %4935 = vmatpush1.msra.mxu0 0.0
    %4936 = vmatprep.subr.mxu0 0.0
    %4937 = vmatpush1.msra.mxu0 0.0
    %4938 = vmatprep.mubr.f32.mxu0 0.0
    %4939 = vmatmul.mubr.f32.gmra.mrb[0].mxu0 %v4821
    %v4940 = vpop.f32.mrb[0].mxu0
    %v4941 = vadd.f32 0.0, %v4940
    %v4942 = vpop.f32.mrb[0].mxu0
    %4943 = vmatprep.mubr.f32.mxu0 0.0
    %4944 = vmatmul.mubr.f32.gmra.mrb[0].mxu0 %v4824
    %v4945 = vpop.f32.mrb[0].mxu0
    %v4946 = vadd.f32 0.0, %v4945
    %v4947 = vpop.f32.mrb[0].mxu0
    %4948 = vmatprep.mubr.f32.mxu0 0.0
    %4949 = vmatmul.mubr.f32.gmra.mrb[0].mxu0 %v4827
    %v4950 = vpop.f32.mrb[0].mxu0
    %v4951 = vadd.f32 0.0, %v4950
    %v4952 = vpop.f32.mrb[0].mxu0
    %4953 = vmatprep.mubr.f32.mxu0 0.0
    %4954 = vmatmul.mubr.f32.gmra.mrb[0].mxu0 %v4830
    %v4955 = vpop.f32.mrb[0].mxu0
    %v4956 = vadd.f32 0.0, %v4955
    %v4957 = vpop.f32.mrb[0].mxu0
    %4958 = vmatprep.mubr.f32.mxu0 0.0
    %4959 = vmatmul.mubr.f32.gmra.mrb[0].mxu0 %v4833
    %v4960 = vpop.f32.mrb[0].mxu0
    %v4961 = vadd.f32 0.0, %v4960
    %v4962 = vpop.f32.mrb[0].mxu0
    %4963 = vmatprep.mubr.f32.mxu0 0.0
    %4964 = vmatmul.mubr.f32.gmra.mrb[0].mxu0 %v4836
    %v4965 = vpop.f32.mrb[0].mxu0
    %v4966 = vadd.f32 0.0, %v4965
    %v4967 = vpop.f32.mrb[0].mxu0
    %4968 = vmatprep.mubr.f32.mxu0 0.0
    %4969 = vmatmul.mubr.f32.gmra.mrb[0].mxu0 %v4839
    %v4970 = vpop.f32.mrb[0].mxu0
    %v4971 = vadd.f32 0.0, %v4970
    %v4972 = vpop.f32.mrb[0].mxu0
    %4973 = vmatprep.mubr.f32.mxu0 0.0
    %4974 = vmatmul.mubr.f32.gmra.mrb[0].mxu0 %v4842
    %v4975 = vpop.f32.mrb[0].mxu0
    %v4976 = vadd.f32 0.0, %v4975
    %v4977 = vpop.f32.mrb[0].mxu0
    %4978 = vmatprep.mubr.f32.mxu0 0.0
    %4979 = vmatmul.mubr.f32.gmra.mrb[0].mxu0 %v4845
    %v4980 = vpop.f32.mrb[0].mxu0
    %v4981 = vadd.f32 0.0, %v4980
    %v4982 = vpop.f32.mrb[0].mxu0
    %4983 = vmatprep.mubr.f32.mxu0 0.0
    %4984 = vmatmul.mubr.f32.gmra.mrb[0].mxu0 %v4848
    %v4985 = vpop.f32.mrb[0].mxu0
    %v4986 = vadd.f32 0.0, %v4985
    %v4987 = vpop.f32.mrb[0].mxu0
    %4988 = vmatprep.mubr.f32.mxu0 0.0
    %4989 = vmatmul.mubr.f32.gmra.mrb[0].mxu0 %v4851
    %v4990 = vpop.f32.mrb[0].mxu0
    %v4991 = vadd.f32 0.0, %v4990
    %v4992 = vpop.f32.mrb[0].mxu0
    %4993 = vmatprep.mubr.f32.mxu0 0.0
    %4994 = vmatmul.mubr.f32.gmra.mrb[0].mxu0 %v4854
    %v4995 = vpop.f32.mrb[0].mxu0
    %v4996 = vadd.f32 0.0, %v4995
    %v4997 = vpop.f32.mrb[0].mxu0
    %4998 = vmatprep.mubr.f32.mxu0 0.0
    %4999 = vmatmul.mubr.f32.gmra.mrb[0].mxu0 %v4857
    %v5000 = vpop.f32.mrb[0].mxu0
    %v5001 = vadd.f32 0.0, %v5000
    %v5002 = vpop.f32.mrb[0].mxu0
    %5003 = vmatprep.mubr.f32.mxu0 0.0
    %5004 = vmatmul.mubr.f32.gmra.mrb[0].mxu0 %v4860
    %v5005 = vpop.f32.mrb[0].mxu0
    %v5006 = vadd.f32 0.0, %v5005
    %v5007 = vpop.f32.mrb[0].mxu0
    %5008 = vmatprep.mubr.f32.mxu0 0.0
    %5009 = vmatmul.mubr.f32.gmra.mrb[0].mxu0 %v4863
    %v5010 = vpop.f32.mrb[0].mxu0
    %v5011 = vadd.f32 0.0, %v5010
    %v5012 = vpop.f32.mrb[0].mxu0
    %5013 = vmatprep.mubr.f32.mxu0 0.0
    %5014 = vmatmul.mubr.f32.gmra.mrb[0].mxu0 %v4866
    %v5015 = vpop.f32.mrb[0].mxu0
    %v5016 = vadd.f32 0.0, %v5015
    %v5017 = vpop.f32.mrb[0].mxu0
    %5018 = vmatprep.mubr.f32.mxu0 0.0
    %5019 = vmatmul.mubr.f32.gmra.mrb[0].mxu0 %v4869
    %v5020 = vpop.f32.mrb[0].mxu0
    %v5021 = vadd.f32 0.0, %v5020
    %v5022 = vpop.f32.mrb[0].mxu0
    %5023 = vmatprep.mubr.f32.mxu0 0.0
    %5024 = vmatmul.mubr.f32.gmra.mrb[0].mxu0 %v4872
    %v5025 = vpop.f32.mrb[0].mxu0
    %v5026 = vadd.f32 0.0, %v5025
    %v5027 = vpop.f32.mrb[0].mxu0
    %5028 = vdwg.mxu0
    %v5029 = vadd.f32 %v4127, %v4941
    %v5030 = vadd.f32 %v4128, %v4946
    %v5031 = vadd.f32 %v4129, %v4951
    %v5032 = vadd.f32 %v4130, %v4956
    %v5033 = vadd.f32 %v4131, %v4961
    %v5034 = vadd.f32 %v4132, %v4966
    %v5035 = vadd.f32 %v4133, %v4971
    %v5036 = vadd.f32 %v4134, %v4976
    %v5037 = vadd.f32 %v4135, %v4981
    %v5038 = vadd.f32 %v4136, %v4986
    %v5039 = vadd.f32 %v4137, %v4991
    %v5040 = vadd.f32 %v4138, %v4996
    %v5041 = vadd.f32 %v4139, %v5001
    %v5042 = vadd.f32 %v4140, %v5006
    %v5043 = vadd.f32 %v4141, %v5011
    %v5044 = vadd.f32 %v4142, %v5016
    %v5045 = vadd.f32 %v4143, %v5021
    %v5046 = vadd.f32 %v4144, %v5026
    %v5047 = vld [vmem:[%s16] sm:$0x1]
    %v5049 = vlaneseq
    %v5050 = vshrl.u32 %v5049, 7
    %v5051 = vsub.s32 0, %v5050
    %v5052 = vrot.slane %v5047, %v5051
    %v5054 = vadd.f32 %v5029, %v5052
    %v5055 = vadd.f32 %v5030, %v5052
    %v5056 = vadd.f32 %v5031, %v5052
    %v5057 = vadd.f32 %v5032, %v5052
    %v5058 = vadd.f32 %v5033, %v5052
    %v5059 = vadd.f32 %v5034, %v5052
    %v5060 = vadd.f32 %v5035, %v5052
    %v5061 = vadd.f32 %v5036, %v5052
    %v5062 = vadd.f32 %v5037, %v5052
    %v5063 = vadd.f32 %v5038, %v5052
    %v5064 = vadd.f32 %v5039, %v5052
    %v5065 = vadd.f32 %v5040, %v5052
    %v5066 = vadd.f32 %v5041, %v5052
    %v5067 = vadd.f32 %v5042, %v5052
    %v5068 = vadd.f32 %v5043, %v5052
    %v5069 = vadd.f32 %v5044, %v5052
    %v5070 = vadd.f32 %v5045, %v5052
    %v5071 = vadd.f32 %v5046, %v5052
    %s5072 = scalar_lea.vmem %s5, 1
    %v5073 = vld [vmem:[%s5072] sm:$0x1]
    %s5074 = scalar_lea.vmem %s6, 1
    %v5075 = vld [vmem:[%s5074] sm:$0x1]
    %v5076 = vsel %vm1434, %v5054, 0.0
    %5077 = vadd.xlane.f32.xlu0 %v5076
    %v5078 = vpop.xlane.xlu0 %5077
    %v5079 = vsel %vm1434, %v5055, 0.0
    %5080 = vadd.xlane.f32.xlu0 %v5079
    %v5081 = vpop.xlane.xlu0 %5080
    %v5082 = vsel %vm1434, %v5056, 0.0
    %5083 = vadd.xlane.f32.xlu0 %v5082
    %v5084 = vpop.xlane.xlu0 %5083
    %v5085 = vsel %vm1434, %v5057, 0.0
    %5086 = vadd.xlane.f32.xlu0 %v5085
    %v5087 = vpop.xlane.xlu0 %5086
    %v5088 = vsel %vm1434, %v5058, 0.0
    %5089 = vadd.xlane.f32.xlu0 %v5088
    %v5090 = vpop.xlane.xlu0 %5089
    %v5091 = vsel %vm1434, %v5059, 0.0
    %5092 = vadd.xlane.f32.xlu0 %v5091
    %v5093 = vpop.xlane.xlu0 %5092
    %v5094 = vsel %vm1434, %v5060, 0.0
    %5095 = vadd.xlane.f32.xlu0 %v5094
    %v5096 = vpop.xlane.xlu0 %5095
    %v5097 = vsel %vm1434, %v5061, 0.0
    %5098 = vadd.xlane.f32.xlu0 %v5097
    %v5099 = vpop.xlane.xlu0 %5098
    %v5100 = vsel %vm1434, %v5062, 0.0
    %5101 = vadd.xlane.f32.xlu0 %v5100
    %v5102 = vpop.xlane.xlu0 %5101
    %v5103 = vsel %vm1434, %v5063, 0.0
    %5104 = vadd.xlane.f32.xlu0 %v5103
    %v5105 = vpop.xlane.xlu0 %5104
    %v5106 = vsel %vm1434, %v5064, 0.0
    %5107 = vadd.xlane.f32.xlu0 %v5106
    %v5108 = vpop.xlane.xlu0 %5107
    %v5109 = vsel %vm1434, %v5065, 0.0
    %5110 = vadd.xlane.f32.xlu0 %v5109
    %v5111 = vpop.xlane.xlu0 %5110
    %v5112 = vsel %vm1434, %v5066, 0.0
    %5113 = vadd.xlane.f32.xlu0 %v5112
    %v5114 = vpop.xlane.xlu0 %5113
    %v5115 = vsel %vm1434, %v5067, 0.0
    %5116 = vadd.xlane.f32.xlu0 %v5115
    %v5117 = vpop.xlane.xlu0 %5116
    %v5118 = vsel %vm1434, %v5068, 0.0
    %5119 = vadd.xlane.f32.xlu0 %v5118
    %v5120 = vpop.xlane.xlu0 %5119
    %v5121 = vsel %vm1434, %v5069, 0.0
    %5122 = vadd.xlane.f32.xlu0 %v5121
    %v5123 = vpop.xlane.xlu0 %5122
    %v5124 = vsel %vm1434, %v5070, 0.0
    %5125 = vadd.xlane.f32.xlu0 %v5124
    %v5126 = vpop.xlane.xlu0 %5125
    %v5127 = vsel %vm1434, %v5071, 0.0
    %5128 = vadd.xlane.f32.xlu0 %v5127
    %v5129 = vpop.xlane.xlu0 %5128
    %v5130 = vmul.f32 %v5078, %v1549
    %v5131 = vmul.f32 %v5081, %v1549
    %v5132 = vmul.f32 %v5084, %v1549
    %v5133 = vmul.f32 %v5087, %v1549
    %v5134 = vmul.f32 %v5090, %v1549
    %v5135 = vmul.f32 %v5093, %v1549
    %v5136 = vmul.f32 %v5096, %v1549
    %v5137 = vmul.f32 %v5099, %v1549
    %v5138 = vmul.f32 %v5102, %v1549
    %v5139 = vmul.f32 %v5105, %v1549
    %v5140 = vmul.f32 %v5108, %v1549
    %v5141 = vmul.f32 %v5111, %v1549
    %v5142 = vmul.f32 %v5114, %v1549
    %v5143 = vmul.f32 %v5117, %v1549
    %v5144 = vmul.f32 %v5120, %v1549
    %v5145 = vmul.f32 %v5123, %v1549
    %v5146 = vmul.f32 %v5126, %v1549
    %v5147 = vmul.f32 %v5129, %v1549
    %v5148 = vsub.f32 %v5054, %v5130
    %v5149 = vsub.f32 %v5055, %v5131
    %v5150 = vsub.f32 %v5056, %v5132
    %v5151 = vsub.f32 %v5057, %v5133
    %v5152 = vsub.f32 %v5058, %v5134
    %v5153 = vsub.f32 %v5059, %v5135
    %v5154 = vsub.f32 %v5060, %v5136
    %v5155 = vsub.f32 %v5061, %v5137
    %v5156 = vsub.f32 %v5062, %v5138
    %v5157 = vsub.f32 %v5063, %v5139
    %v5158 = vsub.f32 %v5064, %v5140
    %v5159 = vsub.f32 %v5065, %v5141
    %v5160 = vsub.f32 %v5066, %v5142
    %v5161 = vsub.f32 %v5067, %v5143
    %v5162 = vsub.f32 %v5068, %v5144
    %v5163 = vsub.f32 %v5069, %v5145
    %v5164 = vsub.f32 %v5070, %v5146
    %v5165 = vsub.f32 %v5071, %v5147
    %v5166 = vmul.f32 %v5148, %v5148
    %v5167 = vmul.f32 %v5149, %v5149
    %v5168 = vmul.f32 %v5150, %v5150
    %v5169 = vmul.f32 %v5151, %v5151
    %v5170 = vmul.f32 %v5152, %v5152
    %v5171 = vmul.f32 %v5153, %v5153
    %v5172 = vmul.f32 %v5154, %v5154
    %v5173 = vmul.f32 %v5155, %v5155
    %v5174 = vmul.f32 %v5156, %v5156
    %v5175 = vmul.f32 %v5157, %v5157
    %v5176 = vmul.f32 %v5158, %v5158
    %v5177 = vmul.f32 %v5159, %v5159
    %v5178 = vmul.f32 %v5160, %v5160
    %v5179 = vmul.f32 %v5161, %v5161
    %v5180 = vmul.f32 %v5162, %v5162
    %v5181 = vmul.f32 %v5163, %v5163
    %v5182 = vmul.f32 %v5164, %v5164
    %v5183 = vmul.f32 %v5165, %v5165
    %v5184 = vsel %vm1434, %v5166, 0.0
    %5185 = vadd.xlane.f32.xlu0 %v5184
    %v5186 = vpop.xlane.xlu0 %5185
    %v5187 = vsel %vm1434, %v5167, 0.0
    %5188 = vadd.xlane.f32.xlu0 %v5187
    %v5189 = vpop.xlane.xlu0 %5188
    %v5190 = vsel %vm1434, %v5168, 0.0
    %5191 = vadd.xlane.f32.xlu0 %v5190
    %v5192 = vpop.xlane.xlu0 %5191
    %v5193 = vsel %vm1434, %v5169, 0.0
    %5194 = vadd.xlane.f32.xlu0 %v5193
    %v5195 = vpop.xlane.xlu0 %5194
    %v5196 = vsel %vm1434, %v5170, 0.0
    %5197 = vadd.xlane.f32.xlu0 %v5196
    %v5198 = vpop.xlane.xlu0 %5197
    %v5199 = vsel %vm1434, %v5171, 0.0
    %5200 = vadd.xlane.f32.xlu0 %v5199
    %v5201 = vpop.xlane.xlu0 %5200
    %v5202 = vsel %vm1434, %v5172, 0.0
    %5203 = vadd.xlane.f32.xlu0 %v5202
    %v5204 = vpop.xlane.xlu0 %5203
    %v5205 = vsel %vm1434, %v5173, 0.0
    %5206 = vadd.xlane.f32.xlu0 %v5205
    %v5207 = vpop.xlane.xlu0 %5206
    %v5208 = vsel %vm1434, %v5174, 0.0
    %5209 = vadd.xlane.f32.xlu0 %v5208
    %v5210 = vpop.xlane.xlu0 %5209
    %v5211 = vsel %vm1434, %v5175, 0.0
    %5212 = vadd.xlane.f32.xlu0 %v5211
    %v5213 = vpop.xlane.xlu0 %5212
    %v5214 = vsel %vm1434, %v5176, 0.0
    %5215 = vadd.xlane.f32.xlu0 %v5214
    %v5216 = vpop.xlane.xlu0 %5215
    %v5217 = vsel %vm1434, %v5177, 0.0
    %5218 = vadd.xlane.f32.xlu0 %v5217
    %v5219 = vpop.xlane.xlu0 %5218
    %v5220 = vsel %vm1434, %v5178, 0.0
    %5221 = vadd.xlane.f32.xlu0 %v5220
    %v5222 = vpop.xlane.xlu0 %5221
    %v5223 = vsel %vm1434, %v5179, 0.0
    %5224 = vadd.xlane.f32.xlu0 %v5223
    %v5225 = vpop.xlane.xlu0 %5224
    %v5226 = vsel %vm1434, %v5180, 0.0
    %5227 = vadd.xlane.f32.xlu0 %v5226
    %v5228 = vpop.xlane.xlu0 %5227
    %v5229 = vsel %vm1434, %v5181, 0.0
    %5230 = vadd.xlane.f32.xlu0 %v5229
    %v5231 = vpop.xlane.xlu0 %5230
    %v5232 = vsel %vm1434, %v5182, 0.0
    %5233 = vadd.xlane.f32.xlu0 %v5232
    %v5234 = vpop.xlane.xlu0 %5233
    %v5235 = vsel %vm1434, %v5183, 0.0
    %5236 = vadd.xlane.f32.xlu0 %v5235
    %v5237 = vpop.xlane.xlu0 %5236
    %v5238 = vmul.f32 %v5186, %v1549
    %v5239 = vmul.f32 %v5189, %v1549
    %v5240 = vmul.f32 %v5192, %v1549
    %v5241 = vmul.f32 %v5195, %v1549
    %v5242 = vmul.f32 %v5198, %v1549
    %v5243 = vmul.f32 %v5201, %v1549
    %v5244 = vmul.f32 %v5204, %v1549
    %v5245 = vmul.f32 %v5207, %v1549
    %v5246 = vmul.f32 %v5210, %v1549
    %v5247 = vmul.f32 %v5213, %v1549
    %v5248 = vmul.f32 %v5216, %v1549
    %v5249 = vmul.f32 %v5219, %v1549
    %v5250 = vmul.f32 %v5222, %v1549
    %v5251 = vmul.f32 %v5225, %v1549
    %v5252 = vmul.f32 %v5228, %v1549
    %v5253 = vmul.f32 %v5231, %v1549
    %v5254 = vmul.f32 %v5234, %v1549
    %v5255 = vmul.f32 %v5237, %v1549
    %v5256 = vadd.f32 %v5238, 1e-05
    %v5257 = vadd.f32 %v5239, 1e-05
    %v5258 = vadd.f32 %v5240, 1e-05
    %v5259 = vadd.f32 %v5241, 1e-05
    %v5260 = vadd.f32 %v5242, 1e-05
    %v5261 = vadd.f32 %v5243, 1e-05
    %v5262 = vadd.f32 %v5244, 1e-05
    %v5263 = vadd.f32 %v5245, 1e-05
    %v5264 = vadd.f32 %v5246, 1e-05
    %v5265 = vadd.f32 %v5247, 1e-05
    %v5266 = vadd.f32 %v5248, 1e-05
    %v5267 = vadd.f32 %v5249, 1e-05
    %v5268 = vadd.f32 %v5250, 1e-05
    %v5269 = vadd.f32 %v5251, 1e-05
    %v5270 = vadd.f32 %v5252, 1e-05
    %v5271 = vadd.f32 %v5253, 1e-05
    %v5272 = vadd.f32 %v5254, 1e-05
    %v5273 = vadd.f32 %v5255, 1e-05
    %v5274 = vrsqrt.pop %v5256
    %v5275 = vrsqrt.pop %v5257
    %v5276 = vrsqrt.pop %v5258
    %v5277 = vrsqrt.pop %v5259
    %v5278 = vrsqrt.pop %v5260
    %v5279 = vrsqrt.pop %v5261
    %v5280 = vrsqrt.pop %v5262
    %v5281 = vrsqrt.pop %v5263
    %v5282 = vrsqrt.pop %v5264
    %v5283 = vrsqrt.pop %v5265
    %v5284 = vrsqrt.pop %v5266
    %v5285 = vrsqrt.pop %v5267
    %v5286 = vrsqrt.pop %v5268
    %v5287 = vrsqrt.pop %v5269
    %v5288 = vrsqrt.pop %v5270
    %v5289 = vrsqrt.pop %v5271
    %v5290 = vrsqrt.pop %v5272
    %v5291 = vrsqrt.pop %v5273
    %v5292 = vmul.f32 %v5148, %v5274
    %v5293 = vmul.f32 %v5149, %v5275
    %v5294 = vmul.f32 %v5150, %v5276
    %v5295 = vmul.f32 %v5151, %v5277
    %v5296 = vmul.f32 %v5152, %v5278
    %v5297 = vmul.f32 %v5153, %v5279
    %v5298 = vmul.f32 %v5154, %v5280
    %v5299 = vmul.f32 %v5155, %v5281
    %v5300 = vmul.f32 %v5156, %v5282
    %v5301 = vmul.f32 %v5157, %v5283
    %v5302 = vmul.f32 %v5158, %v5284
    %v5303 = vmul.f32 %v5159, %v5285
    %v5304 = vmul.f32 %v5160, %v5286
    %v5305 = vmul.f32 %v5161, %v5287
    %v5306 = vmul.f32 %v5162, %v5288
    %v5307 = vmul.f32 %v5163, %v5289
    %v5308 = vmul.f32 %v5164, %v5290
    %v5309 = vmul.f32 %v5165, %v5291
    %v5311 = vlaneseq
    %v5312 = vshrl.u32 %v5311, 7
    %v5313 = vsub.s32 0, %v5312
    %v5314 = vrot.slane %v5073, %v5313
    %v5316 = vmul.f32 %v5292, %v5314
    %v5317 = vmul.f32 %v5293, %v5314
    %v5318 = vmul.f32 %v5294, %v5314
    %v5319 = vmul.f32 %v5295, %v5314
    %v5320 = vmul.f32 %v5296, %v5314
    %v5321 = vmul.f32 %v5297, %v5314
    %v5322 = vmul.f32 %v5298, %v5314
    %v5323 = vmul.f32 %v5299, %v5314
    %v5324 = vmul.f32 %v5300, %v5314
    %v5325 = vmul.f32 %v5301, %v5314
    %v5326 = vmul.f32 %v5302, %v5314
    %v5327 = vmul.f32 %v5303, %v5314
    %v5328 = vmul.f32 %v5304, %v5314
    %v5329 = vmul.f32 %v5305, %v5314
    %v5330 = vmul.f32 %v5306, %v5314
    %v5331 = vmul.f32 %v5307, %v5314
    %v5332 = vmul.f32 %v5308, %v5314
    %v5333 = vmul.f32 %v5309, %v5314
    %v5335 = vlaneseq
    %v5336 = vshrl.u32 %v5335, 7
    %v5337 = vsub.s32 0, %v5336
    %v5338 = vrot.slane %v5075, %v5337
    %v5340 = vadd.f32 %v5316, %v5338
    %v5341 = vadd.f32 %v5317, %v5338
    %v5342 = vadd.f32 %v5318, %v5338
    %v5343 = vadd.f32 %v5319, %v5338
    %v5344 = vadd.f32 %v5320, %v5338
    %v5345 = vadd.f32 %v5321, %v5338
    %v5346 = vadd.f32 %v5322, %v5338
    %v5347 = vadd.f32 %v5323, %v5338
    %v5348 = vadd.f32 %v5324, %v5338
    %v5349 = vadd.f32 %v5325, %v5338
    %v5350 = vadd.f32 %v5326, %v5338
    %v5351 = vadd.f32 %v5327, %v5338
    %v5352 = vadd.f32 %v5328, %v5338
    %v5353 = vadd.f32 %v5329, %v5338
    %v5354 = vadd.f32 %v5330, %v5338
    %v5355 = vadd.f32 %v5331, %v5338
    %v5356 = vadd.f32 %v5332, %v5338
    %v5357 = vadd.f32 %v5333, %v5338
    %s5358 = scalar_lea.vmem %s7, 32
    %v5359 = vld [vmem:[%s5358] sm:$0xff]
    %v5360 = vld [vmem:[%s5358 + $0x8] sm:$0xff]
    %v5361 = vld [vmem:[%s5358 + $0x10] sm:$0xff]
    %v5362 = vld [vmem:[%s5358 + $0x18] sm:$0xff]
    %s5363 = scalar_lea.vmem %s8, 1
    %v5364 = vld [vmem:[%s5363] sm:$0x1]
    %v5366 = vlaneseq
    %v5367 = vshrl.u32 %v5366, 7
    %v5368 = vsub.s32 0, %v5367
    %v5369 = vrot.slane %v5364, %v5368
    %v5372 = vsel %vm1434, %v5340, 0
    %v5375 = vsel %vm1434, %v5341, 0
    %v5378 = vsel %vm1434, %v5342, 0
    %v5381 = vsel %vm1434, %v5343, 0
    %v5384 = vsel %vm1434, %v5344, 0
    %v5387 = vsel %vm1434, %v5345, 0
    %v5390 = vsel %vm1434, %v5346, 0
    %v5393 = vsel %vm1434, %v5347, 0
    %v5396 = vsel %vm1434, %v5348, 0
    %v5399 = vsel %vm1434, %v5349, 0
    %v5402 = vsel %vm1434, %v5350, 0
    %v5405 = vsel %vm1434, %v5351, 0
    %v5408 = vsel %vm1434, %v5352, 0
    %v5411 = vsel %vm1434, %v5353, 0
    %v5414 = vsel %vm1434, %v5354, 0
    %v5417 = vsel %vm1434, %v5355, 0
    %v5420 = vsel %vm1434, %v5356, 0
    %v5423 = vsel %vm1434, %v5357, 0
    %5425 = vmatprep.subr.mxu0 0.0
    %5426 = vmatpush1.msra.mxu0 %v5359
    %5427 = vmatprep.subr.mxu0 0.0
    %5428 = vmatpush1.msra.mxu0 %v5360
    %5429 = vmatprep.subr.mxu0 0.0
    %5430 = vmatpush1.msra.mxu0 %v5361
    %5431 = vmatprep.subr.mxu0 0.0
    %5432 = vmatpush1.msra.mxu0 %v5362
    %5433 = vmatprep.subr.mxu0 0.0
    %5434 = vmatpush1.msra.mxu0 0.0
    %5435 = vmatprep.subr.mxu0 0.0
    %5436 = vmatpush1.msra.mxu0 0.0
    %5437 = vmatprep.subr.mxu0 0.0
    %5438 = vmatpush1.msra.mxu0 0.0
    %5439 = vmatprep.subr.mxu0 0.0
    %5440 = vmatpush1.msra.mxu0 0.0
    %5441 = vmatprep.subr.mxu0 0.0
    %5442 = vmatpush1.msra.mxu0 0.0
    %5443 = vmatprep.subr.mxu0 0.0
    %5444 = vmatpush1.msra.mxu0 0.0
    %5445 = vmatprep.subr.mxu0 0.0
    %5446 = vmatpush1.msra.mxu0 0.0
    %5447 = vmatprep.subr.mxu0 0.0
    %5448 = vmatpush1.msra.mxu0 0.0
    %5449 = vmatprep.subr.mxu0 0.0
    %5450 = vmatpush1.msra.mxu0 0.0
    %5451 = vmatprep.subr.mxu0 0.0
    %5452 = vmatpush1.msra.mxu0 0.0
    %5453 = vmatprep.subr.mxu0 0.0
    %5454 = vmatpush1.msra.mxu0 0.0
    %5455 = vmatprep.subr.mxu0 0.0
    %5456 = vmatpush1.msra.mxu0 0.0
    %5457 = vmatprep.subr.mxu0 0.0
    %5458 = vmatpush1.msra.mxu0 0.0
    %5459 = vmatprep.subr.mxu0 0.0
    %5460 = vmatpush1.msra.mxu0 0.0
    %5461 = vmatprep.subr.mxu0 0.0
    %5462 = vmatpush1.msra.mxu0 0.0
    %5463 = vmatprep.subr.mxu0 0.0
    %5464 = vmatpush1.msra.mxu0 0.0
    %5465 = vmatprep.subr.mxu0 0.0
    %5466 = vmatpush1.msra.mxu0 0.0
    %5467 = vmatprep.subr.mxu0 0.0
    %5468 = vmatpush1.msra.mxu0 0.0
    %5469 = vmatprep.subr.mxu0 0.0
    %5470 = vmatpush1.msra.mxu0 0.0
    %5471 = vmatprep.subr.mxu0 0.0
    %5472 = vmatpush1.msra.mxu0 0.0
    %5473 = vmatprep.subr.mxu0 0.0
    %5474 = vmatpush1.msra.mxu0 0.0
    %5475 = vmatprep.subr.mxu0 0.0
    %5476 = vmatpush1.msra.mxu0 0.0
    %5477 = vmatprep.subr.mxu0 0.0
    %5478 = vmatpush1.msra.mxu0 0.0
    %5479 = vmatprep.subr.mxu0 0.0
    %5480 = vmatpush1.msra.mxu0 0.0
    %5481 = vmatprep.subr.mxu0 0.0
    %5482 = vmatpush1.msra.mxu0 0.0
    %5483 = vmatprep.subr.mxu0 0.0
    %5484 = vmatpush1.msra.mxu0 0.0
    %5485 = vmatprep.subr.mxu0 0.0
    %5486 = vmatpush1.msra.mxu0 0.0
    %5487 = vmatprep.subr.mxu0 0.0
    %5488 = vmatpush1.msra.mxu0 0.0
    %5489 = vmatprep.mubr.f32.mxu0 0.0
    %5490 = vmatmul.mubr.f32.gmra.mrb[0].mxu0 %v5372
    %v5491 = vpop.f32.mrb[0].mxu0
    %v5492 = vadd.f32 %v5369, %v5491
    %v5493 = vpop.f32.mrb[0].mxu0
    %5494 = vmatprep.mubr.f32.mxu0 0.0
    %5495 = vmatmul.mubr.f32.gmra.mrb[0].mxu0 %v5375
    %v5496 = vpop.f32.mrb[0].mxu0
    %v5497 = vadd.f32 %v5369, %v5496
    %v5498 = vpop.f32.mrb[0].mxu0
    %5499 = vmatprep.mubr.f32.mxu0 0.0
    %5500 = vmatmul.mubr.f32.gmra.mrb[0].mxu0 %v5378
    %v5501 = vpop.f32.mrb[0].mxu0
    %v5502 = vadd.f32 %v5369, %v5501
    %v5503 = vpop.f32.mrb[0].mxu0
    %5504 = vmatprep.mubr.f32.mxu0 0.0
    %5505 = vmatmul.mubr.f32.gmra.mrb[0].mxu0 %v5381
    %v5506 = vpop.f32.mrb[0].mxu0
    %v5507 = vadd.f32 %v5369, %v5506
    %v5508 = vpop.f32.mrb[0].mxu0
    %5509 = vmatprep.mubr.f32.mxu0 0.0
    %5510 = vmatmul.mubr.f32.gmra.mrb[0].mxu0 %v5384
    %v5511 = vpop.f32.mrb[0].mxu0
    %v5512 = vadd.f32 %v5369, %v5511
    %v5513 = vpop.f32.mrb[0].mxu0
    %5514 = vmatprep.mubr.f32.mxu0 0.0
    %5515 = vmatmul.mubr.f32.gmra.mrb[0].mxu0 %v5387
    %v5516 = vpop.f32.mrb[0].mxu0
    %v5517 = vadd.f32 %v5369, %v5516
    %v5518 = vpop.f32.mrb[0].mxu0
    %5519 = vmatprep.mubr.f32.mxu0 0.0
    %5520 = vmatmul.mubr.f32.gmra.mrb[0].mxu0 %v5390
    %v5521 = vpop.f32.mrb[0].mxu0
    %v5522 = vadd.f32 %v5369, %v5521
    %v5523 = vpop.f32.mrb[0].mxu0
    %5524 = vmatprep.mubr.f32.mxu0 0.0
    %5525 = vmatmul.mubr.f32.gmra.mrb[0].mxu0 %v5393
    %v5526 = vpop.f32.mrb[0].mxu0
    %v5527 = vadd.f32 %v5369, %v5526
    %v5528 = vpop.f32.mrb[0].mxu0
    %5529 = vmatprep.mubr.f32.mxu0 0.0
    %5530 = vmatmul.mubr.f32.gmra.mrb[0].mxu0 %v5396
    %v5531 = vpop.f32.mrb[0].mxu0
    %v5532 = vadd.f32 %v5369, %v5531
    %v5533 = vpop.f32.mrb[0].mxu0
    %5534 = vmatprep.mubr.f32.mxu0 0.0
    %5535 = vmatmul.mubr.f32.gmra.mrb[0].mxu0 %v5399
    %v5536 = vpop.f32.mrb[0].mxu0
    %v5537 = vadd.f32 %v5369, %v5536
    %v5538 = vpop.f32.mrb[0].mxu0
    %5539 = vmatprep.mubr.f32.mxu0 0.0
    %5540 = vmatmul.mubr.f32.gmra.mrb[0].mxu0 %v5402
    %v5541 = vpop.f32.mrb[0].mxu0
    %v5542 = vadd.f32 %v5369, %v5541
    %v5543 = vpop.f32.mrb[0].mxu0
    %5544 = vmatprep.mubr.f32.mxu0 0.0
    %5545 = vmatmul.mubr.f32.gmra.mrb[0].mxu0 %v5405
    %v5546 = vpop.f32.mrb[0].mxu0
    %v5547 = vadd.f32 %v5369, %v5546
    %v5548 = vpop.f32.mrb[0].mxu0
    %5549 = vmatprep.mubr.f32.mxu0 0.0
    %5550 = vmatmul.mubr.f32.gmra.mrb[0].mxu0 %v5408
    %v5551 = vpop.f32.mrb[0].mxu0
    %v5552 = vadd.f32 %v5369, %v5551
    %v5553 = vpop.f32.mrb[0].mxu0
    %5554 = vmatprep.mubr.f32.mxu0 0.0
    %5555 = vmatmul.mubr.f32.gmra.mrb[0].mxu0 %v5411
    %v5556 = vpop.f32.mrb[0].mxu0
    %v5557 = vadd.f32 %v5369, %v5556
    %v5558 = vpop.f32.mrb[0].mxu0
    %5559 = vmatprep.mubr.f32.mxu0 0.0
    %5560 = vmatmul.mubr.f32.gmra.mrb[0].mxu0 %v5414
    %v5561 = vpop.f32.mrb[0].mxu0
    %v5562 = vadd.f32 %v5369, %v5561
    %v5563 = vpop.f32.mrb[0].mxu0
    %5564 = vmatprep.mubr.f32.mxu0 0.0
    %5565 = vmatmul.mubr.f32.gmra.mrb[0].mxu0 %v5417
    %v5566 = vpop.f32.mrb[0].mxu0
    %v5567 = vadd.f32 %v5369, %v5566
    %v5568 = vpop.f32.mrb[0].mxu0
    %5569 = vmatprep.mubr.f32.mxu0 0.0
    %5570 = vmatmul.mubr.f32.gmra.mrb[0].mxu0 %v5420
    %v5571 = vpop.f32.mrb[0].mxu0
    %v5572 = vadd.f32 %v5369, %v5571
    %v5573 = vpop.f32.mrb[0].mxu0
    %5574 = vmatprep.mubr.f32.mxu0 0.0
    %5575 = vmatmul.mubr.f32.gmra.mrb[0].mxu0 %v5423
    %v5576 = vpop.f32.mrb[0].mxu0
    %v5577 = vadd.f32 %v5369, %v5576
    %v5578 = vpop.f32.mrb[0].mxu0
    %5579 = vdwg.mxu0
    %5589 = vrot.lane.b32.xlu0 %v5492, 96
    %v5590 = vpop.permute.xlu0 %5589
    %5591 = vrot.lane.b32.xlu0 %v5497, 96
    %v5592 = vpop.permute.xlu0 %5591
    %5593 = vrot.lane.b32.xlu0 %v5502, 96
    %v5594 = vpop.permute.xlu0 %5593
    %5595 = vrot.lane.b32.xlu0 %v5507, 96
    %v5596 = vpop.permute.xlu0 %5595
    %5597 = vrot.lane.b32.xlu0 %v5512, 96
    %v5598 = vpop.permute.xlu0 %5597
    %5599 = vrot.lane.b32.xlu0 %v5517, 96
    %v5600 = vpop.permute.xlu0 %5599
    %5601 = vrot.lane.b32.xlu0 %v5522, 96
    %v5602 = vpop.permute.xlu0 %5601
    %5603 = vrot.lane.b32.xlu0 %v5527, 96
    %v5604 = vpop.permute.xlu0 %5603
    %5605 = vrot.lane.b32.xlu0 %v5532, 96
    %v5606 = vpop.permute.xlu0 %5605
    %v5607 = vsel %vm2025, %v5492, 0
    %v5609 = vsel %vm2025, %v5497, 0
    %v5611 = vsel %vm2025, %v5502, 0
    %v5613 = vsel %vm2025, %v5507, 0
    %v5615 = vsel %vm2025, %v5512, 0
    %v5617 = vsel %vm2025, %v5517, 0
    %v5619 = vsel %vm2025, %v5522, 0
    %v5621 = vsel %vm2025, %v5527, 0
    %v5623 = vsel %vm2025, %v5532, 0
    %v5625 = vsel %vm2025, %v5590, 0
    %v5627 = vsel %vm2025, %v5592, 0
    %v5629 = vsel %vm2025, %v5594, 0
    %v5631 = vsel %vm2025, %v5596, 0
    %v5633 = vsel %vm2025, %v5598, 0
    %v5635 = vsel %vm2025, %v5600, 0
    %v5637 = vsel %vm2025, %v5602, 0
    %v5639 = vsel %vm2025, %v5604, 0
    %v5641 = vsel %vm2025, %v5606, 0
    %5643 = vmatprep.subr.mxu0 0.0
    %5644 = vmatpush1.xpose.msra.mxu0 %v5625
    %5645 = vmatprep.subr.mxu0 0.0
    %5646 = vmatpush1.xpose.msra.mxu0 %v5627
    %5647 = vmatprep.subr.mxu0 0.0
    %5648 = vmatpush1.xpose.msra.mxu0 %v5629
    %5649 = vmatprep.subr.mxu0 0.0
    %5650 = vmatpush1.xpose.msra.mxu0 %v5631
    %5651 = vmatprep.subr.mxu0 0.0
    %5652 = vmatpush1.xpose.msra.mxu0 %v5633
    %5653 = vmatprep.subr.mxu0 0.0
    %5654 = vmatpush1.xpose.msra.mxu0 %v5635
    %5655 = vmatprep.subr.mxu0 0.0
    %5656 = vmatpush1.xpose.msra.mxu0 %v5637
    %5657 = vmatprep.subr.mxu0 0.0
    %5658 = vmatpush1.xpose.msra.mxu0 %v5639
    %5659 = vmatprep.subr.mxu0 0.0
    %5660 = vmatpush1.xpose.msra.mxu0 %v5641
    %5661 = vmatprep.subr.mxu0 0.0
    %5662 = vmatpush1.xpose.msra.mxu0 0.0
    %5663 = vmatprep.subr.mxu0 0.0
    %5664 = vmatpush1.xpose.msra.mxu0 0.0
    %5665 = vmatprep.subr.mxu0 0.0
    %5666 = vmatpush1.xpose.msra.mxu0 0.0
    %5667 = vmatprep.subr.mxu0 0.0
    %5668 = vmatpush1.xpose.msra.mxu0 0.0
    %5669 = vmatprep.subr.mxu0 0.0
    %5670 = vmatpush1.xpose.msra.mxu0 0.0
    %5671 = vmatprep.subr.mxu0 0.0
    %5672 = vmatpush1.xpose.msra.mxu0 0.0
    %5673 = vmatprep.subr.mxu0 0.0
    %5674 = vmatpush1.xpose.msra.mxu0 0.0
    %5675 = vmatprep.subr.mxu0 0.0
    %5676 = vmatpush1.xpose.msra.mxu0 0.0
    %5677 = vmatprep.subr.mxu0 0.0
    %5678 = vmatpush1.xpose.msra.mxu0 0.0
    %5679 = vmatprep.subr.mxu0 0.0
    %5680 = vmatpush1.xpose.msra.mxu0 0.0
    %5681 = vmatprep.subr.mxu0 0.0
    %5682 = vmatpush1.xpose.msra.mxu0 0.0
    %5683 = vmatprep.subr.mxu0 0.0
    %5684 = vmatpush1.xpose.msra.mxu0 0.0
    %5685 = vmatprep.subr.mxu0 0.0
    %5686 = vmatpush1.xpose.msra.mxu0 0.0
    %5687 = vmatprep.subr.mxu0 0.0
    %5688 = vmatpush1.xpose.msra.mxu0 0.0
    %5689 = vmatprep.subr.mxu0 0.0
    %5690 = vmatpush1.xpose.msra.mxu0 0.0
    %5691 = vmatprep.subr.mxu0 0.0
    %5692 = vmatpush1.xpose.msra.mxu0 0.0
    %5693 = vmatprep.subr.mxu0 0.0
    %5694 = vmatpush1.xpose.msra.mxu0 0.0
    %5695 = vmatprep.subr.mxu0 0.0
    %5696 = vmatpush1.xpose.msra.mxu0 0.0
    %5697 = vmatprep.subr.mxu0 0.0
    %5698 = vmatpush1.xpose.msra.mxu0 0.0
    %5699 = vmatprep.subr.mxu0 0.0
    %5700 = vmatpush1.xpose.msra.mxu0 0.0
    %5701 = vmatprep.subr.mxu0 0.0
    %5702 = vmatpush1.xpose.msra.mxu0 0.0
    %5703 = vmatprep.subr.mxu0 0.0
    %5704 = vmatpush1.xpose.msra.mxu0 0.0
    %5705 = vmatprep.subr.mxu0 0.0
    %5706 = vmatpush1.xpose.msra.mxu0 0.0
    %5707 = vmatprep.mubr.f32.mxu0 0.0
    %5708 = vmatmul.mubr.f32.gmra.mrb[0].mxu0 %v5607
    %v5709 = vpop.f32.mrb[0].mxu0
    %v5710 = vadd.f32 %v1492, %v5709
    %v5711 = vpop.f32.mrb[0].mxu0
    %5712 = vmatprep.mubr.f32.mxu0 0.0
    %5713 = vmatmul.mubr.f32.gmra.mrb[0].mxu0 %v5609
    %v5714 = vpop.f32.mrb[0].mxu0
    %v5715 = vadd.f32 %v1492, %v5714
    %v5716 = vpop.f32.mrb[0].mxu0
    %5717 = vmatprep.mubr.f32.mxu0 0.0
    %5718 = vmatmul.mubr.f32.gmra.mrb[0].mxu0 %v5611
    %v5719 = vpop.f32.mrb[0].mxu0
    %v5720 = vadd.f32 %v1492, %v5719
    %v5721 = vpop.f32.mrb[0].mxu0
    %5722 = vmatprep.mubr.f32.mxu0 0.0
    %5723 = vmatmul.mubr.f32.gmra.mrb[0].mxu0 %v5613
    %v5724 = vpop.f32.mrb[0].mxu0
    %v5725 = vadd.f32 %v1492, %v5724
    %v5726 = vpop.f32.mrb[0].mxu0
    %5727 = vmatprep.mubr.f32.mxu0 0.0
    %5728 = vmatmul.mubr.f32.gmra.mrb[0].mxu0 %v5615
    %v5729 = vpop.f32.mrb[0].mxu0
    %v5730 = vadd.f32 %v1492, %v5729
    %v5731 = vpop.f32.mrb[0].mxu0
    %5732 = vmatprep.mubr.f32.mxu0 0.0
    %5733 = vmatmul.mubr.f32.gmra.mrb[0].mxu0 %v5617
    %v5734 = vpop.f32.mrb[0].mxu0
    %v5735 = vadd.f32 %v1492, %v5734
    %v5736 = vpop.f32.mrb[0].mxu0
    %5737 = vmatprep.mubr.f32.mxu0 0.0
    %5738 = vmatmul.mubr.f32.gmra.mrb[0].mxu0 %v5619
    %v5739 = vpop.f32.mrb[0].mxu0
    %v5740 = vadd.f32 %v1492, %v5739
    %v5741 = vpop.f32.mrb[0].mxu0
    %5742 = vmatprep.mubr.f32.mxu0 0.0
    %5743 = vmatmul.mubr.f32.gmra.mrb[0].mxu0 %v5621
    %v5744 = vpop.f32.mrb[0].mxu0
    %v5745 = vadd.f32 %v1492, %v5744
    %v5746 = vpop.f32.mrb[0].mxu0
    %5747 = vmatprep.mubr.f32.mxu0 0.0
    %5748 = vmatmul.mubr.f32.gmra.mrb[0].mxu0 %v5623
    %v5749 = vpop.f32.mrb[0].mxu0
    %v5750 = vadd.f32 %v1492, %v5749
    %v5751 = vpop.f32.mrb[0].mxu0
    %5752 = vdwg.mxu0
    %v5753 = vsel %vm2172, %v5710, -inf
    %5754 = vmax.xlane.f32.xlu0 %v5753
    %v5755 = vpop.xlane.xlu0 %5754
    %v5756 = vsel %vm2172, %v5715, -inf
    %5757 = vmax.xlane.f32.xlu0 %v5756
    %v5758 = vpop.xlane.xlu0 %5757
    %v5759 = vsel %vm2172, %v5720, -inf
    %5760 = vmax.xlane.f32.xlu0 %v5759
    %v5761 = vpop.xlane.xlu0 %5760
    %v5762 = vsel %vm2172, %v5725, -inf
    %5763 = vmax.xlane.f32.xlu0 %v5762
    %v5764 = vpop.xlane.xlu0 %5763
    %v5765 = vsel %vm2172, %v5730, -inf
    %5766 = vmax.xlane.f32.xlu0 %v5765
    %v5767 = vpop.xlane.xlu0 %5766
    %v5768 = vsel %vm2172, %v5735, -inf
    %5769 = vmax.xlane.f32.xlu0 %v5768
    %v5770 = vpop.xlane.xlu0 %5769
    %v5771 = vsel %vm2172, %v5740, -inf
    %5772 = vmax.xlane.f32.xlu0 %v5771
    %v5773 = vpop.xlane.xlu0 %5772
    %v5774 = vsel %vm2172, %v5745, -inf
    %5775 = vmax.xlane.f32.xlu0 %v5774
    %v5776 = vpop.xlane.xlu0 %5775
    %v5777 = vsel %vm2172, %v5750, -inf
    %5778 = vmax.xlane.f32.xlu0 %v5777
    %v5779 = vpop.xlane.xlu0 %5778
    %v5780 = vsub.f32 %v5710, %v5755
    %v5781 = vsub.f32 %v5715, %v5758
    %v5782 = vsub.f32 %v5720, %v5761
    %v5783 = vsub.f32 %v5725, %v5764
    %v5784 = vsub.f32 %v5730, %v5767
    %v5785 = vsub.f32 %v5735, %v5770
    %v5786 = vsub.f32 %v5740, %v5773
    %v5787 = vsub.f32 %v5745, %v5776
    %v5788 = vsub.f32 %v5750, %v5779
    %v5789 = vmul.f32 %v5780, 1.442695
    %v5790 = vpow.pop %v5789
    %v5791 = vmul.f32 %v5781, 1.442695
    %v5792 = vpow.pop %v5791
    %v5793 = vmul.f32 %v5782, 1.442695
    %v5794 = vpow.pop %v5793
    %v5795 = vmul.f32 %v5783, 1.442695
    %v5796 = vpow.pop %v5795
    %v5797 = vmul.f32 %v5784, 1.442695
    %v5798 = vpow.pop %v5797
    %v5799 = vmul.f32 %v5785, 1.442695
    %v5800 = vpow.pop %v5799
    %v5801 = vmul.f32 %v5786, 1.442695
    %v5802 = vpow.pop %v5801
    %v5803 = vmul.f32 %v5787, 1.442695
    %v5804 = vpow.pop %v5803
    %v5805 = vmul.f32 %v5788, 1.442695
    %v5806 = vpow.pop %v5805
    %v5807 = vsel %vm2172, %v5790, 0.0
    %5808 = vadd.xlane.f32.xlu0 %v5807
    %v5809 = vpop.xlane.xlu0 %5808
    %v5810 = vsel %vm2172, %v5792, 0.0
    %5811 = vadd.xlane.f32.xlu0 %v5810
    %v5812 = vpop.xlane.xlu0 %5811
    %v5813 = vsel %vm2172, %v5794, 0.0
    %5814 = vadd.xlane.f32.xlu0 %v5813
    %v5815 = vpop.xlane.xlu0 %5814
    %v5816 = vsel %vm2172, %v5796, 0.0
    %5817 = vadd.xlane.f32.xlu0 %v5816
    %v5818 = vpop.xlane.xlu0 %5817
    %v5819 = vsel %vm2172, %v5798, 0.0
    %5820 = vadd.xlane.f32.xlu0 %v5819
    %v5821 = vpop.xlane.xlu0 %5820
    %v5822 = vsel %vm2172, %v5800, 0.0
    %5823 = vadd.xlane.f32.xlu0 %v5822
    %v5824 = vpop.xlane.xlu0 %5823
    %v5825 = vsel %vm2172, %v5802, 0.0
    %5826 = vadd.xlane.f32.xlu0 %v5825
    %v5827 = vpop.xlane.xlu0 %5826
    %v5828 = vsel %vm2172, %v5804, 0.0
    %5829 = vadd.xlane.f32.xlu0 %v5828
    %v5830 = vpop.xlane.xlu0 %5829
    %v5831 = vsel %vm2172, %v5806, 0.0
    %5832 = vadd.xlane.f32.xlu0 %v5831
    %v5833 = vpop.xlane.xlu0 %5832
    %v5834 = vrcp.pop %v5809
    %v5835 = vrcp.pop %v5812
    %v5836 = vrcp.pop %v5815
    %v5837 = vrcp.pop %v5818
    %v5838 = vrcp.pop %v5821
    %v5839 = vrcp.pop %v5824
    %v5840 = vrcp.pop %v5827
    %v5841 = vrcp.pop %v5830
    %v5842 = vrcp.pop %v5833
    %5843 = vrot.lane.b32.xlu0 %v5492, 64
    %v5844 = vpop.permute.xlu0 %5843
    %5845 = vrot.lane.b32.xlu0 %v5497, 64
    %v5846 = vpop.permute.xlu0 %5845
    %5847 = vrot.lane.b32.xlu0 %v5502, 64
    %v5848 = vpop.permute.xlu0 %5847
    %5849 = vrot.lane.b32.xlu0 %v5507, 64
    %v5850 = vpop.permute.xlu0 %5849
    %5851 = vrot.lane.b32.xlu0 %v5512, 64
    %v5852 = vpop.permute.xlu0 %5851
    %5853 = vrot.lane.b32.xlu0 %v5517, 64
    %v5854 = vpop.permute.xlu0 %5853
    %5855 = vrot.lane.b32.xlu0 %v5522, 64
    %v5856 = vpop.permute.xlu0 %5855
    %5857 = vrot.lane.b32.xlu0 %v5527, 64
    %v5858 = vpop.permute.xlu0 %5857
    %5859 = vrot.lane.b32.xlu0 %v5532, 64
    %v5860 = vpop.permute.xlu0 %5859
    %v5871 = vsel %vm2172, %v5790, 0
    %v5874 = vsel %vm2172, %v5792, 0
    %v5877 = vsel %vm2172, %v5794, 0
    %v5880 = vsel %vm2172, %v5796, 0
    %v5883 = vsel %vm2172, %v5798, 0
    %v5886 = vsel %vm2172, %v5800, 0
    %v5889 = vsel %vm2172, %v5802, 0
    %v5892 = vsel %vm2172, %v5804, 0
    %v5895 = vsel %vm2172, %v5806, 0
    %5897 = vmatprep.subr.mxu0 0.0
    %5898 = vmatpush1.msra.mxu0 %v5844
    %5899 = vmatprep.subr.mxu0 0.0
    %5900 = vmatpush1.msra.mxu0 %v5846
    %5901 = vmatprep.subr.mxu0 0.0
    %5902 = vmatpush1.msra.mxu0 %v5848
    %5903 = vmatprep.subr.mxu0 0.0
    %5904 = vmatpush1.msra.mxu0 %v5850
    %5905 = vmatprep.subr.mxu0 0.0
    %5906 = vmatpush1.msra.mxu0 %v5852
    %5907 = vmatprep.subr.mxu0 0.0
    %5908 = vmatpush1.msra.mxu0 %v5854
    %5909 = vmatprep.subr.mxu0 0.0
    %5910 = vmatpush1.msra.mxu0 %v5856
    %5911 = vmatprep.subr.mxu0 0.0
    %5912 = vmatpush1.msra.mxu0 %v5858
    %5913 = vmatprep.subr.mxu0 0.0
    %5914 = vmatpush1.msra.mxu0 %v5860
    %5915 = vmatprep.subr.mxu0 0.0
    %5916 = vmatpush1.msra.mxu0 0.0
    %5917 = vmatprep.subr.mxu0 0.0
    %5918 = vmatpush1.msra.mxu0 0.0
    %5919 = vmatprep.subr.mxu0 0.0
    %5920 = vmatpush1.msra.mxu0 0.0
    %5921 = vmatprep.subr.mxu0 0.0
    %5922 = vmatpush1.msra.mxu0 0.0
    %5923 = vmatprep.subr.mxu0 0.0
    %5924 = vmatpush1.msra.mxu0 0.0
    %5925 = vmatprep.subr.mxu0 0.0
    %5926 = vmatpush1.msra.mxu0 0.0
    %5927 = vmatprep.subr.mxu0 0.0
    %5928 = vmatpush1.msra.mxu0 0.0
    %5929 = vmatprep.subr.mxu0 0.0
    %5930 = vmatpush1.msra.mxu0 0.0
    %5931 = vmatprep.subr.mxu0 0.0
    %5932 = vmatpush1.msra.mxu0 0.0
    %5933 = vmatprep.subr.mxu0 0.0
    %5934 = vmatpush1.msra.mxu0 0.0
    %5935 = vmatprep.subr.mxu0 0.0
    %5936 = vmatpush1.msra.mxu0 0.0
    %5937 = vmatprep.subr.mxu0 0.0
    %5938 = vmatpush1.msra.mxu0 0.0
    %5939 = vmatprep.subr.mxu0 0.0
    %5940 = vmatpush1.msra.mxu0 0.0
    %5941 = vmatprep.subr.mxu0 0.0
    %5942 = vmatpush1.msra.mxu0 0.0
    %5943 = vmatprep.subr.mxu0 0.0
    %5944 = vmatpush1.msra.mxu0 0.0
    %5945 = vmatprep.subr.mxu0 0.0
    %5946 = vmatpush1.msra.mxu0 0.0
    %5947 = vmatprep.subr.mxu0 0.0
    %5948 = vmatpush1.msra.mxu0 0.0
    %5949 = vmatprep.subr.mxu0 0.0
    %5950 = vmatpush1.msra.mxu0 0.0
    %5951 = vmatprep.subr.mxu0 0.0
    %5952 = vmatpush1.msra.mxu0 0.0
    %5953 = vmatprep.subr.mxu0 0.0
    %5954 = vmatpush1.msra.mxu0 0.0
    %5955 = vmatprep.subr.mxu0 0.0
    %5956 = vmatpush1.msra.mxu0 0.0
    %5957 = vmatprep.subr.mxu0 0.0
    %5958 = vmatpush1.msra.mxu0 0.0
    %5959 = vmatprep.subr.mxu0 0.0
    %5960 = vmatpush1.msra.mxu0 0.0
    %5961 = vmatprep.mubr.f32.mxu0 0.0
    %5962 = vmatmul.mubr.f32.gmra.mrb[0].mxu0 %v5871
    %v5963 = vpop.f32.mrb[0].mxu0
    %v5964 = vadd.f32 0.0, %v5963
    %v5965 = vpop.f32.mrb[0].mxu0
    %5966 = vmatprep.mubr.f32.mxu0 0.0
    %5967 = vmatmul.mubr.f32.gmra.mrb[0].mxu0 %v5874
    %v5968 = vpop.f32.mrb[0].mxu0
    %v5969 = vadd.f32 0.0, %v5968
    %v5970 = vpop.f32.mrb[0].mxu0
    %5971 = vmatprep.mubr.f32.mxu0 0.0
    %5972 = vmatmul.mubr.f32.gmra.mrb[0].mxu0 %v5877
    %v5973 = vpop.f32.mrb[0].mxu0
    %v5974 = vadd.f32 0.0, %v5973
    %v5975 = vpop.f32.mrb[0].mxu0
    %5976 = vmatprep.mubr.f32.mxu0 0.0
    %5977 = vmatmul.mubr.f32.gmra.mrb[0].mxu0 %v5880
    %v5978 = vpop.f32.mrb[0].mxu0
    %v5979 = vadd.f32 0.0, %v5978
    %v5980 = vpop.f32.mrb[0].mxu0
    %5981 = vmatprep.mubr.f32.mxu0 0.0
    %5982 = vmatmul.mubr.f32.gmra.mrb[0].mxu0 %v5883
    %v5983 = vpop.f32.mrb[0].mxu0
    %v5984 = vadd.f32 0.0, %v5983
    %v5985 = vpop.f32.mrb[0].mxu0
    %5986 = vmatprep.mubr.f32.mxu0 0.0
    %5987 = vmatmul.mubr.f32.gmra.mrb[0].mxu0 %v5886
    %v5988 = vpop.f32.mrb[0].mxu0
    %v5989 = vadd.f32 0.0, %v5988
    %v5990 = vpop.f32.mrb[0].mxu0
    %5991 = vmatprep.mubr.f32.mxu0 0.0
    %5992 = vmatmul.mubr.f32.gmra.mrb[0].mxu0 %v5889
    %v5993 = vpop.f32.mrb[0].mxu0
    %v5994 = vadd.f32 0.0, %v5993
    %v5995 = vpop.f32.mrb[0].mxu0
    %5996 = vmatprep.mubr.f32.mxu0 0.0
    %5997 = vmatmul.mubr.f32.gmra.mrb[0].mxu0 %v5892
    %v5998 = vpop.f32.mrb[0].mxu0
    %v5999 = vadd.f32 0.0, %v5998
    %v6000 = vpop.f32.mrb[0].mxu0
    %6001 = vmatprep.mubr.f32.mxu0 0.0
    %6002 = vmatmul.mubr.f32.gmra.mrb[0].mxu0 %v5895
    %v6003 = vpop.f32.mrb[0].mxu0
    %v6004 = vadd.f32 0.0, %v6003
    %v6005 = vpop.f32.mrb[0].mxu0
    %6006 = vdwg.mxu0
    %v6007 = vmul.f32 %v5964, %v5834
    %v6008 = vmul.f32 %v5969, %v5835
    %v6009 = vmul.f32 %v5974, %v5836
    %v6010 = vmul.f32 %v5979, %v5837
    %v6011 = vmul.f32 %v5984, %v5838
    %v6012 = vmul.f32 %v5989, %v5839
    %v6013 = vmul.f32 %v5994, %v5840
    %v6014 = vmul.f32 %v5999, %v5841
    %v6015 = vmul.f32 %v6004, %v5842
    %6016 = vst.msk [vmem:[#allocation3] sm:$0xff] %vm2025, %v6007
    %6017 = vst.msk [vmem:[#allocation3 + $0x8] sm:$0xff] %vm2025, %v6008
    %6018 = vst.msk [vmem:[#allocation3 + $0x10] sm:$0xff] %vm2025, %v6009
    %6019 = vst.msk [vmem:[#allocation3 + $0x18] sm:$0xff] %vm2025, %v6010
    %6020 = vst.msk [vmem:[#allocation3 + $0x20] sm:$0xff] %vm2025, %v6011
    %6021 = vst.msk [vmem:[#allocation3 + $0x28] sm:$0xff] %vm2025, %v6012
    %6022 = vst.msk [vmem:[#allocation3 + $0x30] sm:$0xff] %vm2025, %v6013
    %6023 = vst.msk [vmem:[#allocation3 + $0x38] sm:$0xff] %vm2025, %v6014
    %6024 = vst.msk [vmem:[#allocation3 + $0x40] sm:$0xff] %vm2025, %v6015
    %6025 = vrot.lane.b32.xlu0 %v5492, 112
    %v6026 = vpop.permute.xlu0 %6025
    %6027 = vrot.lane.b32.xlu0 %v5497, 112
    %v6028 = vpop.permute.xlu0 %6027
    %6029 = vrot.lane.b32.xlu0 %v5502, 112
    %v6030 = vpop.permute.xlu0 %6029
    %6031 = vrot.lane.b32.xlu0 %v5507, 112
    %v6032 = vpop.permute.xlu0 %6031
    %6033 = vrot.lane.b32.xlu0 %v5512, 112
    %v6034 = vpop.permute.xlu0 %6033
    %6035 = vrot.lane.b32.xlu0 %v5517, 112
    %v6036 = vpop.permute.xlu0 %6035
    %6037 = vrot.lane.b32.xlu0 %v5522, 112
    %v6038 = vpop.permute.xlu0 %6037
    %6039 = vrot.lane.b32.xlu0 %v5527, 112
    %v6040 = vpop.permute.xlu0 %6039
    %6041 = vrot.lane.b32.xlu0 %v5532, 112
    %v6042 = vpop.permute.xlu0 %6041
    %6043 = vrot.lane.b32.xlu0 %v5492, 80
    %v6044 = vpop.permute.xlu0 %6043
    %6045 = vrot.lane.b32.xlu0 %v5497, 80
    %v6046 = vpop.permute.xlu0 %6045
    %6047 = vrot.lane.b32.xlu0 %v5502, 80
    %v6048 = vpop.permute.xlu0 %6047
    %6049 = vrot.lane.b32.xlu0 %v5507, 80
    %v6050 = vpop.permute.xlu0 %6049
    %6051 = vrot.lane.b32.xlu0 %v5512, 80
    %v6052 = vpop.permute.xlu0 %6051
    %6053 = vrot.lane.b32.xlu0 %v5517, 80
    %v6054 = vpop.permute.xlu0 %6053
    %6055 = vrot.lane.b32.xlu0 %v5522, 80
    %v6056 = vpop.permute.xlu0 %6055
    %6057 = vrot.lane.b32.xlu0 %v5527, 80
    %v6058 = vpop.permute.xlu0 %6057
    %6059 = vrot.lane.b32.xlu0 %v5532, 80
    %v6060 = vpop.permute.xlu0 %6059
    %v6061 = vsel %vm2025, %v6026, 0
    %v6063 = vsel %vm2025, %v6028, 0
    %v6065 = vsel %vm2025, %v6030, 0
    %v6067 = vsel %vm2025, %v6032, 0
    %v6069 = vsel %vm2025, %v6034, 0
    %v6071 = vsel %vm2025, %v6036, 0
    %v6073 = vsel %vm2025, %v6038, 0
    %v6075 = vsel %vm2025, %v6040, 0
    %v6077 = vsel %vm2025, %v6042, 0
    %v6079 = vsel %vm2025, %v6044, 0
    %v6081 = vsel %vm2025, %v6046, 0
    %v6083 = vsel %vm2025, %v6048, 0
    %v6085 = vsel %vm2025, %v6050, 0
    %v6087 = vsel %vm2025, %v6052, 0
    %v6089 = vsel %vm2025, %v6054, 0
    %v6091 = vsel %vm2025, %v6056, 0
    %v6093 = vsel %vm2025, %v6058, 0
    %v6095 = vsel %vm2025, %v6060, 0
    %6097 = vmatprep.subr.mxu0 0.0
    %6098 = vmatpush1.xpose.msra.mxu0 %v6079
    %6099 = vmatprep.subr.mxu0 0.0
    %6100 = vmatpush1.xpose.msra.mxu0 %v6081
    %6101 = vmatprep.subr.mxu0 0.0
    %6102 = vmatpush1.xpose.msra.mxu0 %v6083
    %6103 = vmatprep.subr.mxu0 0.0
    %6104 = vmatpush1.xpose.msra.mxu0 %v6085
    %6105 = vmatprep.subr.mxu0 0.0
    %6106 = vmatpush1.xpose.msra.mxu0 %v6087
    %6107 = vmatprep.subr.mxu0 0.0
    %6108 = vmatpush1.xpose.msra.mxu0 %v6089
    %6109 = vmatprep.subr.mxu0 0.0
    %6110 = vmatpush1.xpose.msra.mxu0 %v6091
    %6111 = vmatprep.subr.mxu0 0.0
    %6112 = vmatpush1.xpose.msra.mxu0 %v6093
    %6113 = vmatprep.subr.mxu0 0.0
    %6114 = vmatpush1.xpose.msra.mxu0 %v6095
    %6115 = vmatprep.subr.mxu0 0.0
    %6116 = vmatpush1.xpose.msra.mxu0 0.0
    %6117 = vmatprep.subr.mxu0 0.0
    %6118 = vmatpush1.xpose.msra.mxu0 0.0
    %6119 = vmatprep.subr.mxu0 0.0
    %6120 = vmatpush1.xpose.msra.mxu0 0.0
    %6121 = vmatprep.subr.mxu0 0.0
    %6122 = vmatpush1.xpose.msra.mxu0 0.0
    %6123 = vmatprep.subr.mxu0 0.0
    %6124 = vmatpush1.xpose.msra.mxu0 0.0
    %6125 = vmatprep.subr.mxu0 0.0
    %6126 = vmatpush1.xpose.msra.mxu0 0.0
    %6127 = vmatprep.subr.mxu0 0.0
    %6128 = vmatpush1.xpose.msra.mxu0 0.0
    %6129 = vmatprep.subr.mxu0 0.0
    %6130 = vmatpush1.xpose.msra.mxu0 0.0
    %6131 = vmatprep.subr.mxu0 0.0
    %6132 = vmatpush1.xpose.msra.mxu0 0.0
    %6133 = vmatprep.subr.mxu0 0.0
    %6134 = vmatpush1.xpose.msra.mxu0 0.0
    %6135 = vmatprep.subr.mxu0 0.0
    %6136 = vmatpush1.xpose.msra.mxu0 0.0
    %6137 = vmatprep.subr.mxu0 0.0
    %6138 = vmatpush1.xpose.msra.mxu0 0.0
    %6139 = vmatprep.subr.mxu0 0.0
    %6140 = vmatpush1.xpose.msra.mxu0 0.0
    %6141 = vmatprep.subr.mxu0 0.0
    %6142 = vmatpush1.xpose.msra.mxu0 0.0
    %6143 = vmatprep.subr.mxu0 0.0
    %6144 = vmatpush1.xpose.msra.mxu0 0.0
    %6145 = vmatprep.subr.mxu0 0.0
    %6146 = vmatpush1.xpose.msra.mxu0 0.0
    %6147 = vmatprep.subr.mxu0 0.0
    %6148 = vmatpush1.xpose.msra.mxu0 0.0
    %6149 = vmatprep.subr.mxu0 0.0
    %6150 = vmatpush1.xpose.msra.mxu0 0.0
    %6151 = vmatprep.subr.mxu0 0.0
    %6152 = vmatpush1.xpose.msra.mxu0 0.0
    %6153 = vmatprep.subr.mxu0 0.0
    %6154 = vmatpush1.xpose.msra.mxu0 0.0
    %6155 = vmatprep.subr.mxu0 0.0
    %6156 = vmatpush1.xpose.msra.mxu0 0.0
    %6157 = vmatprep.subr.mxu0 0.0
    %6158 = vmatpush1.xpose.msra.mxu0 0.0
    %6159 = vmatprep.subr.mxu0 0.0
    %6160 = vmatpush1.xpose.msra.mxu0 0.0
    %6161 = vmatprep.mubr.f32.mxu0 0.0
    %6162 = vmatmul.mubr.f32.gmra.mrb[0].mxu0 %v6061
    %v6163 = vpop.f32.mrb[0].mxu0
    %v6164 = vadd.f32 %v1492, %v6163
    %v6165 = vpop.f32.mrb[0].mxu0
    %6166 = vmatprep.mubr.f32.mxu0 0.0
    %6167 = vmatmul.mubr.f32.gmra.mrb[0].mxu0 %v6063
    %v6168 = vpop.f32.mrb[0].mxu0
    %v6169 = vadd.f32 %v1492, %v6168
    %v6170 = vpop.f32.mrb[0].mxu0
    %6171 = vmatprep.mubr.f32.mxu0 0.0
    %6172 = vmatmul.mubr.f32.gmra.mrb[0].mxu0 %v6065
    %v6173 = vpop.f32.mrb[0].mxu0
    %v6174 = vadd.f32 %v1492, %v6173
    %v6175 = vpop.f32.mrb[0].mxu0
    %6176 = vmatprep.mubr.f32.mxu0 0.0
    %6177 = vmatmul.mubr.f32.gmra.mrb[0].mxu0 %v6067
    %v6178 = vpop.f32.mrb[0].mxu0
    %v6179 = vadd.f32 %v1492, %v6178
    %v6180 = vpop.f32.mrb[0].mxu0
    %6181 = vmatprep.mubr.f32.mxu0 0.0
    %6182 = vmatmul.mubr.f32.gmra.mrb[0].mxu0 %v6069
    %v6183 = vpop.f32.mrb[0].mxu0
    %v6184 = vadd.f32 %v1492, %v6183
    %v6185 = vpop.f32.mrb[0].mxu0
    %6186 = vmatprep.mubr.f32.mxu0 0.0
    %6187 = vmatmul.mubr.f32.gmra.mrb[0].mxu0 %v6071
    %v6188 = vpop.f32.mrb[0].mxu0
    %v6189 = vadd.f32 %v1492, %v6188
    %v6190 = vpop.f32.mrb[0].mxu0
    %6191 = vmatprep.mubr.f32.mxu0 0.0
    %6192 = vmatmul.mubr.f32.gmra.mrb[0].mxu0 %v6073
    %v6193 = vpop.f32.mrb[0].mxu0
    %v6194 = vadd.f32 %v1492, %v6193
    %v6195 = vpop.f32.mrb[0].mxu0
    %6196 = vmatprep.mubr.f32.mxu0 0.0
    %6197 = vmatmul.mubr.f32.gmra.mrb[0].mxu0 %v6075
    %v6198 = vpop.f32.mrb[0].mxu0
    %v6199 = vadd.f32 %v1492, %v6198
    %v6200 = vpop.f32.mrb[0].mxu0
    %6201 = vmatprep.mubr.f32.mxu0 0.0
    %6202 = vmatmul.mubr.f32.gmra.mrb[0].mxu0 %v6077
    %v6203 = vpop.f32.mrb[0].mxu0
    %v6204 = vadd.f32 %v1492, %v6203
    %v6205 = vpop.f32.mrb[0].mxu0
    %6206 = vdwg.mxu0
    %v6207 = vsel %vm2172, %v6164, -inf
    %6208 = vmax.xlane.f32.xlu0 %v6207
    %v6209 = vpop.xlane.xlu0 %6208
    %v6210 = vsel %vm2172, %v6169, -inf
    %6211 = vmax.xlane.f32.xlu0 %v6210
    %v6212 = vpop.xlane.xlu0 %6211
    %v6213 = vsel %vm2172, %v6174, -inf
    %6214 = vmax.xlane.f32.xlu0 %v6213
    %v6215 = vpop.xlane.xlu0 %6214
    %v6216 = vsel %vm2172, %v6179, -inf
    %6217 = vmax.xlane.f32.xlu0 %v6216
    %v6218 = vpop.xlane.xlu0 %6217
    %v6219 = vsel %vm2172, %v6184, -inf
    %6220 = vmax.xlane.f32.xlu0 %v6219
    %v6221 = vpop.xlane.xlu0 %6220
    %v6222 = vsel %vm2172, %v6189, -inf
    %6223 = vmax.xlane.f32.xlu0 %v6222
    %v6224 = vpop.xlane.xlu0 %6223
    %v6225 = vsel %vm2172, %v6194, -inf
    %6226 = vmax.xlane.f32.xlu0 %v6225
    %v6227 = vpop.xlane.xlu0 %6226
    %v6228 = vsel %vm2172, %v6199, -inf
    %6229 = vmax.xlane.f32.xlu0 %v6228
    %v6230 = vpop.xlane.xlu0 %6229
    %v6231 = vsel %vm2172, %v6204, -inf
    %6232 = vmax.xlane.f32.xlu0 %v6231
    %v6233 = vpop.xlane.xlu0 %6232
    %v6234 = vsub.f32 %v6164, %v6209
    %v6235 = vsub.f32 %v6169, %v6212
    %v6236 = vsub.f32 %v6174, %v6215
    %v6237 = vsub.f32 %v6179, %v6218
    %v6238 = vsub.f32 %v6184, %v6221
    %v6239 = vsub.f32 %v6189, %v6224
    %v6240 = vsub.f32 %v6194, %v6227
    %v6241 = vsub.f32 %v6199, %v6230
    %v6242 = vsub.f32 %v6204, %v6233
    %v6243 = vmul.f32 %v6234, 1.442695
    %v6244 = vpow.pop %v6243
    %v6245 = vmul.f32 %v6235, 1.442695
    %v6246 = vpow.pop %v6245
    %v6247 = vmul.f32 %v6236, 1.442695
    %v6248 = vpow.pop %v6247
    %v6249 = vmul.f32 %v6237, 1.442695
    %v6250 = vpow.pop %v6249
    %v6251 = vmul.f32 %v6238, 1.442695
    %v6252 = vpow.pop %v6251
    %v6253 = vmul.f32 %v6239, 1.442695
    %v6254 = vpow.pop %v6253
    %v6255 = vmul.f32 %v6240, 1.442695
    %v6256 = vpow.pop %v6255
    %v6257 = vmul.f32 %v6241, 1.442695
    %v6258 = vpow.pop %v6257
    %v6259 = vmul.f32 %v6242, 1.442695
    %v6260 = vpow.pop %v6259
    %v6261 = vsel %vm2172, %v6244, 0.0
    %6262 = vadd.xlane.f32.xlu0 %v6261
    %v6263 = vpop.xlane.xlu0 %6262
    %v6264 = vsel %vm2172, %v6246, 0.0
    %6265 = vadd.xlane.f32.xlu0 %v6264
    %v6266 = vpop.xlane.xlu0 %6265
    %v6267 = vsel %vm2172, %v6248, 0.0
    %6268 = vadd.xlane.f32.xlu0 %v6267
    %v6269 = vpop.xlane.xlu0 %6268
    %v6270 = vsel %vm2172, %v6250, 0.0
    %6271 = vadd.xlane.f32.xlu0 %v6270
    %v6272 = vpop.xlane.xlu0 %6271
    %v6273 = vsel %vm2172, %v6252, 0.0
    %6274 = vadd.xlane.f32.xlu0 %v6273
    %v6275 = vpop.xlane.xlu0 %6274
    %v6276 = vsel %vm2172, %v6254, 0.0
    %6277 = vadd.xlane.f32.xlu0 %v6276
    %v6278 = vpop.xlane.xlu0 %6277
    %v6279 = vsel %vm2172, %v6256, 0.0
    %6280 = vadd.xlane.f32.xlu0 %v6279
    %v6281 = vpop.xlane.xlu0 %6280
    %v6282 = vsel %vm2172, %v6258, 0.0
    %6283 = vadd.xlane.f32.xlu0 %v6282
    %v6284 = vpop.xlane.xlu0 %6283
    %v6285 = vsel %vm2172, %v6260, 0.0
    %6286 = vadd.xlane.f32.xlu0 %v6285
    %v6287 = vpop.xlane.xlu0 %6286
    %v6288 = vrcp.pop %v6263
    %v6289 = vrcp.pop %v6266
    %v6290 = vrcp.pop %v6269
    %v6291 = vrcp.pop %v6272
    %v6292 = vrcp.pop %v6275
    %v6293 = vrcp.pop %v6278
    %v6294 = vrcp.pop %v6281
    %v6295 = vrcp.pop %v6284
    %v6296 = vrcp.pop %v6287
    %6297 = vrot.lane.b32.xlu0 %v5492, 48
    %v6298 = vpop.permute.xlu0 %6297
    %6299 = vrot.lane.b32.xlu0 %v5497, 48
    %v6300 = vpop.permute.xlu0 %6299
    %6301 = vrot.lane.b32.xlu0 %v5502, 48
    %v6302 = vpop.permute.xlu0 %6301
    %6303 = vrot.lane.b32.xlu0 %v5507, 48
    %v6304 = vpop.permute.xlu0 %6303
    %6305 = vrot.lane.b32.xlu0 %v5512, 48
    %v6306 = vpop.permute.xlu0 %6305
    %6307 = vrot.lane.b32.xlu0 %v5517, 48
    %v6308 = vpop.permute.xlu0 %6307
    %6309 = vrot.lane.b32.xlu0 %v5522, 48
    %v6310 = vpop.permute.xlu0 %6309
    %6311 = vrot.lane.b32.xlu0 %v5527, 48
    %v6312 = vpop.permute.xlu0 %6311
    %6313 = vrot.lane.b32.xlu0 %v5532, 48
    %v6314 = vpop.permute.xlu0 %6313
    %v6325 = vsel %vm2172, %v6244, 0
    %v6328 = vsel %vm2172, %v6246, 0
    %v6331 = vsel %vm2172, %v6248, 0
    %v6334 = vsel %vm2172, %v6250, 0
    %v6337 = vsel %vm2172, %v6252, 0
    %v6340 = vsel %vm2172, %v6254, 0
    %v6343 = vsel %vm2172, %v6256, 0
    %v6346 = vsel %vm2172, %v6258, 0
    %v6349 = vsel %vm2172, %v6260, 0
    %6351 = vmatprep.subr.mxu0 0.0
    %6352 = vmatpush1.msra.mxu0 %v6298
    %6353 = vmatprep.subr.mxu0 0.0
    %6354 = vmatpush1.msra.mxu0 %v6300
    %6355 = vmatprep.subr.mxu0 0.0
    %6356 = vmatpush1.msra.mxu0 %v6302
    %6357 = vmatprep.subr.mxu0 0.0
    %6358 = vmatpush1.msra.mxu0 %v6304
    %6359 = vmatprep.subr.mxu0 0.0
    %6360 = vmatpush1.msra.mxu0 %v6306
    %6361 = vmatprep.subr.mxu0 0.0
    %6362 = vmatpush1.msra.mxu0 %v6308
    %6363 = vmatprep.subr.mxu0 0.0
    %6364 = vmatpush1.msra.mxu0 %v6310
    %6365 = vmatprep.subr.mxu0 0.0
    %6366 = vmatpush1.msra.mxu0 %v6312
    %6367 = vmatprep.subr.mxu0 0.0
    %6368 = vmatpush1.msra.mxu0 %v6314
    %6369 = vmatprep.subr.mxu0 0.0
    %6370 = vmatpush1.msra.mxu0 0.0
    %6371 = vmatprep.subr.mxu0 0.0
    %6372 = vmatpush1.msra.mxu0 0.0
    %6373 = vmatprep.subr.mxu0 0.0
    %6374 = vmatpush1.msra.mxu0 0.0
    %6375 = vmatprep.subr.mxu0 0.0
    %6376 = vmatpush1.msra.mxu0 0.0
    %6377 = vmatprep.subr.mxu0 0.0
    %6378 = vmatpush1.msra.mxu0 0.0
    %6379 = vmatprep.subr.mxu0 0.0
    %6380 = vmatpush1.msra.mxu0 0.0
    %6381 = vmatprep.subr.mxu0 0.0
    %6382 = vmatpush1.msra.mxu0 0.0
    %6383 = vmatprep.subr.mxu0 0.0
    %6384 = vmatpush1.msra.mxu0 0.0
    %6385 = vmatprep.subr.mxu0 0.0
    %6386 = vmatpush1.msra.mxu0 0.0
    %6387 = vmatprep.subr.mxu0 0.0
    %6388 = vmatpush1.msra.mxu0 0.0
    %6389 = vmatprep.subr.mxu0 0.0
    %6390 = vmatpush1.msra.mxu0 0.0
    %6391 = vmatprep.subr.mxu0 0.0
    %6392 = vmatpush1.msra.mxu0 0.0
    %6393 = vmatprep.subr.mxu0 0.0
    %6394 = vmatpush1.msra.mxu0 0.0
    %6395 = vmatprep.subr.mxu0 0.0
    %6396 = vmatpush1.msra.mxu0 0.0
    %6397 = vmatprep.subr.mxu0 0.0
    %6398 = vmatpush1.msra.mxu0 0.0
    %6399 = vmatprep.subr.mxu0 0.0
    %6400 = vmatpush1.msra.mxu0 0.0
    %6401 = vmatprep.subr.mxu0 0.0
    %6402 = vmatpush1.msra.mxu0 0.0
    %6403 = vmatprep.subr.mxu0 0.0
    %6404 = vmatpush1.msra.mxu0 0.0
    %6405 = vmatprep.subr.mxu0 0.0
    %6406 = vmatpush1.msra.mxu0 0.0
    %6407 = vmatprep.subr.mxu0 0.0
    %6408 = vmatpush1.msra.mxu0 0.0
    %6409 = vmatprep.subr.mxu0 0.0
    %6410 = vmatpush1.msra.mxu0 0.0
    %6411 = vmatprep.subr.mxu0 0.0
    %6412 = vmatpush1.msra.mxu0 0.0
    %6413 = vmatprep.subr.mxu0 0.0
    %6414 = vmatpush1.msra.mxu0 0.0
    %6415 = vmatprep.mubr.f32.mxu0 0.0
    %6416 = vmatmul.mubr.f32.gmra.mrb[0].mxu0 %v6325
    %v6417 = vpop.f32.mrb[0].mxu0
    %v6418 = vadd.f32 0.0, %v6417
    %v6419 = vpop.f32.mrb[0].mxu0
    %6420 = vmatprep.mubr.f32.mxu0 0.0
    %6421 = vmatmul.mubr.f32.gmra.mrb[0].mxu0 %v6328
    %v6422 = vpop.f32.mrb[0].mxu0
    %v6423 = vadd.f32 0.0, %v6422
    %v6424 = vpop.f32.mrb[0].mxu0
    %6425 = vmatprep.mubr.f32.mxu0 0.0
    %6426 = vmatmul.mubr.f32.gmra.mrb[0].mxu0 %v6331
    %v6427 = vpop.f32.mrb[0].mxu0
    %v6428 = vadd.f32 0.0, %v6427
    %v6429 = vpop.f32.mrb[0].mxu0
    %6430 = vmatprep.mubr.f32.mxu0 0.0
    %6431 = vmatmul.mubr.f32.gmra.mrb[0].mxu0 %v6334
    %v6432 = vpop.f32.mrb[0].mxu0
    %v6433 = vadd.f32 0.0, %v6432
    %v6434 = vpop.f32.mrb[0].mxu0
    %6435 = vmatprep.mubr.f32.mxu0 0.0
    %6436 = vmatmul.mubr.f32.gmra.mrb[0].mxu0 %v6337
    %v6437 = vpop.f32.mrb[0].mxu0
    %v6438 = vadd.f32 0.0, %v6437
    %v6439 = vpop.f32.mrb[0].mxu0
    %6440 = vmatprep.mubr.f32.mxu0 0.0
    %6441 = vmatmul.mubr.f32.gmra.mrb[0].mxu0 %v6340
    %v6442 = vpop.f32.mrb[0].mxu0
    %v6443 = vadd.f32 0.0, %v6442
    %v6444 = vpop.f32.mrb[0].mxu0
    %6445 = vmatprep.mubr.f32.mxu0 0.0
    %6446 = vmatmul.mubr.f32.gmra.mrb[0].mxu0 %v6343
    %v6447 = vpop.f32.mrb[0].mxu0
    %v6448 = vadd.f32 0.0, %v6447
    %v6449 = vpop.f32.mrb[0].mxu0
    %6450 = vmatprep.mubr.f32.mxu0 0.0
    %6451 = vmatmul.mubr.f32.gmra.mrb[0].mxu0 %v6346
    %v6452 = vpop.f32.mrb[0].mxu0
    %v6453 = vadd.f32 0.0, %v6452
    %v6454 = vpop.f32.mrb[0].mxu0
    %6455 = vmatprep.mubr.f32.mxu0 0.0
    %6456 = vmatmul.mubr.f32.gmra.mrb[0].mxu0 %v6349
    %v6457 = vpop.f32.mrb[0].mxu0
    %v6458 = vadd.f32 0.0, %v6457
    %v6459 = vpop.f32.mrb[0].mxu0
    %6460 = vdwg.mxu0
    %v6461 = vmul.f32 %v6418, %v6288
    %v6462 = vmul.f32 %v6423, %v6289
    %v6463 = vmul.f32 %v6428, %v6290
    %v6464 = vmul.f32 %v6433, %v6291
    %v6465 = vmul.f32 %v6438, %v6292
    %v6466 = vmul.f32 %v6443, %v6293
    %v6467 = vmul.f32 %v6448, %v6294
    %v6468 = vmul.f32 %v6453, %v6295
    %v6469 = vmul.f32 %v6458, %v6296
    %6479 = vrot.lane.b32.xlu0 %v6461, 16
    %v6480 = vpop.permute.xlu0 %6479
    %6481 = vrot.lane.b32.xlu0 %v6462, 16
    %v6482 = vpop.permute.xlu0 %6481
    %6483 = vrot.lane.b32.xlu0 %v6463, 16
    %v6484 = vpop.permute.xlu0 %6483
    %6485 = vrot.lane.b32.xlu0 %v6464, 16
    %v6486 = vpop.permute.xlu0 %6485
    %6487 = vrot.lane.b32.xlu0 %v6465, 16
    %v6488 = vpop.permute.xlu0 %6487
    %6489 = vrot.lane.b32.xlu0 %v6466, 16
    %v6490 = vpop.permute.xlu0 %6489
    %6491 = vrot.lane.b32.xlu0 %v6467, 16
    %v6492 = vpop.permute.xlu0 %6491
    %6493 = vrot.lane.b32.xlu0 %v6468, 16
    %v6494 = vpop.permute.xlu0 %6493
    %6495 = vrot.lane.b32.xlu0 %v6469, 16
    %v6496 = vpop.permute.xlu0 %6495
    %6506 = vst.msk [vmem:[#allocation3] sm:$0xff] %vm2926, %v6480
    %6507 = vst.msk [vmem:[#allocation3 + $0x8] sm:$0xff] %vm2926, %v6482
    %6508 = vst.msk [vmem:[#allocation3 + $0x10] sm:$0xff] %vm2926, %v6484
    %6509 = vst.msk [vmem:[#allocation3 + $0x18] sm:$0xff] %vm2926, %v6486
    %6510 = vst.msk [vmem:[#allocation3 + $0x20] sm:$0xff] %vm2926, %v6488
    %6511 = vst.msk [vmem:[#allocation3 + $0x28] sm:$0xff] %vm2926, %v6490
    %6512 = vst.msk [vmem:[#allocation3 + $0x30] sm:$0xff] %vm2926, %v6492
    %6513 = vst.msk [vmem:[#allocation3 + $0x38] sm:$0xff] %vm2926, %v6494
    %6514 = vst.msk [vmem:[#allocation3 + $0x40] sm:$0xff] %vm2926, %v6496
    %6524 = vrot.lane.b32.xlu0 %v5537, 96
    %v6525 = vpop.permute.xlu0 %6524
    %6526 = vrot.lane.b32.xlu0 %v5542, 96
    %v6527 = vpop.permute.xlu0 %6526
    %6528 = vrot.lane.b32.xlu0 %v5547, 96
    %v6529 = vpop.permute.xlu0 %6528
    %6530 = vrot.lane.b32.xlu0 %v5552, 96
    %v6531 = vpop.permute.xlu0 %6530
    %6532 = vrot.lane.b32.xlu0 %v5557, 96
    %v6533 = vpop.permute.xlu0 %6532
    %6534 = vrot.lane.b32.xlu0 %v5562, 96
    %v6535 = vpop.permute.xlu0 %6534
    %6536 = vrot.lane.b32.xlu0 %v5567, 96
    %v6537 = vpop.permute.xlu0 %6536
    %6538 = vrot.lane.b32.xlu0 %v5572, 96
    %v6539 = vpop.permute.xlu0 %6538
    %6540 = vrot.lane.b32.xlu0 %v5577, 96
    %v6541 = vpop.permute.xlu0 %6540
    %v6542 = vsel %vm2025, %v5537, 0
    %v6544 = vsel %vm2025, %v5542, 0
    %v6546 = vsel %vm2025, %v5547, 0
    %v6548 = vsel %vm2025, %v5552, 0
    %v6550 = vsel %vm2025, %v5557, 0
    %v6552 = vsel %vm2025, %v5562, 0
    %v6554 = vsel %vm2025, %v5567, 0
    %v6556 = vsel %vm2025, %v5572, 0
    %v6558 = vsel %vm2025, %v5577, 0
    %v6560 = vsel %vm2025, %v6525, 0
    %v6562 = vsel %vm2025, %v6527, 0
    %v6564 = vsel %vm2025, %v6529, 0
    %v6566 = vsel %vm2025, %v6531, 0
    %v6568 = vsel %vm2025, %v6533, 0
    %v6570 = vsel %vm2025, %v6535, 0
    %v6572 = vsel %vm2025, %v6537, 0
    %v6574 = vsel %vm2025, %v6539, 0
    %v6576 = vsel %vm2025, %v6541, 0
    %6578 = vmatprep.subr.mxu0 0.0
    %6579 = vmatpush1.xpose.msra.mxu0 %v6560
    %6580 = vmatprep.subr.mxu0 0.0
    %6581 = vmatpush1.xpose.msra.mxu0 %v6562
    %6582 = vmatprep.subr.mxu0 0.0
    %6583 = vmatpush1.xpose.msra.mxu0 %v6564
    %6584 = vmatprep.subr.mxu0 0.0
    %6585 = vmatpush1.xpose.msra.mxu0 %v6566
    %6586 = vmatprep.subr.mxu0 0.0
    %6587 = vmatpush1.xpose.msra.mxu0 %v6568
    %6588 = vmatprep.subr.mxu0 0.0
    %6589 = vmatpush1.xpose.msra.mxu0 %v6570
    %6590 = vmatprep.subr.mxu0 0.0
    %6591 = vmatpush1.xpose.msra.mxu0 %v6572
    %6592 = vmatprep.subr.mxu0 0.0
    %6593 = vmatpush1.xpose.msra.mxu0 %v6574
    %6594 = vmatprep.subr.mxu0 0.0
    %6595 = vmatpush1.xpose.msra.mxu0 %v6576
    %6596 = vmatprep.subr.mxu0 0.0
    %6597 = vmatpush1.xpose.msra.mxu0 0.0
    %6598 = vmatprep.subr.mxu0 0.0
    %6599 = vmatpush1.xpose.msra.mxu0 0.0
    %6600 = vmatprep.subr.mxu0 0.0
    %6601 = vmatpush1.xpose.msra.mxu0 0.0
    %6602 = vmatprep.subr.mxu0 0.0
    %6603 = vmatpush1.xpose.msra.mxu0 0.0
    %6604 = vmatprep.subr.mxu0 0.0
    %6605 = vmatpush1.xpose.msra.mxu0 0.0
    %6606 = vmatprep.subr.mxu0 0.0
    %6607 = vmatpush1.xpose.msra.mxu0 0.0
    %6608 = vmatprep.subr.mxu0 0.0
    %6609 = vmatpush1.xpose.msra.mxu0 0.0
    %6610 = vmatprep.subr.mxu0 0.0
    %6611 = vmatpush1.xpose.msra.mxu0 0.0
    %6612 = vmatprep.subr.mxu0 0.0
    %6613 = vmatpush1.xpose.msra.mxu0 0.0
    %6614 = vmatprep.subr.mxu0 0.0
    %6615 = vmatpush1.xpose.msra.mxu0 0.0
    %6616 = vmatprep.subr.mxu0 0.0
    %6617 = vmatpush1.xpose.msra.mxu0 0.0
    %6618 = vmatprep.subr.mxu0 0.0
    %6619 = vmatpush1.xpose.msra.mxu0 0.0
    %6620 = vmatprep.subr.mxu0 0.0
    %6621 = vmatpush1.xpose.msra.mxu0 0.0
    %6622 = vmatprep.subr.mxu0 0.0
    %6623 = vmatpush1.xpose.msra.mxu0 0.0
    %6624 = vmatprep.subr.mxu0 0.0
    %6625 = vmatpush1.xpose.msra.mxu0 0.0
    %6626 = vmatprep.subr.mxu0 0.0
    %6627 = vmatpush1.xpose.msra.mxu0 0.0
    %6628 = vmatprep.subr.mxu0 0.0
    %6629 = vmatpush1.xpose.msra.mxu0 0.0
    %6630 = vmatprep.subr.mxu0 0.0
    %6631 = vmatpush1.xpose.msra.mxu0 0.0
    %6632 = vmatprep.subr.mxu0 0.0
    %6633 = vmatpush1.xpose.msra.mxu0 0.0
    %6634 = vmatprep.subr.mxu0 0.0
    %6635 = vmatpush1.xpose.msra.mxu0 0.0
    %6636 = vmatprep.subr.mxu0 0.0
    %6637 = vmatpush1.xpose.msra.mxu0 0.0
    %6638 = vmatprep.subr.mxu0 0.0
    %6639 = vmatpush1.xpose.msra.mxu0 0.0
    %6640 = vmatprep.subr.mxu0 0.0
    %6641 = vmatpush1.xpose.msra.mxu0 0.0
    %6642 = vmatprep.mubr.f32.mxu0 0.0
    %6643 = vmatmul.mubr.f32.gmra.mrb[0].mxu0 %v6542
    %v6644 = vpop.f32.mrb[0].mxu0
    %v6645 = vadd.f32 %v1492, %v6644
    %v6646 = vpop.f32.mrb[0].mxu0
    %6647 = vmatprep.mubr.f32.mxu0 0.0
    %6648 = vmatmul.mubr.f32.gmra.mrb[0].mxu0 %v6544
    %v6649 = vpop.f32.mrb[0].mxu0
    %v6650 = vadd.f32 %v1492, %v6649
    %v6651 = vpop.f32.mrb[0].mxu0
    %6652 = vmatprep.mubr.f32.mxu0 0.0
    %6653 = vmatmul.mubr.f32.gmra.mrb[0].mxu0 %v6546
    %v6654 = vpop.f32.mrb[0].mxu0
    %v6655 = vadd.f32 %v1492, %v6654
    %v6656 = vpop.f32.mrb[0].mxu0
    %6657 = vmatprep.mubr.f32.mxu0 0.0
    %6658 = vmatmul.mubr.f32.gmra.mrb[0].mxu0 %v6548
    %v6659 = vpop.f32.mrb[0].mxu0
    %v6660 = vadd.f32 %v1492, %v6659
    %v6661 = vpop.f32.mrb[0].mxu0
    %6662 = vmatprep.mubr.f32.mxu0 0.0
    %6663 = vmatmul.mubr.f32.gmra.mrb[0].mxu0 %v6550
    %v6664 = vpop.f32.mrb[0].mxu0
    %v6665 = vadd.f32 %v1492, %v6664
    %v6666 = vpop.f32.mrb[0].mxu0
    %6667 = vmatprep.mubr.f32.mxu0 0.0
    %6668 = vmatmul.mubr.f32.gmra.mrb[0].mxu0 %v6552
    %v6669 = vpop.f32.mrb[0].mxu0
    %v6670 = vadd.f32 %v1492, %v6669
    %v6671 = vpop.f32.mrb[0].mxu0
    %6672 = vmatprep.mubr.f32.mxu0 0.0
    %6673 = vmatmul.mubr.f32.gmra.mrb[0].mxu0 %v6554
    %v6674 = vpop.f32.mrb[0].mxu0
    %v6675 = vadd.f32 %v1492, %v6674
    %v6676 = vpop.f32.mrb[0].mxu0
    %6677 = vmatprep.mubr.f32.mxu0 0.0
    %6678 = vmatmul.mubr.f32.gmra.mrb[0].mxu0 %v6556
    %v6679 = vpop.f32.mrb[0].mxu0
    %v6680 = vadd.f32 %v1492, %v6679
    %v6681 = vpop.f32.mrb[0].mxu0
    %6682 = vmatprep.mubr.f32.mxu0 0.0
    %6683 = vmatmul.mubr.f32.gmra.mrb[0].mxu0 %v6558
    %v6684 = vpop.f32.mrb[0].mxu0
    %v6685 = vadd.f32 %v1492, %v6684
    %v6686 = vpop.f32.mrb[0].mxu0
    %6687 = vdwg.mxu0
    %v6688 = vsel %vm2172, %v6645, -inf
    %6689 = vmax.xlane.f32.xlu0 %v6688
    %v6690 = vpop.xlane.xlu0 %6689
    %v6691 = vsel %vm2172, %v6650, -inf
    %6692 = vmax.xlane.f32.xlu0 %v6691
    %v6693 = vpop.xlane.xlu0 %6692
    %v6694 = vsel %vm2172, %v6655, -inf
    %6695 = vmax.xlane.f32.xlu0 %v6694
    %v6696 = vpop.xlane.xlu0 %6695
    %v6697 = vsel %vm2172, %v6660, -inf
    %6698 = vmax.xlane.f32.xlu0 %v6697
    %v6699 = vpop.xlane.xlu0 %6698
    %v6700 = vsel %vm2172, %v6665, -inf
    %6701 = vmax.xlane.f32.xlu0 %v6700
    %v6702 = vpop.xlane.xlu0 %6701
    %v6703 = vsel %vm2172, %v6670, -inf
    %6704 = vmax.xlane.f32.xlu0 %v6703
    %v6705 = vpop.xlane.xlu0 %6704
    %v6706 = vsel %vm2172, %v6675, -inf
    %6707 = vmax.xlane.f32.xlu0 %v6706
    %v6708 = vpop.xlane.xlu0 %6707
    %v6709 = vsel %vm2172, %v6680, -inf
    %6710 = vmax.xlane.f32.xlu0 %v6709
    %v6711 = vpop.xlane.xlu0 %6710
    %v6712 = vsel %vm2172, %v6685, -inf
    %6713 = vmax.xlane.f32.xlu0 %v6712
    %v6714 = vpop.xlane.xlu0 %6713
    %v6715 = vsub.f32 %v6645, %v6690
    %v6716 = vsub.f32 %v6650, %v6693
    %v6717 = vsub.f32 %v6655, %v6696
    %v6718 = vsub.f32 %v6660, %v6699
    %v6719 = vsub.f32 %v6665, %v6702
    %v6720 = vsub.f32 %v6670, %v6705
    %v6721 = vsub.f32 %v6675, %v6708
    %v6722 = vsub.f32 %v6680, %v6711
    %v6723 = vsub.f32 %v6685, %v6714
    %v6724 = vmul.f32 %v6715, 1.442695
    %v6725 = vpow.pop %v6724
    %v6726 = vmul.f32 %v6716, 1.442695
    %v6727 = vpow.pop %v6726
    %v6728 = vmul.f32 %v6717, 1.442695
    %v6729 = vpow.pop %v6728
    %v6730 = vmul.f32 %v6718, 1.442695
    %v6731 = vpow.pop %v6730
    %v6732 = vmul.f32 %v6719, 1.442695
    %v6733 = vpow.pop %v6732
    %v6734 = vmul.f32 %v6720, 1.442695
    %v6735 = vpow.pop %v6734
    %v6736 = vmul.f32 %v6721, 1.442695
    %v6737 = vpow.pop %v6736
    %v6738 = vmul.f32 %v6722, 1.442695
    %v6739 = vpow.pop %v6738
    %v6740 = vmul.f32 %v6723, 1.442695
    %v6741 = vpow.pop %v6740
    %v6742 = vsel %vm2172, %v6725, 0.0
    %6743 = vadd.xlane.f32.xlu0 %v6742
    %v6744 = vpop.xlane.xlu0 %6743
    %v6745 = vsel %vm2172, %v6727, 0.0
    %6746 = vadd.xlane.f32.xlu0 %v6745
    %v6747 = vpop.xlane.xlu0 %6746
    %v6748 = vsel %vm2172, %v6729, 0.0
    %6749 = vadd.xlane.f32.xlu0 %v6748
    %v6750 = vpop.xlane.xlu0 %6749
    %v6751 = vsel %vm2172, %v6731, 0.0
    %6752 = vadd.xlane.f32.xlu0 %v6751
    %v6753 = vpop.xlane.xlu0 %6752
    %v6754 = vsel %vm2172, %v6733, 0.0
    %6755 = vadd.xlane.f32.xlu0 %v6754
    %v6756 = vpop.xlane.xlu0 %6755
    %v6757 = vsel %vm2172, %v6735, 0.0
    %6758 = vadd.xlane.f32.xlu0 %v6757
    %v6759 = vpop.xlane.xlu0 %6758
    %v6760 = vsel %vm2172, %v6737, 0.0
    %6761 = vadd.xlane.f32.xlu0 %v6760
    %v6762 = vpop.xlane.xlu0 %6761
    %v6763 = vsel %vm2172, %v6739, 0.0
    %6764 = vadd.xlane.f32.xlu0 %v6763
    %v6765 = vpop.xlane.xlu0 %6764
    %v6766 = vsel %vm2172, %v6741, 0.0
    %6767 = vadd.xlane.f32.xlu0 %v6766
    %v6768 = vpop.xlane.xlu0 %6767
    %v6769 = vrcp.pop %v6744
    %v6770 = vrcp.pop %v6747
    %v6771 = vrcp.pop %v6750
    %v6772 = vrcp.pop %v6753
    %v6773 = vrcp.pop %v6756
    %v6774 = vrcp.pop %v6759
    %v6775 = vrcp.pop %v6762
    %v6776 = vrcp.pop %v6765
    %v6777 = vrcp.pop %v6768
    %6778 = vrot.lane.b32.xlu0 %v5537, 64
    %v6779 = vpop.permute.xlu0 %6778
    %6780 = vrot.lane.b32.xlu0 %v5542, 64
    %v6781 = vpop.permute.xlu0 %6780
    %6782 = vrot.lane.b32.xlu0 %v5547, 64
    %v6783 = vpop.permute.xlu0 %6782
    %6784 = vrot.lane.b32.xlu0 %v5552, 64
    %v6785 = vpop.permute.xlu0 %6784
    %6786 = vrot.lane.b32.xlu0 %v5557, 64
    %v6787 = vpop.permute.xlu0 %6786
    %6788 = vrot.lane.b32.xlu0 %v5562, 64
    %v6789 = vpop.permute.xlu0 %6788
    %6790 = vrot.lane.b32.xlu0 %v5567, 64
    %v6791 = vpop.permute.xlu0 %6790
    %6792 = vrot.lane.b32.xlu0 %v5572, 64
    %v6793 = vpop.permute.xlu0 %6792
    %6794 = vrot.lane.b32.xlu0 %v5577, 64
    %v6795 = vpop.permute.xlu0 %6794
    %v6806 = vsel %vm2172, %v6725, 0
    %v6809 = vsel %vm2172, %v6727, 0
    %v6812 = vsel %vm2172, %v6729, 0
    %v6815 = vsel %vm2172, %v6731, 0
    %v6818 = vsel %vm2172, %v6733, 0
    %v6821 = vsel %vm2172, %v6735, 0
    %v6824 = vsel %vm2172, %v6737, 0
    %v6827 = vsel %vm2172, %v6739, 0
    %v6830 = vsel %vm2172, %v6741, 0
    %6832 = vmatprep.subr.mxu0 0.0
    %6833 = vmatpush1.msra.mxu0 %v6779
    %6834 = vmatprep.subr.mxu0 0.0
    %6835 = vmatpush1.msra.mxu0 %v6781
    %6836 = vmatprep.subr.mxu0 0.0
    %6837 = vmatpush1.msra.mxu0 %v6783
    %6838 = vmatprep.subr.mxu0 0.0
    %6839 = vmatpush1.msra.mxu0 %v6785
    %6840 = vmatprep.subr.mxu0 0.0
    %6841 = vmatpush1.msra.mxu0 %v6787
    %6842 = vmatprep.subr.mxu0 0.0
    %6843 = vmatpush1.msra.mxu0 %v6789
    %6844 = vmatprep.subr.mxu0 0.0
    %6845 = vmatpush1.msra.mxu0 %v6791
    %6846 = vmatprep.subr.mxu0 0.0
    %6847 = vmatpush1.msra.mxu0 %v6793
    %6848 = vmatprep.subr.mxu0 0.0
    %6849 = vmatpush1.msra.mxu0 %v6795
    %6850 = vmatprep.subr.mxu0 0.0
    %6851 = vmatpush1.msra.mxu0 0.0
    %6852 = vmatprep.subr.mxu0 0.0
    %6853 = vmatpush1.msra.mxu0 0.0
    %6854 = vmatprep.subr.mxu0 0.0
    %6855 = vmatpush1.msra.mxu0 0.0
    %6856 = vmatprep.subr.mxu0 0.0
    %6857 = vmatpush1.msra.mxu0 0.0
    %6858 = vmatprep.subr.mxu0 0.0
    %6859 = vmatpush1.msra.mxu0 0.0
    %6860 = vmatprep.subr.mxu0 0.0
    %6861 = vmatpush1.msra.mxu0 0.0
    %6862 = vmatprep.subr.mxu0 0.0
    %6863 = vmatpush1.msra.mxu0 0.0
    %6864 = vmatprep.subr.mxu0 0.0
    %6865 = vmatpush1.msra.mxu0 0.0
    %6866 = vmatprep.subr.mxu0 0.0
    %6867 = vmatpush1.msra.mxu0 0.0
    %6868 = vmatprep.subr.mxu0 0.0
    %6869 = vmatpush1.msra.mxu0 0.0
    %6870 = vmatprep.subr.mxu0 0.0
    %6871 = vmatpush1.msra.mxu0 0.0
    %6872 = vmatprep.subr.mxu0 0.0
    %6873 = vmatpush1.msra.mxu0 0.0
    %6874 = vmatprep.subr.mxu0 0.0
    %6875 = vmatpush1.msra.mxu0 0.0
    %6876 = vmatprep.subr.mxu0 0.0
    %6877 = vmatpush1.msra.mxu0 0.0
    %6878 = vmatprep.subr.mxu0 0.0
    %6879 = vmatpush1.msra.mxu0 0.0
    %6880 = vmatprep.subr.mxu0 0.0
    %6881 = vmatpush1.msra.mxu0 0.0
    %6882 = vmatprep.subr.mxu0 0.0
    %6883 = vmatpush1.msra.mxu0 0.0
    %6884 = vmatprep.subr.mxu0 0.0
    %6885 = vmatpush1.msra.mxu0 0.0
    %6886 = vmatprep.subr.mxu0 0.0
    %6887 = vmatpush1.msra.mxu0 0.0
    %6888 = vmatprep.subr.mxu0 0.0
    %6889 = vmatpush1.msra.mxu0 0.0
    %6890 = vmatprep.subr.mxu0 0.0
    %6891 = vmatpush1.msra.mxu0 0.0
    %6892 = vmatprep.subr.mxu0 0.0
    %6893 = vmatpush1.msra.mxu0 0.0
    %6894 = vmatprep.subr.mxu0 0.0
    %6895 = vmatpush1.msra.mxu0 0.0
    %6896 = vmatprep.mubr.f32.mxu0 0.0
    %6897 = vmatmul.mubr.f32.gmra.mrb[0].mxu0 %v6806
    %v6898 = vpop.f32.mrb[0].mxu0
    %v6899 = vadd.f32 0.0, %v6898
    %v6900 = vpop.f32.mrb[0].mxu0
    %6901 = vmatprep.mubr.f32.mxu0 0.0
    %6902 = vmatmul.mubr.f32.gmra.mrb[0].mxu0 %v6809
    %v6903 = vpop.f32.mrb[0].mxu0
    %v6904 = vadd.f32 0.0, %v6903
    %v6905 = vpop.f32.mrb[0].mxu0
    %6906 = vmatprep.mubr.f32.mxu0 0.0
    %6907 = vmatmul.mubr.f32.gmra.mrb[0].mxu0 %v6812
    %v6908 = vpop.f32.mrb[0].mxu0
    %v6909 = vadd.f32 0.0, %v6908
    %v6910 = vpop.f32.mrb[0].mxu0
    %6911 = vmatprep.mubr.f32.mxu0 0.0
    %6912 = vmatmul.mubr.f32.gmra.mrb[0].mxu0 %v6815
    %v6913 = vpop.f32.mrb[0].mxu0
    %v6914 = vadd.f32 0.0, %v6913
    %v6915 = vpop.f32.mrb[0].mxu0
    %6916 = vmatprep.mubr.f32.mxu0 0.0
    %6917 = vmatmul.mubr.f32.gmra.mrb[0].mxu0 %v6818
    %v6918 = vpop.f32.mrb[0].mxu0
    %v6919 = vadd.f32 0.0, %v6918
    %v6920 = vpop.f32.mrb[0].mxu0
    %6921 = vmatprep.mubr.f32.mxu0 0.0
    %6922 = vmatmul.mubr.f32.gmra.mrb[0].mxu0 %v6821
    %v6923 = vpop.f32.mrb[0].mxu0
    %v6924 = vadd.f32 0.0, %v6923
    %v6925 = vpop.f32.mrb[0].mxu0
    %6926 = vmatprep.mubr.f32.mxu0 0.0
    %6927 = vmatmul.mubr.f32.gmra.mrb[0].mxu0 %v6824
    %v6928 = vpop.f32.mrb[0].mxu0
    %v6929 = vadd.f32 0.0, %v6928
    %v6930 = vpop.f32.mrb[0].mxu0
    %6931 = vmatprep.mubr.f32.mxu0 0.0
    %6932 = vmatmul.mubr.f32.gmra.mrb[0].mxu0 %v6827
    %v6933 = vpop.f32.mrb[0].mxu0
    %v6934 = vadd.f32 0.0, %v6933
    %v6935 = vpop.f32.mrb[0].mxu0
    %6936 = vmatprep.mubr.f32.mxu0 0.0
    %6937 = vmatmul.mubr.f32.gmra.mrb[0].mxu0 %v6830
    %v6938 = vpop.f32.mrb[0].mxu0
    %v6939 = vadd.f32 0.0, %v6938
    %v6940 = vpop.f32.mrb[0].mxu0
    %6941 = vdwg.mxu0
    %v6942 = vmul.f32 %v6899, %v6769
    %v6943 = vmul.f32 %v6904, %v6770
    %v6944 = vmul.f32 %v6909, %v6771
    %v6945 = vmul.f32 %v6914, %v6772
    %v6946 = vmul.f32 %v6919, %v6773
    %v6947 = vmul.f32 %v6924, %v6774
    %v6948 = vmul.f32 %v6929, %v6775
    %v6949 = vmul.f32 %v6934, %v6776
    %v6950 = vmul.f32 %v6939, %v6777
    %6951 = vst.msk [vmem:[#allocation3 + $0x48] sm:$0xff] %vm2025, %v6942
    %6952 = vst.msk [vmem:[#allocation3 + $0x50] sm:$0xff] %vm2025, %v6943
    %6953 = vst.msk [vmem:[#allocation3 + $0x58] sm:$0xff] %vm2025, %v6944
    %6954 = vst.msk [vmem:[#allocation3 + $0x60] sm:$0xff] %vm2025, %v6945
    %6955 = vst.msk [vmem:[#allocation3 + $0x68] sm:$0xff] %vm2025, %v6946
    %6956 = vst.msk [vmem:[#allocation3 + $0x70] sm:$0xff] %vm2025, %v6947
    %6957 = vst.msk [vmem:[#allocation3 + $0x78] sm:$0xff] %vm2025, %v6948
    %6958 = vst.msk [vmem:[#allocation3 + $0x80] sm:$0xff] %vm2025, %v6949
    %6959 = vst.msk [vmem:[#allocation3 + $0x88] sm:$0xff] %vm2025, %v6950
    %6960 = vrot.lane.b32.xlu0 %v5537, 112
    %v6961 = vpop.permute.xlu0 %6960
    %6962 = vrot.lane.b32.xlu0 %v5542, 112
    %v6963 = vpop.permute.xlu0 %6962
    %6964 = vrot.lane.b32.xlu0 %v5547, 112
    %v6965 = vpop.permute.xlu0 %6964
    %6966 = vrot.lane.b32.xlu0 %v5552, 112
    %v6967 = vpop.permute.xlu0 %6966
    %6968 = vrot.lane.b32.xlu0 %v5557, 112
    %v6969 = vpop.permute.xlu0 %6968
    %6970 = vrot.lane.b32.xlu0 %v5562, 112
    %v6971 = vpop.permute.xlu0 %6970
    %6972 = vrot.lane.b32.xlu0 %v5567, 112
    %v6973 = vpop.permute.xlu0 %6972
    %6974 = vrot.lane.b32.xlu0 %v5572, 112
    %v6975 = vpop.permute.xlu0 %6974
    %6976 = vrot.lane.b32.xlu0 %v5577, 112
    %v6977 = vpop.permute.xlu0 %6976
    %6978 = vrot.lane.b32.xlu0 %v5537, 80
    %v6979 = vpop.permute.xlu0 %6978
    %6980 = vrot.lane.b32.xlu0 %v5542, 80
    %v6981 = vpop.permute.xlu0 %6980
    %6982 = vrot.lane.b32.xlu0 %v5547, 80
    %v6983 = vpop.permute.xlu0 %6982
    %6984 = vrot.lane.b32.xlu0 %v5552, 80
    %v6985 = vpop.permute.xlu0 %6984
    %6986 = vrot.lane.b32.xlu0 %v5557, 80
    %v6987 = vpop.permute.xlu0 %6986
    %6988 = vrot.lane.b32.xlu0 %v5562, 80
    %v6989 = vpop.permute.xlu0 %6988
    %6990 = vrot.lane.b32.xlu0 %v5567, 80
    %v6991 = vpop.permute.xlu0 %6990
    %6992 = vrot.lane.b32.xlu0 %v5572, 80
    %v6993 = vpop.permute.xlu0 %6992
    %6994 = vrot.lane.b32.xlu0 %v5577, 80
    %v6995 = vpop.permute.xlu0 %6994
    %v6996 = vsel %vm2025, %v6961, 0
    %v6998 = vsel %vm2025, %v6963, 0
    %v7000 = vsel %vm2025, %v6965, 0
    %v7002 = vsel %vm2025, %v6967, 0
    %v7004 = vsel %vm2025, %v6969, 0
    %v7006 = vsel %vm2025, %v6971, 0
    %v7008 = vsel %vm2025, %v6973, 0
    %v7010 = vsel %vm2025, %v6975, 0
    %v7012 = vsel %vm2025, %v6977, 0
    %v7014 = vsel %vm2025, %v6979, 0
    %v7016 = vsel %vm2025, %v6981, 0
    %v7018 = vsel %vm2025, %v6983, 0
    %v7020 = vsel %vm2025, %v6985, 0
    %v7022 = vsel %vm2025, %v6987, 0
    %v7024 = vsel %vm2025, %v6989, 0
    %v7026 = vsel %vm2025, %v6991, 0
    %v7028 = vsel %vm2025, %v6993, 0
    %v7030 = vsel %vm2025, %v6995, 0
    %7032 = vmatprep.subr.mxu0 0.0
    %7033 = vmatpush1.xpose.msra.mxu0 %v7014
    %7034 = vmatprep.subr.mxu0 0.0
    %7035 = vmatpush1.xpose.msra.mxu0 %v7016
    %7036 = vmatprep.subr.mxu0 0.0
    %7037 = vmatpush1.xpose.msra.mxu0 %v7018
    %7038 = vmatprep.subr.mxu0 0.0
    %7039 = vmatpush1.xpose.msra.mxu0 %v7020
    %7040 = vmatprep.subr.mxu0 0.0
    %7041 = vmatpush1.xpose.msra.mxu0 %v7022
    %7042 = vmatprep.subr.mxu0 0.0
    %7043 = vmatpush1.xpose.msra.mxu0 %v7024
    %7044 = vmatprep.subr.mxu0 0.0
    %7045 = vmatpush1.xpose.msra.mxu0 %v7026
    %7046 = vmatprep.subr.mxu0 0.0
    %7047 = vmatpush1.xpose.msra.mxu0 %v7028
    %7048 = vmatprep.subr.mxu0 0.0
    %7049 = vmatpush1.xpose.msra.mxu0 %v7030
    %7050 = vmatprep.subr.mxu0 0.0
    %7051 = vmatpush1.xpose.msra.mxu0 0.0
    %7052 = vmatprep.subr.mxu0 0.0
    %7053 = vmatpush1.xpose.msra.mxu0 0.0
    %7054 = vmatprep.subr.mxu0 0.0
    %7055 = vmatpush1.xpose.msra.mxu0 0.0
    %7056 = vmatprep.subr.mxu0 0.0
    %7057 = vmatpush1.xpose.msra.mxu0 0.0
    %7058 = vmatprep.subr.mxu0 0.0
    %7059 = vmatpush1.xpose.msra.mxu0 0.0
    %7060 = vmatprep.subr.mxu0 0.0
    %7061 = vmatpush1.xpose.msra.mxu0 0.0
    %7062 = vmatprep.subr.mxu0 0.0
    %7063 = vmatpush1.xpose.msra.mxu0 0.0
    %7064 = vmatprep.subr.mxu0 0.0
    %7065 = vmatpush1.xpose.msra.mxu0 0.0
    %7066 = vmatprep.subr.mxu0 0.0
    %7067 = vmatpush1.xpose.msra.mxu0 0.0
    %7068 = vmatprep.subr.mxu0 0.0
    %7069 = vmatpush1.xpose.msra.mxu0 0.0
    %7070 = vmatprep.subr.mxu0 0.0
    %7071 = vmatpush1.xpose.msra.mxu0 0.0
    %7072 = vmatprep.subr.mxu0 0.0
    %7073 = vmatpush1.xpose.msra.mxu0 0.0
    %7074 = vmatprep.subr.mxu0 0.0
    %7075 = vmatpush1.xpose.msra.mxu0 0.0
    %7076 = vmatprep.subr.mxu0 0.0
    %7077 = vmatpush1.xpose.msra.mxu0 0.0
    %7078 = vmatprep.subr.mxu0 0.0
    %7079 = vmatpush1.xpose.msra.mxu0 0.0
    %7080 = vmatprep.subr.mxu0 0.0
    %7081 = vmatpush1.xpose.msra.mxu0 0.0
    %7082 = vmatprep.subr.mxu0 0.0
    %7083 = vmatpush1.xpose.msra.mxu0 0.0
    %7084 = vmatprep.subr.mxu0 0.0
    %7085 = vmatpush1.xpose.msra.mxu0 0.0
    %7086 = vmatprep.subr.mxu0 0.0
    %7087 = vmatpush1.xpose.msra.mxu0 0.0
    %7088 = vmatprep.subr.mxu0 0.0
    %7089 = vmatpush1.xpose.msra.mxu0 0.0
    %7090 = vmatprep.subr.mxu0 0.0
    %7091 = vmatpush1.xpose.msra.mxu0 0.0
    %7092 = vmatprep.subr.mxu0 0.0
    %7093 = vmatpush1.xpose.msra.mxu0 0.0
    %7094 = vmatprep.subr.mxu0 0.0
    %7095 = vmatpush1.xpose.msra.mxu0 0.0
    %7096 = vmatprep.mubr.f32.mxu0 0.0
    %7097 = vmatmul.mubr.f32.gmra.mrb[0].mxu0 %v6996
    %v7098 = vpop.f32.mrb[0].mxu0
    %v7099 = vadd.f32 %v1492, %v7098
    %v7100 = vpop.f32.mrb[0].mxu0
    %7101 = vmatprep.mubr.f32.mxu0 0.0
    %7102 = vmatmul.mubr.f32.gmra.mrb[0].mxu0 %v6998
    %v7103 = vpop.f32.mrb[0].mxu0
    %v7104 = vadd.f32 %v1492, %v7103
    %v7105 = vpop.f32.mrb[0].mxu0
    %7106 = vmatprep.mubr.f32.mxu0 0.0
    %7107 = vmatmul.mubr.f32.gmra.mrb[0].mxu0 %v7000
    %v7108 = vpop.f32.mrb[0].mxu0
    %v7109 = vadd.f32 %v1492, %v7108
    %v7110 = vpop.f32.mrb[0].mxu0
    %7111 = vmatprep.mubr.f32.mxu0 0.0
    %7112 = vmatmul.mubr.f32.gmra.mrb[0].mxu0 %v7002
    %v7113 = vpop.f32.mrb[0].mxu0
    %v7114 = vadd.f32 %v1492, %v7113
    %v7115 = vpop.f32.mrb[0].mxu0
    %7116 = vmatprep.mubr.f32.mxu0 0.0
    %7117 = vmatmul.mubr.f32.gmra.mrb[0].mxu0 %v7004
    %v7118 = vpop.f32.mrb[0].mxu0
    %v7119 = vadd.f32 %v1492, %v7118
    %v7120 = vpop.f32.mrb[0].mxu0
    %7121 = vmatprep.mubr.f32.mxu0 0.0
    %7122 = vmatmul.mubr.f32.gmra.mrb[0].mxu0 %v7006
    %v7123 = vpop.f32.mrb[0].mxu0
    %v7124 = vadd.f32 %v1492, %v7123
    %v7125 = vpop.f32.mrb[0].mxu0
    %7126 = vmatprep.mubr.f32.mxu0 0.0
    %7127 = vmatmul.mubr.f32.gmra.mrb[0].mxu0 %v7008
    %v7128 = vpop.f32.mrb[0].mxu0
    %v7129 = vadd.f32 %v1492, %v7128
    %v7130 = vpop.f32.mrb[0].mxu0
    %7131 = vmatprep.mubr.f32.mxu0 0.0
    %7132 = vmatmul.mubr.f32.gmra.mrb[0].mxu0 %v7010
    %v7133 = vpop.f32.mrb[0].mxu0
    %v7134 = vadd.f32 %v1492, %v7133
    %v7135 = vpop.f32.mrb[0].mxu0
    %7136 = vmatprep.mubr.f32.mxu0 0.0
    %7137 = vmatmul.mubr.f32.gmra.mrb[0].mxu0 %v7012
    %v7138 = vpop.f32.mrb[0].mxu0
    %v7139 = vadd.f32 %v1492, %v7138
    %v7140 = vpop.f32.mrb[0].mxu0
    %7141 = vdwg.mxu0
    %v7142 = vsel %vm2172, %v7099, -inf
    %7143 = vmax.xlane.f32.xlu0 %v7142
    %v7144 = vpop.xlane.xlu0 %7143
    %v7145 = vsel %vm2172, %v7104, -inf
    %7146 = vmax.xlane.f32.xlu0 %v7145
    %v7147 = vpop.xlane.xlu0 %7146
    %v7148 = vsel %vm2172, %v7109, -inf
    %7149 = vmax.xlane.f32.xlu0 %v7148
    %v7150 = vpop.xlane.xlu0 %7149
    %v7151 = vsel %vm2172, %v7114, -inf
    %7152 = vmax.xlane.f32.xlu0 %v7151
    %v7153 = vpop.xlane.xlu0 %7152
    %v7154 = vsel %vm2172, %v7119, -inf
    %7155 = vmax.xlane.f32.xlu0 %v7154
    %v7156 = vpop.xlane.xlu0 %7155
    %v7157 = vsel %vm2172, %v7124, -inf
    %7158 = vmax.xlane.f32.xlu0 %v7157
    %v7159 = vpop.xlane.xlu0 %7158
    %v7160 = vsel %vm2172, %v7129, -inf
    %7161 = vmax.xlane.f32.xlu0 %v7160
    %v7162 = vpop.xlane.xlu0 %7161
    %v7163 = vsel %vm2172, %v7134, -inf
    %7164 = vmax.xlane.f32.xlu0 %v7163
    %v7165 = vpop.xlane.xlu0 %7164
    %v7166 = vsel %vm2172, %v7139, -inf
    %7167 = vmax.xlane.f32.xlu0 %v7166
    %v7168 = vpop.xlane.xlu0 %7167
    %v7169 = vsub.f32 %v7099, %v7144
    %v7170 = vsub.f32 %v7104, %v7147
    %v7171 = vsub.f32 %v7109, %v7150
    %v7172 = vsub.f32 %v7114, %v7153
    %v7173 = vsub.f32 %v7119, %v7156
    %v7174 = vsub.f32 %v7124, %v7159
    %v7175 = vsub.f32 %v7129, %v7162
    %v7176 = vsub.f32 %v7134, %v7165
    %v7177 = vsub.f32 %v7139, %v7168
    %v7178 = vmul.f32 %v7169, 1.442695
    %v7179 = vpow.pop %v7178
    %v7180 = vmul.f32 %v7170, 1.442695
    %v7181 = vpow.pop %v7180
    %v7182 = vmul.f32 %v7171, 1.442695
    %v7183 = vpow.pop %v7182
    %v7184 = vmul.f32 %v7172, 1.442695
    %v7185 = vpow.pop %v7184
    %v7186 = vmul.f32 %v7173, 1.442695
    %v7187 = vpow.pop %v7186
    %v7188 = vmul.f32 %v7174, 1.442695
    %v7189 = vpow.pop %v7188
    %v7190 = vmul.f32 %v7175, 1.442695
    %v7191 = vpow.pop %v7190
    %v7192 = vmul.f32 %v7176, 1.442695
    %v7193 = vpow.pop %v7192
    %v7194 = vmul.f32 %v7177, 1.442695
    %v7195 = vpow.pop %v7194
    %v7196 = vsel %vm2172, %v7179, 0.0
    %7197 = vadd.xlane.f32.xlu0 %v7196
    %v7198 = vpop.xlane.xlu0 %7197
    %v7199 = vsel %vm2172, %v7181, 0.0
    %7200 = vadd.xlane.f32.xlu0 %v7199
    %v7201 = vpop.xlane.xlu0 %7200
    %v7202 = vsel %vm2172, %v7183, 0.0
    %7203 = vadd.xlane.f32.xlu0 %v7202
    %v7204 = vpop.xlane.xlu0 %7203
    %v7205 = vsel %vm2172, %v7185, 0.0
    %7206 = vadd.xlane.f32.xlu0 %v7205
    %v7207 = vpop.xlane.xlu0 %7206
    %v7208 = vsel %vm2172, %v7187, 0.0
    %7209 = vadd.xlane.f32.xlu0 %v7208
    %v7210 = vpop.xlane.xlu0 %7209
    %v7211 = vsel %vm2172, %v7189, 0.0
    %7212 = vadd.xlane.f32.xlu0 %v7211
    %v7213 = vpop.xlane.xlu0 %7212
    %v7214 = vsel %vm2172, %v7191, 0.0
    %7215 = vadd.xlane.f32.xlu0 %v7214
    %v7216 = vpop.xlane.xlu0 %7215
    %v7217 = vsel %vm2172, %v7193, 0.0
    %7218 = vadd.xlane.f32.xlu0 %v7217
    %v7219 = vpop.xlane.xlu0 %7218
    %v7220 = vsel %vm2172, %v7195, 0.0
    %7221 = vadd.xlane.f32.xlu0 %v7220
    %v7222 = vpop.xlane.xlu0 %7221
    %v7223 = vrcp.pop %v7198
    %v7224 = vrcp.pop %v7201
    %v7225 = vrcp.pop %v7204
    %v7226 = vrcp.pop %v7207
    %v7227 = vrcp.pop %v7210
    %v7228 = vrcp.pop %v7213
    %v7229 = vrcp.pop %v7216
    %v7230 = vrcp.pop %v7219
    %v7231 = vrcp.pop %v7222
    %7232 = vrot.lane.b32.xlu0 %v5537, 48
    %v7233 = vpop.permute.xlu0 %7232
    %7234 = vrot.lane.b32.xlu0 %v5542, 48
    %v7235 = vpop.permute.xlu0 %7234
    %7236 = vrot.lane.b32.xlu0 %v5547, 48
    %v7237 = vpop.permute.xlu0 %7236
    %7238 = vrot.lane.b32.xlu0 %v5552, 48
    %v7239 = vpop.permute.xlu0 %7238
    %7240 = vrot.lane.b32.xlu0 %v5557, 48
    %v7241 = vpop.permute.xlu0 %7240
    %7242 = vrot.lane.b32.xlu0 %v5562, 48
    %v7243 = vpop.permute.xlu0 %7242
    %7244 = vrot.lane.b32.xlu0 %v5567, 48
    %v7245 = vpop.permute.xlu0 %7244
    %7246 = vrot.lane.b32.xlu0 %v5572, 48
    %v7247 = vpop.permute.xlu0 %7246
    %7248 = vrot.lane.b32.xlu0 %v5577, 48
    %v7249 = vpop.permute.xlu0 %7248
    %v7260 = vsel %vm2172, %v7179, 0
    %v7263 = vsel %vm2172, %v7181, 0
    %v7266 = vsel %vm2172, %v7183, 0
    %v7269 = vsel %vm2172, %v7185, 0
    %v7272 = vsel %vm2172, %v7187, 0
    %v7275 = vsel %vm2172, %v7189, 0
    %v7278 = vsel %vm2172, %v7191, 0
    %v7281 = vsel %vm2172, %v7193, 0
    %v7284 = vsel %vm2172, %v7195, 0
    %7286 = vmatprep.subr.mxu0 0.0
    %7287 = vmatpush1.msra.mxu0 %v7233
    %7288 = vmatprep.subr.mxu0 0.0
    %7289 = vmatpush1.msra.mxu0 %v7235
    %7290 = vmatprep.subr.mxu0 0.0
    %7291 = vmatpush1.msra.mxu0 %v7237
    %7292 = vmatprep.subr.mxu0 0.0
    %7293 = vmatpush1.msra.mxu0 %v7239
    %7294 = vmatprep.subr.mxu0 0.0
    %7295 = vmatpush1.msra.mxu0 %v7241
    %7296 = vmatprep.subr.mxu0 0.0
    %7297 = vmatpush1.msra.mxu0 %v7243
    %7298 = vmatprep.subr.mxu0 0.0
    %7299 = vmatpush1.msra.mxu0 %v7245
    %7300 = vmatprep.subr.mxu0 0.0
    %7301 = vmatpush1.msra.mxu0 %v7247
    %7302 = vmatprep.subr.mxu0 0.0
    %7303 = vmatpush1.msra.mxu0 %v7249
    %7304 = vmatprep.subr.mxu0 0.0
    %7305 = vmatpush1.msra.mxu0 0.0
    %7306 = vmatprep.subr.mxu0 0.0
    %7307 = vmatpush1.msra.mxu0 0.0
    %7308 = vmatprep.subr.mxu0 0.0
    %7309 = vmatpush1.msra.mxu0 0.0
    %7310 = vmatprep.subr.mxu0 0.0
    %7311 = vmatpush1.msra.mxu0 0.0
    %7312 = vmatprep.subr.mxu0 0.0
    %7313 = vmatpush1.msra.mxu0 0.0
    %7314 = vmatprep.subr.mxu0 0.0
    %7315 = vmatpush1.msra.mxu0 0.0
    %7316 = vmatprep.subr.mxu0 0.0
    %7317 = vmatpush1.msra.mxu0 0.0
    %7318 = vmatprep.subr.mxu0 0.0
    %7319 = vmatpush1.msra.mxu0 0.0
    %7320 = vmatprep.subr.mxu0 0.0
    %7321 = vmatpush1.msra.mxu0 0.0
    %7322 = vmatprep.subr.mxu0 0.0
    %7323 = vmatpush1.msra.mxu0 0.0
    %7324 = vmatprep.subr.mxu0 0.0
    %7325 = vmatpush1.msra.mxu0 0.0
    %7326 = vmatprep.subr.mxu0 0.0
    %7327 = vmatpush1.msra.mxu0 0.0
    %7328 = vmatprep.subr.mxu0 0.0
    %7329 = vmatpush1.msra.mxu0 0.0
    %7330 = vmatprep.subr.mxu0 0.0
    %7331 = vmatpush1.msra.mxu0 0.0
    %7332 = vmatprep.subr.mxu0 0.0
    %7333 = vmatpush1.msra.mxu0 0.0
    %7334 = vmatprep.subr.mxu0 0.0
    %7335 = vmatpush1.msra.mxu0 0.0
    %7336 = vmatprep.subr.mxu0 0.0
    %7337 = vmatpush1.msra.mxu0 0.0
    %7338 = vmatprep.subr.mxu0 0.0
    %7339 = vmatpush1.msra.mxu0 0.0
    %7340 = vmatprep.subr.mxu0 0.0
    %7341 = vmatpush1.msra.mxu0 0.0
    %7342 = vmatprep.subr.mxu0 0.0
    %7343 = vmatpush1.msra.mxu0 0.0
    %7344 = vmatprep.subr.mxu0 0.0
    %7345 = vmatpush1.msra.mxu0 0.0
    %7346 = vmatprep.subr.mxu0 0.0
    %7347 = vmatpush1.msra.mxu0 0.0
    %7348 = vmatprep.subr.mxu0 0.0
    %7349 = vmatpush1.msra.mxu0 0.0
    %7350 = vmatprep.mubr.f32.mxu0 0.0
    %7351 = vmatmul.mubr.f32.gmra.mrb[0].mxu0 %v7260
    %v7352 = vpop.f32.mrb[0].mxu0
    %v7353 = vadd.f32 0.0, %v7352
    %v7354 = vpop.f32.mrb[0].mxu0
    %7355 = vmatprep.mubr.f32.mxu0 0.0
    %7356 = vmatmul.mubr.f32.gmra.mrb[0].mxu0 %v7263
    %v7357 = vpop.f32.mrb[0].mxu0
    %v7358 = vadd.f32 0.0, %v7357
    %v7359 = vpop.f32.mrb[0].mxu0
    %7360 = vmatprep.mubr.f32.mxu0 0.0
    %7361 = vmatmul.mubr.f32.gmra.mrb[0].mxu0 %v7266
    %v7362 = vpop.f32.mrb[0].mxu0
    %v7363 = vadd.f32 0.0, %v7362
    %v7364 = vpop.f32.mrb[0].mxu0
    %7365 = vmatprep.mubr.f32.mxu0 0.0
    %7366 = vmatmul.mubr.f32.gmra.mrb[0].mxu0 %v7269
    %v7367 = vpop.f32.mrb[0].mxu0
    %v7368 = vadd.f32 0.0, %v7367
    %v7369 = vpop.f32.mrb[0].mxu0
    %7370 = vmatprep.mubr.f32.mxu0 0.0
    %7371 = vmatmul.mubr.f32.gmra.mrb[0].mxu0 %v7272
    %v7372 = vpop.f32.mrb[0].mxu0
    %v7373 = vadd.f32 0.0, %v7372
    %v7374 = vpop.f32.mrb[0].mxu0
    %7375 = vmatprep.mubr.f32.mxu0 0.0
    %7376 = vmatmul.mubr.f32.gmra.mrb[0].mxu0 %v7275
    %v7377 = vpop.f32.mrb[0].mxu0
    %v7378 = vadd.f32 0.0, %v7377
    %v7379 = vpop.f32.mrb[0].mxu0
    %7380 = vmatprep.mubr.f32.mxu0 0.0
    %7381 = vmatmul.mubr.f32.gmra.mrb[0].mxu0 %v7278
    %v7382 = vpop.f32.mrb[0].mxu0
    %v7383 = vadd.f32 0.0, %v7382
    %v7384 = vpop.f32.mrb[0].mxu0
    %7385 = vmatprep.mubr.f32.mxu0 0.0
    %7386 = vmatmul.mubr.f32.gmra.mrb[0].mxu0 %v7281
    %v7387 = vpop.f32.mrb[0].mxu0
    %v7388 = vadd.f32 0.0, %v7387
    %v7389 = vpop.f32.mrb[0].mxu0
    %7390 = vmatprep.mubr.f32.mxu0 0.0
    %7391 = vmatmul.mubr.f32.gmra.mrb[0].mxu0 %v7284
    %v7392 = vpop.f32.mrb[0].mxu0
    %v7393 = vadd.f32 0.0, %v7392
    %v7394 = vpop.f32.mrb[0].mxu0
    %7395 = vdwg.mxu0
    %v7396 = vmul.f32 %v7353, %v7223
    %v7397 = vmul.f32 %v7358, %v7224
    %v7398 = vmul.f32 %v7363, %v7225
    %v7399 = vmul.f32 %v7368, %v7226
    %v7400 = vmul.f32 %v7373, %v7227
    %v7401 = vmul.f32 %v7378, %v7228
    %v7402 = vmul.f32 %v7383, %v7229
    %v7403 = vmul.f32 %v7388, %v7230
    %v7404 = vmul.f32 %v7393, %v7231
    %7414 = vrot.lane.b32.xlu0 %v7396, 16
    %v7415 = vpop.permute.xlu0 %7414
    %7416 = vrot.lane.b32.xlu0 %v7397, 16
    %v7417 = vpop.permute.xlu0 %7416
    %7418 = vrot.lane.b32.xlu0 %v7398, 16
    %v7419 = vpop.permute.xlu0 %7418
    %7420 = vrot.lane.b32.xlu0 %v7399, 16
    %v7421 = vpop.permute.xlu0 %7420
    %7422 = vrot.lane.b32.xlu0 %v7400, 16
    %v7423 = vpop.permute.xlu0 %7422
    %7424 = vrot.lane.b32.xlu0 %v7401, 16
    %v7425 = vpop.permute.xlu0 %7424
    %7426 = vrot.lane.b32.xlu0 %v7402, 16
    %v7427 = vpop.permute.xlu0 %7426
    %7428 = vrot.lane.b32.xlu0 %v7403, 16
    %v7429 = vpop.permute.xlu0 %7428
    %7430 = vrot.lane.b32.xlu0 %v7404, 16
    %v7431 = vpop.permute.xlu0 %7430
    %7441 = vst.msk [vmem:[#allocation3 + $0x48] sm:$0xff] %vm2926, %v7415
    %7442 = vst.msk [vmem:[#allocation3 + $0x50] sm:$0xff] %vm2926, %v7417
    %7443 = vst.msk [vmem:[#allocation3 + $0x58] sm:$0xff] %vm2926, %v7419
    %7444 = vst.msk [vmem:[#allocation3 + $0x60] sm:$0xff] %vm2926, %v7421
    %7445 = vst.msk [vmem:[#allocation3 + $0x68] sm:$0xff] %vm2926, %v7423
    %7446 = vst.msk [vmem:[#allocation3 + $0x70] sm:$0xff] %vm2926, %v7425
    %7447 = vst.msk [vmem:[#allocation3 + $0x78] sm:$0xff] %vm2926, %v7427
    %7448 = vst.msk [vmem:[#allocation3 + $0x80] sm:$0xff] %vm2926, %v7429
    %7449 = vst.msk [vmem:[#allocation3 + $0x88] sm:$0xff] %vm2926, %v7431
    %v7450 = vld [vmem:[#allocation3] sm:$0xff]
    %v7451 = vld [vmem:[#allocation3 + $0x8] sm:$0xff]
    %v7452 = vld [vmem:[#allocation3 + $0x10] sm:$0xff]
    %v7453 = vld [vmem:[#allocation3 + $0x18] sm:$0xff]
    %v7454 = vld [vmem:[#allocation3 + $0x20] sm:$0xff]
    %v7455 = vld [vmem:[#allocation3 + $0x28] sm:$0xff]
    %v7456 = vld [vmem:[#allocation3 + $0x30] sm:$0xff]
    %v7457 = vld [vmem:[#allocation3 + $0x38] sm:$0xff]
    %v7458 = vld [vmem:[#allocation3 + $0x40] sm:$0xff]
    %v7459 = vld [vmem:[#allocation3 + $0x48] sm:$0xff]
    %v7460 = vld [vmem:[#allocation3 + $0x50] sm:$0xff]
    %v7461 = vld [vmem:[#allocation3 + $0x58] sm:$0xff]
    %v7462 = vld [vmem:[#allocation3 + $0x60] sm:$0xff]
    %v7463 = vld [vmem:[#allocation3 + $0x68] sm:$0xff]
    %v7464 = vld [vmem:[#allocation3 + $0x70] sm:$0xff]
    %v7465 = vld [vmem:[#allocation3 + $0x78] sm:$0xff]
    %v7466 = vld [vmem:[#allocation3 + $0x80] sm:$0xff]
    %v7467 = vld [vmem:[#allocation3 + $0x88] sm:$0xff]
    %s7468 = scalar_lea.vmem %s9, 32
    %v7469 = vld [vmem:[%s7468] sm:$0xff]
    %v7470 = vld [vmem:[%s7468 + $0x8] sm:$0xff]
    %v7471 = vld [vmem:[%s7468 + $0x10] sm:$0xff]
    %v7472 = vld [vmem:[%s7468 + $0x18] sm:$0xff]
    %v7474 = vsel %vm1434, %v7450, 0
    %v7477 = vsel %vm1434, %v7451, 0
    %v7480 = vsel %vm1434, %v7452, 0
    %v7483 = vsel %vm1434, %v7453, 0
    %v7486 = vsel %vm1434, %v7454, 0
    %v7489 = vsel %vm1434, %v7455, 0
    %v7492 = vsel %vm1434, %v7456, 0
    %v7495 = vsel %vm1434, %v7457, 0
    %v7498 = vsel %vm1434, %v7458, 0
    %v7501 = vsel %vm1434, %v7459, 0
    %v7504 = vsel %vm1434, %v7460, 0
    %v7507 = vsel %vm1434, %v7461, 0
    %v7510 = vsel %vm1434, %v7462, 0
    %v7513 = vsel %vm1434, %v7463, 0
    %v7516 = vsel %vm1434, %v7464, 0
    %v7519 = vsel %vm1434, %v7465, 0
    %v7522 = vsel %vm1434, %v7466, 0
    %v7525 = vsel %vm1434, %v7467, 0
    %7527 = vmatprep.subr.mxu0 0.0
    %7528 = vmatpush1.msra.mxu0 %v7469
    %7529 = vmatprep.subr.mxu0 0.0
    %7530 = vmatpush1.msra.mxu0 %v7470
    %7531 = vmatprep.subr.mxu0 0.0
    %7532 = vmatpush1.msra.mxu0 %v7471
    %7533 = vmatprep.subr.mxu0 0.0
    %7534 = vmatpush1.msra.mxu0 %v7472
    %7535 = vmatprep.subr.mxu0 0.0
    %7536 = vmatpush1.msra.mxu0 0.0
    %7537 = vmatprep.subr.mxu0 0.0
    %7538 = vmatpush1.msra.mxu0 0.0
    %7539 = vmatprep.subr.mxu0 0.0
    %7540 = vmatpush1.msra.mxu0 0.0
    %7541 = vmatprep.subr.mxu0 0.0
    %7542 = vmatpush1.msra.mxu0 0.0
    %7543 = vmatprep.subr.mxu0 0.0
    %7544 = vmatpush1.msra.mxu0 0.0
    %7545 = vmatprep.subr.mxu0 0.0
    %7546 = vmatpush1.msra.mxu0 0.0
    %7547 = vmatprep.subr.mxu0 0.0
    %7548 = vmatpush1.msra.mxu0 0.0
    %7549 = vmatprep.subr.mxu0 0.0
    %7550 = vmatpush1.msra.mxu0 0.0
    %7551 = vmatprep.subr.mxu0 0.0
    %7552 = vmatpush1.msra.mxu0 0.0
    %7553 = vmatprep.subr.mxu0 0.0
    %7554 = vmatpush1.msra.mxu0 0.0
    %7555 = vmatprep.subr.mxu0 0.0
    %7556 = vmatpush1.msra.mxu0 0.0
    %7557 = vmatprep.subr.mxu0 0.0
    %7558 = vmatpush1.msra.mxu0 0.0
    %7559 = vmatprep.subr.mxu0 0.0
    %7560 = vmatpush1.msra.mxu0 0.0
    %7561 = vmatprep.subr.mxu0 0.0
    %7562 = vmatpush1.msra.mxu0 0.0
    %7563 = vmatprep.subr.mxu0 0.0
    %7564 = vmatpush1.msra.mxu0 0.0
    %7565 = vmatprep.subr.mxu0 0.0
    %7566 = vmatpush1.msra.mxu0 0.0
    %7567 = vmatprep.subr.mxu0 0.0
    %7568 = vmatpush1.msra.mxu0 0.0
    %7569 = vmatprep.subr.mxu0 0.0
    %7570 = vmatpush1.msra.mxu0 0.0
    %7571 = vmatprep.subr.mxu0 0.0
    %7572 = vmatpush1.msra.mxu0 0.0
    %7573 = vmatprep.subr.mxu0 0.0
    %7574 = vmatpush1.msra.mxu0 0.0
    %7575 = vmatprep.subr.mxu0 0.0
    %7576 = vmatpush1.msra.mxu0 0.0
    %7577 = vmatprep.subr.mxu0 0.0
    %7578 = vmatpush1.msra.mxu0 0.0
    %7579 = vmatprep.subr.mxu0 0.0
    %7580 = vmatpush1.msra.mxu0 0.0
    %7581 = vmatprep.subr.mxu0 0.0
    %7582 = vmatpush1.msra.mxu0 0.0
    %7583 = vmatprep.subr.mxu0 0.0
    %7584 = vmatpush1.msra.mxu0 0.0
    %7585 = vmatprep.subr.mxu0 0.0
    %7586 = vmatpush1.msra.mxu0 0.0
    %7587 = vmatprep.subr.mxu0 0.0
    %7588 = vmatpush1.msra.mxu0 0.0
    %7589 = vmatprep.subr.mxu0 0.0
    %7590 = vmatpush1.msra.mxu0 0.0
    %7591 = vmatprep.mubr.f32.mxu0 0.0
    %7592 = vmatmul.mubr.f32.gmra.mrb[0].mxu0 %v7474
    %v7593 = vpop.f32.mrb[0].mxu0
    %v7594 = vadd.f32 0.0, %v7593
    %v7595 = vpop.f32.mrb[0].mxu0
    %7596 = vmatprep.mubr.f32.mxu0 0.0
    %7597 = vmatmul.mubr.f32.gmra.mrb[0].mxu0 %v7477
    %v7598 = vpop.f32.mrb[0].mxu0
    %v7599 = vadd.f32 0.0, %v7598
    %v7600 = vpop.f32.mrb[0].mxu0
    %7601 = vmatprep.mubr.f32.mxu0 0.0
    %7602 = vmatmul.mubr.f32.gmra.mrb[0].mxu0 %v7480
    %v7603 = vpop.f32.mrb[0].mxu0
    %v7604 = vadd.f32 0.0, %v7603
    %v7605 = vpop.f32.mrb[0].mxu0
    %7606 = vmatprep.mubr.f32.mxu0 0.0
    %7607 = vmatmul.mubr.f32.gmra.mrb[0].mxu0 %v7483
    %v7608 = vpop.f32.mrb[0].mxu0
    %v7609 = vadd.f32 0.0, %v7608
    %v7610 = vpop.f32.mrb[0].mxu0
    %7611 = vmatprep.mubr.f32.mxu0 0.0
    %7612 = vmatmul.mubr.f32.gmra.mrb[0].mxu0 %v7486
    %v7613 = vpop.f32.mrb[0].mxu0
    %v7614 = vadd.f32 0.0, %v7613
    %v7615 = vpop.f32.mrb[0].mxu0
    %7616 = vmatprep.mubr.f32.mxu0 0.0
    %7617 = vmatmul.mubr.f32.gmra.mrb[0].mxu0 %v7489
    %v7618 = vpop.f32.mrb[0].mxu0
    %v7619 = vadd.f32 0.0, %v7618
    %v7620 = vpop.f32.mrb[0].mxu0
    %7621 = vmatprep.mubr.f32.mxu0 0.0
    %7622 = vmatmul.mubr.f32.gmra.mrb[0].mxu0 %v7492
    %v7623 = vpop.f32.mrb[0].mxu0
    %v7624 = vadd.f32 0.0, %v7623
    %v7625 = vpop.f32.mrb[0].mxu0
    %7626 = vmatprep.mubr.f32.mxu0 0.0
    %7627 = vmatmul.mubr.f32.gmra.mrb[0].mxu0 %v7495
    %v7628 = vpop.f32.mrb[0].mxu0
    %v7629 = vadd.f32 0.0, %v7628
    %v7630 = vpop.f32.mrb[0].mxu0
    %7631 = vmatprep.mubr.f32.mxu0 0.0
    %7632 = vmatmul.mubr.f32.gmra.mrb[0].mxu0 %v7498
    %v7633 = vpop.f32.mrb[0].mxu0
    %v7634 = vadd.f32 0.0, %v7633
    %v7635 = vpop.f32.mrb[0].mxu0
    %7636 = vmatprep.mubr.f32.mxu0 0.0
    %7637 = vmatmul.mubr.f32.gmra.mrb[0].mxu0 %v7501
    %v7638 = vpop.f32.mrb[0].mxu0
    %v7639 = vadd.f32 0.0, %v7638
    %v7640 = vpop.f32.mrb[0].mxu0
    %7641 = vmatprep.mubr.f32.mxu0 0.0
    %7642 = vmatmul.mubr.f32.gmra.mrb[0].mxu0 %v7504
    %v7643 = vpop.f32.mrb[0].mxu0
    %v7644 = vadd.f32 0.0, %v7643
    %v7645 = vpop.f32.mrb[0].mxu0
    %7646 = vmatprep.mubr.f32.mxu0 0.0
    %7647 = vmatmul.mubr.f32.gmra.mrb[0].mxu0 %v7507
    %v7648 = vpop.f32.mrb[0].mxu0
    %v7649 = vadd.f32 0.0, %v7648
    %v7650 = vpop.f32.mrb[0].mxu0
    %7651 = vmatprep.mubr.f32.mxu0 0.0
    %7652 = vmatmul.mubr.f32.gmra.mrb[0].mxu0 %v7510
    %v7653 = vpop.f32.mrb[0].mxu0
    %v7654 = vadd.f32 0.0, %v7653
    %v7655 = vpop.f32.mrb[0].mxu0
    %7656 = vmatprep.mubr.f32.mxu0 0.0
    %7657 = vmatmul.mubr.f32.gmra.mrb[0].mxu0 %v7513
    %v7658 = vpop.f32.mrb[0].mxu0
    %v7659 = vadd.f32 0.0, %v7658
    %v7660 = vpop.f32.mrb[0].mxu0
    %7661 = vmatprep.mubr.f32.mxu0 0.0
    %7662 = vmatmul.mubr.f32.gmra.mrb[0].mxu0 %v7516
    %v7663 = vpop.f32.mrb[0].mxu0
    %v7664 = vadd.f32 0.0, %v7663
    %v7665 = vpop.f32.mrb[0].mxu0
    %7666 = vmatprep.mubr.f32.mxu0 0.0
    %7667 = vmatmul.mubr.f32.gmra.mrb[0].mxu0 %v7519
    %v7668 = vpop.f32.mrb[0].mxu0
    %v7669 = vadd.f32 0.0, %v7668
    %v7670 = vpop.f32.mrb[0].mxu0
    %7671 = vmatprep.mubr.f32.mxu0 0.0
    %7672 = vmatmul.mubr.f32.gmra.mrb[0].mxu0 %v7522
    %v7673 = vpop.f32.mrb[0].mxu0
    %v7674 = vadd.f32 0.0, %v7673
    %v7675 = vpop.f32.mrb[0].mxu0
    %7676 = vmatprep.mubr.f32.mxu0 0.0
    %7677 = vmatmul.mubr.f32.gmra.mrb[0].mxu0 %v7525
    %v7678 = vpop.f32.mrb[0].mxu0
    %v7679 = vadd.f32 0.0, %v7678
    %v7680 = vpop.f32.mrb[0].mxu0
    %7681 = vdwg.mxu0
    %v7682 = vadd.f32 %v5054, %v7594
    %v7683 = vadd.f32 %v5055, %v7599
    %v7684 = vadd.f32 %v5056, %v7604
    %v7685 = vadd.f32 %v5057, %v7609
    %v7686 = vadd.f32 %v5058, %v7614
    %v7687 = vadd.f32 %v5059, %v7619
    %v7688 = vadd.f32 %v5060, %v7624
    %v7689 = vadd.f32 %v5061, %v7629
    %v7690 = vadd.f32 %v5062, %v7634
    %v7691 = vadd.f32 %v5063, %v7639
    %v7692 = vadd.f32 %v5064, %v7644
    %v7693 = vadd.f32 %v5065, %v7649
    %v7694 = vadd.f32 %v5066, %v7654
    %v7695 = vadd.f32 %v5067, %v7659
    %v7696 = vadd.f32 %v5068, %v7664
    %v7697 = vadd.f32 %v5069, %v7669
    %v7698 = vadd.f32 %v5070, %v7674
    %v7699 = vadd.f32 %v5071, %v7679
    %s7700 = scalar_lea.vmem %s10, 1
    %v7701 = vld [vmem:[%s7700] sm:$0x1]
    %v7703 = vlaneseq
    %v7704 = vshrl.u32 %v7703, 7
    %v7705 = vsub.s32 0, %v7704
    %v7706 = vrot.slane %v7701, %v7705
    %v7708 = vadd.f32 %v7682, %v7706
    %v7709 = vadd.f32 %v7683, %v7706
    %v7710 = vadd.f32 %v7684, %v7706
    %v7711 = vadd.f32 %v7685, %v7706
    %v7712 = vadd.f32 %v7686, %v7706
    %v7713 = vadd.f32 %v7687, %v7706
    %v7714 = vadd.f32 %v7688, %v7706
    %v7715 = vadd.f32 %v7689, %v7706
    %v7716 = vadd.f32 %v7690, %v7706
    %v7717 = vadd.f32 %v7691, %v7706
    %v7718 = vadd.f32 %v7692, %v7706
    %v7719 = vadd.f32 %v7693, %v7706
    %v7720 = vadd.f32 %v7694, %v7706
    %v7721 = vadd.f32 %v7695, %v7706
    %v7722 = vadd.f32 %v7696, %v7706
    %v7723 = vadd.f32 %v7697, %v7706
    %v7724 = vadd.f32 %v7698, %v7706
    %v7725 = vadd.f32 %v7699, %v7706
    %s7726 = scalar_lea.vmem %s11, 1
    %v7727 = vld [vmem:[%s7726] sm:$0x1]
    %s7728 = scalar_lea.vmem %s12, 1
    %v7729 = vld [vmem:[%s7728] sm:$0x1]
    %v7730 = vsel %vm1434, %v7708, 0.0
    %7731 = vadd.xlane.f32.xlu0 %v7730
    %v7732 = vpop.xlane.xlu0 %7731
    %v7733 = vsel %vm1434, %v7709, 0.0
    %7734 = vadd.xlane.f32.xlu0 %v7733
    %v7735 = vpop.xlane.xlu0 %7734
    %v7736 = vsel %vm1434, %v7710, 0.0
    %7737 = vadd.xlane.f32.xlu0 %v7736
    %v7738 = vpop.xlane.xlu0 %7737
    %v7739 = vsel %vm1434, %v7711, 0.0
    %7740 = vadd.xlane.f32.xlu0 %v7739
    %v7741 = vpop.xlane.xlu0 %7740
    %v7742 = vsel %vm1434, %v7712, 0.0
    %7743 = vadd.xlane.f32.xlu0 %v7742
    %v7744 = vpop.xlane.xlu0 %7743
    %v7745 = vsel %vm1434, %v7713, 0.0
    %7746 = vadd.xlane.f32.xlu0 %v7745
    %v7747 = vpop.xlane.xlu0 %7746
    %v7748 = vsel %vm1434, %v7714, 0.0
    %7749 = vadd.xlane.f32.xlu0 %v7748
    %v7750 = vpop.xlane.xlu0 %7749
    %v7751 = vsel %vm1434, %v7715, 0.0
    %7752 = vadd.xlane.f32.xlu0 %v7751
    %v7753 = vpop.xlane.xlu0 %7752
    %v7754 = vsel %vm1434, %v7716, 0.0
    %7755 = vadd.xlane.f32.xlu0 %v7754
    %v7756 = vpop.xlane.xlu0 %7755
    %v7757 = vsel %vm1434, %v7717, 0.0
    %7758 = vadd.xlane.f32.xlu0 %v7757
    %v7759 = vpop.xlane.xlu0 %7758
    %v7760 = vsel %vm1434, %v7718, 0.0
    %7761 = vadd.xlane.f32.xlu0 %v7760
    %v7762 = vpop.xlane.xlu0 %7761
    %v7763 = vsel %vm1434, %v7719, 0.0
    %7764 = vadd.xlane.f32.xlu0 %v7763
    %v7765 = vpop.xlane.xlu0 %7764
    %v7766 = vsel %vm1434, %v7720, 0.0
    %7767 = vadd.xlane.f32.xlu0 %v7766
    %v7768 = vpop.xlane.xlu0 %7767
    %v7769 = vsel %vm1434, %v7721, 0.0
    %7770 = vadd.xlane.f32.xlu0 %v7769
    %v7771 = vpop.xlane.xlu0 %7770
    %v7772 = vsel %vm1434, %v7722, 0.0
    %7773 = vadd.xlane.f32.xlu0 %v7772
    %v7774 = vpop.xlane.xlu0 %7773
    %v7775 = vsel %vm1434, %v7723, 0.0
    %7776 = vadd.xlane.f32.xlu0 %v7775
    %v7777 = vpop.xlane.xlu0 %7776
    %v7778 = vsel %vm1434, %v7724, 0.0
    %7779 = vadd.xlane.f32.xlu0 %v7778
    %v7780 = vpop.xlane.xlu0 %7779
    %v7781 = vsel %vm1434, %v7725, 0.0
    %7782 = vadd.xlane.f32.xlu0 %v7781
    %v7783 = vpop.xlane.xlu0 %7782
    %v7784 = vmul.f32 %v7732, %v1549
    %v7785 = vmul.f32 %v7735, %v1549
    %v7786 = vmul.f32 %v7738, %v1549
    %v7787 = vmul.f32 %v7741, %v1549
    %v7788 = vmul.f32 %v7744, %v1549
    %v7789 = vmul.f32 %v7747, %v1549
    %v7790 = vmul.f32 %v7750, %v1549
    %v7791 = vmul.f32 %v7753, %v1549
    %v7792 = vmul.f32 %v7756, %v1549
    %v7793 = vmul.f32 %v7759, %v1549
    %v7794 = vmul.f32 %v7762, %v1549
    %v7795 = vmul.f32 %v7765, %v1549
    %v7796 = vmul.f32 %v7768, %v1549
    %v7797 = vmul.f32 %v7771, %v1549
    %v7798 = vmul.f32 %v7774, %v1549
    %v7799 = vmul.f32 %v7777, %v1549
    %v7800 = vmul.f32 %v7780, %v1549
    %v7801 = vmul.f32 %v7783, %v1549
    %v7802 = vsub.f32 %v7708, %v7784
    %v7803 = vsub.f32 %v7709, %v7785
    %v7804 = vsub.f32 %v7710, %v7786
    %v7805 = vsub.f32 %v7711, %v7787
    %v7806 = vsub.f32 %v7712, %v7788
    %v7807 = vsub.f32 %v7713, %v7789
    %v7808 = vsub.f32 %v7714, %v7790
    %v7809 = vsub.f32 %v7715, %v7791
    %v7810 = vsub.f32 %v7716, %v7792
    %v7811 = vsub.f32 %v7717, %v7793
    %v7812 = vsub.f32 %v7718, %v7794
    %v7813 = vsub.f32 %v7719, %v7795
    %v7814 = vsub.f32 %v7720, %v7796
    %v7815 = vsub.f32 %v7721, %v7797
    %v7816 = vsub.f32 %v7722, %v7798
    %v7817 = vsub.f32 %v7723, %v7799
    %v7818 = vsub.f32 %v7724, %v7800
    %v7819 = vsub.f32 %v7725, %v7801
    %v7820 = vmul.f32 %v7802, %v7802
    %v7821 = vmul.f32 %v7803, %v7803
    %v7822 = vmul.f32 %v7804, %v7804
    %v7823 = vmul.f32 %v7805, %v7805
    %v7824 = vmul.f32 %v7806, %v7806
    %v7825 = vmul.f32 %v7807, %v7807
    %v7826 = vmul.f32 %v7808, %v7808
    %v7827 = vmul.f32 %v7809, %v7809
    %v7828 = vmul.f32 %v7810, %v7810
    %v7829 = vmul.f32 %v7811, %v7811
    %v7830 = vmul.f32 %v7812, %v7812
    %v7831 = vmul.f32 %v7813, %v7813
    %v7832 = vmul.f32 %v7814, %v7814
    %v7833 = vmul.f32 %v7815, %v7815
    %v7834 = vmul.f32 %v7816, %v7816
    %v7835 = vmul.f32 %v7817, %v7817
    %v7836 = vmul.f32 %v7818, %v7818
    %v7837 = vmul.f32 %v7819, %v7819
    %v7838 = vsel %vm1434, %v7820, 0.0
    %7839 = vadd.xlane.f32.xlu0 %v7838
    %v7840 = vpop.xlane.xlu0 %7839
    %v7841 = vsel %vm1434, %v7821, 0.0
    %7842 = vadd.xlane.f32.xlu0 %v7841
    %v7843 = vpop.xlane.xlu0 %7842
    %v7844 = vsel %vm1434, %v7822, 0.0
    %7845 = vadd.xlane.f32.xlu0 %v7844
    %v7846 = vpop.xlane.xlu0 %7845
    %v7847 = vsel %vm1434, %v7823, 0.0
    %7848 = vadd.xlane.f32.xlu0 %v7847
    %v7849 = vpop.xlane.xlu0 %7848
    %v7850 = vsel %vm1434, %v7824, 0.0
    %7851 = vadd.xlane.f32.xlu0 %v7850
    %v7852 = vpop.xlane.xlu0 %7851
    %v7853 = vsel %vm1434, %v7825, 0.0
    %7854 = vadd.xlane.f32.xlu0 %v7853
    %v7855 = vpop.xlane.xlu0 %7854
    %v7856 = vsel %vm1434, %v7826, 0.0
    %7857 = vadd.xlane.f32.xlu0 %v7856
    %v7858 = vpop.xlane.xlu0 %7857
    %v7859 = vsel %vm1434, %v7827, 0.0
    %7860 = vadd.xlane.f32.xlu0 %v7859
    %v7861 = vpop.xlane.xlu0 %7860
    %v7862 = vsel %vm1434, %v7828, 0.0
    %7863 = vadd.xlane.f32.xlu0 %v7862
    %v7864 = vpop.xlane.xlu0 %7863
    %v7865 = vsel %vm1434, %v7829, 0.0
    %7866 = vadd.xlane.f32.xlu0 %v7865
    %v7867 = vpop.xlane.xlu0 %7866
    %v7868 = vsel %vm1434, %v7830, 0.0
    %7869 = vadd.xlane.f32.xlu0 %v7868
    %v7870 = vpop.xlane.xlu0 %7869
    %v7871 = vsel %vm1434, %v7831, 0.0
    %7872 = vadd.xlane.f32.xlu0 %v7871
    %v7873 = vpop.xlane.xlu0 %7872
    %v7874 = vsel %vm1434, %v7832, 0.0
    %7875 = vadd.xlane.f32.xlu0 %v7874
    %v7876 = vpop.xlane.xlu0 %7875
    %v7877 = vsel %vm1434, %v7833, 0.0
    %7878 = vadd.xlane.f32.xlu0 %v7877
    %v7879 = vpop.xlane.xlu0 %7878
    %v7880 = vsel %vm1434, %v7834, 0.0
    %7881 = vadd.xlane.f32.xlu0 %v7880
    %v7882 = vpop.xlane.xlu0 %7881
    %v7883 = vsel %vm1434, %v7835, 0.0
    %7884 = vadd.xlane.f32.xlu0 %v7883
    %v7885 = vpop.xlane.xlu0 %7884
    %v7886 = vsel %vm1434, %v7836, 0.0
    %7887 = vadd.xlane.f32.xlu0 %v7886
    %v7888 = vpop.xlane.xlu0 %7887
    %v7889 = vsel %vm1434, %v7837, 0.0
    %7890 = vadd.xlane.f32.xlu0 %v7889
    %v7891 = vpop.xlane.xlu0 %7890
    %v7892 = vmul.f32 %v7840, %v1549
    %v7893 = vmul.f32 %v7843, %v1549
    %v7894 = vmul.f32 %v7846, %v1549
    %v7895 = vmul.f32 %v7849, %v1549
    %v7896 = vmul.f32 %v7852, %v1549
    %v7897 = vmul.f32 %v7855, %v1549
    %v7898 = vmul.f32 %v7858, %v1549
    %v7899 = vmul.f32 %v7861, %v1549
    %v7900 = vmul.f32 %v7864, %v1549
    %v7901 = vmul.f32 %v7867, %v1549
    %v7902 = vmul.f32 %v7870, %v1549
    %v7903 = vmul.f32 %v7873, %v1549
    %v7904 = vmul.f32 %v7876, %v1549
    %v7905 = vmul.f32 %v7879, %v1549
    %v7906 = vmul.f32 %v7882, %v1549
    %v7907 = vmul.f32 %v7885, %v1549
    %v7908 = vmul.f32 %v7888, %v1549
    %v7909 = vmul.f32 %v7891, %v1549
    %v7910 = vadd.f32 %v7892, 1e-05
    %v7911 = vadd.f32 %v7893, 1e-05
    %v7912 = vadd.f32 %v7894, 1e-05
    %v7913 = vadd.f32 %v7895, 1e-05
    %v7914 = vadd.f32 %v7896, 1e-05
    %v7915 = vadd.f32 %v7897, 1e-05
    %v7916 = vadd.f32 %v7898, 1e-05
    %v7917 = vadd.f32 %v7899, 1e-05
    %v7918 = vadd.f32 %v7900, 1e-05
    %v7919 = vadd.f32 %v7901, 1e-05
    %v7920 = vadd.f32 %v7902, 1e-05
    %v7921 = vadd.f32 %v7903, 1e-05
    %v7922 = vadd.f32 %v7904, 1e-05
    %v7923 = vadd.f32 %v7905, 1e-05
    %v7924 = vadd.f32 %v7906, 1e-05
    %v7925 = vadd.f32 %v7907, 1e-05
    %v7926 = vadd.f32 %v7908, 1e-05
    %v7927 = vadd.f32 %v7909, 1e-05
    %v7928 = vrsqrt.pop %v7910
    %v7929 = vrsqrt.pop %v7911
    %v7930 = vrsqrt.pop %v7912
    %v7931 = vrsqrt.pop %v7913
    %v7932 = vrsqrt.pop %v7914
    %v7933 = vrsqrt.pop %v7915
    %v7934 = vrsqrt.pop %v7916
    %v7935 = vrsqrt.pop %v7917
    %v7936 = vrsqrt.pop %v7918
    %v7937 = vrsqrt.pop %v7919
    %v7938 = vrsqrt.pop %v7920
    %v7939 = vrsqrt.pop %v7921
    %v7940 = vrsqrt.pop %v7922
    %v7941 = vrsqrt.pop %v7923
    %v7942 = vrsqrt.pop %v7924
    %v7943 = vrsqrt.pop %v7925
    %v7944 = vrsqrt.pop %v7926
    %v7945 = vrsqrt.pop %v7927
    %v7946 = vmul.f32 %v7802, %v7928
    %v7947 = vmul.f32 %v7803, %v7929
    %v7948 = vmul.f32 %v7804, %v7930
    %v7949 = vmul.f32 %v7805, %v7931
    %v7950 = vmul.f32 %v7806, %v7932
    %v7951 = vmul.f32 %v7807, %v7933
    %v7952 = vmul.f32 %v7808, %v7934
    %v7953 = vmul.f32 %v7809, %v7935
    %v7954 = vmul.f32 %v7810, %v7936
    %v7955 = vmul.f32 %v7811, %v7937
    %v7956 = vmul.f32 %v7812, %v7938
    %v7957 = vmul.f32 %v7813, %v7939
    %v7958 = vmul.f32 %v7814, %v7940
    %v7959 = vmul.f32 %v7815, %v7941
    %v7960 = vmul.f32 %v7816, %v7942
    %v7961 = vmul.f32 %v7817, %v7943
    %v7962 = vmul.f32 %v7818, %v7944
    %v7963 = vmul.f32 %v7819, %v7945
    %v7965 = vlaneseq
    %v7966 = vshrl.u32 %v7965, 7
    %v7967 = vsub.s32 0, %v7966
    %v7968 = vrot.slane %v7727, %v7967
    %v7970 = vmul.f32 %v7946, %v7968
    %v7971 = vmul.f32 %v7947, %v7968
    %v7972 = vmul.f32 %v7948, %v7968
    %v7973 = vmul.f32 %v7949, %v7968
    %v7974 = vmul.f32 %v7950, %v7968
    %v7975 = vmul.f32 %v7951, %v7968
    %v7976 = vmul.f32 %v7952, %v7968
    %v7977 = vmul.f32 %v7953, %v7968
    %v7978 = vmul.f32 %v7954, %v7968
    %v7979 = vmul.f32 %v7955, %v7968
    %v7980 = vmul.f32 %v7956, %v7968
    %v7981 = vmul.f32 %v7957, %v7968
    %v7982 = vmul.f32 %v7958, %v7968
    %v7983 = vmul.f32 %v7959, %v7968
    %v7984 = vmul.f32 %v7960, %v7968
    %v7985 = vmul.f32 %v7961, %v7968
    %v7986 = vmul.f32 %v7962, %v7968
    %v7987 = vmul.f32 %v7963, %v7968
    %v7989 = vlaneseq
    %v7990 = vshrl.u32 %v7989, 7
    %v7991 = vsub.s32 0, %v7990
    %v7992 = vrot.slane %v7729, %v7991
    %v7994 = vadd.f32 %v7970, %v7992
    %v7995 = vadd.f32 %v7971, %v7992
    %v7996 = vadd.f32 %v7972, %v7992
    %v7997 = vadd.f32 %v7973, %v7992
    %v7998 = vadd.f32 %v7974, %v7992
    %v7999 = vadd.f32 %v7975, %v7992
    %v8000 = vadd.f32 %v7976, %v7992
    %v8001 = vadd.f32 %v7977, %v7992
    %v8002 = vadd.f32 %v7978, %v7992
    %v8003 = vadd.f32 %v7979, %v7992
    %v8004 = vadd.f32 %v7980, %v7992
    %v8005 = vadd.f32 %v7981, %v7992
    %v8006 = vadd.f32 %v7982, %v7992
    %v8007 = vadd.f32 %v7983, %v7992
    %v8008 = vadd.f32 %v7984, %v7992
    %v8009 = vadd.f32 %v7985, %v7992
    %v8010 = vadd.f32 %v7986, %v7992
    %v8011 = vadd.f32 %v7987, %v7992
    %s8012 = scalar_lea.vmem %s13, 32
    %v8013 = vld [vmem:[%s8012] sm:$0xff]
    %v8014 = vld [vmem:[%s8012 + $0x8] sm:$0xff]
    %v8015 = vld [vmem:[%s8012 + $0x10] sm:$0xff]
    %v8016 = vld [vmem:[%s8012 + $0x18] sm:$0xff]
    %s8017 = scalar_lea.vmem %s14, 1
    %v8018 = vld [vmem:[%s8017] sm:$0x1]
    %v8020 = vlaneseq
    %v8021 = vshrl.u32 %v8020, 7
    %v8022 = vsub.s32 0, %v8021
    %v8023 = vrot.slane %v8018, %v8022
    %v8026 = vsel %vm1434, %v7994, 0
    %v8029 = vsel %vm1434, %v7995, 0
    %v8032 = vsel %vm1434, %v7996, 0
    %v8035 = vsel %vm1434, %v7997, 0
    %v8038 = vsel %vm1434, %v7998, 0
    %v8041 = vsel %vm1434, %v7999, 0
    %v8044 = vsel %vm1434, %v8000, 0
    %v8047 = vsel %vm1434, %v8001, 0
    %v8050 = vsel %vm1434, %v8002, 0
    %v8053 = vsel %vm1434, %v8003, 0
    %v8056 = vsel %vm1434, %v8004, 0
    %v8059 = vsel %vm1434, %v8005, 0
    %v8062 = vsel %vm1434, %v8006, 0
    %v8065 = vsel %vm1434, %v8007, 0
    %v8068 = vsel %vm1434, %v8008, 0
    %v8071 = vsel %vm1434, %v8009, 0
    %v8074 = vsel %vm1434, %v8010, 0
    %v8077 = vsel %vm1434, %v8011, 0
    %8079 = vmatprep.subr.mxu0 0.0
    %8080 = vmatpush1.msra.mxu0 %v8013
    %8081 = vmatprep.subr.mxu0 0.0
    %8082 = vmatpush1.msra.mxu0 %v8014
    %8083 = vmatprep.subr.mxu0 0.0
    %8084 = vmatpush1.msra.mxu0 %v8015
    %8085 = vmatprep.subr.mxu0 0.0
    %8086 = vmatpush1.msra.mxu0 %v8016
    %8087 = vmatprep.subr.mxu0 0.0
    %8088 = vmatpush1.msra.mxu0 0.0
    %8089 = vmatprep.subr.mxu0 0.0
    %8090 = vmatpush1.msra.mxu0 0.0
    %8091 = vmatprep.subr.mxu0 0.0
    %8092 = vmatpush1.msra.mxu0 0.0
    %8093 = vmatprep.subr.mxu0 0.0
    %8094 = vmatpush1.msra.mxu0 0.0
    %8095 = vmatprep.subr.mxu0 0.0
    %8096 = vmatpush1.msra.mxu0 0.0
    %8097 = vmatprep.subr.mxu0 0.0
    %8098 = vmatpush1.msra.mxu0 0.0
    %8099 = vmatprep.subr.mxu0 0.0
    %8100 = vmatpush1.msra.mxu0 0.0
    %8101 = vmatprep.subr.mxu0 0.0
    %8102 = vmatpush1.msra.mxu0 0.0
    %8103 = vmatprep.subr.mxu0 0.0
    %8104 = vmatpush1.msra.mxu0 0.0
    %8105 = vmatprep.subr.mxu0 0.0
    %8106 = vmatpush1.msra.mxu0 0.0
    %8107 = vmatprep.subr.mxu0 0.0
    %8108 = vmatpush1.msra.mxu0 0.0
    %8109 = vmatprep.subr.mxu0 0.0
    %8110 = vmatpush1.msra.mxu0 0.0
    %8111 = vmatprep.subr.mxu0 0.0
    %8112 = vmatpush1.msra.mxu0 0.0
    %8113 = vmatprep.subr.mxu0 0.0
    %8114 = vmatpush1.msra.mxu0 0.0
    %8115 = vmatprep.subr.mxu0 0.0
    %8116 = vmatpush1.msra.mxu0 0.0
    %8117 = vmatprep.subr.mxu0 0.0
    %8118 = vmatpush1.msra.mxu0 0.0
    %8119 = vmatprep.subr.mxu0 0.0
    %8120 = vmatpush1.msra.mxu0 0.0
    %8121 = vmatprep.subr.mxu0 0.0
    %8122 = vmatpush1.msra.mxu0 0.0
    %8123 = vmatprep.subr.mxu0 0.0
    %8124 = vmatpush1.msra.mxu0 0.0
    %8125 = vmatprep.subr.mxu0 0.0
    %8126 = vmatpush1.msra.mxu0 0.0
    %8127 = vmatprep.subr.mxu0 0.0
    %8128 = vmatpush1.msra.mxu0 0.0
    %8129 = vmatprep.subr.mxu0 0.0
    %8130 = vmatpush1.msra.mxu0 0.0
    %8131 = vmatprep.subr.mxu0 0.0
    %8132 = vmatpush1.msra.mxu0 0.0
    %8133 = vmatprep.subr.mxu0 0.0
    %8134 = vmatpush1.msra.mxu0 0.0
    %8135 = vmatprep.subr.mxu0 0.0
    %8136 = vmatpush1.msra.mxu0 0.0
    %8137 = vmatprep.subr.mxu0 0.0
    %8138 = vmatpush1.msra.mxu0 0.0
    %8139 = vmatprep.subr.mxu0 0.0
    %8140 = vmatpush1.msra.mxu0 0.0
    %8141 = vmatprep.subr.mxu0 0.0
    %8142 = vmatpush1.msra.mxu0 0.0
    %8143 = vmatprep.mubr.f32.mxu0 0.0
    %8144 = vmatmul.mubr.f32.gmra.mrb[0].mxu0 %v8026
    %v8145 = vpop.f32.mrb[0].mxu0
    %v8146 = vadd.f32 %v8023, %v8145
    %v8147 = vpop.f32.mrb[0].mxu0
    %8148 = vmatprep.mubr.f32.mxu0 0.0
    %8149 = vmatmul.mubr.f32.gmra.mrb[0].mxu0 %v8029
    %v8150 = vpop.f32.mrb[0].mxu0
    %v8151 = vadd.f32 %v8023, %v8150
    %v8152 = vpop.f32.mrb[0].mxu0
    %8153 = vmatprep.mubr.f32.mxu0 0.0
    %8154 = vmatmul.mubr.f32.gmra.mrb[0].mxu0 %v8032
    %v8155 = vpop.f32.mrb[0].mxu0
    %v8156 = vadd.f32 %v8023, %v8155
    %v8157 = vpop.f32.mrb[0].mxu0
    %8158 = vmatprep.mubr.f32.mxu0 0.0
    %8159 = vmatmul.mubr.f32.gmra.mrb[0].mxu0 %v8035
    %v8160 = vpop.f32.mrb[0].mxu0
    %v8161 = vadd.f32 %v8023, %v8160
    %v8162 = vpop.f32.mrb[0].mxu0
    %8163 = vmatprep.mubr.f32.mxu0 0.0
    %8164 = vmatmul.mubr.f32.gmra.mrb[0].mxu0 %v8038
    %v8165 = vpop.f32.mrb[0].mxu0
    %v8166 = vadd.f32 %v8023, %v8165
    %v8167 = vpop.f32.mrb[0].mxu0
    %8168 = vmatprep.mubr.f32.mxu0 0.0
    %8169 = vmatmul.mubr.f32.gmra.mrb[0].mxu0 %v8041
    %v8170 = vpop.f32.mrb[0].mxu0
    %v8171 = vadd.f32 %v8023, %v8170
    %v8172 = vpop.f32.mrb[0].mxu0
    %8173 = vmatprep.mubr.f32.mxu0 0.0
    %8174 = vmatmul.mubr.f32.gmra.mrb[0].mxu0 %v8044
    %v8175 = vpop.f32.mrb[0].mxu0
    %v8176 = vadd.f32 %v8023, %v8175
    %v8177 = vpop.f32.mrb[0].mxu0
    %8178 = vmatprep.mubr.f32.mxu0 0.0
    %8179 = vmatmul.mubr.f32.gmra.mrb[0].mxu0 %v8047
    %v8180 = vpop.f32.mrb[0].mxu0
    %v8181 = vadd.f32 %v8023, %v8180
    %v8182 = vpop.f32.mrb[0].mxu0
    %8183 = vmatprep.mubr.f32.mxu0 0.0
    %8184 = vmatmul.mubr.f32.gmra.mrb[0].mxu0 %v8050
    %v8185 = vpop.f32.mrb[0].mxu0
    %v8186 = vadd.f32 %v8023, %v8185
    %v8187 = vpop.f32.mrb[0].mxu0
    %8188 = vmatprep.mubr.f32.mxu0 0.0
    %8189 = vmatmul.mubr.f32.gmra.mrb[0].mxu0 %v8053
    %v8190 = vpop.f32.mrb[0].mxu0
    %v8191 = vadd.f32 %v8023, %v8190
    %v8192 = vpop.f32.mrb[0].mxu0
    %8193 = vmatprep.mubr.f32.mxu0 0.0
    %8194 = vmatmul.mubr.f32.gmra.mrb[0].mxu0 %v8056
    %v8195 = vpop.f32.mrb[0].mxu0
    %v8196 = vadd.f32 %v8023, %v8195
    %v8197 = vpop.f32.mrb[0].mxu0
    %8198 = vmatprep.mubr.f32.mxu0 0.0
    %8199 = vmatmul.mubr.f32.gmra.mrb[0].mxu0 %v8059
    %v8200 = vpop.f32.mrb[0].mxu0
    %v8201 = vadd.f32 %v8023, %v8200
    %v8202 = vpop.f32.mrb[0].mxu0
    %8203 = vmatprep.mubr.f32.mxu0 0.0
    %8204 = vmatmul.mubr.f32.gmra.mrb[0].mxu0 %v8062
    %v8205 = vpop.f32.mrb[0].mxu0
    %v8206 = vadd.f32 %v8023, %v8205
    %v8207 = vpop.f32.mrb[0].mxu0
    %8208 = vmatprep.mubr.f32.mxu0 0.0
    %8209 = vmatmul.mubr.f32.gmra.mrb[0].mxu0 %v8065
    %v8210 = vpop.f32.mrb[0].mxu0
    %v8211 = vadd.f32 %v8023, %v8210
    %v8212 = vpop.f32.mrb[0].mxu0
    %8213 = vmatprep.mubr.f32.mxu0 0.0
    %8214 = vmatmul.mubr.f32.gmra.mrb[0].mxu0 %v8068
    %v8215 = vpop.f32.mrb[0].mxu0
    %v8216 = vadd.f32 %v8023, %v8215
    %v8217 = vpop.f32.mrb[0].mxu0
    %8218 = vmatprep.mubr.f32.mxu0 0.0
    %8219 = vmatmul.mubr.f32.gmra.mrb[0].mxu0 %v8071
    %v8220 = vpop.f32.mrb[0].mxu0
    %v8221 = vadd.f32 %v8023, %v8220
    %v8222 = vpop.f32.mrb[0].mxu0
    %8223 = vmatprep.mubr.f32.mxu0 0.0
    %8224 = vmatmul.mubr.f32.gmra.mrb[0].mxu0 %v8074
    %v8225 = vpop.f32.mrb[0].mxu0
    %v8226 = vadd.f32 %v8023, %v8225
    %v8227 = vpop.f32.mrb[0].mxu0
    %8228 = vmatprep.mubr.f32.mxu0 0.0
    %8229 = vmatmul.mubr.f32.gmra.mrb[0].mxu0 %v8077
    %v8230 = vpop.f32.mrb[0].mxu0
    %v8231 = vadd.f32 %v8023, %v8230
    %v8232 = vpop.f32.mrb[0].mxu0
    %8233 = vdwg.mxu0
    %v8234 = vmul.f32 %v8146, 0.5
    %v8235 = vmul.f32 %v8151, 0.5
    %v8236 = vmul.f32 %v8156, 0.5
    %v8237 = vmul.f32 %v8161, 0.5
    %v8238 = vmul.f32 %v8166, 0.5
    %v8239 = vmul.f32 %v8171, 0.5
    %v8240 = vmul.f32 %v8176, 0.5
    %v8241 = vmul.f32 %v8181, 0.5
    %v8242 = vmul.f32 %v8186, 0.5
    %v8243 = vmul.f32 %v8191, 0.5
    %v8244 = vmul.f32 %v8196, 0.5
    %v8245 = vmul.f32 %v8201, 0.5
    %v8246 = vmul.f32 %v8206, 0.5
    %v8247 = vmul.f32 %v8211, 0.5
    %v8248 = vmul.f32 %v8216, 0.5
    %v8249 = vmul.f32 %v8221, 0.5
    %v8250 = vmul.f32 %v8226, 0.5
    %v8251 = vmul.f32 %v8231, 0.5
    %v8252 = vmul.f32 %v8146, 0.044715
    %v8253 = vmul.f32 %v8151, 0.044715
    %v8254 = vmul.f32 %v8156, 0.044715
    %v8255 = vmul.f32 %v8161, 0.044715
    %v8256 = vmul.f32 %v8166, 0.044715
    %v8257 = vmul.f32 %v8171, 0.044715
    %v8258 = vmul.f32 %v8176, 0.044715
    %v8259 = vmul.f32 %v8181, 0.044715
    %v8260 = vmul.f32 %v8186, 0.044715
    %v8261 = vmul.f32 %v8191, 0.044715
    %v8262 = vmul.f32 %v8196, 0.044715
    %v8263 = vmul.f32 %v8201, 0.044715
    %v8264 = vmul.f32 %v8206, 0.044715
    %v8265 = vmul.f32 %v8211, 0.044715
    %v8266 = vmul.f32 %v8216, 0.044715
    %v8267 = vmul.f32 %v8221, 0.044715
    %v8268 = vmul.f32 %v8226, 0.044715
    %v8269 = vmul.f32 %v8231, 0.044715
    %v8270 = vmul.f32 %v8252, %v8146
    %v8271 = vmul.f32 %v8253, %v8151
    %v8272 = vmul.f32 %v8254, %v8156
    %v8273 = vmul.f32 %v8255, %v8161
    %v8274 = vmul.f32 %v8256, %v8166
    %v8275 = vmul.f32 %v8257, %v8171
    %v8276 = vmul.f32 %v8258, %v8176
    %v8277 = vmul.f32 %v8259, %v8181
    %v8278 = vmul.f32 %v8260, %v8186
    %v8279 = vmul.f32 %v8261, %v8191
    %v8280 = vmul.f32 %v8262, %v8196
    %v8281 = vmul.f32 %v8263, %v8201
    %v8282 = vmul.f32 %v8264, %v8206
    %v8283 = vmul.f32 %v8265, %v8211
    %v8284 = vmul.f32 %v8266, %v8216
    %v8285 = vmul.f32 %v8267, %v8221
    %v8286 = vmul.f32 %v8268, %v8226
    %v8287 = vmul.f32 %v8269, %v8231
    %v8288 = vmul.f32 %v8270, %v8146
    %v8289 = vmul.f32 %v8271, %v8151
    %v8290 = vmul.f32 %v8272, %v8156
    %v8291 = vmul.f32 %v8273, %v8161
    %v8292 = vmul.f32 %v8274, %v8166
    %v8293 = vmul.f32 %v8275, %v8171
    %v8294 = vmul.f32 %v8276, %v8176
    %v8295 = vmul.f32 %v8277, %v8181
    %v8296 = vmul.f32 %v8278, %v8186
    %v8297 = vmul.f32 %v8279, %v8191
    %v8298 = vmul.f32 %v8280, %v8196
    %v8299 = vmul.f32 %v8281, %v8201
    %v8300 = vmul.f32 %v8282, %v8206
    %v8301 = vmul.f32 %v8283, %v8211
    %v8302 = vmul.f32 %v8284, %v8216
    %v8303 = vmul.f32 %v8285, %v8221
    %v8304 = vmul.f32 %v8286, %v8226
    %v8305 = vmul.f32 %v8287, %v8231
    %v8306 = vadd.f32 %v8146, %v8288
    %v8307 = vadd.f32 %v8151, %v8289
    %v8308 = vadd.f32 %v8156, %v8290
    %v8309 = vadd.f32 %v8161, %v8291
    %v8310 = vadd.f32 %v8166, %v8292
    %v8311 = vadd.f32 %v8171, %v8293
    %v8312 = vadd.f32 %v8176, %v8294
    %v8313 = vadd.f32 %v8181, %v8295
    %v8314 = vadd.f32 %v8186, %v8296
    %v8315 = vadd.f32 %v8191, %v8297
    %v8316 = vadd.f32 %v8196, %v8298
    %v8317 = vadd.f32 %v8201, %v8299
    %v8318 = vadd.f32 %v8206, %v8300
    %v8319 = vadd.f32 %v8211, %v8301
    %v8320 = vadd.f32 %v8216, %v8302
    %v8321 = vadd.f32 %v8221, %v8303
    %v8322 = vadd.f32 %v8226, %v8304
    %v8323 = vadd.f32 %v8231, %v8305
    %v8324 = vmul.f32 %v8306, 0.7978846
    %v8325 = vmul.f32 %v8307, 0.7978846
    %v8326 = vmul.f32 %v8308, 0.7978846
    %v8327 = vmul.f32 %v8309, 0.7978846
    %v8328 = vmul.f32 %v8310, 0.7978846
    %v8329 = vmul.f32 %v8311, 0.7978846
    %v8330 = vmul.f32 %v8312, 0.7978846
    %v8331 = vmul.f32 %v8313, 0.7978846
    %v8332 = vmul.f32 %v8314, 0.7978846
    %v8333 = vmul.f32 %v8315, 0.7978846
    %v8334 = vmul.f32 %v8316, 0.7978846
    %v8335 = vmul.f32 %v8317, 0.7978846
    %v8336 = vmul.f32 %v8318, 0.7978846
    %v8337 = vmul.f32 %v8319, 0.7978846
    %v8338 = vmul.f32 %v8320, 0.7978846
    %v8339 = vmul.f32 %v8321, 0.7978846
    %v8340 = vmul.f32 %v8322, 0.7978846
    %v8341 = vmul.f32 %v8323, 0.7978846
    %v8342 = vtanh.pop %v8324
    %v8343 = vtanh.pop %v8325
    %v8344 = vtanh.pop %v8326
    %v8345 = vtanh.pop %v8327
    %v8346 = vtanh.pop %v8328
    %v8347 = vtanh.pop %v8329
    %v8348 = vtanh.pop %v8330
    %v8349 = vtanh.pop %v8331
    %v8350 = vtanh.pop %v8332
    %v8351 = vtanh.pop %v8333
    %v8352 = vtanh.pop %v8334
    %v8353 = vtanh.pop %v8335
    %v8354 = vtanh.pop %v8336
    %v8355 = vtanh.pop %v8337
    %v8356 = vtanh.pop %v8338
    %v8357 = vtanh.pop %v8339
    %v8358 = vtanh.pop %v8340
    %v8359 = vtanh.pop %v8341
    %v8360 = vadd.f32 %v8342, 1.0
    %v8361 = vadd.f32 %v8343, 1.0
    %v8362 = vadd.f32 %v8344, 1.0
    %v8363 = vadd.f32 %v8345, 1.0
    %v8364 = vadd.f32 %v8346, 1.0
    %v8365 = vadd.f32 %v8347, 1.0
    %v8366 = vadd.f32 %v8348, 1.0
    %v8367 = vadd.f32 %v8349, 1.0
    %v8368 = vadd.f32 %v8350, 1.0
    %v8369 = vadd.f32 %v8351, 1.0
    %v8370 = vadd.f32 %v8352, 1.0
    %v8371 = vadd.f32 %v8353, 1.0
    %v8372 = vadd.f32 %v8354, 1.0
    %v8373 = vadd.f32 %v8355, 1.0
    %v8374 = vadd.f32 %v8356, 1.0
    %v8375 = vadd.f32 %v8357, 1.0
    %v8376 = vadd.f32 %v8358, 1.0
    %v8377 = vadd.f32 %v8359, 1.0
    %v8378 = vmul.f32 %v8234, %v8360
    %v8379 = vmul.f32 %v8235, %v8361
    %v8380 = vmul.f32 %v8236, %v8362
    %v8381 = vmul.f32 %v8237, %v8363
    %v8382 = vmul.f32 %v8238, %v8364
    %v8383 = vmul.f32 %v8239, %v8365
    %v8384 = vmul.f32 %v8240, %v8366
    %v8385 = vmul.f32 %v8241, %v8367
    %v8386 = vmul.f32 %v8242, %v8368
    %v8387 = vmul.f32 %v8243, %v8369
    %v8388 = vmul.f32 %v8244, %v8370
    %v8389 = vmul.f32 %v8245, %v8371
    %v8390 = vmul.f32 %v8246, %v8372
    %v8391 = vmul.f32 %v8247, %v8373
    %v8392 = vmul.f32 %v8248, %v8374
    %v8393 = vmul.f32 %v8249, %v8375
    %v8394 = vmul.f32 %v8250, %v8376
    %v8395 = vmul.f32 %v8251, %v8377
    %s8396 = scalar_lea.vmem %s15, 64
    %v8397 = vld [vmem:[%s8396] sm:$0xff]
    %v8398 = vld [vmem:[%s8396 + $0x8] sm:$0xff]
    %v8399 = vld [vmem:[%s8396 + $0x10] sm:$0xff]
    %v8400 = vld [vmem:[%s8396 + $0x18] sm:$0xff]
    %v8401 = vld [vmem:[%s8396 + $0x20] sm:$0xff]
    %v8402 = vld [vmem:[%s8396 + $0x28] sm:$0xff]
    %v8403 = vld [vmem:[%s8396 + $0x30] sm:$0xff]
    %v8404 = vld [vmem:[%s8396 + $0x38] sm:$0xff]
    %v8406 = vsel %vm4819, %v8378, 0
    %v8409 = vsel %vm4819, %v8379, 0
    %v8412 = vsel %vm4819, %v8380, 0
    %v8415 = vsel %vm4819, %v8381, 0
    %v8418 = vsel %vm4819, %v8382, 0
    %v8421 = vsel %vm4819, %v8383, 0
    %v8424 = vsel %vm4819, %v8384, 0
    %v8427 = vsel %vm4819, %v8385, 0
    %v8430 = vsel %vm4819, %v8386, 0
    %v8433 = vsel %vm4819, %v8387, 0
    %v8436 = vsel %vm4819, %v8388, 0
    %v8439 = vsel %vm4819, %v8389, 0
    %v8442 = vsel %vm4819, %v8390, 0
    %v8445 = vsel %vm4819, %v8391, 0
    %v8448 = vsel %vm4819, %v8392, 0
    %v8451 = vsel %vm4819, %v8393, 0
    %v8454 = vsel %vm4819, %v8394, 0
    %v8457 = vsel %vm4819, %v8395, 0
    %8459 = vmatprep.subr.mxu0 0.0
    %8460 = vmatpush1.msra.mxu0 %v8397
    %8461 = vmatprep.subr.mxu0 0.0
    %8462 = vmatpush1.msra.mxu0 %v8398
    %8463 = vmatprep.subr.mxu0 0.0
    %8464 = vmatpush1.msra.mxu0 %v8399
    %8465 = vmatprep.subr.mxu0 0.0
    %8466 = vmatpush1.msra.mxu0 %v8400
    %8467 = vmatprep.subr.mxu0 0.0
    %8468 = vmatpush1.msra.mxu0 %v8401
    %8469 = vmatprep.subr.mxu0 0.0
    %8470 = vmatpush1.msra.mxu0 %v8402
    %8471 = vmatprep.subr.mxu0 0.0
    %8472 = vmatpush1.msra.mxu0 %v8403
    %8473 = vmatprep.subr.mxu0 0.0
    %8474 = vmatpush1.msra.mxu0 %v8404
    %8475 = vmatprep.subr.mxu0 0.0
    %8476 = vmatpush1.msra.mxu0 0.0
    %8477 = vmatprep.subr.mxu0 0.0
    %8478 = vmatpush1.msra.mxu0 0.0
    %8479 = vmatprep.subr.mxu0 0.0
    %8480 = vmatpush1.msra.mxu0 0.0
    %8481 = vmatprep.subr.mxu0 0.0
    %8482 = vmatpush1.msra.mxu0 0.0
    %8483 = vmatprep.subr.mxu0 0.0
    %8484 = vmatpush1.msra.mxu0 0.0
    %8485 = vmatprep.subr.mxu0 0.0
    %8486 = vmatpush1.msra.mxu0 0.0
    %8487 = vmatprep.subr.mxu0 0.0
    %8488 = vmatpush1.msra.mxu0 0.0
    %8489 = vmatprep.subr.mxu0 0.0
    %8490 = vmatpush1.msra.mxu0 0.0
    %8491 = vmatprep.subr.mxu0 0.0
    %8492 = vmatpush1.msra.mxu0 0.0
    %8493 = vmatprep.subr.mxu0 0.0
    %8494 = vmatpush1.msra.mxu0 0.0
    %8495 = vmatprep.subr.mxu0 0.0
    %8496 = vmatpush1.msra.mxu0 0.0
    %8497 = vmatprep.subr.mxu0 0.0
    %8498 = vmatpush1.msra.mxu0 0.0
    %8499 = vmatprep.subr.mxu0 0.0
    %8500 = vmatpush1.msra.mxu0 0.0
    %8501 = vmatprep.subr.mxu0 0.0
    %8502 = vmatpush1.msra.mxu0 0.0
    %8503 = vmatprep.subr.mxu0 0.0
    %8504 = vmatpush1.msra.mxu0 0.0
    %8505 = vmatprep.subr.mxu0 0.0
    %8506 = vmatpush1.msra.mxu0 0.0
    %8507 = vmatprep.subr.mxu0 0.0
    %8508 = vmatpush1.msra.mxu0 0.0
    %8509 = vmatprep.subr.mxu0 0.0
    %8510 = vmatpush1.msra.mxu0 0.0
    %8511 = vmatprep.subr.mxu0 0.0
    %8512 = vmatpush1.msra.mxu0 0.0
    %8513 = vmatprep.subr.mxu0 0.0
    %8514 = vmatpush1.msra.mxu0 0.0
    %8515 = vmatprep.subr.mxu0 0.0
    %8516 = vmatpush1.msra.mxu0 0.0
    %8517 = vmatprep.subr.mxu0 0.0
    %8518 = vmatpush1.msra.mxu0 0.0
    %8519 = vmatprep.subr.mxu0 0.0
    %8520 = vmatpush1.msra.mxu0 0.0
    %8521 = vmatprep.subr.mxu0 0.0
    %8522 = vmatpush1.msra.mxu0 0.0
    %8523 = vmatprep.mubr.f32.mxu0 0.0
    %8524 = vmatmul.mubr.f32.gmra.mrb[0].mxu0 %v8406
    %v8525 = vpop.f32.mrb[0].mxu0
    %v8526 = vpop.f32.mrb[0].mxu0
    %8527 = vmatprep.mubr.f32.mxu0 0.0
    %8528 = vmatmul.mubr.f32.gmra.mrb[0].mxu0 %v8409
    %v8529 = vpop.f32.mrb[0].mxu0
    %v8530 = vpop.f32.mrb[0].mxu0
    %8531 = vmatprep.mubr.f32.mxu0 0.0
    %8532 = vmatmul.mubr.f32.gmra.mrb[0].mxu0 %v8412
    %v8533 = vpop.f32.mrb[0].mxu0
    %v8534 = vpop.f32.mrb[0].mxu0
    %8535 = vmatprep.mubr.f32.mxu0 0.0
    %8536 = vmatmul.mubr.f32.gmra.mrb[0].mxu0 %v8415
    %v8537 = vpop.f32.mrb[0].mxu0
    %v8538 = vpop.f32.mrb[0].mxu0
    %8539 = vmatprep.mubr.f32.mxu0 0.0
    %8540 = vmatmul.mubr.f32.gmra.mrb[0].mxu0 %v8418
    %v8541 = vpop.f32.mrb[0].mxu0
    %v8542 = vpop.f32.mrb[0].mxu0
    %8543 = vmatprep.mubr.f32.mxu0 0.0
    %8544 = vmatmul.mubr.f32.gmra.mrb[0].mxu0 %v8421
    %v8545 = vpop.f32.mrb[0].mxu0
    %v8546 = vpop.f32.mrb[0].mxu0
    %8547 = vmatprep.mubr.f32.mxu0 0.0
    %8548 = vmatmul.mubr.f32.gmra.mrb[0].mxu0 %v8424
    %v8549 = vpop.f32.mrb[0].mxu0
    %v8550 = vpop.f32.mrb[0].mxu0
    %8551 = vmatprep.mubr.f32.mxu0 0.0
    %8552 = vmatmul.mubr.f32.gmra.mrb[0].mxu0 %v8427
    %v8553 = vpop.f32.mrb[0].mxu0
    %v8554 = vpop.f32.mrb[0].mxu0
    %8555 = vmatprep.mubr.f32.mxu0 0.0
    %8556 = vmatmul.mubr.f32.gmra.mrb[0].mxu0 %v8430
    %v8557 = vpop.f32.mrb[0].mxu0
    %v8558 = vadd.f32 0.0, %v8557
    %v8559 = vpop.f32.mrb[0].mxu0
    %8560 = vmatprep.mubr.f32.mxu0 0.0
    %8561 = vmatmul.mubr.f32.gmra.mrb[0].mxu0 %v8433
    %v8562 = vpop.f32.mrb[0].mxu0
    %v8563 = vpop.f32.mrb[0].mxu0
    %8564 = vmatprep.mubr.f32.mxu0 0.0
    %8565 = vmatmul.mubr.f32.gmra.mrb[0].mxu0 %v8436
    %v8566 = vpop.f32.mrb[0].mxu0
    %v8567 = vpop.f32.mrb[0].mxu0
    %8568 = vmatprep.mubr.f32.mxu0 0.0
    %8569 = vmatmul.mubr.f32.gmra.mrb[0].mxu0 %v8439
    %v8570 = vpop.f32.mrb[0].mxu0
    %v8571 = vpop.f32.mrb[0].mxu0
    %8572 = vmatprep.mubr.f32.mxu0 0.0
    %8573 = vmatmul.mubr.f32.gmra.mrb[0].mxu0 %v8442
    %v8574 = vpop.f32.mrb[0].mxu0
    %v8575 = vpop.f32.mrb[0].mxu0
    %8576 = vmatprep.mubr.f32.mxu0 0.0
    %8577 = vmatmul.mubr.f32.gmra.mrb[0].mxu0 %v8445
    %v8578 = vpop.f32.mrb[0].mxu0
    %v8579 = vpop.f32.mrb[0].mxu0
    %8580 = vmatprep.mubr.f32.mxu0 0.0
    %8581 = vmatmul.mubr.f32.gmra.mrb[0].mxu0 %v8448
    %v8582 = vpop.f32.mrb[0].mxu0
    %v8583 = vpop.f32.mrb[0].mxu0
    %8584 = vmatprep.mubr.f32.mxu0 0.0
    %8585 = vmatmul.mubr.f32.gmra.mrb[0].mxu0 %v8451
    %v8586 = vpop.f32.mrb[0].mxu0
    %v8587 = vpop.f32.mrb[0].mxu0
    %8588 = vmatprep.mubr.f32.mxu0 0.0
    %8589 = vmatmul.mubr.f32.gmra.mrb[0].mxu0 %v8454
    %v8590 = vpop.f32.mrb[0].mxu0
    %v8591 = vpop.f32.mrb[0].mxu0
    %8592 = vmatprep.mubr.f32.mxu0 0.0
    %8593 = vmatmul.mubr.f32.gmra.mrb[0].mxu0 %v8457
    %v8594 = vpop.f32.mrb[0].mxu0
    %v8595 = vadd.f32 0.0, %v8594
    %v8596 = vpop.f32.mrb[0].mxu0
    %8597 = vdwg.mxu0
    %v8598 = vadd.f32 %v7716, %v8558
    %v8599 = vadd.f32 %v7725, %v8595
    %s8600 = scalar_lea.vmem %s16, 1
    %v8601 = vld [vmem:[%s8600] sm:$0x1]
    %v8603 = vlaneseq
    %v8604 = vshrl.u32 %v8603, 7
    %v8605 = vsub.s32 0, %v8604
    %v8606 = vrot.slane %v8601, %v8605
    %v8608 = vadd.f32 %v8598, %v8606
    %v8609 = vadd.f32 %v8599, %v8606
    %v8610 = vld [vmem:[%s17] sm:$0x1]
    %v8611 = vld [vmem:[%s18] sm:$0x1]
    %v8612 = vsel %vm1434, %v8608, 0.0
    %8613 = vadd.xlane.f32.xlu0 %v8612
    %v8614 = vpop.xlane.xlu0 %8613
    %v8615 = vsel %vm1434, %v8609, 0.0
    %8616 = vadd.xlane.f32.xlu0 %v8615
    %v8617 = vpop.xlane.xlu0 %8616
    %v8618 = vmul.f32 %v8614, %v1549
    %v8619 = vmul.f32 %v8617, %v1549
    %v8620 = vsub.f32 %v8608, %v8618
    %v8621 = vsub.f32 %v8609, %v8619
    %v8622 = vmul.f32 %v8620, %v8620
    %v8623 = vmul.f32 %v8621, %v8621
    %v8624 = vsel %vm1434, %v8622, 0.0
    %8625 = vadd.xlane.f32.xlu0 %v8624
    %v8626 = vpop.xlane.xlu0 %8625
    %v8627 = vsel %vm1434, %v8623, 0.0
    %8628 = vadd.xlane.f32.xlu0 %v8627
    %v8629 = vpop.xlane.xlu0 %8628
    %v8630 = vmul.f32 %v8626, %v1549
    %v8631 = vmul.f32 %v8629, %v1549
    %v8632 = vadd.f32 %v8630, 1e-05
    %v8633 = vadd.f32 %v8631, 1e-05
    %v8634 = vrsqrt.pop %v8632
    %v8635 = vrsqrt.pop %v8633
    %v8636 = vmul.f32 %v8620, %v8634
    %v8637 = vmul.f32 %v8621, %v8635
    %v8639 = vlaneseq
    %v8640 = vshrl.u32 %v8639, 7
    %v8641 = vsub.s32 0, %v8640
    %v8642 = vrot.slane %v8610, %v8641
    %v8644 = vmul.f32 %v8636, %v8642
    %v8645 = vmul.f32 %v8637, %v8642
    %v8647 = vlaneseq
    %v8648 = vshrl.u32 %v8647, 7
    %v8649 = vsub.s32 0, %v8648
    %v8650 = vrot.slane %v8611, %v8649
    %v8652 = vadd.f32 %v8644, %v8650
    %v8653 = vadd.f32 %v8645, %v8650
    %v8655 = vrot.slane %v8653, 7
    %vm8657 = vcmask 1040384
    %v8658 = vsel %vm8657, %v8652, %v8655
    %v8659 = vadd.f32 %v8658, %v1415
    %v8660 = vld [vmem:[%s19] sm:$0xff]
    %v8661 = vld [vmem:[%s19 + $0x8] sm:$0xff]
    %v8662 = vld [vmem:[%s19 + $0x10] sm:$0xff]
    %v8663 = vld [vmem:[%s19 + $0x18] sm:$0xff]
    %v8664 = vld [vmem:[%s20] sm:$0x1]
    %v8666 = vlaneseq
    %v8667 = vshrl.u32 %v8666, 7
    %v8668 = vsub.s32 0, %v8667
    %v8669 = vrot.slane %v8664, %v8668
    %v8672 = vsel %vm1434, %v8659, 0
    %8674 = vmatprep.subr.mxu0 0.0
    %8675 = vmatpush1.msra.mxu0 %v8660
    %8676 = vmatprep.subr.mxu0 0.0
    %8677 = vmatpush1.msra.mxu0 %v8661
    %8678 = vmatprep.subr.mxu0 0.0
    %8679 = vmatpush1.msra.mxu0 %v8662
    %8680 = vmatprep.subr.mxu0 0.0
    %8681 = vmatpush1.msra.mxu0 %v8663
    %8682 = vmatprep.subr.mxu0 0.0
    %8683 = vmatpush1.msra.mxu0 0.0
    %8684 = vmatprep.subr.mxu0 0.0
    %8685 = vmatpush1.msra.mxu0 0.0
    %8686 = vmatprep.subr.mxu0 0.0
    %8687 = vmatpush1.msra.mxu0 0.0
    %8688 = vmatprep.subr.mxu0 0.0
    %8689 = vmatpush1.msra.mxu0 0.0
    %8690 = vmatprep.subr.mxu0 0.0
    %8691 = vmatpush1.msra.mxu0 0.0
    %8692 = vmatprep.subr.mxu0 0.0
    %8693 = vmatpush1.msra.mxu0 0.0
    %8694 = vmatprep.subr.mxu0 0.0
    %8695 = vmatpush1.msra.mxu0 0.0
    %8696 = vmatprep.subr.mxu0 0.0
    %8697 = vmatpush1.msra.mxu0 0.0
    %8698 = vmatprep.subr.mxu0 0.0
    %8699 = vmatpush1.msra.mxu0 0.0
    %8700 = vmatprep.subr.mxu0 0.0
    %8701 = vmatpush1.msra.mxu0 0.0
    %8702 = vmatprep.subr.mxu0 0.0
    %8703 = vmatpush1.msra.mxu0 0.0
    %8704 = vmatprep.subr.mxu0 0.0
    %8705 = vmatpush1.msra.mxu0 0.0
    %8706 = vmatprep.subr.mxu0 0.0
    %8707 = vmatpush1.msra.mxu0 0.0
    %8708 = vmatprep.subr.mxu0 0.0
    %8709 = vmatpush1.msra.mxu0 0.0
    %8710 = vmatprep.subr.mxu0 0.0
    %8711 = vmatpush1.msra.mxu0 0.0
    %8712 = vmatprep.subr.mxu0 0.0
    %8713 = vmatpush1.msra.mxu0 0.0
    %8714 = vmatprep.subr.mxu0 0.0
    %8715 = vmatpush1.msra.mxu0 0.0
    %8716 = vmatprep.subr.mxu0 0.0
    %8717 = vmatpush1.msra.mxu0 0.0
    %8718 = vmatprep.subr.mxu0 0.0
    %8719 = vmatpush1.msra.mxu0 0.0
    %8720 = vmatprep.subr.mxu0 0.0
    %8721 = vmatpush1.msra.mxu0 0.0
    %8722 = vmatprep.subr.mxu0 0.0
    %8723 = vmatpush1.msra.mxu0 0.0
    %8724 = vmatprep.subr.mxu0 0.0
    %8725 = vmatpush1.msra.mxu0 0.0
    %8726 = vmatprep.subr.mxu0 0.0
    %8727 = vmatpush1.msra.mxu0 0.0
    %8728 = vmatprep.subr.mxu0 0.0
    %8729 = vmatpush1.msra.mxu0 0.0
    %8730 = vmatprep.subr.mxu0 0.0
    %8731 = vmatpush1.msra.mxu0 0.0
    %8732 = vmatprep.subr.mxu0 0.0
    %8733 = vmatpush1.msra.mxu0 0.0
    %8734 = vmatprep.subr.mxu0 0.0
    %8735 = vmatpush1.msra.mxu0 0.0
    %8736 = vmatprep.subr.mxu0 0.0
    %8737 = vmatpush1.msra.mxu0 0.0
    %8738 = vmatprep.mubr.f32.mxu0 0.0
    %8739 = vmatmul.mubr.f32.gmra.mrb[0].mxu0 %v8672
    %v8740 = vpop.f32.mrb[0].mxu0
    %v8741 = vadd.f32 %v8669, %v8740
    %v8742 = vpop.f32.mrb[0].mxu0
    %8743 = vdwg.mxu0
    %v8746 = vunpack.c.l.s4 1966171168
    %v8747 = vunpack.c.0.s8 %v8746
    %v8748 = vlaneseq
    %v8749 = vshrl.u32 %v8748, 7
    %v8750 = vsub.s32 %v8747, %v8749
    %v8751 = vrot.slane %v8741, %v8750
    %v8752 = vcombine.high %v8751, %v8751
    %v8754 = vunpack.c.l.s4 1966171168
    %v8755 = vunpack.c.0.s8 %v8754
    %v8756 = vlaneseq
    %v8757 = vshrl.u32 %v8756, 7
    %v8758 = vsub.s32 %v8755, %v8757
    %v8759 = vrot.slane %v8751, %v8758
    %v8761 = vunpack.c.l.s4 1966171168
    %v8762 = vunpack.c.0.s8 %v8761
    %v8763 = vlaneseq
    %v8764 = vshrl.u32 %v8763, 7
    %v8765 = vsub.s32 %v8762, %v8764
    %v8766 = vrot.slane %v8752, %v8765
    %8769 = vst [vmem:[#allocation4] sm:$0x1] %v8759
    %8770 = vst [vmem:[#allocation4 + $0x1] sm:$0x1] %v8766
    // Predicated region
    $region86: #{mma_test_forward.1} parent=1 // pred_check
      _
    $region87: #{mma_test_forward.1} parent=1 // pred_check_branch
      %8772 = sbr.rel (0) target = $region89
    $region88: #{mma_test_forward.1} parent=1 // pred_region
      %s8774 = ssub.s32 32, 32
      %8775 = vsyncadd [#allocation5], %s8774
      %s8776 = sshll.u32 [#allocation4], 4
      %s8777 = int_to_ptr.vmem [resolvable:$true] %s8776
      %8782 = dma.vmem_to_hbm [thread:$0]  %s8777, 32, %s21, [#allocation5], 16, 16, 1
    $region89: #{mma_test_forward.1} parent=1 // pred_fallthru
      _
    // Predicated region
    $region90: #{mma_test_forward.1} parent=1 // pred_check
      _
    $region91: #{mma_test_forward.1} parent=1 // pred_check_branch
      %8784 = sbr.rel (0) target = $region93
    $region92: #{mma_test_forward.1} parent=1 // pred_region
      %8785 = dma.done [#allocation5], 32
    $region93: #{mma_test_forward.1} parent=1 // pred_fallthru
      _
    %8786 = vsyncpa [#allocation5], 1

</llo_original>
